<compile_context>
chip_gen: v7x
topology: tpu7x:2x2x1
jax: 0.10.0
libtpu: 0.0.40
codegen_flags: <defaults>
</compile_context>

<pallas_src>
import functools
import numpy as np
import jax
import jax.numpy as jnp
from jax.experimental import pallas as pl
from jax.experimental.pallas import tpu as pltpu

BN_EPS = 1e-5


def _round_up(x, m):
    return (x + m - 1) // m * m


# ----------------------------------------------------------------------------
# Fused matmul + bias + activation Pallas kernel (bf16 MXU, f32 epilogue)
# ----------------------------------------------------------------------------
def _fused_matmul_kernel(x_ref, w_ref, b_ref, o_ref, acc_ref, *, act):
    @pl.when(pl.program_id(2) == 0)
    def _():
        acc_ref[...] = jnp.zeros_like(acc_ref)

    acc_ref[...] += jnp.dot(x_ref[...], w_ref[...],
                            preferred_element_type=jnp.float32)

    @pl.when(pl.program_id(2) == pl.num_programs(2) - 1)
    def _():
        y = acc_ref[...] + b_ref[...]
        if act == "relu":
            y = jnp.maximum(y, 0.0)
        elif act == "sigmoid":
            y = jax.nn.sigmoid(y)
        o_ref[...] = y.astype(o_ref.dtype)


def fused_matmul(x, w_pad, b_pad, n_out, act="none", out_dtype=jnp.bfloat16):
    """act(x @ w_pad + b_pad)[:, :n_out].

    x:(M,K) float  w_pad:(Kp,Np) bf16 pre-padded  b_pad:(1,Np) f32."""
    M, K = x.shape
    Kp, Np = w_pad.shape
    assert K <= Kp and n_out <= Np

    tm = min(128, _round_up(M, 16))          # don't pad tiny M up to 128
    Mp = _round_up(M, tm)
    tn = 128                                 # >=2 parallel N blocks on wide layers
    # 2-step K split on the big-K layers so weight DMA pipelines across steps.
    tk = Kp // 2 if (Kp > 1024 and Kp % 256 == 0) else Kp

    xp = jnp.pad(x.astype(jnp.bfloat16), ((0, Mp - M), (0, Kp - K)))

    out = pl.pallas_call(
        functools.partial(_fused_matmul_kernel, act=act),
        out_shape=jax.ShapeDtypeStruct((Mp, Np), out_dtype),
        grid_spec=pltpu.PrefetchScalarGridSpec(
            num_scalar_prefetch=0,
            grid=(Mp // tm, Np // tn, Kp // tk),
            in_specs=[
                pl.BlockSpec((tm, tk), lambda i, j, k: (i, k)),
                pl.BlockSpec((tk, tn), lambda i, j, k: (k, j)),
                pl.BlockSpec((1, tn), lambda i, j, k: (0, j)),
            ],
            out_specs=pl.BlockSpec((tm, tn), lambda i, j, k: (i, j)),
            scratch_shapes=[pltpu.VMEM((tm, tn), jnp.float32)],
        ),
        compiler_params=pltpu.CompilerParams(
            dimension_semantics=("parallel", "parallel", "arbitrary"),
            vmem_limit_bytes=32 * 1024 * 1024,
        ),
    )(xp, w_pad, b_pad)
    return out[:M, :n_out]


# ----------------------------------------------------------------------------
# im2col glue (plain JAX: only slices / padding, fused by jit)
# ----------------------------------------------------------------------------
def im2col_2d(x, kh, kw, stride, pad):
    B, H, W, C = x.shape
    xp = jnp.pad(x, ((0, 0), (pad, pad), (pad, pad), (0, 0)))
    Ho = (H + 2 * pad - kh) // stride + 1
    Wo = (W + 2 * pad - kw) // stride + 1
    cols = []
    for i in range(kh):
        for j in range(kw):
            cols.append(xp[:, i:i + stride * Ho:stride, j:j + stride * Wo:stride, :])
    patches = jnp.stack(cols, axis=3)                      # (B,Ho,Wo,kh*kw,C)
    return patches.reshape(B * Ho * Wo, kh * kw * C), (B, Ho, Wo)


def im2col_1d(x, k, stride, pad):
    B, L, C = x.shape
    xp = jnp.pad(x, ((0, 0), (pad, pad), (0, 0)))
    Lo = (L + 2 * pad - k) // stride + 1
    cols = [xp[:, i:i + stride * Lo:stride, :] for i in range(k)]
    patches = jnp.stack(cols, axis=2)                      # (B,Lo,k,C)
    return patches.reshape(B * Lo, k * C), (B, Lo)


# ----------------------------------------------------------------------------
# One-time weight preparation (runs OUTSIDE the jit): BN fold, transpose,
# ConvTranspose phase decomposition, pad to (Kp, Np), cast to bf16.
# ----------------------------------------------------------------------------
def _bn_fold(p):
    scale = p["gamma"] * jax.lax.rsqrt(p["var"] + BN_EPS)
    bias = (p["b"] - p["mean"]) * scale + p["beta"]
    return scale, bias


def _prep_matmul_weights(w_t, bias):
    K, N = w_t.shape
    # K > 1024 padded to a multiple of 256 so the kernel can 2-way split it.
    Kp = _round_up(K, 256) if K > 1024 else _round_up(K, 128)
    Np = _round_up(N, 128)
    wp = jnp.pad(w_t, ((0, Kp - K), (0, Np - N))).astype(jnp.bfloat16)
    bp = jnp.pad(bias, (0, Np - N)).astype(jnp.float32).reshape(1, Np)
    return {"w": wp, "b": bp}


def _prep_conv2d(p, bn=True):
    w = p["w"]                                             # (Cout, Cin, kh, kw)
    Cout, Cin, kh, kw = w.shape
    w_t = jnp.transpose(w, (2, 3, 1, 0)).reshape(kh * kw * Cin, Cout)
    if bn:
        scale, bias = _bn_fold(p)
        w_t = w_t * scale[None, :]
    else:
        bias = p["b"]
    return _prep_matmul_weights(w_t, bias)


def _prep_conv1d(p):
    w = p["w"]                                             # (Cout, Cin, k)
    Cout, Cin, k = w.shape
    w_t = jnp.transpose(w, (2, 1, 0)).reshape(k * Cin, Cout)
    scale, bias = _bn_fold(p)
    return _prep_matmul_weights(w_t * scale[None, :], bias)


# Sub-pixel phase map for ConvTranspose2d(k=4, s=2, p=1):
#   out[2m]   = w[3]*x[m-1] + w[1]*x[m]
#   out[2m+1] = w[2]*x[m]   + w[0]*x[m+1]
# Window offset d in {0,1,2} covers x[m-1+d] (shared 3x3/stride-1 im2col, pad 1).
_PHASE_R = np.zeros((2, 3, 4), np.float32)
_PHASE_R[0, 0, 3] = 1.0
_PHASE_R[0, 1, 1] = 1.0
_PHASE_R[1, 1, 2] = 1.0
_PHASE_R[1, 2, 0] = 1.0


def _prep_conv_transpose2d(p, bn=True):
    w = p["w"]                                             # (Cin, Cout, 4, 4)
    Cin, Cout, _, _ = w.shape
    R = jnp.asarray(_PHASE_R)
    wph = jnp.einsum("pik,qjl,cokl->pqijco", R, R, w)      # (2,2,3,3,Cin,Cout)
    w_t = jnp.transpose(wph, (2, 3, 4, 0, 1, 5)).reshape(9 * Cin, 4 * Cout)
    if bn:
        scale, bias = _bn_fold(p)
        w_t = w_t * jnp.tile(scale, 4)[None, :]
        bias4 = jnp.tile(bias, 4)
    else:
        bias4 = jnp.tile(p["b"], 4)
    return _prep_matmul_weights(w_t, bias4)


def prepare_model(params):
    prepared = {
        "audio": [_prep_conv1d(p) for p in params["audio"]],
        "face": [_prep_conv2d(p) for p in params["face"]],
        "fusion_conv": _prep_conv2d(params["fusion_conv"]),
        "fusion_up1": _prep_conv_transpose2d(params["fusion_up1"]),
        "fusion_up2": _prep_conv_transpose2d(params["fusion_up2"]),
        "fusion_up3": _prep_conv_transpose2d(params["fusion_up3"], bn=False),
    }
    meta = {                                               # static (Python ints)
        "audio": [int(p["w"].shape[0]) for p in params["audio"]],
        "face": [int(p["w"].shape[0]) for p in params["face"]],
        "fusion_conv": int(params["fusion_conv"]["w"].shape[0]),
        "fusion_up1": int(params["fusion_up1"]["w"].shape[1]),
        "fusion_up2": int(params["fusion_up2"]["w"].shape[1]),
        "fusion_up3": int(params["fusion_up3"]["w"].shape[1]),
    }
    return prepared, meta


# ----------------------------------------------------------------------------
# Layer application (im2col + one fused Pallas matmul per layer)
# ----------------------------------------------------------------------------
def conv2d_apply(x, layer, cout, stride, pad, act="relu",
                 out_dtype=jnp.bfloat16):
    patches, (B, Ho, Wo) = im2col_2d(x, 3, 3, stride, pad)
    y = fused_matmul(patches, layer["w"], layer["b"], cout, act=act,
                     out_dtype=out_dtype)
    return y.reshape(B, Ho, Wo, cout)


def conv1d_apply(x, layer, cout, stride, pad, act="relu",
                 out_dtype=jnp.bfloat16):
    patches, (B, Lo) = im2col_1d(x, 3, stride, pad)
    y = fused_matmul(patches, layer["w"], layer["b"], cout, act=act,
                     out_dtype=out_dtype)
    return y.reshape(B, Lo, cout)


def conv_transpose2d_apply(x, layer, cout, act="relu", out_dtype=jnp.bfloat16):
    """ConvTranspose2d(k=4, s=2, p=1): shared 3x3 stride-1 im2col, one matmul
    with the 4 output phases concatenated along N, then pixel-shuffle."""
    B, H, W, _ = x.shape
    patches, _ = im2col_2d(x, 3, 3, 1, 1)                  # Ho=H, Wo=W
    y = fused_matmul(patches, layer["w"], layer["b"], 4 * cout, act=act,
                     out_dtype=out_dtype)                  # (B*H*W, 4*Cout)
    y = y.reshape(B, H, W, 2, 2, cout)
    y = jnp.transpose(y, (0, 1, 3, 2, 4, 5)).reshape(B, 2 * H, 2 * W, cout)
    return y


def bilinear_matrix(in_size, out_size):
    """PyTorch bilinear (align_corners=False) 1-D resampling matrix (out, in)."""
    M = np.zeros((out_size, in_size), np.float32)
    scale = in_size / out_size
    for j in range(out_size):
        src = max((j + 0.5) * scale - 0.5, 0.0)
        i0 = min(int(np.floor(src)), in_size - 1)
        i1 = min(i0 + 1, in_size - 1)
        lam = src - i0
        M[j, i0] += 1.0 - lam
        M[j, i1] += lam
    return M


# ----------------------------------------------------------------------------
# Model
# ----------------------------------------------------------------------------
def init_params(key):
    def make_layer(k, w_shape, out_ch, bn=True):
        kw, kb = jax.random.split(k)
        fan_in = int(np.prod(w_shape)) // out_ch
        std = 1.0 / np.sqrt(fan_in)
        p = {"w": std * jax.random.normal(kw, w_shape, jnp.float32),
             "b": 0.01 * jax.random.normal(kb, (out_ch,), jnp.float32)}
        if bn:
            p.update(gamma=jnp.ones((out_ch,), jnp.float32),
                     beta=jnp.zeros((out_ch,), jnp.float32),
                     mean=jnp.zeros((out_ch,), jnp.float32),
                     var=jnp.ones((out_ch,), jnp.float32))
        return p

    ks = jax.random.split(key, 10)
    return {
        "audio": [make_layer(ks[0], (32, 1, 3), 32),
                  make_layer(ks[1], (64, 32, 3), 64),
                  make_layer(ks[2], (128, 64, 3), 128)],
        "face": [make_layer(ks[3], (32, 3, 3, 3), 32),
                 make_layer(ks[4], (64, 32, 3, 3), 64),
                 make_layer(ks[5], (128, 64, 3, 3), 128)],
        "fusion_conv": make_layer(ks[6], (256, 256, 3, 3), 256),
        "fusion_up1": make_layer(ks[7], (256, 128, 4, 4), 128),   # ConvTranspose2d
        "fusion_up2": make_layer(ks[8], (128, 64, 4, 4), 64),     # ConvTranspose2d
        "fusion_up3": make_layer(ks[9], (64, 3, 4, 4), 3, bn=False),
    }


def lip_sync_forward(face_nchw, audio_ncl, prepared, *, meta):
    face = jnp.transpose(face_nchw, (0, 2, 3, 1)).astype(jnp.bfloat16)  # NCHW->NHWC
    audio = jnp.transpose(audio_ncl, (0, 2, 1)).astype(jnp.bfloat16)    # NCL ->NLC

    # face encoder: 3 x (conv2d s2 p1 + BN + ReLU)
    f = face
    for layer, cout in zip(prepared["face"], meta["face"]):
        f = conv2d_apply(f, layer, cout, stride=2, pad=1, act="relu")

    # audio encoder: 3 x (conv1d s2 p1 + BN + ReLU)
    a = audio
    for layer, cout in zip(prepared["audio"], meta["audio"]):
        a = conv1d_apply(a, layer, cout, stride=2, pad=1, act="relu")

    B, h, w_sp, _ = f.shape
    _, T, Ca = a.shape

    # bilinear interpolate (1, T) -> (h, w): vertical is replication of the
    # single row, horizontal resample is a tiny constant matrix — plain XLA,
    # not worth a kernel launch (K=8, N=2 degenerate matmul).
    Mb = jnp.asarray(bilinear_matrix(T, w_sp))             # (w, T)
    a_img = jnp.einsum("wt,btc->bwc", Mb, a.astype(jnp.float32))
    a_img = jnp.broadcast_to(a_img[:, None, :, :], (B, h, w_sp, Ca))
    a_img = a_img.astype(jnp.bfloat16)

    # concat along channels (face first, matching PyTorch dim=1 order)
    combined = jnp.concatenate([f, a_img], axis=-1)        # (B, h, w, 256)

    x = conv2d_apply(combined, prepared["fusion_conv"], meta["fusion_conv"],
                     stride=1, pad=1, act="relu")
    x = conv_transpose2d_apply(x, prepared["fusion_up1"], meta["fusion_up1"],
                               act="relu")
    x = conv_transpose2d_apply(x, prepared["fusion_up2"], meta["fusion_up2"],
                               act="relu")
    x = conv_transpose2d_apply(x, prepared["fusion_up3"], meta["fusion_up3"],
                               act="sigmoid", out_dtype=jnp.float32)
    return jnp.transpose(x, (0, 3, 1, 2))                  # NHWC -> NCHW


if __name__ == "__main__":
    key = jax.random.PRNGKey(0)
    pkey, fkey, akey = jax.random.split(key, 3)
    params = init_params(pkey)
    # BN fold / transpose / phase-decompose / pad / bf16-cast the weights ONCE,
    # outside the jit.
    prepared, meta = prepare_model(params)
    forward = jax.jit(functools.partial(lip_sync_forward, meta=meta))

    B, H, W, T = 2, 16, 16, 64
    face = jax.random.uniform(fkey, (B, 3, H, W), jnp.float32)     # NCHW like PyTorch
    audio = jax.random.normal(akey, (B, 1, T), jnp.float32)        # NCL  like PyTorch

    out = forward(face, audio, prepared)
    out = jax.block_until_ready(out)
    assert out.shape == (B, 3, H, W), out.shape
    assert bool(jnp.all(jnp.isfinite(out)))
    assert bool(jnp.all((out >= 0.0) & (out <= 1.0)))              # sigmoid output
    print("KERNEL_OK")
</pallas_src>

<mosaic_0001>
module attributes {stable_mosaic.version = 11 : i64} {
  func.func @_fused_matmul_kernel(%arg0: i32, %arg1: i32, %arg2: i32, %arg3: memref<64x128xbf16, #tpu.memory_space<vmem>>, %arg4: memref<128x128xbf16, #tpu.memory_space<vmem>>, %arg5: memref<1x128xf32, #tpu.memory_space<vmem>>, %arg6: memref<64x128xbf16, #tpu.memory_space<vmem>>, %arg7: memref<64x128xf32, #tpu.memory_space<vmem>>) attributes {dimension_semantics = [#tpu.dimension_semantics<parallel>, #tpu.dimension_semantics<parallel>, #tpu.dimension_semantics<arbitrary>], iteration_bounds = array<i64: 1, 1, 1>, scalar_prefetch = 0 : i64, scratch_operands = 1 : i64, tpu.core_type = #tpu.core_type<tc>, window_params = [{transform_indices = @transform_0, window_bounds = array<i64: 64, 128>}, {transform_indices = @transform_1, window_bounds = array<i64: 128, 128>}, {transform_indices = @transform_2, window_bounds = array<i64: 1, 128>}, {transform_indices = @transform_3, window_bounds = array<i64: 64, 128>}]} {
    %c0_i32 = arith.constant 0 : i32
    %0 = arith.cmpi eq, %arg2, %c0_i32 : i32
    %1 = arith.extui %0 : i1 to i32
    %c0_i32_0 = arith.constant 0 : i32
    %2 = arith.cmpi ne, %1, %c0_i32_0 : i32
    scf.if %2 {
      %cst_10 = arith.constant 0.000000e+00 : f32
      %12 = vector.broadcast %cst_10 : f32 to vector<64x128xf32>
      %c0_11 = arith.constant 0 : index
      %c0_12 = arith.constant 0 : index
      %13 = vector.load %arg7[%c0_11, %c0_12] : memref<64x128xf32, #tpu.memory_space<vmem>>, vector<64x128xf32>
      tpu.vector_store %arg7[%c0_11, %c0_12], %12 {strides = array<i32>} : memref<64x128xf32, #tpu.memory_space<vmem>>, vector<64x128xf32>,
    } else {
    }
    %c0 = arith.constant 0 : index
    %c0_1 = arith.constant 0 : index
    %3 = vector.load %arg7[%c0, %c0_1] : memref<64x128xf32, #tpu.memory_space<vmem>>, vector<64x128xf32>
    %c0_2 = arith.constant 0 : index
    %c0_3 = arith.constant 0 : index
    %4 = vector.load %arg3[%c0_2, %c0_3] : memref<64x128xbf16, #tpu.memory_space<vmem>>, vector<64x128xbf16>
    %c0_4 = arith.constant 0 : index
    %c0_5 = arith.constant 0 : index
    %5 = vector.load %arg4[%c0_4, %c0_5] : memref<128x128xbf16, #tpu.memory_space<vmem>>, vector<128x128xbf16>
    %cst = arith.constant dense<0.000000e+00> : vector<64x128xf32>
    %6 = tpu.matmul %4, %5, %cst {dimension_numbers = #tpu.dot_dimension_numbers<[1], [0], [0], [1], [0, 0, 1, 1], [], []>} : vector<64x128xbf16>, vector<128x128xbf16>, vector<64x128xf32> -> vector<64x128xf32>
    %7 = arith.addf %3, %6 : vector<64x128xf32>
    %c0_6 = arith.constant 0 : index
    %c0_7 = arith.constant 0 : index
    %8 = vector.load %arg7[%c0_6, %c0_7] : memref<64x128xf32, #tpu.memory_space<vmem>>, vector<64x128xf32>
    tpu.vector_store %arg7[%c0_6, %c0_7], %7 {strides = array<i32>} : memref<64x128xf32, #tpu.memory_space<vmem>>, vector<64x128xf32>,
    %c0_i32_8 = arith.constant 0 : i32
    %9 = arith.cmpi eq, %arg2, %c0_i32_8 : i32
    %10 = arith.extui %9 : i1 to i32
    %c0_i32_9 = arith.constant 0 : i32
    %11 = arith.cmpi ne, %10, %c0_i32_9 : i32
    scf.if %11 {
      %c0_10 = arith.constant 0 : index
      %c0_11 = arith.constant 0 : index
      %12 = vector.load %arg7[%c0_10, %c0_11] : memref<64x128xf32, #tpu.memory_space<vmem>>, vector<64x128xf32>
      %c0_12 = arith.constant 0 : index
      %c0_13 = arith.constant 0 : index
      %13 = vector.load %arg5[%c0_12, %c0_13] : memref<1x128xf32, #tpu.memory_space<vmem>>, vector<1x128xf32>
      %14 = vector.broadcast %13 : vector<1x128xf32> to vector<64x128xf32>
      %15 = arith.addf %12, %14 : vector<64x128xf32>
      %cst_14 = arith.constant 0.000000e+00 : f32
      %16 = vector.broadcast %cst_14 : f32 to vector<64x128xf32>
      %17 = arith.maximumf %15, %16 : vector<64x128xf32>
      %18 = arith.truncf %17 : vector<64x128xf32> to vector<64x128xbf16>
      %c0_15 = arith.constant 0 : index
      %c0_16 = arith.constant 0 : index
      %19 = vector.load %arg6[%c0_15, %c0_16] : memref<64x128xbf16, #tpu.memory_space<vmem>>, vector<64x128xbf16>
      tpu.vector_store %arg6[%c0_15, %c0_16], %18 {strides = array<i32>} : memref<64x128xbf16, #tpu.memory_space<vmem>>, vector<64x128xbf16>,
    } else {
    }
    return
  }
  func.func @transform_0(%arg0: i32, %arg1: i32, %arg2: i32) -> (i32, i32) {
    %c0_i32 = arith.constant 0 : i32
    return %arg0, %arg2 : i32, i32
  }
  func.func @transform_1(%arg0: i32, %arg1: i32, %arg2: i32) -> (i32, i32) {
    %c0_i32 = arith.constant 0 : i32
    return %arg2, %arg1 : i32, i32
  }
  func.func @transform_2(%arg0: i32, %arg1: i32, %arg2: i32) -> (i32, i32) {
    %c0_i32 = arith.constant 0 : i32
    %c0_i32_0 = arith.constant 0 : i32
    return %c0_i32, %arg1 : i32, i32
  }
  func.func @transform_3(%arg0: i32, %arg1: i32, %arg2: i32) -> (i32, i32) {
    %c0_i32 = arith.constant 0 : i32
    return %arg0, %arg1 : i32, i32
  }
}

module attributes {stable_mosaic.version = 11 : i64} {
  func.func @_fused_matmul_kernel(%arg0: i32, %arg1: i32, %arg2: i32, %arg3: memref<32x128xbf16, #tpu.memory_space<vmem>>, %arg4: memref<128x128xbf16, #tpu.memory_space<vmem>>, %arg5: memref<1x128xf32, #tpu.memory_space<vmem>>, %arg6: memref<32x128xbf16, #tpu.memory_space<vmem>>, %arg7: memref<32x128xf32, #tpu.memory_space<vmem>>) attributes {dimension_semantics = [#tpu.dimension_semantics<parallel>, #tpu.dimension_semantics<parallel>, #tpu.dimension_semantics<arbitrary>], iteration_bounds = array<i64: 1, 1, 1>, scalar_prefetch = 0 : i64, scratch_operands = 1 : i64, tpu.core_type = #tpu.core_type<tc>, window_params = [{transform_indices = @transform_0, window_bounds = array<i64: 32, 128>}, {transform_indices = @transform_1, window_bounds = array<i64: 128, 128>}, {transform_indices = @transform_2, window_bounds = array<i64: 1, 128>}, {transform_indices = @transform_3, window_bounds = array<i64: 32, 128>}]} {
    %c0_i32 = arith.constant 0 : i32
    %0 = arith.cmpi eq, %arg2, %c0_i32 : i32
    %1 = arith.extui %0 : i1 to i32
    %c0_i32_0 = arith.constant 0 : i32
    %2 = arith.cmpi ne, %1, %c0_i32_0 : i32
    scf.if %2 {
      %cst_10 = arith.constant 0.000000e+00 : f32
      %12 = vector.broadcast %cst_10 : f32 to vector<32x128xf32>
      %c0_11 = arith.constant 0 : index
      %c0_12 = arith.constant 0 : index
      %13 = vector.load %arg7[%c0_11, %c0_12] : memref<32x128xf32, #tpu.memory_space<vmem>>, vector<32x128xf32>
      tpu.vector_store %arg7[%c0_11, %c0_12], %12 {strides = array<i32>} : memref<32x128xf32, #tpu.memory_space<vmem>>, vector<32x128xf32>,
    } else {
    }
    %c0 = arith.constant 0 : index
    %c0_1 = arith.constant 0 : index
    %3 = vector.load %arg7[%c0, %c0_1] : memref<32x128xf32, #tpu.memory_space<vmem>>, vector<32x128xf32>
    %c0_2 = arith.constant 0 : index
    %c0_3 = arith.constant 0 : index
    %4 = vector.load %arg3[%c0_2, %c0_3] : memref<32x128xbf16, #tpu.memory_space<vmem>>, vector<32x128xbf16>
    %c0_4 = arith.constant 0 : index
    %c0_5 = arith.constant 0 : index
    %5 = vector.load %arg4[%c0_4, %c0_5] : memref<128x128xbf16, #tpu.memory_space<vmem>>, vector<128x128xbf16>
    %cst = arith.constant dense<0.000000e+00> : vector<32x128xf32>
    %6 = tpu.matmul %4, %5, %cst {dimension_numbers = #tpu.dot_dimension_numbers<[1], [0], [0], [1], [0, 0, 1, 1], [], []>} : vector<32x128xbf16>, vector<128x128xbf16>, vector<32x128xf32> -> vector<32x128xf32>
    %7 = arith.addf %3, %6 : vector<32x128xf32>
    %c0_6 = arith.constant 0 : index
    %c0_7 = arith.constant 0 : index
    %8 = vector.load %arg7[%c0_6, %c0_7] : memref<32x128xf32, #tpu.memory_space<vmem>>, vector<32x128xf32>
    tpu.vector_store %arg7[%c0_6, %c0_7], %7 {strides = array<i32>} : memref<32x128xf32, #tpu.memory_space<vmem>>, vector<32x128xf32>,
    %c0_i32_8 = arith.constant 0 : i32
    %9 = arith.cmpi eq, %arg2, %c0_i32_8 : i32
    %10 = arith.extui %9 : i1 to i32
    %c0_i32_9 = arith.constant 0 : i32
    %11 = arith.cmpi ne, %10, %c0_i32_9 : i32
    scf.if %11 {
      %c0_10 = arith.constant 0 : index
      %c0_11 = arith.constant 0 : index
      %12 = vector.load %arg7[%c0_10, %c0_11] : memref<32x128xf32, #tpu.memory_space<vmem>>, vector<32x128xf32>
      %c0_12 = arith.constant 0 : index
      %c0_13 = arith.constant 0 : index
      %13 = vector.load %arg5[%c0_12, %c0_13] : memref<1x128xf32, #tpu.memory_space<vmem>>, vector<1x128xf32>
      %14 = vector.broadcast %13 : vector<1x128xf32> to vector<32x128xf32>
      %15 = arith.addf %12, %14 : vector<32x128xf32>
      %cst_14 = arith.constant 0.000000e+00 : f32
      %16 = vector.broadcast %cst_14 : f32 to vector<32x128xf32>
      %17 = arith.maximumf %15, %16 : vector<32x128xf32>
      %18 = arith.truncf %17 : vector<32x128xf32> to vector<32x128xbf16>
      %c0_15 = arith.constant 0 : index
      %c0_16 = arith.constant 0 : index
      %19 = vector.load %arg6[%c0_15, %c0_16] : memref<32x128xbf16, #tpu.memory_space<vmem>>, vector<32x128xbf16>
      tpu.vector_store %arg6[%c0_15, %c0_16], %18 {strides = array<i32>} : memref<32x128xbf16, #tpu.memory_space<vmem>>, vector<32x128xbf16>,
    } else {
    }
    return
  }
  func.func @transform_0(%arg0: i32, %arg1: i32, %arg2: i32) -> (i32, i32) {
    %c0_i32 = arith.constant 0 : i32
    return %arg0, %arg2 : i32, i32
  }
  func.func @transform_1(%arg0: i32, %arg1: i32, %arg2: i32) -> (i32, i32) {
    %c0_i32 = arith.constant 0 : i32
    return %arg2, %arg1 : i32, i32
  }
  func.func @transform_2(%arg0: i32, %arg1: i32, %arg2: i32) -> (i32, i32) {
    %c0_i32 = arith.constant 0 : i32
    %c0_i32_0 = arith.constant 0 : i32
    return %c0_i32, %arg1 : i32, i32
  }
  func.func @transform_3(%arg0: i32, %arg1: i32, %arg2: i32) -> (i32, i32) {
    %c0_i32 = arith.constant 0 : i32
    return %arg0, %arg1 : i32, i32
  }
}

module attributes {stable_mosaic.version = 11 : i64} {
  func.func @_fused_matmul_kernel(%arg0: i32, %arg1: i32, %arg2: i32, %arg3: memref<16x256xbf16, #tpu.memory_space<vmem>>, %arg4: memref<256x128xbf16, #tpu.memory_space<vmem>>, %arg5: memref<1x128xf32, #tpu.memory_space<vmem>>, %arg6: memref<16x128xbf16, #tpu.memory_space<vmem>>, %arg7: memref<16x128xf32, #tpu.memory_space<vmem>>) attributes {dimension_semantics = [#tpu.dimension_semantics<parallel>, #tpu.dimension_semantics<parallel>, #tpu.dimension_semantics<arbitrary>], iteration_bounds = array<i64: 1, 1, 1>, scalar_prefetch = 0 : i64, scratch_operands = 1 : i64, tpu.core_type = #tpu.core_type<tc>, window_params = [{transform_indices = @transform_0, window_bounds = array<i64: 16, 256>}, {transform_indices = @transform_1, window_bounds = array<i64: 256, 128>}, {transform_indices = @transform_2, window_bounds = array<i64: 1, 128>}, {transform_indices = @transform_3, window_bounds = array<i64: 16, 128>}]} {
    %c0_i32 = arith.constant 0 : i32
    %0 = arith.cmpi eq, %arg2, %c0_i32 : i32
    %1 = arith.extui %0 : i1 to i32
    %c0_i32_0 = arith.constant 0 : i32
    %2 = arith.cmpi ne, %1, %c0_i32_0 : i32
    scf.if %2 {
      %cst_10 = arith.constant 0.000000e+00 : f32
      %12 = vector.broadcast %cst_10 : f32 to vector<16x128xf32>
      %c0_11 = arith.constant 0 : index
      %c0_12 = arith.constant 0 : index
      %13 = vector.load %arg7[%c0_11, %c0_12] : memref<16x128xf32, #tpu.memory_space<vmem>>, vector<16x128xf32>
      tpu.vector_store %arg7[%c0_11, %c0_12], %12 {strides = array<i32>} : memref<16x128xf32, #tpu.memory_space<vmem>>, vector<16x128xf32>,
    } else {
    }
    %c0 = arith.constant 0 : index
    %c0_1 = arith.constant 0 : index
    %3 = vector.load %arg7[%c0, %c0_1] : memref<16x128xf32, #tpu.memory_space<vmem>>, vector<16x128xf32>
    %c0_2 = arith.constant 0 : index
    %c0_3 = arith.constant 0 : index
    %4 = vector.load %arg3[%c0_2, %c0_3] : memref<16x256xbf16, #tpu.memory_space<vmem>>, vector<16x256xbf16>
    %c0_4 = arith.constant 0 : index
    %c0_5 = arith.constant 0 : index
    %5 = vector.load %arg4[%c0_4, %c0_5] : memref<256x128xbf16, #tpu.memory_space<vmem>>, vector<256x128xbf16>
    %cst = arith.constant dense<0.000000e+00> : vector<16x128xf32>
    %6 = tpu.matmul %4, %5, %cst {dimension_numbers = #tpu.dot_dimension_numbers<[1], [0], [0], [1], [0, 0, 1, 1], [], []>} : vector<16x256xbf16>, vector<256x128xbf16>, vector<16x128xf32> -> vector<16x128xf32>
    %7 = arith.addf %3, %6 : vector<16x128xf32>
    %c0_6 = arith.constant 0 : index
    %c0_7 = arith.constant 0 : index
    %8 = vector.load %arg7[%c0_6, %c0_7] : memref<16x128xf32, #tpu.memory_space<vmem>>, vector<16x128xf32>
    tpu.vector_store %arg7[%c0_6, %c0_7], %7 {strides = array<i32>} : memref<16x128xf32, #tpu.memory_space<vmem>>, vector<16x128xf32>,
    %c0_i32_8 = arith.constant 0 : i32
    %9 = arith.cmpi eq, %arg2, %c0_i32_8 : i32
    %10 = arith.extui %9 : i1 to i32
    %c0_i32_9 = arith.constant 0 : i32
    %11 = arith.cmpi ne, %10, %c0_i32_9 : i32
    scf.if %11 {
      %c0_10 = arith.constant 0 : index
      %c0_11 = arith.constant 0 : index
      %12 = vector.load %arg7[%c0_10, %c0_11] : memref<16x128xf32, #tpu.memory_space<vmem>>, vector<16x128xf32>
      %c0_12 = arith.constant 0 : index
      %c0_13 = arith.constant 0 : index
      %13 = vector.load %arg5[%c0_12, %c0_13] : memref<1x128xf32, #tpu.memory_space<vmem>>, vector<1x128xf32>
      %14 = vector.broadcast %13 : vector<1x128xf32> to vector<16x128xf32>
      %15 = arith.addf %12, %14 : vector<16x128xf32>
      %cst_14 = arith.constant 0.000000e+00 : f32
      %16 = vector.broadcast %cst_14 : f32 to vector<16x128xf32>
      %17 = arith.maximumf %15, %16 : vector<16x128xf32>
      %18 = arith.truncf %17 : vector<16x128xf32> to vector<16x128xbf16>
      %c0_15 = arith.constant 0 : index
      %c0_16 = arith.constant 0 : index
      %19 = vector.load %arg6[%c0_15, %c0_16] : memref<16x128xbf16, #tpu.memory_space<vmem>>, vector<16x128xbf16>
      tpu.vector_store %arg6[%c0_15, %c0_16], %18 {strides = array<i32>} : memref<16x128xbf16, #tpu.memory_space<vmem>>, vector<16x128xbf16>,
    } else {
    }
    return
  }
  func.func @transform_0(%arg0: i32, %arg1: i32, %arg2: i32) -> (i32, i32) {
    %c0_i32 = arith.constant 0 : i32
    return %arg0, %arg2 : i32, i32
  }
  func.func @transform_1(%arg0: i32, %arg1: i32, %arg2: i32) -> (i32, i32) {
    %c0_i32 = arith.constant 0 : i32
    return %arg2, %arg1 : i32, i32
  }
  func.func @transform_2(%arg0: i32, %arg1: i32, %arg2: i32) -> (i32, i32) {
    %c0_i32 = arith.constant 0 : i32
    %c0_i32_0 = arith.constant 0 : i32
    return %c0_i32, %arg1 : i32, i32
  }
  func.func @transform_3(%arg0: i32, %arg1: i32, %arg2: i32) -> (i32, i32) {
    %c0_i32 = arith.constant 0 : i32
    return %arg0, %arg1 : i32, i32
  }
}

module attributes {stable_mosaic.version = 11 : i64} {
  func.func @_fused_matmul_kernel(%arg0: i32, %arg1: i32, %arg2: i32, %arg3: memref<128x128xbf16, #tpu.memory_space<vmem>>, %arg4: memref<128x128xbf16, #tpu.memory_space<vmem>>, %arg5: memref<1x128xf32, #tpu.memory_space<vmem>>, %arg6: memref<128x128xbf16, #tpu.memory_space<vmem>>, %arg7: memref<128x128xf32, #tpu.memory_space<vmem>>) attributes {dimension_semantics = [#tpu.dimension_semantics<parallel>, #tpu.dimension_semantics<parallel>, #tpu.dimension_semantics<arbitrary>], iteration_bounds = array<i64: 1, 1, 1>, scalar_prefetch = 0 : i64, scratch_operands = 1 : i64, tpu.core_type = #tpu.core_type<tc>, window_params = [{transform_indices = @transform_0, window_bounds = array<i64: 128, 128>}, {transform_indices = @transform_1, window_bounds = array<i64: 128, 128>}, {transform_indices = @transform_2, window_bounds = array<i64: 1, 128>}, {transform_indices = @transform_3, window_bounds = array<i64: 128, 128>}]} {
    %c0_i32 = arith.constant 0 : i32
    %0 = arith.cmpi eq, %arg2, %c0_i32 : i32
    %1 = arith.extui %0 : i1 to i32
    %c0_i32_0 = arith.constant 0 : i32
    %2 = arith.cmpi ne, %1, %c0_i32_0 : i32
    scf.if %2 {
      %cst_10 = arith.constant 0.000000e+00 : f32
      %12 = vector.broadcast %cst_10 : f32 to vector<128x128xf32>
      %c0_11 = arith.constant 0 : index
      %c0_12 = arith.constant 0 : index
      %13 = vector.load %arg7[%c0_11, %c0_12] : memref<128x128xf32, #tpu.memory_space<vmem>>, vector<128x128xf32>
      tpu.vector_store %arg7[%c0_11, %c0_12], %12 {strides = array<i32>} : memref<128x128xf32, #tpu.memory_space<vmem>>, vector<128x128xf32>,
    } else {
    }
    %c0 = arith.constant 0 : index
    %c0_1 = arith.constant 0 : index
    %3 = vector.load %arg7[%c0, %c0_1] : memref<128x128xf32, #tpu.memory_space<vmem>>, vector<128x128xf32>
    %c0_2 = arith.constant 0 : index
    %c0_3 = arith.constant 0 : index
    %4 = vector.load %arg3[%c0_2, %c0_3] : memref<128x128xbf16, #tpu.memory_space<vmem>>, vector<128x128xbf16>
    %c0_4 = arith.constant 0 : index
    %c0_5 = arith.constant 0 : index
    %5 = vector.load %arg4[%c0_4, %c0_5] : memref<128x128xbf16, #tpu.memory_space<vmem>>, vector<128x128xbf16>
    %cst = arith.constant dense<0.000000e+00> : vector<128x128xf32>
    %6 = tpu.matmul %4, %5, %cst {dimension_numbers = #tpu.dot_dimension_numbers<[1], [0], [0], [1], [0, 0, 1, 1], [], []>} : vector<128x128xbf16>, vector<128x128xbf16>, vector<128x128xf32> -> vector<128x128xf32>
    %7 = arith.addf %3, %6 : vector<128x128xf32>
    %c0_6 = arith.constant 0 : index
    %c0_7 = arith.constant 0 : index
    %8 = vector.load %arg7[%c0_6, %c0_7] : memref<128x128xf32, #tpu.memory_space<vmem>>, vector<128x128xf32>
    tpu.vector_store %arg7[%c0_6, %c0_7], %7 {strides = array<i32>} : memref<128x128xf32, #tpu.memory_space<vmem>>, vector<128x128xf32>,
    %c0_i32_8 = arith.constant 0 : i32
    %9 = arith.cmpi eq, %arg2, %c0_i32_8 : i32
    %10 = arith.extui %9 : i1 to i32
    %c0_i32_9 = arith.constant 0 : i32
    %11 = arith.cmpi ne, %10, %c0_i32_9 : i32
    scf.if %11 {
      %c0_10 = arith.constant 0 : index
      %c0_11 = arith.constant 0 : index
      %12 = vector.load %arg7[%c0_10, %c0_11] : memref<128x128xf32, #tpu.memory_space<vmem>>, vector<128x128xf32>
      %c0_12 = arith.constant 0 : index
      %c0_13 = arith.constant 0 : index
      %13 = vector.load %arg5[%c0_12, %c0_13] : memref<1x128xf32, #tpu.memory_space<vmem>>, vector<1x128xf32>
      %14 = vector.broadcast %13 : vector<1x128xf32> to vector<128x128xf32>
      %15 = arith.addf %12, %14 : vector<128x128xf32>
      %cst_14 = arith.constant 0.000000e+00 : f32
      %16 = vector.broadcast %cst_14 : f32 to vector<128x128xf32>
      %17 = arith.maximumf %15, %16 : vector<128x128xf32>
      %18 = arith.truncf %17 : vector<128x128xf32> to vector<128x128xbf16>
      %c0_15 = arith.constant 0 : index
      %c0_16 = arith.constant 0 : index
      %19 = vector.load %arg6[%c0_15, %c0_16] : memref<128x128xbf16, #tpu.memory_space<vmem>>, vector<128x128xbf16>
      tpu.vector_store %arg6[%c0_15, %c0_16], %18 {strides = array<i32>} : memref<128x128xbf16, #tpu.memory_space<vmem>>, vector<128x128xbf16>,
    } else {
    }
    return
  }
  func.func @transform_0(%arg0: i32, %arg1: i32, %arg2: i32) -> (i32, i32) {
    %c0_i32 = arith.constant 0 : i32
    return %arg0, %arg2 : i32, i32
  }
  func.func @transform_1(%arg0: i32, %arg1: i32, %arg2: i32) -> (i32, i32) {
    %c0_i32 = arith.constant 0 : i32
    return %arg2, %arg1 : i32, i32
  }
  func.func @transform_2(%arg0: i32, %arg1: i32, %arg2: i32) -> (i32, i32) {
    %c0_i32 = arith.constant 0 : i32
    %c0_i32_0 = arith.constant 0 : i32
    return %c0_i32, %arg1 : i32, i32
  }
  func.func @transform_3(%arg0: i32, %arg1: i32, %arg2: i32) -> (i32, i32) {
    %c0_i32 = arith.constant 0 : i32
    return %arg0, %arg1 : i32, i32
  }
}

module attributes {stable_mosaic.version = 11 : i64} {
  func.func @_fused_matmul_kernel(%arg0: i32, %arg1: i32, %arg2: i32, %arg3: memref<32x384xbf16, #tpu.memory_space<vmem>>, %arg4: memref<384x128xbf16, #tpu.memory_space<vmem>>, %arg5: memref<1x128xf32, #tpu.memory_space<vmem>>, %arg6: memref<32x128xbf16, #tpu.memory_space<vmem>>, %arg7: memref<32x128xf32, #tpu.memory_space<vmem>>) attributes {dimension_semantics = [#tpu.dimension_semantics<parallel>, #tpu.dimension_semantics<parallel>, #tpu.dimension_semantics<arbitrary>], iteration_bounds = array<i64: 1, 1, 1>, scalar_prefetch = 0 : i64, scratch_operands = 1 : i64, tpu.core_type = #tpu.core_type<tc>, window_params = [{transform_indices = @transform_0, window_bounds = array<i64: 32, 384>}, {transform_indices = @transform_1, window_bounds = array<i64: 384, 128>}, {transform_indices = @transform_2, window_bounds = array<i64: 1, 128>}, {transform_indices = @transform_3, window_bounds = array<i64: 32, 128>}]} {
    %c0_i32 = arith.constant 0 : i32
    %0 = arith.cmpi eq, %arg2, %c0_i32 : i32
    %1 = arith.extui %0 : i1 to i32
    %c0_i32_0 = arith.constant 0 : i32
    %2 = arith.cmpi ne, %1, %c0_i32_0 : i32
    scf.if %2 {
      %cst_10 = arith.constant 0.000000e+00 : f32
      %12 = vector.broadcast %cst_10 : f32 to vector<32x128xf32>
      %c0_11 = arith.constant 0 : index
      %c0_12 = arith.constant 0 : index
      %13 = vector.load %arg7[%c0_11, %c0_12] : memref<32x128xf32, #tpu.memory_space<vmem>>, vector<32x128xf32>
      tpu.vector_store %arg7[%c0_11, %c0_12], %12 {strides = array<i32>} : memref<32x128xf32, #tpu.memory_space<vmem>>, vector<32x128xf32>,
    } else {
    }
    %c0 = arith.constant 0 : index
    %c0_1 = arith.constant 0 : index
    %3 = vector.load %arg7[%c0, %c0_1] : memref<32x128xf32, #tpu.memory_space<vmem>>, vector<32x128xf32>
    %c0_2 = arith.constant 0 : index
    %c0_3 = arith.constant 0 : index
    %4 = vector.load %arg3[%c0_2, %c0_3] : memref<32x384xbf16, #tpu.memory_space<vmem>>, vector<32x384xbf16>
    %c0_4 = arith.constant 0 : index
    %c0_5 = arith.constant 0 : index
    %5 = vector.load %arg4[%c0_4, %c0_5] : memref<384x128xbf16, #tpu.memory_space<vmem>>, vector<384x128xbf16>
    %cst = arith.constant dense<0.000000e+00> : vector<32x128xf32>
    %6 = tpu.matmul %4, %5, %cst {dimension_numbers = #tpu.dot_dimension_numbers<[1], [0], [0], [1], [0, 0, 1, 1], [], []>} : vector<32x384xbf16>, vector<384x128xbf16>, vector<32x128xf32> -> vector<32x128xf32>
    %7 = arith.addf %3, %6 : vector<32x128xf32>
    %c0_6 = arith.constant 0 : index
    %c0_7 = arith.constant 0 : index
    %8 = vector.load %arg7[%c0_6, %c0_7] : memref<32x128xf32, #tpu.memory_space<vmem>>, vector<32x128xf32>
    tpu.vector_store %arg7[%c0_6, %c0_7], %7 {strides = array<i32>} : memref<32x128xf32, #tpu.memory_space<vmem>>, vector<32x128xf32>,
    %c0_i32_8 = arith.constant 0 : i32
    %9 = arith.cmpi eq, %arg2, %c0_i32_8 : i32
    %10 = arith.extui %9 : i1 to i32
    %c0_i32_9 = arith.constant 0 : i32
    %11 = arith.cmpi ne, %10, %c0_i32_9 : i32
    scf.if %11 {
      %c0_10 = arith.constant 0 : index
      %c0_11 = arith.constant 0 : index
      %12 = vector.load %arg7[%c0_10, %c0_11] : memref<32x128xf32, #tpu.memory_space<vmem>>, vector<32x128xf32>
      %c0_12 = arith.constant 0 : index
      %c0_13 = arith.constant 0 : index
      %13 = vector.load %arg5[%c0_12, %c0_13] : memref<1x128xf32, #tpu.memory_space<vmem>>, vector<1x128xf32>
      %14 = vector.broadcast %13 : vector<1x128xf32> to vector<32x128xf32>
      %15 = arith.addf %12, %14 : vector<32x128xf32>
      %cst_14 = arith.constant 0.000000e+00 : f32
      %16 = vector.broadcast %cst_14 : f32 to vector<32x128xf32>
      %17 = arith.maximumf %15, %16 : vector<32x128xf32>
      %18 = arith.truncf %17 : vector<32x128xf32> to vector<32x128xbf16>
      %c0_15 = arith.constant 0 : index
      %c0_16 = arith.constant 0 : index
      %19 = vector.load %arg6[%c0_15, %c0_16] : memref<32x128xbf16, #tpu.memory_space<vmem>>, vector<32x128xbf16>
      tpu.vector_store %arg6[%c0_15, %c0_16], %18 {strides = array<i32>} : memref<32x128xbf16, #tpu.memory_space<vmem>>, vector<32x128xbf16>,
    } else {
    }
    return
  }
  func.func @transform_0(%arg0: i32, %arg1: i32, %arg2: i32) -> (i32, i32) {
    %c0_i32 = arith.constant 0 : i32
    return %arg0, %arg2 : i32, i32
  }
  func.func @transform_1(%arg0: i32, %arg1: i32, %arg2: i32) -> (i32, i32) {
    %c0_i32 = arith.constant 0 : i32
    return %arg2, %arg1 : i32, i32
  }
  func.func @transform_2(%arg0: i32, %arg1: i32, %arg2: i32) -> (i32, i32) {
    %c0_i32 = arith.constant 0 : i32
    %c0_i32_0 = arith.constant 0 : i32
    return %c0_i32, %arg1 : i32, i32
  }
  func.func @transform_3(%arg0: i32, %arg1: i32, %arg2: i32) -> (i32, i32) {
    %c0_i32 = arith.constant 0 : i32
    return %arg0, %arg1 : i32, i32
  }
}

module attributes {stable_mosaic.version = 11 : i64} {
  func.func @_fused_matmul_kernel(%arg0: i32, %arg1: i32, %arg2: i32, %arg3: memref<16x640xbf16, #tpu.memory_space<vmem>>, %arg4: memref<640x128xbf16, #tpu.memory_space<vmem>>, %arg5: memref<1x128xf32, #tpu.memory_space<vmem>>, %arg6: memref<16x128xbf16, #tpu.memory_space<vmem>>, %arg7: memref<16x128xf32, #tpu.memory_space<vmem>>) attributes {dimension_semantics = [#tpu.dimension_semantics<parallel>, #tpu.dimension_semantics<parallel>, #tpu.dimension_semantics<arbitrary>], iteration_bounds = array<i64: 1, 1, 1>, scalar_prefetch = 0 : i64, scratch_operands = 1 : i64, tpu.core_type = #tpu.core_type<tc>, window_params = [{transform_indices = @transform_0, window_bounds = array<i64: 16, 640>}, {transform_indices = @transform_1, window_bounds = array<i64: 640, 128>}, {transform_indices = @transform_2, window_bounds = array<i64: 1, 128>}, {transform_indices = @transform_3, window_bounds = array<i64: 16, 128>}]} {
    %c0_i32 = arith.constant 0 : i32
    %0 = arith.cmpi eq, %arg2, %c0_i32 : i32
    %1 = arith.extui %0 : i1 to i32
    %c0_i32_0 = arith.constant 0 : i32
    %2 = arith.cmpi ne, %1, %c0_i32_0 : i32
    scf.if %2 {
      %cst_10 = arith.constant 0.000000e+00 : f32
      %12 = vector.broadcast %cst_10 : f32 to vector<16x128xf32>
      %c0_11 = arith.constant 0 : index
      %c0_12 = arith.constant 0 : index
      %13 = vector.load %arg7[%c0_11, %c0_12] : memref<16x128xf32, #tpu.memory_space<vmem>>, vector<16x128xf32>
      tpu.vector_store %arg7[%c0_11, %c0_12], %12 {strides = array<i32>} : memref<16x128xf32, #tpu.memory_space<vmem>>, vector<16x128xf32>,
    } else {
    }
    %c0 = arith.constant 0 : index
    %c0_1 = arith.constant 0 : index
    %3 = vector.load %arg7[%c0, %c0_1] : memref<16x128xf32, #tpu.memory_space<vmem>>, vector<16x128xf32>
    %c0_2 = arith.constant 0 : index
    %c0_3 = arith.constant 0 : index
    %4 = vector.load %arg3[%c0_2, %c0_3] : memref<16x640xbf16, #tpu.memory_space<vmem>>, vector<16x640xbf16>
    %c0_4 = arith.constant 0 : index
    %c0_5 = arith.constant 0 : index
    %5 = vector.load %arg4[%c0_4, %c0_5] : memref<640x128xbf16, #tpu.memory_space<vmem>>, vector<640x128xbf16>
    %cst = arith.constant dense<0.000000e+00> : vector<16x128xf32>
    %6 = tpu.matmul %4, %5, %cst {dimension_numbers = #tpu.dot_dimension_numbers<[1], [0], [0], [1], [0, 0, 1, 1], [], []>} : vector<16x640xbf16>, vector<640x128xbf16>, vector<16x128xf32> -> vector<16x128xf32>
    %7 = arith.addf %3, %6 : vector<16x128xf32>
    %c0_6 = arith.constant 0 : index
    %c0_7 = arith.constant 0 : index
    %8 = vector.load %arg7[%c0_6, %c0_7] : memref<16x128xf32, #tpu.memory_space<vmem>>, vector<16x128xf32>
    tpu.vector_store %arg7[%c0_6, %c0_7], %7 {strides = array<i32>} : memref<16x128xf32, #tpu.memory_space<vmem>>, vector<16x128xf32>,
    %c0_i32_8 = arith.constant 0 : i32
    %9 = arith.cmpi eq, %arg2, %c0_i32_8 : i32
    %10 = arith.extui %9 : i1 to i32
    %c0_i32_9 = arith.constant 0 : i32
    %11 = arith.cmpi ne, %10, %c0_i32_9 : i32
    scf.if %11 {
      %c0_10 = arith.constant 0 : index
      %c0_11 = arith.constant 0 : index
      %12 = vector.load %arg7[%c0_10, %c0_11] : memref<16x128xf32, #tpu.memory_space<vmem>>, vector<16x128xf32>
      %c0_12 = arith.constant 0 : index
      %c0_13 = arith.constant 0 : index
      %13 = vector.load %arg5[%c0_12, %c0_13] : memref<1x128xf32, #tpu.memory_space<vmem>>, vector<1x128xf32>
      %14 = vector.broadcast %13 : vector<1x128xf32> to vector<16x128xf32>
      %15 = arith.addf %12, %14 : vector<16x128xf32>
      %cst_14 = arith.constant 0.000000e+00 : f32
      %16 = vector.broadcast %cst_14 : f32 to vector<16x128xf32>
      %17 = arith.maximumf %15, %16 : vector<16x128xf32>
      %18 = arith.truncf %17 : vector<16x128xf32> to vector<16x128xbf16>
      %c0_15 = arith.constant 0 : index
      %c0_16 = arith.constant 0 : index
      %19 = vector.load %arg6[%c0_15, %c0_16] : memref<16x128xbf16, #tpu.memory_space<vmem>>, vector<16x128xbf16>
      tpu.vector_store %arg6[%c0_15, %c0_16], %18 {strides = array<i32>} : memref<16x128xbf16, #tpu.memory_space<vmem>>, vector<16x128xbf16>,
    } else {
    }
    return
  }
  func.func @transform_0(%arg0: i32, %arg1: i32, %arg2: i32) -> (i32, i32) {
    %c0_i32 = arith.constant 0 : i32
    return %arg0, %arg2 : i32, i32
  }
  func.func @transform_1(%arg0: i32, %arg1: i32, %arg2: i32) -> (i32, i32) {
    %c0_i32 = arith.constant 0 : i32
    return %arg2, %arg1 : i32, i32
  }
  func.func @transform_2(%arg0: i32, %arg1: i32, %arg2: i32) -> (i32, i32) {
    %c0_i32 = arith.constant 0 : i32
    %c0_i32_0 = arith.constant 0 : i32
    return %c0_i32, %arg1 : i32, i32
  }
  func.func @transform_3(%arg0: i32, %arg1: i32, %arg2: i32) -> (i32, i32) {
    %c0_i32 = arith.constant 0 : i32
    return %arg0, %arg1 : i32, i32
  }
}

module attributes {stable_mosaic.version = 11 : i64} {
  func.func @_fused_matmul_kernel(%arg0: i32, %arg1: i32, %arg2: i32, %arg3: memref<16x1152xbf16, #tpu.memory_space<vmem>>, %arg4: memref<1152x128xbf16, #tpu.memory_space<vmem>>, %arg5: memref<1x128xf32, #tpu.memory_space<vmem>>, %arg6: memref<16x128xbf16, #tpu.memory_space<vmem>>, %arg7: memref<16x128xf32, #tpu.memory_space<vmem>>) attributes {dimension_semantics = [#tpu.dimension_semantics<parallel>, #tpu.dimension_semantics<parallel>, #tpu.dimension_semantics<arbitrary>], iteration_bounds = array<i64: 1, 2, 2>, scalar_prefetch = 0 : i64, scratch_operands = 1 : i64, tpu.core_type = #tpu.core_type<tc>, window_params = [{transform_indices = @transform_0, window_bounds = array<i64: 16, 1152>}, {transform_indices = @transform_1, window_bounds = array<i64: 1152, 128>}, {transform_indices = @transform_2, window_bounds = array<i64: 1, 128>}, {transform_indices = @transform_3, window_bounds = array<i64: 16, 128>}]} {
    %c0_i32 = arith.constant 0 : i32
    %0 = arith.cmpi eq, %arg2, %c0_i32 : i32
    %1 = arith.extui %0 : i1 to i32
    %c0_i32_0 = arith.constant 0 : i32
    %2 = arith.cmpi ne, %1, %c0_i32_0 : i32
    scf.if %2 {
      %cst_9 = arith.constant 0.000000e+00 : f32
      %12 = vector.broadcast %cst_9 : f32 to vector<16x128xf32>
      %c0_10 = arith.constant 0 : index
      %c0_11 = arith.constant 0 : index
      %13 = vector.load %arg7[%c0_10, %c0_11] : memref<16x128xf32, #tpu.memory_space<vmem>>, vector<16x128xf32>
      tpu.vector_store %arg7[%c0_10, %c0_11], %12 {strides = array<i32>} : memref<16x128xf32, #tpu.memory_space<vmem>>, vector<16x128xf32>,
    } else {
    }
    %c0 = arith.constant 0 : index
    %c0_1 = arith.constant 0 : index
    %3 = vector.load %arg7[%c0, %c0_1] : memref<16x128xf32, #tpu.memory_space<vmem>>, vector<16x128xf32>
    %c0_2 = arith.constant 0 : index
    %c0_3 = arith.constant 0 : index
    %4 = vector.load %arg3[%c0_2, %c0_3] : memref<16x1152xbf16, #tpu.memory_space<vmem>>, vector<16x1152xbf16>
    %c0_4 = arith.constant 0 : index
    %c0_5 = arith.constant 0 : index
    %5 = vector.load %arg4[%c0_4, %c0_5] : memref<1152x128xbf16, #tpu.memory_space<vmem>>, vector<1152x128xbf16>
    %cst = arith.constant dense<0.000000e+00> : vector<16x128xf32>
    %6 = tpu.matmul %4, %5, %cst {dimension_numbers = #tpu.dot_dimension_numbers<[1], [0], [0], [1], [0, 0, 1, 1], [], []>} : vector<16x1152xbf16>, vector<1152x128xbf16>, vector<16x128xf32> -> vector<16x128xf32>
    %7 = arith.addf %3, %6 : vector<16x128xf32>
    %c0_6 = arith.constant 0 : index
    %c0_7 = arith.constant 0 : index
    %8 = vector.load %arg7[%c0_6, %c0_7] : memref<16x128xf32, #tpu.memory_space<vmem>>, vector<16x128xf32>
    tpu.vector_store %arg7[%c0_6, %c0_7], %7 {strides = array<i32>} : memref<16x128xf32, #tpu.memory_space<vmem>>, vector<16x128xf32>,
    %c1_i32 = arith.constant 1 : i32
    %9 = arith.cmpi eq, %arg2, %c1_i32 : i32
    %10 = arith.extui %9 : i1 to i32
    %c0_i32_8 = arith.constant 0 : i32
    %11 = arith.cmpi ne, %10, %c0_i32_8 : i32
    scf.if %11 {
      %c0_9 = arith.constant 0 : index
      %c0_10 = arith.constant 0 : index
      %12 = vector.load %arg7[%c0_9, %c0_10] : memref<16x128xf32, #tpu.memory_space<vmem>>, vector<16x128xf32>
      %c0_11 = arith.constant 0 : index
      %c0_12 = arith.constant 0 : index
      %13 = vector.load %arg5[%c0_11, %c0_12] : memref<1x128xf32, #tpu.memory_space<vmem>>, vector<1x128xf32>
      %14 = vector.broadcast %13 : vector<1x128xf32> to vector<16x128xf32>
      %15 = arith.addf %12, %14 : vector<16x128xf32>
      %cst_13 = arith.constant 0.000000e+00 : f32
      %16 = vector.broadcast %cst_13 : f32 to vector<16x128xf32>
      %17 = arith.maximumf %15, %16 : vector<16x128xf32>
      %18 = arith.truncf %17 : vector<16x128xf32> to vector<16x128xbf16>
      %c0_14 = arith.constant 0 : index
      %c0_15 = arith.constant 0 : index
      %19 = vector.load %arg6[%c0_14, %c0_15] : memref<16x128xbf16, #tpu.memory_space<vmem>>, vector<16x128xbf16>
      tpu.vector_store %arg6[%c0_14, %c0_15], %18 {strides = array<i32>} : memref<16x128xbf16, #tpu.memory_space<vmem>>, vector<16x128xbf16>,
    } else {
    }
    return
  }
  func.func @transform_0(%arg0: i32, %arg1: i32, %arg2: i32) -> (i32, i32) {
    %c0_i32 = arith.constant 0 : i32
    return %arg0, %arg2 : i32, i32
  }
  func.func @transform_1(%arg0: i32, %arg1: i32, %arg2: i32) -> (i32, i32) {
    %c0_i32 = arith.constant 0 : i32
    return %arg2, %arg1 : i32, i32
  }
  func.func @transform_2(%arg0: i32, %arg1: i32, %arg2: i32) -> (i32, i32) {
    %c0_i32 = arith.constant 0 : i32
    %c0_i32_0 = arith.constant 0 : i32
    return %c0_i32, %arg1 : i32, i32
  }
  func.func @transform_3(%arg0: i32, %arg1: i32, %arg2: i32) -> (i32, i32) {
    %c0_i32 = arith.constant 0 : i32
    return %arg0, %arg1 : i32, i32
  }
}

module attributes {stable_mosaic.version = 11 : i64} {
  func.func @_fused_matmul_kernel(%arg0: i32, %arg1: i32, %arg2: i32, %arg3: memref<16x1152xbf16, #tpu.memory_space<vmem>>, %arg4: memref<1152x128xbf16, #tpu.memory_space<vmem>>, %arg5: memref<1x128xf32, #tpu.memory_space<vmem>>, %arg6: memref<16x128xbf16, #tpu.memory_space<vmem>>, %arg7: memref<16x128xf32, #tpu.memory_space<vmem>>) attributes {dimension_semantics = [#tpu.dimension_semantics<parallel>, #tpu.dimension_semantics<parallel>, #tpu.dimension_semantics<arbitrary>], iteration_bounds = array<i64: 1, 4, 2>, scalar_prefetch = 0 : i64, scratch_operands = 1 : i64, tpu.core_type = #tpu.core_type<tc>, window_params = [{transform_indices = @transform_0, window_bounds = array<i64: 16, 1152>}, {transform_indices = @transform_1, window_bounds = array<i64: 1152, 128>}, {transform_indices = @transform_2, window_bounds = array<i64: 1, 128>}, {transform_indices = @transform_3, window_bounds = array<i64: 16, 128>}]} {
    %c0_i32 = arith.constant 0 : i32
    %0 = arith.cmpi eq, %arg2, %c0_i32 : i32
    %1 = arith.extui %0 : i1 to i32
    %c0_i32_0 = arith.constant 0 : i32
    %2 = arith.cmpi ne, %1, %c0_i32_0 : i32
    scf.if %2 {
      %cst_9 = arith.constant 0.000000e+00 : f32
      %12 = vector.broadcast %cst_9 : f32 to vector<16x128xf32>
      %c0_10 = arith.constant 0 : index
      %c0_11 = arith.constant 0 : index
      %13 = vector.load %arg7[%c0_10, %c0_11] : memref<16x128xf32, #tpu.memory_space<vmem>>, vector<16x128xf32>
      tpu.vector_store %arg7[%c0_10, %c0_11], %12 {strides = array<i32>} : memref<16x128xf32, #tpu.memory_space<vmem>>, vector<16x128xf32>,
    } else {
    }
    %c0 = arith.constant 0 : index
    %c0_1 = arith.constant 0 : index
    %3 = vector.load %arg7[%c0, %c0_1] : memref<16x128xf32, #tpu.memory_space<vmem>>, vector<16x128xf32>
    %c0_2 = arith.constant 0 : index
    %c0_3 = arith.constant 0 : index
    %4 = vector.load %arg3[%c0_2, %c0_3] : memref<16x1152xbf16, #tpu.memory_space<vmem>>, vector<16x1152xbf16>
    %c0_4 = arith.constant 0 : index
    %c0_5 = arith.constant 0 : index
    %5 = vector.load %arg4[%c0_4, %c0_5] : memref<1152x128xbf16, #tpu.memory_space<vmem>>, vector<1152x128xbf16>
    %cst = arith.constant dense<0.000000e+00> : vector<16x128xf32>
    %6 = tpu.matmul %4, %5, %cst {dimension_numbers = #tpu.dot_dimension_numbers<[1], [0], [0], [1], [0, 0, 1, 1], [], []>} : vector<16x1152xbf16>, vector<1152x128xbf16>, vector<16x128xf32> -> vector<16x128xf32>
    %7 = arith.addf %3, %6 : vector<16x128xf32>
    %c0_6 = arith.constant 0 : index
    %c0_7 = arith.constant 0 : index
    %8 = vector.load %arg7[%c0_6, %c0_7] : memref<16x128xf32, #tpu.memory_space<vmem>>, vector<16x128xf32>
    tpu.vector_store %arg7[%c0_6, %c0_7], %7 {strides = array<i32>} : memref<16x128xf32, #tpu.memory_space<vmem>>, vector<16x128xf32>,
    %c1_i32 = arith.constant 1 : i32
    %9 = arith.cmpi eq, %arg2, %c1_i32 : i32
    %10 = arith.extui %9 : i1 to i32
    %c0_i32_8 = arith.constant 0 : i32
    %11 = arith.cmpi ne, %10, %c0_i32_8 : i32
    scf.if %11 {
      %c0_9 = arith.constant 0 : index
      %c0_10 = arith.constant 0 : index
      %12 = vector.load %arg7[%c0_9, %c0_10] : memref<16x128xf32, #tpu.memory_space<vmem>>, vector<16x128xf32>
      %c0_11 = arith.constant 0 : index
      %c0_12 = arith.constant 0 : index
      %13 = vector.load %arg5[%c0_11, %c0_12] : memref<1x128xf32, #tpu.memory_space<vmem>>, vector<1x128xf32>
      %14 = vector.broadcast %13 : vector<1x128xf32> to vector<16x128xf32>
      %15 = arith.addf %12, %14 : vector<16x128xf32>
      %cst_13 = arith.constant 0.000000e+00 : f32
      %16 = vector.broadcast %cst_13 : f32 to vector<16x128xf32>
      %17 = arith.maximumf %15, %16 : vector<16x128xf32>
      %18 = arith.truncf %17 : vector<16x128xf32> to vector<16x128xbf16>
      %c0_14 = arith.constant 0 : index
      %c0_15 = arith.constant 0 : index
      %19 = vector.load %arg6[%c0_14, %c0_15] : memref<16x128xbf16, #tpu.memory_space<vmem>>, vector<16x128xbf16>
      tpu.vector_store %arg6[%c0_14, %c0_15], %18 {strides = array<i32>} : memref<16x128xbf16, #tpu.memory_space<vmem>>, vector<16x128xbf16>,
    } else {
    }
    return
  }
  func.func @transform_0(%arg0: i32, %arg1: i32, %arg2: i32) -> (i32, i32) {
    %c0_i32 = arith.constant 0 : i32
    return %arg0, %arg2 : i32, i32
  }
  func.func @transform_1(%arg0: i32, %arg1: i32, %arg2: i32) -> (i32, i32) {
    %c0_i32 = arith.constant 0 : i32
    return %arg2, %arg1 : i32, i32
  }
  func.func @transform_2(%arg0: i32, %arg1: i32, %arg2: i32) -> (i32, i32) {
    %c0_i32 = arith.constant 0 : i32
    %c0_i32_0 = arith.constant 0 : i32
    return %c0_i32, %arg1 : i32, i32
  }
  func.func @transform_3(%arg0: i32, %arg1: i32, %arg2: i32) -> (i32, i32) {
    %c0_i32 = arith.constant 0 : i32
    return %arg0, %arg1 : i32, i32
  }
}

module attributes {stable_mosaic.version = 11 : i64} {
  func.func @_fused_matmul_kernel(%arg0: i32, %arg1: i32, %arg2: i32, %arg3: memref<32x640xbf16, #tpu.memory_space<vmem>>, %arg4: memref<640x128xbf16, #tpu.memory_space<vmem>>, %arg5: memref<1x128xf32, #tpu.memory_space<vmem>>, %arg6: memref<32x128xbf16, #tpu.memory_space<vmem>>, %arg7: memref<32x128xf32, #tpu.memory_space<vmem>>) attributes {dimension_semantics = [#tpu.dimension_semantics<parallel>, #tpu.dimension_semantics<parallel>, #tpu.dimension_semantics<arbitrary>], iteration_bounds = array<i64: 1, 2, 2>, scalar_prefetch = 0 : i64, scratch_operands = 1 : i64, tpu.core_type = #tpu.core_type<tc>, window_params = [{transform_indices = @transform_0, window_bounds = array<i64: 32, 640>}, {transform_indices = @transform_1, window_bounds = array<i64: 640, 128>}, {transform_indices = @transform_2, window_bounds = array<i64: 1, 128>}, {transform_indices = @transform_3, window_bounds = array<i64: 32, 128>}]} {
    %c0_i32 = arith.constant 0 : i32
    %0 = arith.cmpi eq, %arg2, %c0_i32 : i32
    %1 = arith.extui %0 : i1 to i32
    %c0_i32_0 = arith.constant 0 : i32
    %2 = arith.cmpi ne, %1, %c0_i32_0 : i32
    scf.if %2 {
      %cst_9 = arith.constant 0.000000e+00 : f32
      %12 = vector.broadcast %cst_9 : f32 to vector<32x128xf32>
      %c0_10 = arith.constant 0 : index
      %c0_11 = arith.constant 0 : index
      %13 = vector.load %arg7[%c0_10, %c0_11] : memref<32x128xf32, #tpu.memory_space<vmem>>, vector<32x128xf32>
      tpu.vector_store %arg7[%c0_10, %c0_11], %12 {strides = array<i32>} : memref<32x128xf32, #tpu.memory_space<vmem>>, vector<32x128xf32>,
    } else {
    }
    %c0 = arith.constant 0 : index
    %c0_1 = arith.constant 0 : index
    %3 = vector.load %arg7[%c0, %c0_1] : memref<32x128xf32, #tpu.memory_space<vmem>>, vector<32x128xf32>
    %c0_2 = arith.constant 0 : index
    %c0_3 = arith.constant 0 : index
    %4 = vector.load %arg3[%c0_2, %c0_3] : memref<32x640xbf16, #tpu.memory_space<vmem>>, vector<32x640xbf16>
    %c0_4 = arith.constant 0 : index
    %c0_5 = arith.constant 0 : index
    %5 = vector.load %arg4[%c0_4, %c0_5] : memref<640x128xbf16, #tpu.memory_space<vmem>>, vector<640x128xbf16>
    %cst = arith.constant dense<0.000000e+00> : vector<32x128xf32>
    %6 = tpu.matmul %4, %5, %cst {dimension_numbers = #tpu.dot_dimension_numbers<[1], [0], [0], [1], [0, 0, 1, 1], [], []>} : vector<32x640xbf16>, vector<640x128xbf16>, vector<32x128xf32> -> vector<32x128xf32>
    %7 = arith.addf %3, %6 : vector<32x128xf32>
    %c0_6 = arith.constant 0 : index
    %c0_7 = arith.constant 0 : index
    %8 = vector.load %arg7[%c0_6, %c0_7] : memref<32x128xf32, #tpu.memory_space<vmem>>, vector<32x128xf32>
    tpu.vector_store %arg7[%c0_6, %c0_7], %7 {strides = array<i32>} : memref<32x128xf32, #tpu.memory_space<vmem>>, vector<32x128xf32>,
    %c1_i32 = arith.constant 1 : i32
    %9 = arith.cmpi eq, %arg2, %c1_i32 : i32
    %10 = arith.extui %9 : i1 to i32
    %c0_i32_8 = arith.constant 0 : i32
    %11 = arith.cmpi ne, %10, %c0_i32_8 : i32
    scf.if %11 {
      %c0_9 = arith.constant 0 : index
      %c0_10 = arith.constant 0 : index
      %12 = vector.load %arg7[%c0_9, %c0_10] : memref<32x128xf32, #tpu.memory_space<vmem>>, vector<32x128xf32>
      %c0_11 = arith.constant 0 : index
      %c0_12 = arith.constant 0 : index
      %13 = vector.load %arg5[%c0_11, %c0_12] : memref<1x128xf32, #tpu.memory_space<vmem>>, vector<1x128xf32>
      %14 = vector.broadcast %13 : vector<1x128xf32> to vector<32x128xf32>
      %15 = arith.addf %12, %14 : vector<32x128xf32>
      %cst_13 = arith.constant 0.000000e+00 : f32
      %16 = vector.broadcast %cst_13 : f32 to vector<32x128xf32>
      %17 = arith.maximumf %15, %16 : vector<32x128xf32>
      %18 = arith.truncf %17 : vector<32x128xf32> to vector<32x128xbf16>
      %c0_14 = arith.constant 0 : index
      %c0_15 = arith.constant 0 : index
      %19 = vector.load %arg6[%c0_14, %c0_15] : memref<32x128xbf16, #tpu.memory_space<vmem>>, vector<32x128xbf16>
      tpu.vector_store %arg6[%c0_14, %c0_15], %18 {strides = array<i32>} : memref<32x128xbf16, #tpu.memory_space<vmem>>, vector<32x128xbf16>,
    } else {
    }
    return
  }
  func.func @transform_0(%arg0: i32, %arg1: i32, %arg2: i32) -> (i32, i32) {
    %c0_i32 = arith.constant 0 : i32
    return %arg0, %arg2 : i32, i32
  }
  func.func @transform_1(%arg0: i32, %arg1: i32, %arg2: i32) -> (i32, i32) {
    %c0_i32 = arith.constant 0 : i32
    return %arg2, %arg1 : i32, i32
  }
  func.func @transform_2(%arg0: i32, %arg1: i32, %arg2: i32) -> (i32, i32) {
    %c0_i32 = arith.constant 0 : i32
    %c0_i32_0 = arith.constant 0 : i32
    return %c0_i32, %arg1 : i32, i32
  }
  func.func @transform_3(%arg0: i32, %arg1: i32, %arg2: i32) -> (i32, i32) {
    %c0_i32 = arith.constant 0 : i32
    return %arg0, %arg1 : i32, i32
  }
}

module attributes {stable_mosaic.version = 11 : i64} {
  func.func @_fused_matmul_kernel(%arg0: i32, %arg1: i32, %arg2: i32, %arg3: memref<128x640xbf16, #tpu.memory_space<vmem>>, %arg4: memref<640x128xbf16, #tpu.memory_space<vmem>>, %arg5: memref<1x128xf32, #tpu.memory_space<vmem>>, %arg6: memref<128x128xf32, #tpu.memory_space<vmem>>, %arg7: memref<128x128xf32, #tpu.memory_space<vmem>>) attributes {dimension_semantics = [#tpu.dimension_semantics<parallel>, #tpu.dimension_semantics<parallel>, #tpu.dimension_semantics<arbitrary>], iteration_bounds = array<i64: 1, 1, 1>, scalar_prefetch = 0 : i64, scratch_operands = 1 : i64, tpu.core_type = #tpu.core_type<tc>, window_params = [{transform_indices = @transform_0, window_bounds = array<i64: 128, 640>}, {transform_indices = @transform_1, window_bounds = array<i64: 640, 128>}, {transform_indices = @transform_2, window_bounds = array<i64: 1, 128>}, {transform_indices = @transform_3, window_bounds = array<i64: 128, 128>}]} {
    %c0_i32 = arith.constant 0 : i32
    %0 = arith.cmpi eq, %arg2, %c0_i32 : i32
    %1 = arith.extui %0 : i1 to i32
    %c0_i32_0 = arith.constant 0 : i32
    %2 = arith.cmpi ne, %1, %c0_i32_0 : i32
    scf.if %2 {
      %cst_10 = arith.constant 0.000000e+00 : f32
      %12 = vector.broadcast %cst_10 : f32 to vector<128x128xf32>
      %c0_11 = arith.constant 0 : index
      %c0_12 = arith.constant 0 : index
      %13 = vector.load %arg7[%c0_11, %c0_12] : memref<128x128xf32, #tpu.memory_space<vmem>>, vector<128x128xf32>
      tpu.vector_store %arg7[%c0_11, %c0_12], %12 {strides = array<i32>} : memref<128x128xf32, #tpu.memory_space<vmem>>, vector<128x128xf32>,
    } else {
    }
    %c0 = arith.constant 0 : index
    %c0_1 = arith.constant 0 : index
    %3 = vector.load %arg7[%c0, %c0_1] : memref<128x128xf32, #tpu.memory_space<vmem>>, vector<128x128xf32>
    %c0_2 = arith.constant 0 : index
    %c0_3 = arith.constant 0 : index
    %4 = vector.load %arg3[%c0_2, %c0_3] : memref<128x640xbf16, #tpu.memory_space<vmem>>, vector<128x640xbf16>
    %c0_4 = arith.constant 0 : index
    %c0_5 = arith.constant 0 : index
    %5 = vector.load %arg4[%c0_4, %c0_5] : memref<640x128xbf16, #tpu.memory_space<vmem>>, vector<640x128xbf16>
    %cst = arith.constant dense<0.000000e+00> : vector<128x128xf32>
    %6 = tpu.matmul %4, %5, %cst {dimension_numbers = #tpu.dot_dimension_numbers<[1], [0], [0], [1], [0, 0, 1, 1], [], []>} : vector<128x640xbf16>, vector<640x128xbf16>, vector<128x128xf32> -> vector<128x128xf32>
    %7 = arith.addf %3, %6 : vector<128x128xf32>
    %c0_6 = arith.constant 0 : index
    %c0_7 = arith.constant 0 : index
    %8 = vector.load %arg7[%c0_6, %c0_7] : memref<128x128xf32, #tpu.memory_space<vmem>>, vector<128x128xf32>
    tpu.vector_store %arg7[%c0_6, %c0_7], %7 {strides = array<i32>} : memref<128x128xf32, #tpu.memory_space<vmem>>, vector<128x128xf32>,
    %c0_i32_8 = arith.constant 0 : i32
    %9 = arith.cmpi eq, %arg2, %c0_i32_8 : i32
    %10 = arith.extui %9 : i1 to i32
    %c0_i32_9 = arith.constant 0 : i32
    %11 = arith.cmpi ne, %10, %c0_i32_9 : i32
    scf.if %11 {
      %c0_10 = arith.constant 0 : index
      %c0_11 = arith.constant 0 : index
      %12 = vector.load %arg7[%c0_10, %c0_11] : memref<128x128xf32, #tpu.memory_space<vmem>>, vector<128x128xf32>
      %c0_12 = arith.constant 0 : index
      %c0_13 = arith.constant 0 : index
      %13 = vector.load %arg5[%c0_12, %c0_13] : memref<1x128xf32, #tpu.memory_space<vmem>>, vector<1x128xf32>
      %14 = vector.broadcast %13 : vector<1x128xf32> to vector<128x128xf32>
      %15 = arith.addf %12, %14 : vector<128x128xf32>
      %16 = arith.negf %15 : vector<128x128xf32>
      %17 = math.exp %16 : vector<128x128xf32>
      %cst_14 = arith.constant 1.000000e+00 : f32
      %18 = vector.broadcast %cst_14 : f32 to vector<128x128xf32>
      %19 = arith.addf %18, %17 : vector<128x128xf32>
      %20 = arith.divf %18, %19 : vector<128x128xf32>
      %c0_15 = arith.constant 0 : index
      %c0_16 = arith.constant 0 : index
      %21 = vector.load %arg6[%c0_15, %c0_16] : memref<128x128xf32, #tpu.memory_space<vmem>>, vector<128x128xf32>
      tpu.vector_store %arg6[%c0_15, %c0_16], %20 {strides = array<i32>} : memref<128x128xf32, #tpu.memory_space<vmem>>, vector<128x128xf32>,
    } else {
    }
    return
  }
  func.func @transform_0(%arg0: i32, %arg1: i32, %arg2: i32) -> (i32, i32) {
    %c0_i32 = arith.constant 0 : i32
    return %arg0, %arg2 : i32, i32
  }
  func.func @transform_1(%arg0: i32, %arg1: i32, %arg2: i32) -> (i32, i32) {
    %c0_i32 = arith.constant 0 : i32
    return %arg2, %arg1 : i32, i32
  }
  func.func @transform_2(%arg0: i32, %arg1: i32, %arg2: i32) -> (i32, i32) {
    %c0_i32 = arith.constant 0 : i32
    %c0_i32_0 = arith.constant 0 : i32
    return %c0_i32, %arg1 : i32, i32
  }
  func.func @transform_3(%arg0: i32, %arg1: i32, %arg2: i32) -> (i32, i32) {
    %c0_i32 = arith.constant 0 : i32
    return %arg0, %arg1 : i32, i32
  }
}

</mosaic_0001>

<llo_original>
// kernel: lip_sync_forward.14
$region0: #{lip_sync_forward.14}
  #allocation0 [shape = 'u32[]', space=smem, size = 0x4, offset = 0x4, fixed_abs, tag = 'smem constant byte address 0x4 - core index']
  #allocation1 [shape = 'u32[144,128]{1,0:T(1,128)}', space=vmem, size = 0x12000, scoped, tag = 'internal scratch']
  #allocation2 [shape = 'f32[32,128]{1,0:T(8,128)}', space=vmem, size = 0x4000, scoped, tag = 'scratch operand']
  %s0 = inlined_call_operand.vmem [shape: bf16[32,128], index: 0, kind: input, shape index: {}]
  %s1 = inlined_call_operand.hbm [shape: bf16[128,128], index: 1, kind: input, shape index: {}]
  %s2 = inlined_call_operand.hbm [shape: f32[1,128], index: 2, kind: input, shape index: {}]
  %s3 = inlined_call_operand.vmem [shape: bf16[32,128], index: 3, kind: output, shape index: {}]
  %s4 = sld [smem:[#allocation0]]
  $region38: #{lip_sync_forward.14} parent=0
    _
  %s6 = ssub.s32 1, %s4
  %s7 = scalar_select 0, %s6, %s4
  $region1: #{lip_sync_forward.14} parent=0
    #allocation3 [shape = 'u8[32768]{0}', space=vmem, size = 0x8000, scoped, tag = 'input window, operand 1, single buffered']
    #allocation4 [shape = 's32[1]{0}', space=sflag, size = 0x4, scoped, tag = 'scoped memory for lip_sync_forward.14']
    #allocation5 [shape = 'u8[512]{0}', space=vmem, size = 0x400, scoped, tag = 'input window, operand 2, single buffered']
    #allocation6 [shape = 's32[1]{0}', space=sflag, size = 0x4, scoped, tag = 'scoped memory for lip_sync_forward.14']
    %8 = vsyncpa [#allocation4], 0
    %9 = vsyncpa [#allocation6], 0
    // Predicated region
    $region2: #{lip_sync_forward.14} parent=1 // pred_check
      _
    $region3: #{lip_sync_forward.14} parent=1 // pred_check_branch
      %11 = sbr.rel (0) target = $region5
    $region4: #{lip_sync_forward.14} parent=1 // pred_region
      _
    $region5: #{lip_sync_forward.14} parent=1 // pred_fallthru
      _
    // Predicated region
    $region6: #{lip_sync_forward.14} parent=1 // pred_check
      _
    $region7: #{lip_sync_forward.14} parent=1 // pred_check_branch
      %13 = sbr.rel (0) target = $region9
    $region8: #{lip_sync_forward.14} parent=1 // pred_region
      %s15 = ssub.s32 1024, 1024
      %16 = vsyncadd [#allocation4], %s15
      %s17 = sshll.u32 [#allocation3], 4
      %s18 = int_to_ptr.vmem [resolvable:$true] %s17
      %23 = dma.hbm_to_vmem [thread:$0]  %s1, 1024, %s18, [#allocation4], 64, 64, 4
    $region9: #{lip_sync_forward.14} parent=1 // pred_fallthru
      _
    // Predicated region
    $region10: #{lip_sync_forward.14} parent=1 // pred_check
      _
    $region11: #{lip_sync_forward.14} parent=1 // pred_check_branch
      %25 = sbr.rel (0) target = $region13
    $region12: #{lip_sync_forward.14} parent=1 // pred_region
      %s27 = ssub.s32 16, 16
      %28 = vsyncadd [#allocation6], %s27
      %s30 = sshll.u32 [#allocation5], 4
      %s31 = int_to_ptr.vmem [resolvable:$true] %s30
      %33 = dma.hbm_to_vmem [thread:$0]  %s2, 16, %s31, [#allocation6]
    $region13: #{lip_sync_forward.14} parent=1 // pred_fallthru
      _
    // Predicated region
    $region14: #{lip_sync_forward.14} parent=1 // pred_check
      _
    $region15: #{lip_sync_forward.14} parent=1 // pred_check_branch
      %35 = sbr.rel (0) target = $region17
    $region16: #{lip_sync_forward.14} parent=1 // pred_region
      %36 = dma.done [#allocation4], 1024
    $region17: #{lip_sync_forward.14} parent=1 // pred_fallthru
      _
    // Predicated region
    $region18: #{lip_sync_forward.14} parent=1 // pred_check
      _
    $region19: #{lip_sync_forward.14} parent=1 // pred_check_branch
      %38 = sbr.rel (0) target = $region21
    $region20: #{lip_sync_forward.14} parent=1 // pred_region
      %39 = dma.done [#allocation6], 16
    $region21: #{lip_sync_forward.14} parent=1 // pred_fallthru
      _
    %p41 = scmp.eq.s32.totalorder 0, 0
    // Predicated region
    $region22: #{lip_sync_forward.14} parent=1 // pred_check
      %p42 = pneg %p41
    $region23: #{lip_sync_forward.14} parent=1 // pred_check_branch
      %44 = sbr.rel (%p42) target = $region25
    $region24: #{lip_sync_forward.14} parent=1 // pred_region
      %45 = vst [vmem:[#allocation2] sm:$0xff] 0.0
      %46 = vst [vmem:[#allocation2 + $0x8] sm:$0xff] 0.0
      %47 = vst [vmem:[#allocation2 + $0x10] sm:$0xff] 0.0
      %48 = vst [vmem:[#allocation2 + $0x18] sm:$0xff] 0.0
    $region25: #{lip_sync_forward.14} parent=1 // pred_fallthru
      _
    %v49 = vld [vmem:[#allocation2] sm:$0xff]
    %v50 = vld [vmem:[#allocation2 + $0x8] sm:$0xff]
    %v51 = vld [vmem:[#allocation2 + $0x10] sm:$0xff]
    %v52 = vld [vmem:[#allocation2 + $0x18] sm:$0xff]
    %v53 = vld [vmem:[%s0] sm:$0xf]
    %v54 = vld [vmem:[%s0 + $0x4] sm:$0xf]
    %v55 = vld [vmem:[%s0 + $0x8] sm:$0xf]
    %v56 = vld [vmem:[%s0 + $0xc] sm:$0xf]
    %v57 = vld [vmem:[#allocation3] sm:$0xf]
    %v58 = vld [vmem:[#allocation3 + $0x4] sm:$0xf]
    %v59 = vld [vmem:[#allocation3 + $0x8] sm:$0xf]
    %v60 = vld [vmem:[#allocation3 + $0xc] sm:$0xf]
    %v61 = vld [vmem:[#allocation3 + $0x10] sm:$0xf]
    %v62 = vld [vmem:[#allocation3 + $0x14] sm:$0xf]
    %v63 = vld [vmem:[#allocation3 + $0x18] sm:$0xf]
    %v64 = vld [vmem:[#allocation3 + $0x1c] sm:$0xf]
    %v65 = vld [vmem:[#allocation3 + $0x20] sm:$0xf]
    %v66 = vld [vmem:[#allocation3 + $0x24] sm:$0xf]
    %v67 = vld [vmem:[#allocation3 + $0x28] sm:$0xf]
    %v68 = vld [vmem:[#allocation3 + $0x2c] sm:$0xf]
    %v69 = vld [vmem:[#allocation3 + $0x30] sm:$0xf]
    %v70 = vld [vmem:[#allocation3 + $0x34] sm:$0xf]
    %v71 = vld [vmem:[#allocation3 + $0x38] sm:$0xf]
    %v72 = vld [vmem:[#allocation3 + $0x3c] sm:$0xf]
    %v77 = vunpack.c.l.b16 %v53
    %v78 = vunpack.c.l.b16 %v54
    %v79 = vunpack.c.l.b16 %v55
    %v80 = vunpack.c.l.b16 %v56
    %v81 = vpack.c.b16 %v78, %v77
    %v82 = vpack.c.b16 %v80, %v79
    %v101 = vunpack.c.l.b16 %v57
    %v102 = vunpack.c.l.b16 %v58
    %v103 = vunpack.c.l.b16 %v59
    %v104 = vunpack.c.l.b16 %v60
    %v105 = vunpack.c.l.b16 %v61
    %v106 = vunpack.c.l.b16 %v62
    %v107 = vunpack.c.l.b16 %v63
    %v108 = vunpack.c.l.b16 %v64
    %v109 = vunpack.c.l.b16 %v65
    %v110 = vunpack.c.l.b16 %v66
    %v111 = vunpack.c.l.b16 %v67
    %v112 = vunpack.c.l.b16 %v68
    %v113 = vunpack.c.l.b16 %v69
    %v114 = vunpack.c.l.b16 %v70
    %v115 = vunpack.c.l.b16 %v71
    %v116 = vunpack.c.l.b16 %v72
    %v117 = vpack.c.b16 %v102, %v101
    %v118 = vpack.c.b16 %v104, %v103
    %v119 = vpack.c.b16 %v106, %v105
    %v120 = vpack.c.b16 %v108, %v107
    %v121 = vpack.c.b16 %v110, %v109
    %v122 = vpack.c.b16 %v112, %v111
    %v123 = vpack.c.b16 %v114, %v113
    %v124 = vpack.c.b16 %v116, %v115
    %133 = vmatprep.subr.bf16.mxu0 0
    %134 = vmatpush1.bf16.msra.mxu0 %v117
    %135 = vmatprep.subr.bf16.mxu0 0
    %136 = vmatpush1.bf16.msra.mxu0 %v118
    %137 = vmatprep.subr.bf16.mxu0 0
    %138 = vmatpush1.bf16.msra.mxu0 %v119
    %139 = vmatprep.subr.bf16.mxu0 0
    %140 = vmatpush1.bf16.msra.mxu0 %v120
    %141 = vmatprep.subr.bf16.mxu0 0
    %142 = vmatpush1.bf16.msra.mxu0 %v121
    %143 = vmatprep.subr.bf16.mxu0 0
    %144 = vmatpush1.bf16.msra.mxu0 %v122
    %145 = vmatprep.subr.bf16.mxu0 0
    %146 = vmatpush1.bf16.msra.mxu0 %v123
    %147 = vmatprep.subr.bf16.mxu0 0
    %148 = vmatpush1.bf16.msra.mxu0 %v124
    %149 = vmatprep.subr.bf16.mxu0 0
    %150 = vmatpush1.bf16.msra.mxu0 0
    %151 = vmatprep.subr.bf16.mxu0 0
    %152 = vmatpush1.bf16.msra.mxu0 0
    %153 = vmatprep.subr.bf16.mxu0 0
    %154 = vmatpush1.bf16.msra.mxu0 0
    %155 = vmatprep.subr.bf16.mxu0 0
    %156 = vmatpush1.bf16.msra.mxu0 0
    %157 = vmatprep.subr.bf16.mxu0 0
    %158 = vmatpush1.bf16.msra.mxu0 0
    %159 = vmatprep.subr.bf16.mxu0 0
    %160 = vmatpush1.bf16.msra.mxu0 0
    %161 = vmatprep.subr.bf16.mxu0 0
    %162 = vmatpush1.bf16.msra.mxu0 0
    %163 = vmatprep.subr.bf16.mxu0 0
    %164 = vmatpush1.bf16.msra.mxu0 0
    %165 = vmatprep.mubr.bf16.mxu0 0
    %166 = vmatmul.mubr.bf16.gmra.mrb[0].mxu0 %v81
    %v167 = vpop.f32.mrb[0].mxu0
    %v168 = vadd.f32 0.0, %v167
    %v169 = vpop.f32.mrb[0].mxu0
    %v170 = vpop.f32.mrb[0].mxu0
    %v171 = vadd.f32 0.0, %v170
    %v172 = vpop.f32.mrb[0].mxu0
    %173 = vmatprep.mubr.bf16.mxu0 0
    %174 = vmatmul.mubr.bf16.gmra.mrb[0].mxu0 %v82
    %v175 = vpop.f32.mrb[0].mxu0
    %v176 = vadd.f32 0.0, %v175
    %v177 = vpop.f32.mrb[0].mxu0
    %v178 = vpop.f32.mrb[0].mxu0
    %v179 = vadd.f32 0.0, %v178
    %v180 = vpop.f32.mrb[0].mxu0
    %181 = vdwg.mxu0
    %v182 = vadd.f32 %v49, %v168
    %v183 = vadd.f32 %v50, %v171
    %v184 = vadd.f32 %v51, %v176
    %v185 = vadd.f32 %v52, %v179
    %186 = vst [vmem:[#allocation2] sm:$0xff] %v182
    %187 = vst [vmem:[#allocation2 + $0x8] sm:$0xff] %v183
    %188 = vst [vmem:[#allocation2 + $0x10] sm:$0xff] %v184
    %189 = vst [vmem:[#allocation2 + $0x18] sm:$0xff] %v185
    // Predicated region
    $region26: #{lip_sync_forward.14} parent=1 // pred_check
      %p190 = pneg %p41
    $region27: #{lip_sync_forward.14} parent=1 // pred_check_branch
      %192 = sbr.rel (%p190) target = $region29
    $region28: #{lip_sync_forward.14} parent=1 // pred_region
      %v193 = vld [vmem:[#allocation2] sm:$0xff]
      %v194 = vld [vmem:[#allocation2 + $0x8] sm:$0xff]
      %v195 = vld [vmem:[#allocation2 + $0x10] sm:$0xff]
      %v196 = vld [vmem:[#allocation2 + $0x18] sm:$0xff]
      %v197 = vld [vmem:[#allocation5] sm:$0x1]
      %v199 = vlaneseq
      %v200 = vshrl.u32 %v199, 7
      %v201 = vsub.s32 0, %v200
      %v202 = vrot.slane %v197, %v201
      %v204 = vadd.f32 %v193, %v202
      %v205 = vadd.f32 %v194, %v202
      %v206 = vadd.f32 %v195, %v202
      %v207 = vadd.f32 %v196, %v202
      %v208 = vmax.f32 %v204, 0.0
      %v209 = vmax.f32 %v205, 0.0
      %v210 = vmax.f32 %v206, 0.0
      %v211 = vmax.f32 %v207, 0.0
      %v212 = vpack.c.bf16 %v209, %v208
      %v213 = vpack.c.bf16 %v211, %v210
      %v216 = vunpack.c.l.b16 %v212
      %v217 = vunpack.c.h.b16 %v212
      %v218 = vunpack.c.l.b16 %v213
      %v219 = vunpack.c.h.b16 %v213
      %v220 = vpack.c.b16 %v216, %v216
      %v221 = vpack.c.b16 %v217, %v217
      %v222 = vpack.c.b16 %v218, %v218
      %v223 = vpack.c.b16 %v219, %v219
      %228 = vst [vmem:[%s3] sm:$0xf] %v220
      %229 = vst [vmem:[%s3 + $0x4] sm:$0xf] %v221
      %230 = vst [vmem:[%s3 + $0x8] sm:$0xf] %v222
      %231 = vst [vmem:[%s3 + $0xc] sm:$0xf] %v223
    $region29: #{lip_sync_forward.14} parent=1 // pred_fallthru
      _
    // Predicated region
    $region30: #{lip_sync_forward.14} parent=1 // pred_check
      _
    $region31: #{lip_sync_forward.14} parent=1 // pred_check_branch
      %233 = sbr.rel (0) target = $region33
    $region32: #{lip_sync_forward.14} parent=1 // pred_region
      _
    $region33: #{lip_sync_forward.14} parent=1 // pred_fallthru
      _
    // Predicated region
    $region34: #{lip_sync_forward.14} parent=1 // pred_check
      _
    $region35: #{lip_sync_forward.14} parent=1 // pred_check_branch
      %235 = sbr.rel (0) target = $region37
    $region36: #{lip_sync_forward.14} parent=1 // pred_region
      _
    $region37: #{lip_sync_forward.14} parent=1 // pred_fallthru
      _
    %236 = vsyncpa [#allocation4], 1
    %237 = vsyncpa [#allocation6], 1

// kernel: lip_sync_forward.13
$region0: #{lip_sync_forward.13}
  #allocation0 [shape = 'u32[]', space=smem, size = 0x4, offset = 0x4, fixed_abs, tag = 'smem constant byte address 0x4 - core index']
  #allocation1 [shape = 'u32[144,128]{1,0:T(1,128)}', space=vmem, size = 0x12000, scoped, tag = 'internal scratch']
  #allocation2 [shape = 'f32[64,128]{1,0:T(8,128)}', space=vmem, size = 0x8000, scoped, tag = 'scratch operand']
  %s0 = inlined_call_operand.vmem [shape: bf16[64,128], index: 0, kind: input, shape index: {}]
  %s1 = inlined_call_operand.hbm [shape: bf16[128,128], index: 1, kind: input, shape index: {}]
  %s2 = inlined_call_operand.hbm [shape: f32[1,128], index: 2, kind: input, shape index: {}]
  %s3 = inlined_call_operand.vmem [shape: bf16[64,128], index: 3, kind: output, shape index: {}]
  %s4 = sld [smem:[#allocation0]]
  $region38: #{lip_sync_forward.13} parent=0
    _
  %s6 = ssub.s32 1, %s4
  %s7 = scalar_select 0, %s6, %s4
  $region1: #{lip_sync_forward.13} parent=0
    #allocation3 [shape = 'u8[32768]{0}', space=vmem, size = 0x8000, scoped, tag = 'input window, operand 1, single buffered']
    #allocation4 [shape = 's32[1]{0}', space=sflag, size = 0x4, scoped, tag = 'scoped memory for lip_sync_forward.13']
    #allocation5 [shape = 'u8[512]{0}', space=vmem, size = 0x400, scoped, tag = 'input window, operand 2, single buffered']
    #allocation6 [shape = 's32[1]{0}', space=sflag, size = 0x4, scoped, tag = 'scoped memory for lip_sync_forward.13']
    %8 = vsyncpa [#allocation4], 0
    %9 = vsyncpa [#allocation6], 0
    // Predicated region
    $region2: #{lip_sync_forward.13} parent=1 // pred_check
      _
    $region3: #{lip_sync_forward.13} parent=1 // pred_check_branch
      %11 = sbr.rel (0) target = $region5
    $region4: #{lip_sync_forward.13} parent=1 // pred_region
      _
    $region5: #{lip_sync_forward.13} parent=1 // pred_fallthru
      _
    // Predicated region
    $region6: #{lip_sync_forward.13} parent=1 // pred_check
      _
    $region7: #{lip_sync_forward.13} parent=1 // pred_check_branch
      %13 = sbr.rel (0) target = $region9
    $region8: #{lip_sync_forward.13} parent=1 // pred_region
      %s15 = ssub.s32 1024, 1024
      %16 = vsyncadd [#allocation4], %s15
      %s17 = sshll.u32 [#allocation3], 4
      %s18 = int_to_ptr.vmem [resolvable:$true] %s17
      %23 = dma.hbm_to_vmem [thread:$0]  %s1, 1024, %s18, [#allocation4], 64, 64, 4
    $region9: #{lip_sync_forward.13} parent=1 // pred_fallthru
      _
    // Predicated region
    $region10: #{lip_sync_forward.13} parent=1 // pred_check
      _
    $region11: #{lip_sync_forward.13} parent=1 // pred_check_branch
      %25 = sbr.rel (0) target = $region13
    $region12: #{lip_sync_forward.13} parent=1 // pred_region
      %s27 = ssub.s32 16, 16
      %28 = vsyncadd [#allocation6], %s27
      %s30 = sshll.u32 [#allocation5], 4
      %s31 = int_to_ptr.vmem [resolvable:$true] %s30
      %33 = dma.hbm_to_vmem [thread:$0]  %s2, 16, %s31, [#allocation6]
    $region13: #{lip_sync_forward.13} parent=1 // pred_fallthru
      _
    // Predicated region
    $region14: #{lip_sync_forward.13} parent=1 // pred_check
      _
    $region15: #{lip_sync_forward.13} parent=1 // pred_check_branch
      %35 = sbr.rel (0) target = $region17
    $region16: #{lip_sync_forward.13} parent=1 // pred_region
      %36 = dma.done [#allocation4], 1024
    $region17: #{lip_sync_forward.13} parent=1 // pred_fallthru
      _
    // Predicated region
    $region18: #{lip_sync_forward.13} parent=1 // pred_check
      _
    $region19: #{lip_sync_forward.13} parent=1 // pred_check_branch
      %38 = sbr.rel (0) target = $region21
    $region20: #{lip_sync_forward.13} parent=1 // pred_region
      %39 = dma.done [#allocation6], 16
    $region21: #{lip_sync_forward.13} parent=1 // pred_fallthru
      _
    %p41 = scmp.eq.s32.totalorder 0, 0
    // Predicated region
    $region22: #{lip_sync_forward.13} parent=1 // pred_check
      %p42 = pneg %p41
    $region23: #{lip_sync_forward.13} parent=1 // pred_check_branch
      %44 = sbr.rel (%p42) target = $region25
    $region24: #{lip_sync_forward.13} parent=1 // pred_region
      %45 = vst [vmem:[#allocation2] sm:$0xff] 0.0
      %46 = vst [vmem:[#allocation2 + $0x8] sm:$0xff] 0.0
      %47 = vst [vmem:[#allocation2 + $0x10] sm:$0xff] 0.0
      %48 = vst [vmem:[#allocation2 + $0x18] sm:$0xff] 0.0
      %49 = vst [vmem:[#allocation2 + $0x20] sm:$0xff] 0.0
      %50 = vst [vmem:[#allocation2 + $0x28] sm:$0xff] 0.0
      %51 = vst [vmem:[#allocation2 + $0x30] sm:$0xff] 0.0
      %52 = vst [vmem:[#allocation2 + $0x38] sm:$0xff] 0.0
    $region25: #{lip_sync_forward.13} parent=1 // pred_fallthru
      _
    %v53 = vld [vmem:[#allocation2] sm:$0xff]
    %v54 = vld [vmem:[#allocation2 + $0x8] sm:$0xff]
    %v55 = vld [vmem:[#allocation2 + $0x10] sm:$0xff]
    %v56 = vld [vmem:[#allocation2 + $0x18] sm:$0xff]
    %v57 = vld [vmem:[#allocation2 + $0x20] sm:$0xff]
    %v58 = vld [vmem:[#allocation2 + $0x28] sm:$0xff]
    %v59 = vld [vmem:[#allocation2 + $0x30] sm:$0xff]
    %v60 = vld [vmem:[#allocation2 + $0x38] sm:$0xff]
    %v61 = vld [vmem:[%s0] sm:$0xf]
    %v62 = vld [vmem:[%s0 + $0x4] sm:$0xf]
    %v63 = vld [vmem:[%s0 + $0x8] sm:$0xf]
    %v64 = vld [vmem:[%s0 + $0xc] sm:$0xf]
    %v65 = vld [vmem:[%s0 + $0x10] sm:$0xf]
    %v66 = vld [vmem:[%s0 + $0x14] sm:$0xf]
    %v67 = vld [vmem:[%s0 + $0x18] sm:$0xf]
    %v68 = vld [vmem:[%s0 + $0x1c] sm:$0xf]
    %v69 = vld [vmem:[#allocation3] sm:$0xf]
    %v70 = vld [vmem:[#allocation3 + $0x4] sm:$0xf]
    %v71 = vld [vmem:[#allocation3 + $0x8] sm:$0xf]
    %v72 = vld [vmem:[#allocation3 + $0xc] sm:$0xf]
    %v73 = vld [vmem:[#allocation3 + $0x10] sm:$0xf]
    %v74 = vld [vmem:[#allocation3 + $0x14] sm:$0xf]
    %v75 = vld [vmem:[#allocation3 + $0x18] sm:$0xf]
    %v76 = vld [vmem:[#allocation3 + $0x1c] sm:$0xf]
    %v77 = vld [vmem:[#allocation3 + $0x20] sm:$0xf]
    %v78 = vld [vmem:[#allocation3 + $0x24] sm:$0xf]
    %v79 = vld [vmem:[#allocation3 + $0x28] sm:$0xf]
    %v80 = vld [vmem:[#allocation3 + $0x2c] sm:$0xf]
    %v81 = vld [vmem:[#allocation3 + $0x30] sm:$0xf]
    %v82 = vld [vmem:[#allocation3 + $0x34] sm:$0xf]
    %v83 = vld [vmem:[#allocation3 + $0x38] sm:$0xf]
    %v84 = vld [vmem:[#allocation3 + $0x3c] sm:$0xf]
    %v93 = vunpack.c.l.b16 %v61
    %v94 = vunpack.c.l.b16 %v62
    %v95 = vunpack.c.l.b16 %v63
    %v96 = vunpack.c.l.b16 %v64
    %v97 = vunpack.c.l.b16 %v65
    %v98 = vunpack.c.l.b16 %v66
    %v99 = vunpack.c.l.b16 %v67
    %v100 = vunpack.c.l.b16 %v68
    %v101 = vpack.c.b16 %v94, %v93
    %v102 = vpack.c.b16 %v96, %v95
    %v103 = vpack.c.b16 %v98, %v97
    %v104 = vpack.c.b16 %v100, %v99
    %v125 = vunpack.c.l.b16 %v69
    %v126 = vunpack.c.l.b16 %v70
    %v127 = vunpack.c.l.b16 %v71
    %v128 = vunpack.c.l.b16 %v72
    %v129 = vunpack.c.l.b16 %v73
    %v130 = vunpack.c.l.b16 %v74
    %v131 = vunpack.c.l.b16 %v75
    %v132 = vunpack.c.l.b16 %v76
    %v133 = vunpack.c.l.b16 %v77
    %v134 = vunpack.c.l.b16 %v78
    %v135 = vunpack.c.l.b16 %v79
    %v136 = vunpack.c.l.b16 %v80
    %v137 = vunpack.c.l.b16 %v81
    %v138 = vunpack.c.l.b16 %v82
    %v139 = vunpack.c.l.b16 %v83
    %v140 = vunpack.c.l.b16 %v84
    %v141 = vpack.c.b16 %v126, %v125
    %v142 = vpack.c.b16 %v128, %v127
    %v143 = vpack.c.b16 %v130, %v129
    %v144 = vpack.c.b16 %v132, %v131
    %v145 = vpack.c.b16 %v134, %v133
    %v146 = vpack.c.b16 %v136, %v135
    %v147 = vpack.c.b16 %v138, %v137
    %v148 = vpack.c.b16 %v140, %v139
    %157 = vmatprep.subr.bf16.mxu0 0
    %158 = vmatpush1.bf16.msra.mxu0 %v141
    %159 = vmatprep.subr.bf16.mxu0 0
    %160 = vmatpush1.bf16.msra.mxu0 %v142
    %161 = vmatprep.subr.bf16.mxu0 0
    %162 = vmatpush1.bf16.msra.mxu0 %v143
    %163 = vmatprep.subr.bf16.mxu0 0
    %164 = vmatpush1.bf16.msra.mxu0 %v144
    %165 = vmatprep.subr.bf16.mxu0 0
    %166 = vmatpush1.bf16.msra.mxu0 %v145
    %167 = vmatprep.subr.bf16.mxu0 0
    %168 = vmatpush1.bf16.msra.mxu0 %v146
    %169 = vmatprep.subr.bf16.mxu0 0
    %170 = vmatpush1.bf16.msra.mxu0 %v147
    %171 = vmatprep.subr.bf16.mxu0 0
    %172 = vmatpush1.bf16.msra.mxu0 %v148
    %173 = vmatprep.subr.bf16.mxu0 0
    %174 = vmatpush1.bf16.msra.mxu0 0
    %175 = vmatprep.subr.bf16.mxu0 0
    %176 = vmatpush1.bf16.msra.mxu0 0
    %177 = vmatprep.subr.bf16.mxu0 0
    %178 = vmatpush1.bf16.msra.mxu0 0
    %179 = vmatprep.subr.bf16.mxu0 0
    %180 = vmatpush1.bf16.msra.mxu0 0
    %181 = vmatprep.subr.bf16.mxu0 0
    %182 = vmatpush1.bf16.msra.mxu0 0
    %183 = vmatprep.subr.bf16.mxu0 0
    %184 = vmatpush1.bf16.msra.mxu0 0
    %185 = vmatprep.subr.bf16.mxu0 0
    %186 = vmatpush1.bf16.msra.mxu0 0
    %187 = vmatprep.subr.bf16.mxu0 0
    %188 = vmatpush1.bf16.msra.mxu0 0
    %189 = vmatprep.mubr.bf16.mxu0 0
    %190 = vmatmul.mubr.bf16.gmra.mrb[0].mxu0 %v101
    %v191 = vpop.f32.mrb[0].mxu0
    %v192 = vadd.f32 0.0, %v191
    %v193 = vpop.f32.mrb[0].mxu0
    %v194 = vpop.f32.mrb[0].mxu0
    %v195 = vadd.f32 0.0, %v194
    %v196 = vpop.f32.mrb[0].mxu0
    %197 = vmatprep.mubr.bf16.mxu0 0
    %198 = vmatmul.mubr.bf16.gmra.mrb[0].mxu0 %v102
    %v199 = vpop.f32.mrb[0].mxu0
    %v200 = vadd.f32 0.0, %v199
    %v201 = vpop.f32.mrb[0].mxu0
    %v202 = vpop.f32.mrb[0].mxu0
    %v203 = vadd.f32 0.0, %v202
    %v204 = vpop.f32.mrb[0].mxu0
    %205 = vmatprep.mubr.bf16.mxu0 0
    %206 = vmatmul.mubr.bf16.gmra.mrb[0].mxu0 %v103
    %v207 = vpop.f32.mrb[0].mxu0
    %v208 = vadd.f32 0.0, %v207
    %v209 = vpop.f32.mrb[0].mxu0
    %v210 = vpop.f32.mrb[0].mxu0
    %v211 = vadd.f32 0.0, %v210
    %v212 = vpop.f32.mrb[0].mxu0
    %213 = vmatprep.mubr.bf16.mxu0 0
    %214 = vmatmul.mubr.bf16.gmra.mrb[0].mxu0 %v104
    %v215 = vpop.f32.mrb[0].mxu0
    %v216 = vadd.f32 0.0, %v215
    %v217 = vpop.f32.mrb[0].mxu0
    %v218 = vpop.f32.mrb[0].mxu0
    %v219 = vadd.f32 0.0, %v218
    %v220 = vpop.f32.mrb[0].mxu0
    %221 = vdwg.mxu0
    %v222 = vadd.f32 %v53, %v192
    %v223 = vadd.f32 %v54, %v195
    %v224 = vadd.f32 %v55, %v200
    %v225 = vadd.f32 %v56, %v203
    %v226 = vadd.f32 %v57, %v208
    %v227 = vadd.f32 %v58, %v211
    %v228 = vadd.f32 %v59, %v216
    %v229 = vadd.f32 %v60, %v219
    %230 = vst [vmem:[#allocation2] sm:$0xff] %v222
    %231 = vst [vmem:[#allocation2 + $0x8] sm:$0xff] %v223
    %232 = vst [vmem:[#allocation2 + $0x10] sm:$0xff] %v224
    %233 = vst [vmem:[#allocation2 + $0x18] sm:$0xff] %v225
    %234 = vst [vmem:[#allocation2 + $0x20] sm:$0xff] %v226
    %235 = vst [vmem:[#allocation2 + $0x28] sm:$0xff] %v227
    %236 = vst [vmem:[#allocation2 + $0x30] sm:$0xff] %v228
    %237 = vst [vmem:[#allocation2 + $0x38] sm:$0xff] %v229
    // Predicated region
    $region26: #{lip_sync_forward.13} parent=1 // pred_check
      %p238 = pneg %p41
    $region27: #{lip_sync_forward.13} parent=1 // pred_check_branch
      %240 = sbr.rel (%p238) target = $region29
    $region28: #{lip_sync_forward.13} parent=1 // pred_region
      %v241 = vld [vmem:[#allocation2] sm:$0xff]
      %v242 = vld [vmem:[#allocation2 + $0x8] sm:$0xff]
      %v243 = vld [vmem:[#allocation2 + $0x10] sm:$0xff]
      %v244 = vld [vmem:[#allocation2 + $0x18] sm:$0xff]
      %v245 = vld [vmem:[#allocation2 + $0x20] sm:$0xff]
      %v246 = vld [vmem:[#allocation2 + $0x28] sm:$0xff]
      %v247 = vld [vmem:[#allocation2 + $0x30] sm:$0xff]
      %v248 = vld [vmem:[#allocation2 + $0x38] sm:$0xff]
      %v249 = vld [vmem:[#allocation5] sm:$0x1]
      %v251 = vlaneseq
      %v252 = vshrl.u32 %v251, 7
      %v253 = vsub.s32 0, %v252
      %v254 = vrot.slane %v249, %v253
      %v256 = vadd.f32 %v241, %v254
      %v257 = vadd.f32 %v242, %v254
      %v258 = vadd.f32 %v243, %v254
      %v259 = vadd.f32 %v244, %v254
      %v260 = vadd.f32 %v245, %v254
      %v261 = vadd.f32 %v246, %v254
      %v262 = vadd.f32 %v247, %v254
      %v263 = vadd.f32 %v248, %v254
      %v264 = vmax.f32 %v256, 0.0
      %v265 = vmax.f32 %v257, 0.0
      %v266 = vmax.f32 %v258, 0.0
      %v267 = vmax.f32 %v259, 0.0
      %v268 = vmax.f32 %v260, 0.0
      %v269 = vmax.f32 %v261, 0.0
      %v270 = vmax.f32 %v262, 0.0
      %v271 = vmax.f32 %v263, 0.0
      %v272 = vpack.c.bf16 %v265, %v264
      %v273 = vpack.c.bf16 %v267, %v266
      %v274 = vpack.c.bf16 %v269, %v268
      %v275 = vpack.c.bf16 %v271, %v270
      %v280 = vunpack.c.l.b16 %v272
      %v281 = vunpack.c.h.b16 %v272
      %v282 = vunpack.c.l.b16 %v273
      %v283 = vunpack.c.h.b16 %v273
      %v284 = vunpack.c.l.b16 %v274
      %v285 = vunpack.c.h.b16 %v274
      %v286 = vunpack.c.l.b16 %v275
      %v287 = vunpack.c.h.b16 %v275
      %v288 = vpack.c.b16 %v280, %v280
      %v289 = vpack.c.b16 %v281, %v281
      %v290 = vpack.c.b16 %v282, %v282
      %v291 = vpack.c.b16 %v283, %v283
      %v292 = vpack.c.b16 %v284, %v284
      %v293 = vpack.c.b16 %v285, %v285
      %v294 = vpack.c.b16 %v286, %v286
      %v295 = vpack.c.b16 %v287, %v287
      %304 = vst [vmem:[%s3] sm:$0xf] %v288
      %305 = vst [vmem:[%s3 + $0x4] sm:$0xf] %v289
      %306 = vst [vmem:[%s3 + $0x8] sm:$0xf] %v290
      %307 = vst [vmem:[%s3 + $0xc] sm:$0xf] %v291
      %308 = vst [vmem:[%s3 + $0x10] sm:$0xf] %v292
      %309 = vst [vmem:[%s3 + $0x14] sm:$0xf] %v293
      %310 = vst [vmem:[%s3 + $0x18] sm:$0xf] %v294
      %311 = vst [vmem:[%s3 + $0x1c] sm:$0xf] %v295
    $region29: #{lip_sync_forward.13} parent=1 // pred_fallthru
      _
    // Predicated region
    $region30: #{lip_sync_forward.13} parent=1 // pred_check
      _
    $region31: #{lip_sync_forward.13} parent=1 // pred_check_branch
      %313 = sbr.rel (0) target = $region33
    $region32: #{lip_sync_forward.13} parent=1 // pred_region
      _
    $region33: #{lip_sync_forward.13} parent=1 // pred_fallthru
      _
    // Predicated region
    $region34: #{lip_sync_forward.13} parent=1 // pred_check
      _
    $region35: #{lip_sync_forward.13} parent=1 // pred_check_branch
      %315 = sbr.rel (0) target = $region37
    $region36: #{lip_sync_forward.13} parent=1 // pred_region
      _
    $region37: #{lip_sync_forward.13} parent=1 // pred_fallthru
      _
    %316 = vsyncpa [#allocation4], 1
    %317 = vsyncpa [#allocation6], 1

// kernel: lip_sync_forward.15
$region0: #{lip_sync_forward.15}
  #allocation0 [shape = 'u32[]', space=smem, size = 0x4, offset = 0x4, fixed_abs, tag = 'smem constant byte address 0x4 - core index']
  #allocation1 [shape = 'u32[144,128]{1,0:T(1,128)}', space=vmem, size = 0x12000, scoped, tag = 'internal scratch']
  #allocation2 [shape = 'f32[16,128]{1,0:T(8,128)}', space=vmem, size = 0x2000, scoped, tag = 'scratch operand']
  %s0 = inlined_call_operand.vmem [shape: bf16[16,256], index: 0, kind: input, shape index: {}]
  %s1 = inlined_call_operand.hbm [shape: bf16[256,128], index: 1, kind: input, shape index: {}]
  %s2 = inlined_call_operand.hbm [shape: f32[1,128], index: 2, kind: input, shape index: {}]
  %s3 = inlined_call_operand.vmem [shape: bf16[16,128], index: 3, kind: output, shape index: {}]
  %s4 = sld [smem:[#allocation0]]
  $region38: #{lip_sync_forward.15} parent=0
    _
  %s6 = ssub.s32 1, %s4
  %s7 = scalar_select 0, %s6, %s4
  $region1: #{lip_sync_forward.15} parent=0
    #allocation3 [shape = 'u8[65536]{0}', space=vmem, size = 0x10000, scoped, tag = 'input window, operand 1, single buffered']
    #allocation4 [shape = 's32[1]{0}', space=sflag, size = 0x4, scoped, tag = 'scoped memory for lip_sync_forward.15']
    #allocation5 [shape = 'u8[512]{0}', space=vmem, size = 0x400, scoped, tag = 'input window, operand 2, single buffered']
    #allocation6 [shape = 's32[1]{0}', space=sflag, size = 0x4, scoped, tag = 'scoped memory for lip_sync_forward.15']
    %8 = vsyncpa [#allocation4], 0
    %9 = vsyncpa [#allocation6], 0
    // Predicated region
    $region2: #{lip_sync_forward.15} parent=1 // pred_check
      _
    $region3: #{lip_sync_forward.15} parent=1 // pred_check_branch
      %11 = sbr.rel (0) target = $region5
    $region4: #{lip_sync_forward.15} parent=1 // pred_region
      _
    $region5: #{lip_sync_forward.15} parent=1 // pred_fallthru
      _
    // Predicated region
    $region6: #{lip_sync_forward.15} parent=1 // pred_check
      _
    $region7: #{lip_sync_forward.15} parent=1 // pred_check_branch
      %13 = sbr.rel (0) target = $region9
    $region8: #{lip_sync_forward.15} parent=1 // pred_region
      %s15 = ssub.s32 2048, 2048
      %16 = vsyncadd [#allocation4], %s15
      %s17 = sshll.u32 [#allocation3], 4
      %s18 = int_to_ptr.vmem [resolvable:$true] %s17
      %23 = dma.hbm_to_vmem [thread:$0]  %s1, 2048, %s18, [#allocation4], 64, 64, 4
    $region9: #{lip_sync_forward.15} parent=1 // pred_fallthru
      _
    // Predicated region
    $region10: #{lip_sync_forward.15} parent=1 // pred_check
      _
    $region11: #{lip_sync_forward.15} parent=1 // pred_check_branch
      %25 = sbr.rel (0) target = $region13
    $region12: #{lip_sync_forward.15} parent=1 // pred_region
      %s27 = ssub.s32 16, 16
      %28 = vsyncadd [#allocation6], %s27
      %s30 = sshll.u32 [#allocation5], 4
      %s31 = int_to_ptr.vmem [resolvable:$true] %s30
      %33 = dma.hbm_to_vmem [thread:$0]  %s2, 16, %s31, [#allocation6]
    $region13: #{lip_sync_forward.15} parent=1 // pred_fallthru
      _
    // Predicated region
    $region14: #{lip_sync_forward.15} parent=1 // pred_check
      _
    $region15: #{lip_sync_forward.15} parent=1 // pred_check_branch
      %35 = sbr.rel (0) target = $region17
    $region16: #{lip_sync_forward.15} parent=1 // pred_region
      %36 = dma.done [#allocation4], 2048
    $region17: #{lip_sync_forward.15} parent=1 // pred_fallthru
      _
    // Predicated region
    $region18: #{lip_sync_forward.15} parent=1 // pred_check
      _
    $region19: #{lip_sync_forward.15} parent=1 // pred_check_branch
      %38 = sbr.rel (0) target = $region21
    $region20: #{lip_sync_forward.15} parent=1 // pred_region
      %39 = dma.done [#allocation6], 16
    $region21: #{lip_sync_forward.15} parent=1 // pred_fallthru
      _
    %p41 = scmp.eq.s32.totalorder 0, 0
    // Predicated region
    $region22: #{lip_sync_forward.15} parent=1 // pred_check
      %p42 = pneg %p41
    $region23: #{lip_sync_forward.15} parent=1 // pred_check_branch
      %44 = sbr.rel (%p42) target = $region25
    $region24: #{lip_sync_forward.15} parent=1 // pred_region
      %45 = vst [vmem:[#allocation2] sm:$0xff] 0.0
      %46 = vst [vmem:[#allocation2 + $0x8] sm:$0xff] 0.0
    $region25: #{lip_sync_forward.15} parent=1 // pred_fallthru
      _
    %v47 = vld [vmem:[#allocation2] sm:$0xff]
    %v48 = vld [vmem:[#allocation2 + $0x8] sm:$0xff]
    %v49 = vld [vmem:[%s0] sm:$0xff]
    %v50 = vld [vmem:[%s0 + $0x8] sm:$0xff]
    %v51 = vld [vmem:[#allocation3] sm:$0xf]
    %v52 = vld [vmem:[#allocation3 + $0x4] sm:$0xf]
    %v53 = vld [vmem:[#allocation3 + $0x8] sm:$0xf]
    %v54 = vld [vmem:[#allocation3 + $0xc] sm:$0xf]
    %v55 = vld [vmem:[#allocation3 + $0x10] sm:$0xf]
    %v56 = vld [vmem:[#allocation3 + $0x14] sm:$0xf]
    %v57 = vld [vmem:[#allocation3 + $0x18] sm:$0xf]
    %v58 = vld [vmem:[#allocation3 + $0x1c] sm:$0xf]
    %v59 = vld [vmem:[#allocation3 + $0x20] sm:$0xf]
    %v60 = vld [vmem:[#allocation3 + $0x24] sm:$0xf]
    %v61 = vld [vmem:[#allocation3 + $0x28] sm:$0xf]
    %v62 = vld [vmem:[#allocation3 + $0x2c] sm:$0xf]
    %v63 = vld [vmem:[#allocation3 + $0x30] sm:$0xf]
    %v64 = vld [vmem:[#allocation3 + $0x34] sm:$0xf]
    %v65 = vld [vmem:[#allocation3 + $0x38] sm:$0xf]
    %v66 = vld [vmem:[#allocation3 + $0x3c] sm:$0xf]
    %v67 = vld [vmem:[#allocation3 + $0x40] sm:$0xf]
    %v68 = vld [vmem:[#allocation3 + $0x44] sm:$0xf]
    %v69 = vld [vmem:[#allocation3 + $0x48] sm:$0xf]
    %v70 = vld [vmem:[#allocation3 + $0x4c] sm:$0xf]
    %v71 = vld [vmem:[#allocation3 + $0x50] sm:$0xf]
    %v72 = vld [vmem:[#allocation3 + $0x54] sm:$0xf]
    %v73 = vld [vmem:[#allocation3 + $0x58] sm:$0xf]
    %v74 = vld [vmem:[#allocation3 + $0x5c] sm:$0xf]
    %v75 = vld [vmem:[#allocation3 + $0x60] sm:$0xf]
    %v76 = vld [vmem:[#allocation3 + $0x64] sm:$0xf]
    %v77 = vld [vmem:[#allocation3 + $0x68] sm:$0xf]
    %v78 = vld [vmem:[#allocation3 + $0x6c] sm:$0xf]
    %v79 = vld [vmem:[#allocation3 + $0x70] sm:$0xf]
    %v80 = vld [vmem:[#allocation3 + $0x74] sm:$0xf]
    %v81 = vld [vmem:[#allocation3 + $0x78] sm:$0xf]
    %v82 = vld [vmem:[#allocation3 + $0x7c] sm:$0xf]
    %v85 = vunpack.c.l.b16 %v49
    %v86 = vunpack.c.h.b16 %v49
    %v87 = vunpack.c.l.b16 %v50
    %v88 = vunpack.c.h.b16 %v50
    %v89 = vpack.c.b16 %v87, %v85
    %v90 = vpack.c.b16 %v88, %v86
    %v125 = vunpack.c.l.b16 %v51
    %v126 = vunpack.c.l.b16 %v52
    %v127 = vunpack.c.l.b16 %v53
    %v128 = vunpack.c.l.b16 %v54
    %v129 = vunpack.c.l.b16 %v55
    %v130 = vunpack.c.l.b16 %v56
    %v131 = vunpack.c.l.b16 %v57
    %v132 = vunpack.c.l.b16 %v58
    %v133 = vunpack.c.l.b16 %v59
    %v134 = vunpack.c.l.b16 %v60
    %v135 = vunpack.c.l.b16 %v61
    %v136 = vunpack.c.l.b16 %v62
    %v137 = vunpack.c.l.b16 %v63
    %v138 = vunpack.c.l.b16 %v64
    %v139 = vunpack.c.l.b16 %v65
    %v140 = vunpack.c.l.b16 %v66
    %v141 = vunpack.c.l.b16 %v67
    %v142 = vunpack.c.l.b16 %v68
    %v143 = vunpack.c.l.b16 %v69
    %v144 = vunpack.c.l.b16 %v70
    %v145 = vunpack.c.l.b16 %v71
    %v146 = vunpack.c.l.b16 %v72
    %v147 = vunpack.c.l.b16 %v73
    %v148 = vunpack.c.l.b16 %v74
    %v149 = vunpack.c.l.b16 %v75
    %v150 = vunpack.c.l.b16 %v76
    %v151 = vunpack.c.l.b16 %v77
    %v152 = vunpack.c.l.b16 %v78
    %v153 = vunpack.c.l.b16 %v79
    %v154 = vunpack.c.l.b16 %v80
    %v155 = vunpack.c.l.b16 %v81
    %v156 = vunpack.c.l.b16 %v82
    %v157 = vpack.c.b16 %v126, %v125
    %v158 = vpack.c.b16 %v128, %v127
    %v159 = vpack.c.b16 %v130, %v129
    %v160 = vpack.c.b16 %v132, %v131
    %v161 = vpack.c.b16 %v134, %v133
    %v162 = vpack.c.b16 %v136, %v135
    %v163 = vpack.c.b16 %v138, %v137
    %v164 = vpack.c.b16 %v140, %v139
    %v165 = vpack.c.b16 %v142, %v141
    %v166 = vpack.c.b16 %v144, %v143
    %v167 = vpack.c.b16 %v146, %v145
    %v168 = vpack.c.b16 %v148, %v147
    %v169 = vpack.c.b16 %v150, %v149
    %v170 = vpack.c.b16 %v152, %v151
    %v171 = vpack.c.b16 %v154, %v153
    %v172 = vpack.c.b16 %v156, %v155
    %189 = vmatprep.subr.bf16.mxu0 0
    %190 = vmatpush1.bf16.msra.mxu0 %v157
    %191 = vmatprep.subr.bf16.mxu0 0
    %192 = vmatpush1.bf16.msra.mxu0 %v158
    %193 = vmatprep.subr.bf16.mxu0 0
    %194 = vmatpush1.bf16.msra.mxu0 %v159
    %195 = vmatprep.subr.bf16.mxu0 0
    %196 = vmatpush1.bf16.msra.mxu0 %v160
    %197 = vmatprep.subr.bf16.mxu0 0
    %198 = vmatpush1.bf16.msra.mxu0 %v161
    %199 = vmatprep.subr.bf16.mxu0 0
    %200 = vmatpush1.bf16.msra.mxu0 %v162
    %201 = vmatprep.subr.bf16.mxu0 0
    %202 = vmatpush1.bf16.msra.mxu0 %v163
    %203 = vmatprep.subr.bf16.mxu0 0
    %204 = vmatpush1.bf16.msra.mxu0 %v164
    %205 = vmatprep.subr.bf16.mxu0 0
    %206 = vmatpush1.bf16.msra.mxu0 %v165
    %207 = vmatprep.subr.bf16.mxu0 0
    %208 = vmatpush1.bf16.msra.mxu0 %v166
    %209 = vmatprep.subr.bf16.mxu0 0
    %210 = vmatpush1.bf16.msra.mxu0 %v167
    %211 = vmatprep.subr.bf16.mxu0 0
    %212 = vmatpush1.bf16.msra.mxu0 %v168
    %213 = vmatprep.subr.bf16.mxu0 0
    %214 = vmatpush1.bf16.msra.mxu0 %v169
    %215 = vmatprep.subr.bf16.mxu0 0
    %216 = vmatpush1.bf16.msra.mxu0 %v170
    %217 = vmatprep.subr.bf16.mxu0 0
    %218 = vmatpush1.bf16.msra.mxu0 %v171
    %219 = vmatprep.subr.bf16.mxu0 0
    %220 = vmatpush1.bf16.msra.mxu0 %v172
    %221 = vmatprep.mubr.bf16.mxu0 %v90
    %222 = vmatmul.mubr.bf16.gmra.mrb[0].mxu0 %v89
    %v223 = vpop.f32.mrb[0].mxu0
    %v224 = vadd.f32 0.0, %v223
    %v225 = vpop.f32.mrb[0].mxu0
    %v226 = vpop.f32.mrb[0].mxu0
    %v227 = vadd.f32 0.0, %v226
    %v228 = vpop.f32.mrb[0].mxu0
    %229 = vdwg.mxu0
    %v230 = vadd.f32 %v47, %v224
    %v231 = vadd.f32 %v48, %v227
    %232 = vst [vmem:[#allocation2] sm:$0xff] %v230
    %233 = vst [vmem:[#allocation2 + $0x8] sm:$0xff] %v231
    // Predicated region
    $region26: #{lip_sync_forward.15} parent=1 // pred_check
      %p234 = pneg %p41
    $region27: #{lip_sync_forward.15} parent=1 // pred_check_branch
      %236 = sbr.rel (%p234) target = $region29
    $region28: #{lip_sync_forward.15} parent=1 // pred_region
      %v237 = vld [vmem:[#allocation2] sm:$0xff]
      %v238 = vld [vmem:[#allocation2 + $0x8] sm:$0xff]
      %v239 = vld [vmem:[#allocation5] sm:$0x1]
      %v241 = vlaneseq
      %v242 = vshrl.u32 %v241, 7
      %v243 = vsub.s32 0, %v242
      %v244 = vrot.slane %v239, %v243
      %v246 = vadd.f32 %v237, %v244
      %v247 = vadd.f32 %v238, %v244
      %v248 = vmax.f32 %v246, 0.0
      %v249 = vmax.f32 %v247, 0.0
      %v250 = vpack.c.bf16 %v249, %v248
      %v252 = vunpack.c.l.b16 %v250
      %v253 = vunpack.c.h.b16 %v250
      %v254 = vpack.c.b16 %v252, %v252
      %v255 = vpack.c.b16 %v253, %v253
      %258 = vst [vmem:[%s3] sm:$0xf] %v254
      %259 = vst [vmem:[%s3 + $0x4] sm:$0xf] %v255
    $region29: #{lip_sync_forward.15} parent=1 // pred_fallthru
      _
    // Predicated region
    $region30: #{lip_sync_forward.15} parent=1 // pred_check
      _
    $region31: #{lip_sync_forward.15} parent=1 // pred_check_branch
      %261 = sbr.rel (0) target = $region33
    $region32: #{lip_sync_forward.15} parent=1 // pred_region
      _
    $region33: #{lip_sync_forward.15} parent=1 // pred_fallthru
      _
    // Predicated region
    $region34: #{lip_sync_forward.15} parent=1 // pred_check
      _
    $region35: #{lip_sync_forward.15} parent=1 // pred_check_branch
      %263 = sbr.rel (0) target = $region37
    $region36: #{lip_sync_forward.15} parent=1 // pred_region
      _
    $region37: #{lip_sync_forward.15} parent=1 // pred_fallthru
      _
    %264 = vsyncpa [#allocation4], 1
    %265 = vsyncpa [#allocation6], 1

// kernel: lip_sync_forward.10
$region0: #{lip_sync_forward.10}
  #allocation0 [shape = 'u32[]', space=smem, size = 0x4, offset = 0x4, fixed_abs, tag = 'smem constant byte address 0x4 - core index']
  #allocation1 [shape = 'u32[144,128]{1,0:T(1,128)}', space=vmem, size = 0x12000, scoped, tag = 'internal scratch']
  #allocation2 [shape = 'f32[128,128]{1,0:T(8,128)}', space=vmem, size = 0x10000, scoped, tag = 'scratch operand']
  %s0 = inlined_call_operand.vmem [shape: bf16[128,128], index: 0, kind: input, shape index: {}]
  %s1 = inlined_call_operand.hbm [shape: bf16[128,128], index: 1, kind: input, shape index: {}]
  %s2 = inlined_call_operand.hbm [shape: f32[1,128], index: 2, kind: input, shape index: {}]
  %s3 = inlined_call_operand.vmem [shape: bf16[128,128], index: 3, kind: output, shape index: {}]
  %s4 = sld [smem:[#allocation0]]
  $region38: #{lip_sync_forward.10} parent=0
    _
  %s6 = ssub.s32 1, %s4
  %s7 = scalar_select 0, %s6, %s4
  $region1: #{lip_sync_forward.10} parent=0
    #allocation3 [shape = 'u8[32768]{0}', space=vmem, size = 0x8000, scoped, tag = 'input window, operand 1, single buffered']
    #allocation4 [shape = 's32[1]{0}', space=sflag, size = 0x4, scoped, tag = 'scoped memory for lip_sync_forward.10']
    #allocation5 [shape = 'u8[512]{0}', space=vmem, size = 0x400, scoped, tag = 'input window, operand 2, single buffered']
    #allocation6 [shape = 's32[1]{0}', space=sflag, size = 0x4, scoped, tag = 'scoped memory for lip_sync_forward.10']
    %8 = vsyncpa [#allocation4], 0
    %9 = vsyncpa [#allocation6], 0
    // Predicated region
    $region2: #{lip_sync_forward.10} parent=1 // pred_check
      _
    $region3: #{lip_sync_forward.10} parent=1 // pred_check_branch
      %11 = sbr.rel (0) target = $region5
    $region4: #{lip_sync_forward.10} parent=1 // pred_region
      _
    $region5: #{lip_sync_forward.10} parent=1 // pred_fallthru
      _
    // Predicated region
    $region6: #{lip_sync_forward.10} parent=1 // pred_check
      _
    $region7: #{lip_sync_forward.10} parent=1 // pred_check_branch
      %13 = sbr.rel (0) target = $region9
    $region8: #{lip_sync_forward.10} parent=1 // pred_region
      %s15 = ssub.s32 1024, 1024
      %16 = vsyncadd [#allocation4], %s15
      %s17 = sshll.u32 [#allocation3], 4
      %s18 = int_to_ptr.vmem [resolvable:$true] %s17
      %23 = dma.hbm_to_vmem [thread:$0]  %s1, 1024, %s18, [#allocation4], 64, 64, 4
    $region9: #{lip_sync_forward.10} parent=1 // pred_fallthru
      _
    // Predicated region
    $region10: #{lip_sync_forward.10} parent=1 // pred_check
      _
    $region11: #{lip_sync_forward.10} parent=1 // pred_check_branch
      %25 = sbr.rel (0) target = $region13
    $region12: #{lip_sync_forward.10} parent=1 // pred_region
      %s27 = ssub.s32 16, 16
      %28 = vsyncadd [#allocation6], %s27
      %s30 = sshll.u32 [#allocation5], 4
      %s31 = int_to_ptr.vmem [resolvable:$true] %s30
      %33 = dma.hbm_to_vmem [thread:$0]  %s2, 16, %s31, [#allocation6]
    $region13: #{lip_sync_forward.10} parent=1 // pred_fallthru
      _
    // Predicated region
    $region14: #{lip_sync_forward.10} parent=1 // pred_check
      _
    $region15: #{lip_sync_forward.10} parent=1 // pred_check_branch
      %35 = sbr.rel (0) target = $region17
    $region16: #{lip_sync_forward.10} parent=1 // pred_region
      %36 = dma.done [#allocation4], 1024
    $region17: #{lip_sync_forward.10} parent=1 // pred_fallthru
      _
    // Predicated region
    $region18: #{lip_sync_forward.10} parent=1 // pred_check
      _
    $region19: #{lip_sync_forward.10} parent=1 // pred_check_branch
      %38 = sbr.rel (0) target = $region21
    $region20: #{lip_sync_forward.10} parent=1 // pred_region
      %39 = dma.done [#allocation6], 16
    $region21: #{lip_sync_forward.10} parent=1 // pred_fallthru
      _
    %p41 = scmp.eq.s32.totalorder 0, 0
    // Predicated region
    $region22: #{lip_sync_forward.10} parent=1 // pred_check
      %p42 = pneg %p41
    $region23: #{lip_sync_forward.10} parent=1 // pred_check_branch
      %44 = sbr.rel (%p42) target = $region25
    $region24: #{lip_sync_forward.10} parent=1 // pred_region
      %45 = vst [vmem:[#allocation2] sm:$0xff] 0.0
      %46 = vst [vmem:[#allocation2 + $0x8] sm:$0xff] 0.0
      %47 = vst [vmem:[#allocation2 + $0x10] sm:$0xff] 0.0
      %48 = vst [vmem:[#allocation2 + $0x18] sm:$0xff] 0.0
      %49 = vst [vmem:[#allocation2 + $0x20] sm:$0xff] 0.0
      %50 = vst [vmem:[#allocation2 + $0x28] sm:$0xff] 0.0
      %51 = vst [vmem:[#allocation2 + $0x30] sm:$0xff] 0.0
      %52 = vst [vmem:[#allocation2 + $0x38] sm:$0xff] 0.0
      %53 = vst [vmem:[#allocation2 + $0x40] sm:$0xff] 0.0
      %54 = vst [vmem:[#allocation2 + $0x48] sm:$0xff] 0.0
      %55 = vst [vmem:[#allocation2 + $0x50] sm:$0xff] 0.0
      %56 = vst [vmem:[#allocation2 + $0x58] sm:$0xff] 0.0
      %57 = vst [vmem:[#allocation2 + $0x60] sm:$0xff] 0.0
      %58 = vst [vmem:[#allocation2 + $0x68] sm:$0xff] 0.0
      %59 = vst [vmem:[#allocation2 + $0x70] sm:$0xff] 0.0
      %60 = vst [vmem:[#allocation2 + $0x78] sm:$0xff] 0.0
    $region25: #{lip_sync_forward.10} parent=1 // pred_fallthru
      _
    %v61 = vld [vmem:[#allocation2] sm:$0xff]
    %v62 = vld [vmem:[#allocation2 + $0x8] sm:$0xff]
    %v63 = vld [vmem:[#allocation2 + $0x10] sm:$0xff]
    %v64 = vld [vmem:[#allocation2 + $0x18] sm:$0xff]
    %v65 = vld [vmem:[#allocation2 + $0x20] sm:$0xff]
    %v66 = vld [vmem:[#allocation2 + $0x28] sm:$0xff]
    %v67 = vld [vmem:[#allocation2 + $0x30] sm:$0xff]
    %v68 = vld [vmem:[#allocation2 + $0x38] sm:$0xff]
    %v69 = vld [vmem:[#allocation2 + $0x40] sm:$0xff]
    %v70 = vld [vmem:[#allocation2 + $0x48] sm:$0xff]
    %v71 = vld [vmem:[#allocation2 + $0x50] sm:$0xff]
    %v72 = vld [vmem:[#allocation2 + $0x58] sm:$0xff]
    %v73 = vld [vmem:[#allocation2 + $0x60] sm:$0xff]
    %v74 = vld [vmem:[#allocation2 + $0x68] sm:$0xff]
    %v75 = vld [vmem:[#allocation2 + $0x70] sm:$0xff]
    %v76 = vld [vmem:[#allocation2 + $0x78] sm:$0xff]
    %v77 = vld [vmem:[%s0] sm:$0xf]
    %v78 = vld [vmem:[%s0 + $0x4] sm:$0xf]
    %v79 = vld [vmem:[%s0 + $0x8] sm:$0xf]
    %v80 = vld [vmem:[%s0 + $0xc] sm:$0xf]
    %v81 = vld [vmem:[%s0 + $0x10] sm:$0xf]
    %v82 = vld [vmem:[%s0 + $0x14] sm:$0xf]
    %v83 = vld [vmem:[%s0 + $0x18] sm:$0xf]
    %v84 = vld [vmem:[%s0 + $0x1c] sm:$0xf]
    %v85 = vld [vmem:[%s0 + $0x20] sm:$0xf]
    %v86 = vld [vmem:[%s0 + $0x24] sm:$0xf]
    %v87 = vld [vmem:[%s0 + $0x28] sm:$0xf]
    %v88 = vld [vmem:[%s0 + $0x2c] sm:$0xf]
    %v89 = vld [vmem:[%s0 + $0x30] sm:$0xf]
    %v90 = vld [vmem:[%s0 + $0x34] sm:$0xf]
    %v91 = vld [vmem:[%s0 + $0x38] sm:$0xf]
    %v92 = vld [vmem:[%s0 + $0x3c] sm:$0xf]
    %v93 = vld [vmem:[#allocation3] sm:$0xf]
    %v94 = vld [vmem:[#allocation3 + $0x4] sm:$0xf]
    %v95 = vld [vmem:[#allocation3 + $0x8] sm:$0xf]
    %v96 = vld [vmem:[#allocation3 + $0xc] sm:$0xf]
    %v97 = vld [vmem:[#allocation3 + $0x10] sm:$0xf]
    %v98 = vld [vmem:[#allocation3 + $0x14] sm:$0xf]
    %v99 = vld [vmem:[#allocation3 + $0x18] sm:$0xf]
    %v100 = vld [vmem:[#allocation3 + $0x1c] sm:$0xf]
    %v101 = vld [vmem:[#allocation3 + $0x20] sm:$0xf]
    %v102 = vld [vmem:[#allocation3 + $0x24] sm:$0xf]
    %v103 = vld [vmem:[#allocation3 + $0x28] sm:$0xf]
    %v104 = vld [vmem:[#allocation3 + $0x2c] sm:$0xf]
    %v105 = vld [vmem:[#allocation3 + $0x30] sm:$0xf]
    %v106 = vld [vmem:[#allocation3 + $0x34] sm:$0xf]
    %v107 = vld [vmem:[#allocation3 + $0x38] sm:$0xf]
    %v108 = vld [vmem:[#allocation3 + $0x3c] sm:$0xf]
    %v125 = vunpack.c.l.b16 %v77
    %v126 = vunpack.c.l.b16 %v78
    %v127 = vunpack.c.l.b16 %v79
    %v128 = vunpack.c.l.b16 %v80
    %v129 = vunpack.c.l.b16 %v81
    %v130 = vunpack.c.l.b16 %v82
    %v131 = vunpack.c.l.b16 %v83
    %v132 = vunpack.c.l.b16 %v84
    %v133 = vunpack.c.l.b16 %v85
    %v134 = vunpack.c.l.b16 %v86
    %v135 = vunpack.c.l.b16 %v87
    %v136 = vunpack.c.l.b16 %v88
    %v137 = vunpack.c.l.b16 %v89
    %v138 = vunpack.c.l.b16 %v90
    %v139 = vunpack.c.l.b16 %v91
    %v140 = vunpack.c.l.b16 %v92
    %v141 = vpack.c.b16 %v126, %v125
    %v142 = vpack.c.b16 %v128, %v127
    %v143 = vpack.c.b16 %v130, %v129
    %v144 = vpack.c.b16 %v132, %v131
    %v145 = vpack.c.b16 %v134, %v133
    %v146 = vpack.c.b16 %v136, %v135
    %v147 = vpack.c.b16 %v138, %v137
    %v148 = vpack.c.b16 %v140, %v139
    %v173 = vunpack.c.l.b16 %v93
    %v174 = vunpack.c.l.b16 %v94
    %v175 = vunpack.c.l.b16 %v95
    %v176 = vunpack.c.l.b16 %v96
    %v177 = vunpack.c.l.b16 %v97
    %v178 = vunpack.c.l.b16 %v98
    %v179 = vunpack.c.l.b16 %v99
    %v180 = vunpack.c.l.b16 %v100
    %v181 = vunpack.c.l.b16 %v101
    %v182 = vunpack.c.l.b16 %v102
    %v183 = vunpack.c.l.b16 %v103
    %v184 = vunpack.c.l.b16 %v104
    %v185 = vunpack.c.l.b16 %v105
    %v186 = vunpack.c.l.b16 %v106
    %v187 = vunpack.c.l.b16 %v107
    %v188 = vunpack.c.l.b16 %v108
    %v189 = vpack.c.b16 %v174, %v173
    %v190 = vpack.c.b16 %v176, %v175
    %v191 = vpack.c.b16 %v178, %v177
    %v192 = vpack.c.b16 %v180, %v179
    %v193 = vpack.c.b16 %v182, %v181
    %v194 = vpack.c.b16 %v184, %v183
    %v195 = vpack.c.b16 %v186, %v185
    %v196 = vpack.c.b16 %v188, %v187
    %205 = vmatprep.subr.bf16.mxu0 0
    %206 = vmatpush1.bf16.msra.mxu0 %v189
    %207 = vmatprep.subr.bf16.mxu0 0
    %208 = vmatpush1.bf16.msra.mxu0 %v190
    %209 = vmatprep.subr.bf16.mxu0 0
    %210 = vmatpush1.bf16.msra.mxu0 %v191
    %211 = vmatprep.subr.bf16.mxu0 0
    %212 = vmatpush1.bf16.msra.mxu0 %v192
    %213 = vmatprep.subr.bf16.mxu0 0
    %214 = vmatpush1.bf16.msra.mxu0 %v193
    %215 = vmatprep.subr.bf16.mxu0 0
    %216 = vmatpush1.bf16.msra.mxu0 %v194
    %217 = vmatprep.subr.bf16.mxu0 0
    %218 = vmatpush1.bf16.msra.mxu0 %v195
    %219 = vmatprep.subr.bf16.mxu0 0
    %220 = vmatpush1.bf16.msra.mxu0 %v196
    %221 = vmatprep.subr.bf16.mxu0 0
    %222 = vmatpush1.bf16.msra.mxu0 0
    %223 = vmatprep.subr.bf16.mxu0 0
    %224 = vmatpush1.bf16.msra.mxu0 0
    %225 = vmatprep.subr.bf16.mxu0 0
    %226 = vmatpush1.bf16.msra.mxu0 0
    %227 = vmatprep.subr.bf16.mxu0 0
    %228 = vmatpush1.bf16.msra.mxu0 0
    %229 = vmatprep.subr.bf16.mxu0 0
    %230 = vmatpush1.bf16.msra.mxu0 0
    %231 = vmatprep.subr.bf16.mxu0 0
    %232 = vmatpush1.bf16.msra.mxu0 0
    %233 = vmatprep.subr.bf16.mxu0 0
    %234 = vmatpush1.bf16.msra.mxu0 0
    %235 = vmatprep.subr.bf16.mxu0 0
    %236 = vmatpush1.bf16.msra.mxu0 0
    %237 = vmatprep.mubr.bf16.mxu0 0
    %238 = vmatmul.mubr.bf16.gmra.mrb[0].mxu0 %v141
    %v239 = vpop.f32.mrb[0].mxu0
    %v240 = vadd.f32 0.0, %v239
    %v241 = vpop.f32.mrb[0].mxu0
    %v242 = vpop.f32.mrb[0].mxu0
    %v243 = vadd.f32 0.0, %v242
    %v244 = vpop.f32.mrb[0].mxu0
    %245 = vmatprep.mubr.bf16.mxu0 0
    %246 = vmatmul.mubr.bf16.gmra.mrb[0].mxu0 %v142
    %v247 = vpop.f32.mrb[0].mxu0
    %v248 = vadd.f32 0.0, %v247
    %v249 = vpop.f32.mrb[0].mxu0
    %v250 = vpop.f32.mrb[0].mxu0
    %v251 = vadd.f32 0.0, %v250
    %v252 = vpop.f32.mrb[0].mxu0
    %253 = vmatprep.mubr.bf16.mxu0 0
    %254 = vmatmul.mubr.bf16.gmra.mrb[0].mxu0 %v143
    %v255 = vpop.f32.mrb[0].mxu0
    %v256 = vadd.f32 0.0, %v255
    %v257 = vpop.f32.mrb[0].mxu0
    %v258 = vpop.f32.mrb[0].mxu0
    %v259 = vadd.f32 0.0, %v258
    %v260 = vpop.f32.mrb[0].mxu0
    %261 = vmatprep.mubr.bf16.mxu0 0
    %262 = vmatmul.mubr.bf16.gmra.mrb[0].mxu0 %v144
    %v263 = vpop.f32.mrb[0].mxu0
    %v264 = vadd.f32 0.0, %v263
    %v265 = vpop.f32.mrb[0].mxu0
    %v266 = vpop.f32.mrb[0].mxu0
    %v267 = vadd.f32 0.0, %v266
    %v268 = vpop.f32.mrb[0].mxu0
    %269 = vmatprep.mubr.bf16.mxu0 0
    %270 = vmatmul.mubr.bf16.gmra.mrb[0].mxu0 %v145
    %v271 = vpop.f32.mrb[0].mxu0
    %v272 = vadd.f32 0.0, %v271
    %v273 = vpop.f32.mrb[0].mxu0
    %v274 = vpop.f32.mrb[0].mxu0
    %v275 = vadd.f32 0.0, %v274
    %v276 = vpop.f32.mrb[0].mxu0
    %277 = vmatprep.mubr.bf16.mxu0 0
    %278 = vmatmul.mubr.bf16.gmra.mrb[0].mxu0 %v146
    %v279 = vpop.f32.mrb[0].mxu0
    %v280 = vadd.f32 0.0, %v279
    %v281 = vpop.f32.mrb[0].mxu0
    %v282 = vpop.f32.mrb[0].mxu0
    %v283 = vadd.f32 0.0, %v282
    %v284 = vpop.f32.mrb[0].mxu0
    %285 = vmatprep.mubr.bf16.mxu0 0
    %286 = vmatmul.mubr.bf16.gmra.mrb[0].mxu0 %v147
    %v287 = vpop.f32.mrb[0].mxu0
    %v288 = vadd.f32 0.0, %v287
    %v289 = vpop.f32.mrb[0].mxu0
    %v290 = vpop.f32.mrb[0].mxu0
    %v291 = vadd.f32 0.0, %v290
    %v292 = vpop.f32.mrb[0].mxu0
    %293 = vmatprep.mubr.bf16.mxu0 0
    %294 = vmatmul.mubr.bf16.gmra.mrb[0].mxu0 %v148
    %v295 = vpop.f32.mrb[0].mxu0
    %v296 = vadd.f32 0.0, %v295
    %v297 = vpop.f32.mrb[0].mxu0
    %v298 = vpop.f32.mrb[0].mxu0
    %v299 = vadd.f32 0.0, %v298
    %v300 = vpop.f32.mrb[0].mxu0
    %301 = vdwg.mxu0
    %v302 = vadd.f32 %v61, %v240
    %v303 = vadd.f32 %v62, %v243
    %v304 = vadd.f32 %v63, %v248
    %v305 = vadd.f32 %v64, %v251
    %v306 = vadd.f32 %v65, %v256
    %v307 = vadd.f32 %v66, %v259
    %v308 = vadd.f32 %v67, %v264
    %v309 = vadd.f32 %v68, %v267
    %v310 = vadd.f32 %v69, %v272
    %v311 = vadd.f32 %v70, %v275
    %v312 = vadd.f32 %v71, %v280
    %v313 = vadd.f32 %v72, %v283
    %v314 = vadd.f32 %v73, %v288
    %v315 = vadd.f32 %v74, %v291
    %v316 = vadd.f32 %v75, %v296
    %v317 = vadd.f32 %v76, %v299
    %318 = vst [vmem:[#allocation2] sm:$0xff] %v302
    %319 = vst [vmem:[#allocation2 + $0x8] sm:$0xff] %v303
    %320 = vst [vmem:[#allocation2 + $0x10] sm:$0xff] %v304
    %321 = vst [vmem:[#allocation2 + $0x18] sm:$0xff] %v305
    %322 = vst [vmem:[#allocation2 + $0x20] sm:$0xff] %v306
    %323 = vst [vmem:[#allocation2 + $0x28] sm:$0xff] %v307
    %324 = vst [vmem:[#allocation2 + $0x30] sm:$0xff] %v308
    %325 = vst [vmem:[#allocation2 + $0x38] sm:$0xff] %v309
    %326 = vst [vmem:[#allocation2 + $0x40] sm:$0xff] %v310
    %327 = vst [vmem:[#allocation2 + $0x48] sm:$0xff] %v311
    %328 = vst [vmem:[#allocation2 + $0x50] sm:$0xff] %v312
    %329 = vst [vmem:[#allocation2 + $0x58] sm:$0xff] %v313
    %330 = vst [vmem:[#allocation2 + $0x60] sm:$0xff] %v314
    %331 = vst [vmem:[#allocation2 + $0x68] sm:$0xff] %v315
    %332 = vst [vmem:[#allocation2 + $0x70] sm:$0xff] %v316
    %333 = vst [vmem:[#allocation2 + $0x78] sm:$0xff] %v317
    // Predicated region
    $region26: #{lip_sync_forward.10} parent=1 // pred_check
      %p334 = pneg %p41
    $region27: #{lip_sync_forward.10} parent=1 // pred_check_branch
      %336 = sbr.rel (%p334) target = $region29
    $region28: #{lip_sync_forward.10} parent=1 // pred_region
      %v337 = vld [vmem:[#allocation2] sm:$0xff]
      %v338 = vld [vmem:[#allocation2 + $0x8] sm:$0xff]
      %v339 = vld [vmem:[#allocation2 + $0x10] sm:$0xff]
      %v340 = vld [vmem:[#allocation2 + $0x18] sm:$0xff]
      %v341 = vld [vmem:[#allocation2 + $0x20] sm:$0xff]
      %v342 = vld [vmem:[#allocation2 + $0x28] sm:$0xff]
      %v343 = vld [vmem:[#allocation2 + $0x30] sm:$0xff]
      %v344 = vld [vmem:[#allocation2 + $0x38] sm:$0xff]
      %v345 = vld [vmem:[#allocation2 + $0x40] sm:$0xff]
      %v346 = vld [vmem:[#allocation2 + $0x48] sm:$0xff]
      %v347 = vld [vmem:[#allocation2 + $0x50] sm:$0xff]
      %v348 = vld [vmem:[#allocation2 + $0x58] sm:$0xff]
      %v349 = vld [vmem:[#allocation2 + $0x60] sm:$0xff]
      %v350 = vld [vmem:[#allocation2 + $0x68] sm:$0xff]
      %v351 = vld [vmem:[#allocation2 + $0x70] sm:$0xff]
      %v352 = vld [vmem:[#allocation2 + $0x78] sm:$0xff]
      %v353 = vld [vmem:[#allocation5] sm:$0x1]
      %v355 = vlaneseq
      %v356 = vshrl.u32 %v355, 7
      %v357 = vsub.s32 0, %v356
      %v358 = vrot.slane %v353, %v357
      %v360 = vadd.f32 %v337, %v358
      %v361 = vadd.f32 %v338, %v358
      %v362 = vadd.f32 %v339, %v358
      %v363 = vadd.f32 %v340, %v358
      %v364 = vadd.f32 %v341, %v358
      %v365 = vadd.f32 %v342, %v358
      %v366 = vadd.f32 %v343, %v358
      %v367 = vadd.f32 %v344, %v358
      %v368 = vadd.f32 %v345, %v358
      %v369 = vadd.f32 %v346, %v358
      %v370 = vadd.f32 %v347, %v358
      %v371 = vadd.f32 %v348, %v358
      %v372 = vadd.f32 %v349, %v358
      %v373 = vadd.f32 %v350, %v358
      %v374 = vadd.f32 %v351, %v358
      %v375 = vadd.f32 %v352, %v358
      %v376 = vmax.f32 %v360, 0.0
      %v377 = vmax.f32 %v361, 0.0
      %v378 = vmax.f32 %v362, 0.0
      %v379 = vmax.f32 %v363, 0.0
      %v380 = vmax.f32 %v364, 0.0
      %v381 = vmax.f32 %v365, 0.0
      %v382 = vmax.f32 %v366, 0.0
      %v383 = vmax.f32 %v367, 0.0
      %v384 = vmax.f32 %v368, 0.0
      %v385 = vmax.f32 %v369, 0.0
      %v386 = vmax.f32 %v370, 0.0
      %v387 = vmax.f32 %v371, 0.0
      %v388 = vmax.f32 %v372, 0.0
      %v389 = vmax.f32 %v373, 0.0
      %v390 = vmax.f32 %v374, 0.0
      %v391 = vmax.f32 %v375, 0.0
      %v392 = vpack.c.bf16 %v377, %v376
      %v393 = vpack.c.bf16 %v379, %v378
      %v394 = vpack.c.bf16 %v381, %v380
      %v395 = vpack.c.bf16 %v383, %v382
      %v396 = vpack.c.bf16 %v385, %v384
      %v397 = vpack.c.bf16 %v387, %v386
      %v398 = vpack.c.bf16 %v389, %v388
      %v399 = vpack.c.bf16 %v391, %v390
      %v408 = vunpack.c.l.b16 %v392
      %v409 = vunpack.c.h.b16 %v392
      %v410 = vunpack.c.l.b16 %v393
      %v411 = vunpack.c.h.b16 %v393
      %v412 = vunpack.c.l.b16 %v394
      %v413 = vunpack.c.h.b16 %v394
      %v414 = vunpack.c.l.b16 %v395
      %v415 = vunpack.c.h.b16 %v395
      %v416 = vunpack.c.l.b16 %v396
      %v417 = vunpack.c.h.b16 %v396
      %v418 = vunpack.c.l.b16 %v397
      %v419 = vunpack.c.h.b16 %v397
      %v420 = vunpack.c.l.b16 %v398
      %v421 = vunpack.c.h.b16 %v398
      %v422 = vunpack.c.l.b16 %v399
      %v423 = vunpack.c.h.b16 %v399
      %v424 = vpack.c.b16 %v408, %v408
      %v425 = vpack.c.b16 %v409, %v409
      %v426 = vpack.c.b16 %v410, %v410
      %v427 = vpack.c.b16 %v411, %v411
      %v428 = vpack.c.b16 %v412, %v412
      %v429 = vpack.c.b16 %v413, %v413
      %v430 = vpack.c.b16 %v414, %v414
      %v431 = vpack.c.b16 %v415, %v415
      %v432 = vpack.c.b16 %v416, %v416
      %v433 = vpack.c.b16 %v417, %v417
      %v434 = vpack.c.b16 %v418, %v418
      %v435 = vpack.c.b16 %v419, %v419
      %v436 = vpack.c.b16 %v420, %v420
      %v437 = vpack.c.b16 %v421, %v421
      %v438 = vpack.c.b16 %v422, %v422
      %v439 = vpack.c.b16 %v423, %v423
      %456 = vst [vmem:[%s3] sm:$0xf] %v424
      %457 = vst [vmem:[%s3 + $0x4] sm:$0xf] %v425
      %458 = vst [vmem:[%s3 + $0x8] sm:$0xf] %v426
      %459 = vst [vmem:[%s3 + $0xc] sm:$0xf] %v427
      %460 = vst [vmem:[%s3 + $0x10] sm:$0xf] %v428
      %461 = vst [vmem:[%s3 + $0x14] sm:$0xf] %v429
      %462 = vst [vmem:[%s3 + $0x18] sm:$0xf] %v430
      %463 = vst [vmem:[%s3 + $0x1c] sm:$0xf] %v431
      %464 = vst [vmem:[%s3 + $0x20] sm:$0xf] %v432
      %465 = vst [vmem:[%s3 + $0x24] sm:$0xf] %v433
      %466 = vst [vmem:[%s3 + $0x28] sm:$0xf] %v434
      %467 = vst [vmem:[%s3 + $0x2c] sm:$0xf] %v435
      %468 = vst [vmem:[%s3 + $0x30] sm:$0xf] %v436
      %469 = vst [vmem:[%s3 + $0x34] sm:$0xf] %v437
      %470 = vst [vmem:[%s3 + $0x38] sm:$0xf] %v438
      %471 = vst [vmem:[%s3 + $0x3c] sm:$0xf] %v439
    $region29: #{lip_sync_forward.10} parent=1 // pred_fallthru
      _
    // Predicated region
    $region30: #{lip_sync_forward.10} parent=1 // pred_check
      _
    $region31: #{lip_sync_forward.10} parent=1 // pred_check_branch
      %473 = sbr.rel (0) target = $region33
    $region32: #{lip_sync_forward.10} parent=1 // pred_region
      _
    $region33: #{lip_sync_forward.10} parent=1 // pred_fallthru
      _
    // Predicated region
    $region34: #{lip_sync_forward.10} parent=1 // pred_check
      _
    $region35: #{lip_sync_forward.10} parent=1 // pred_check_branch
      %475 = sbr.rel (0) target = $region37
    $region36: #{lip_sync_forward.10} parent=1 // pred_region
      _
    $region37: #{lip_sync_forward.10} parent=1 // pred_fallthru
      _
    %476 = vsyncpa [#allocation4], 1
    %477 = vsyncpa [#allocation6], 1

// kernel: lip_sync_forward.11
$region0: #{lip_sync_forward.11}
  #allocation0 [shape = 'u32[]', space=smem, size = 0x4, offset = 0x4, fixed_abs, tag = 'smem constant byte address 0x4 - core index']
  #allocation1 [shape = 'u32[144,128]{1,0:T(1,128)}', space=vmem, size = 0x12000, scoped, tag = 'internal scratch']
  #allocation2 [shape = 'f32[32,128]{1,0:T(8,128)}', space=vmem, size = 0x4000, scoped, tag = 'scratch operand']
  %s0 = inlined_call_operand.vmem [shape: bf16[32,384], index: 0, kind: input, shape index: {}]
  %s1 = inlined_call_operand.vmem [shape: bf16[384,128], index: 1, kind: input, shape index: {}]
  %s2 = inlined_call_operand.vmem [shape: f32[1,128], index: 2, kind: input, shape index: {}]
  %s3 = inlined_call_operand.vmem [shape: bf16[32,128], index: 3, kind: output, shape index: {}]
  %s4 = sld [smem:[#allocation0]]
  $region30: #{lip_sync_forward.11} parent=0
    _
  %s6 = ssub.s32 1, %s4
  %s7 = scalar_select 0, %s6, %s4
  // Predicated region
  $region2: #{lip_sync_forward.11} parent=0 // pred_check
    _
  $region3: #{lip_sync_forward.11} parent=0 // pred_check_branch
    %9 = sbr.rel (0) target = $region5
  $region4: #{lip_sync_forward.11} parent=0 // pred_region
    _
  $region5: #{lip_sync_forward.11} parent=0 // pred_fallthru
    _
  // Predicated region
  $region6: #{lip_sync_forward.11} parent=0 // pred_check
    _
  $region7: #{lip_sync_forward.11} parent=0 // pred_check_branch
    %11 = sbr.rel (0) target = $region9
  $region8: #{lip_sync_forward.11} parent=0 // pred_region
    _
  $region9: #{lip_sync_forward.11} parent=0 // pred_fallthru
    _
  // Predicated region
  $region10: #{lip_sync_forward.11} parent=0 // pred_check
    _
  $region11: #{lip_sync_forward.11} parent=0 // pred_check_branch
    %13 = sbr.rel (0) target = $region13
  $region12: #{lip_sync_forward.11} parent=0 // pred_region
    _
  $region13: #{lip_sync_forward.11} parent=0 // pred_fallthru
    _
  %p15 = scmp.eq.s32.totalorder 0, 0
  // Predicated region
  $region14: #{lip_sync_forward.11} parent=0 // pred_check
    %p16 = pneg %p15
  $region15: #{lip_sync_forward.11} parent=0 // pred_check_branch
    %18 = sbr.rel (%p16) target = $region17
  $region16: #{lip_sync_forward.11} parent=0 // pred_region
    %19 = vst [vmem:[#allocation2] sm:$0xff] 0.0
    %20 = vst [vmem:[#allocation2 + $0x8] sm:$0xff] 0.0
    %21 = vst [vmem:[#allocation2 + $0x10] sm:$0xff] 0.0
    %22 = vst [vmem:[#allocation2 + $0x18] sm:$0xff] 0.0
  $region17: #{lip_sync_forward.11} parent=0 // pred_fallthru
    _
  %v23 = vld [vmem:[#allocation2] sm:$0xff]
  %v24 = vld [vmem:[#allocation2 + $0x8] sm:$0xff]
  %v25 = vld [vmem:[#allocation2 + $0x10] sm:$0xff]
  %v26 = vld [vmem:[#allocation2 + $0x18] sm:$0xff]
  %v27 = vld [vmem:[%s0] sm:$0xff]
  %v28 = vld [vmem:[%s0 + $0x8] sm:$0xf]
  %v29 = vld [vmem:[%s0 + $0xc] sm:$0xff]
  %v30 = vld [vmem:[%s0 + $0x14] sm:$0xf]
  %v31 = vld [vmem:[%s0 + $0x18] sm:$0xff]
  %v32 = vld [vmem:[%s0 + $0x20] sm:$0xf]
  %v33 = vld [vmem:[%s0 + $0x24] sm:$0xff]
  %v34 = vld [vmem:[%s0 + $0x2c] sm:$0xf]
  %v35 = vld [vmem:[%s1] sm:$0xf]
  %v36 = vld [vmem:[%s1 + $0x4] sm:$0xf]
  %v37 = vld [vmem:[%s1 + $0x8] sm:$0xf]
  %v38 = vld [vmem:[%s1 + $0xc] sm:$0xf]
  %v39 = vld [vmem:[%s1 + $0x10] sm:$0xf]
  %v40 = vld [vmem:[%s1 + $0x14] sm:$0xf]
  %v41 = vld [vmem:[%s1 + $0x18] sm:$0xf]
  %v42 = vld [vmem:[%s1 + $0x1c] sm:$0xf]
  %v43 = vld [vmem:[%s1 + $0x20] sm:$0xf]
  %v44 = vld [vmem:[%s1 + $0x24] sm:$0xf]
  %v45 = vld [vmem:[%s1 + $0x28] sm:$0xf]
  %v46 = vld [vmem:[%s1 + $0x2c] sm:$0xf]
  %v47 = vld [vmem:[%s1 + $0x30] sm:$0xf]
  %v48 = vld [vmem:[%s1 + $0x34] sm:$0xf]
  %v49 = vld [vmem:[%s1 + $0x38] sm:$0xf]
  %v50 = vld [vmem:[%s1 + $0x3c] sm:$0xf]
  %v51 = vld [vmem:[%s1 + $0x40] sm:$0xf]
  %v52 = vld [vmem:[%s1 + $0x44] sm:$0xf]
  %v53 = vld [vmem:[%s1 + $0x48] sm:$0xf]
  %v54 = vld [vmem:[%s1 + $0x4c] sm:$0xf]
  %v55 = vld [vmem:[%s1 + $0x50] sm:$0xf]
  %v56 = vld [vmem:[%s1 + $0x54] sm:$0xf]
  %v57 = vld [vmem:[%s1 + $0x58] sm:$0xf]
  %v58 = vld [vmem:[%s1 + $0x5c] sm:$0xf]
  %v59 = vld [vmem:[%s1 + $0x60] sm:$0xf]
  %v60 = vld [vmem:[%s1 + $0x64] sm:$0xf]
  %v61 = vld [vmem:[%s1 + $0x68] sm:$0xf]
  %v62 = vld [vmem:[%s1 + $0x6c] sm:$0xf]
  %v63 = vld [vmem:[%s1 + $0x70] sm:$0xf]
  %v64 = vld [vmem:[%s1 + $0x74] sm:$0xf]
  %v65 = vld [vmem:[%s1 + $0x78] sm:$0xf]
  %v66 = vld [vmem:[%s1 + $0x7c] sm:$0xf]
  %v67 = vld [vmem:[%s1 + $0x80] sm:$0xf]
  %v68 = vld [vmem:[%s1 + $0x84] sm:$0xf]
  %v69 = vld [vmem:[%s1 + $0x88] sm:$0xf]
  %v70 = vld [vmem:[%s1 + $0x8c] sm:$0xf]
  %v71 = vld [vmem:[%s1 + $0x90] sm:$0xf]
  %v72 = vld [vmem:[%s1 + $0x94] sm:$0xf]
  %v73 = vld [vmem:[%s1 + $0x98] sm:$0xf]
  %v74 = vld [vmem:[%s1 + $0x9c] sm:$0xf]
  %v75 = vld [vmem:[%s1 + $0xa0] sm:$0xf]
  %v76 = vld [vmem:[%s1 + $0xa4] sm:$0xf]
  %v77 = vld [vmem:[%s1 + $0xa8] sm:$0xf]
  %v78 = vld [vmem:[%s1 + $0xac] sm:$0xf]
  %v79 = vld [vmem:[%s1 + $0xb0] sm:$0xf]
  %v80 = vld [vmem:[%s1 + $0xb4] sm:$0xf]
  %v81 = vld [vmem:[%s1 + $0xb8] sm:$0xf]
  %v82 = vld [vmem:[%s1 + $0xbc] sm:$0xf]
  %v91 = vunpack.c.l.b16 %v27
  %v92 = vunpack.c.h.b16 %v27
  %v93 = vunpack.c.l.b16 %v28
  %v94 = vunpack.c.l.b16 %v29
  %v95 = vunpack.c.h.b16 %v29
  %v96 = vunpack.c.l.b16 %v30
  %v97 = vunpack.c.l.b16 %v31
  %v98 = vunpack.c.h.b16 %v31
  %v99 = vunpack.c.l.b16 %v32
  %v100 = vunpack.c.l.b16 %v33
  %v101 = vunpack.c.h.b16 %v33
  %v102 = vunpack.c.l.b16 %v34
  %v103 = vpack.c.b16 %v94, %v91
  %v104 = vpack.c.b16 %v95, %v92
  %v105 = vpack.c.b16 %v96, %v93
  %v106 = vpack.c.b16 %v100, %v97
  %v107 = vpack.c.b16 %v101, %v98
  %v108 = vpack.c.b16 %v102, %v99
  %v163 = vunpack.c.l.b16 %v35
  %v164 = vunpack.c.l.b16 %v36
  %v165 = vunpack.c.l.b16 %v37
  %v166 = vunpack.c.l.b16 %v38
  %v167 = vunpack.c.l.b16 %v39
  %v168 = vunpack.c.l.b16 %v40
  %v169 = vunpack.c.l.b16 %v41
  %v170 = vunpack.c.l.b16 %v42
  %v171 = vunpack.c.l.b16 %v43
  %v172 = vunpack.c.l.b16 %v44
  %v173 = vunpack.c.l.b16 %v45
  %v174 = vunpack.c.l.b16 %v46
  %v175 = vunpack.c.l.b16 %v47
  %v176 = vunpack.c.l.b16 %v48
  %v177 = vunpack.c.l.b16 %v49
  %v178 = vunpack.c.l.b16 %v50
  %v179 = vunpack.c.l.b16 %v51
  %v180 = vunpack.c.l.b16 %v52
  %v181 = vunpack.c.l.b16 %v53
  %v182 = vunpack.c.l.b16 %v54
  %v183 = vunpack.c.l.b16 %v55
  %v184 = vunpack.c.l.b16 %v56
  %v185 = vunpack.c.l.b16 %v57
  %v186 = vunpack.c.l.b16 %v58
  %v187 = vunpack.c.l.b16 %v59
  %v188 = vunpack.c.l.b16 %v60
  %v189 = vunpack.c.l.b16 %v61
  %v190 = vunpack.c.l.b16 %v62
  %v191 = vunpack.c.l.b16 %v63
  %v192 = vunpack.c.l.b16 %v64
  %v193 = vunpack.c.l.b16 %v65
  %v194 = vunpack.c.l.b16 %v66
  %v195 = vunpack.c.l.b16 %v67
  %v196 = vunpack.c.l.b16 %v68
  %v197 = vunpack.c.l.b16 %v69
  %v198 = vunpack.c.l.b16 %v70
  %v199 = vunpack.c.l.b16 %v71
  %v200 = vunpack.c.l.b16 %v72
  %v201 = vunpack.c.l.b16 %v73
  %v202 = vunpack.c.l.b16 %v74
  %v203 = vunpack.c.l.b16 %v75
  %v204 = vunpack.c.l.b16 %v76
  %v205 = vunpack.c.l.b16 %v77
  %v206 = vunpack.c.l.b16 %v78
  %v207 = vunpack.c.l.b16 %v79
  %v208 = vunpack.c.l.b16 %v80
  %v209 = vunpack.c.l.b16 %v81
  %v210 = vunpack.c.l.b16 %v82
  %v211 = vpack.c.b16 %v164, %v163
  %v212 = vpack.c.b16 %v166, %v165
  %v213 = vpack.c.b16 %v168, %v167
  %v214 = vpack.c.b16 %v170, %v169
  %v215 = vpack.c.b16 %v172, %v171
  %v216 = vpack.c.b16 %v174, %v173
  %v217 = vpack.c.b16 %v176, %v175
  %v218 = vpack.c.b16 %v178, %v177
  %v219 = vpack.c.b16 %v180, %v179
  %v220 = vpack.c.b16 %v182, %v181
  %v221 = vpack.c.b16 %v184, %v183
  %v222 = vpack.c.b16 %v186, %v185
  %v223 = vpack.c.b16 %v188, %v187
  %v224 = vpack.c.b16 %v190, %v189
  %v225 = vpack.c.b16 %v192, %v191
  %v226 = vpack.c.b16 %v194, %v193
  %v227 = vpack.c.b16 %v196, %v195
  %v228 = vpack.c.b16 %v198, %v197
  %v229 = vpack.c.b16 %v200, %v199
  %v230 = vpack.c.b16 %v202, %v201
  %v231 = vpack.c.b16 %v204, %v203
  %v232 = vpack.c.b16 %v206, %v205
  %v233 = vpack.c.b16 %v208, %v207
  %v234 = vpack.c.b16 %v210, %v209
  %259 = vmatprep.subr.bf16.mxu0 0
  %260 = vmatpush1.bf16.msra.mxu0 %v211
  %261 = vmatprep.subr.bf16.mxu0 0
  %262 = vmatpush1.bf16.msra.mxu0 %v212
  %263 = vmatprep.subr.bf16.mxu0 0
  %264 = vmatpush1.bf16.msra.mxu0 %v213
  %265 = vmatprep.subr.bf16.mxu0 0
  %266 = vmatpush1.bf16.msra.mxu0 %v214
  %267 = vmatprep.subr.bf16.mxu0 0
  %268 = vmatpush1.bf16.msra.mxu0 %v215
  %269 = vmatprep.subr.bf16.mxu0 0
  %270 = vmatpush1.bf16.msra.mxu0 %v216
  %271 = vmatprep.subr.bf16.mxu0 0
  %272 = vmatpush1.bf16.msra.mxu0 %v217
  %273 = vmatprep.subr.bf16.mxu0 0
  %274 = vmatpush1.bf16.msra.mxu0 %v218
  %275 = vmatprep.subr.bf16.mxu0 0
  %276 = vmatpush1.bf16.msra.mxu0 %v219
  %277 = vmatprep.subr.bf16.mxu0 0
  %278 = vmatpush1.bf16.msra.mxu0 %v220
  %279 = vmatprep.subr.bf16.mxu0 0
  %280 = vmatpush1.bf16.msra.mxu0 %v221
  %281 = vmatprep.subr.bf16.mxu0 0
  %282 = vmatpush1.bf16.msra.mxu0 %v222
  %283 = vmatprep.subr.bf16.mxu0 0
  %284 = vmatpush1.bf16.msra.mxu0 %v223
  %285 = vmatprep.subr.bf16.mxu0 0
  %286 = vmatpush1.bf16.msra.mxu0 %v224
  %287 = vmatprep.subr.bf16.mxu0 0
  %288 = vmatpush1.bf16.msra.mxu0 %v225
  %289 = vmatprep.subr.bf16.mxu0 0
  %290 = vmatpush1.bf16.msra.mxu0 %v226
  %291 = vmatprep.mubr.bf16.mxu0 %v104
  %292 = vmatmul.mubr.bf16.gmra.mrb[0].mxu0 %v103
  %v293 = vpop.f32.mrb[0].mxu0
  %v294 = vadd.f32 0.0, %v293
  %v295 = vpop.f32.mrb[0].mxu0
  %v296 = vpop.f32.mrb[0].mxu0
  %v297 = vadd.f32 0.0, %v296
  %v298 = vpop.f32.mrb[0].mxu0
  %299 = vmatprep.mubr.bf16.mxu0 %v107
  %300 = vmatmul.mubr.bf16.gmra.mrb[0].mxu0 %v106
  %v301 = vpop.f32.mrb[0].mxu0
  %v302 = vadd.f32 0.0, %v301
  %v303 = vpop.f32.mrb[0].mxu0
  %v304 = vpop.f32.mrb[0].mxu0
  %v305 = vadd.f32 0.0, %v304
  %v306 = vpop.f32.mrb[0].mxu0
  %307 = vdwg.mxu0
  %308 = vmatprep.subr.bf16.mxu0 0
  %309 = vmatpush1.bf16.msra.mxu0 %v227
  %310 = vmatprep.subr.bf16.mxu0 0
  %311 = vmatpush1.bf16.msra.mxu0 %v228
  %312 = vmatprep.subr.bf16.mxu0 0
  %313 = vmatpush1.bf16.msra.mxu0 %v229
  %314 = vmatprep.subr.bf16.mxu0 0
  %315 = vmatpush1.bf16.msra.mxu0 %v230
  %316 = vmatprep.subr.bf16.mxu0 0
  %317 = vmatpush1.bf16.msra.mxu0 %v231
  %318 = vmatprep.subr.bf16.mxu0 0
  %319 = vmatpush1.bf16.msra.mxu0 %v232
  %320 = vmatprep.subr.bf16.mxu0 0
  %321 = vmatpush1.bf16.msra.mxu0 %v233
  %322 = vmatprep.subr.bf16.mxu0 0
  %323 = vmatpush1.bf16.msra.mxu0 %v234
  %324 = vmatprep.subr.bf16.mxu0 0
  %325 = vmatpush1.bf16.msra.mxu0 0
  %326 = vmatprep.subr.bf16.mxu0 0
  %327 = vmatpush1.bf16.msra.mxu0 0
  %328 = vmatprep.subr.bf16.mxu0 0
  %329 = vmatpush1.bf16.msra.mxu0 0
  %330 = vmatprep.subr.bf16.mxu0 0
  %331 = vmatpush1.bf16.msra.mxu0 0
  %332 = vmatprep.subr.bf16.mxu0 0
  %333 = vmatpush1.bf16.msra.mxu0 0
  %334 = vmatprep.subr.bf16.mxu0 0
  %335 = vmatpush1.bf16.msra.mxu0 0
  %336 = vmatprep.subr.bf16.mxu0 0
  %337 = vmatpush1.bf16.msra.mxu0 0
  %338 = vmatprep.subr.bf16.mxu0 0
  %339 = vmatpush1.bf16.msra.mxu0 0
  %340 = vmatprep.mubr.bf16.mxu0 0
  %341 = vmatmul.mubr.bf16.gmra.mrb[0].mxu0 %v105
  %v342 = vpop.f32.mrb[0].mxu0
  %v343 = vadd.f32 %v294, %v342
  %v344 = vpop.f32.mrb[0].mxu0
  %v345 = vpop.f32.mrb[0].mxu0
  %v346 = vadd.f32 %v297, %v345
  %v347 = vpop.f32.mrb[0].mxu0
  %348 = vmatprep.mubr.bf16.mxu0 0
  %349 = vmatmul.mubr.bf16.gmra.mrb[0].mxu0 %v108
  %v350 = vpop.f32.mrb[0].mxu0
  %v351 = vadd.f32 %v302, %v350
  %v352 = vpop.f32.mrb[0].mxu0
  %v353 = vpop.f32.mrb[0].mxu0
  %v354 = vadd.f32 %v305, %v353
  %v355 = vpop.f32.mrb[0].mxu0
  %356 = vdwg.mxu0
  %v357 = vadd.f32 %v23, %v343
  %v358 = vadd.f32 %v24, %v346
  %v359 = vadd.f32 %v25, %v351
  %v360 = vadd.f32 %v26, %v354
  %361 = vst [vmem:[#allocation2] sm:$0xff] %v357
  %362 = vst [vmem:[#allocation2 + $0x8] sm:$0xff] %v358
  %363 = vst [vmem:[#allocation2 + $0x10] sm:$0xff] %v359
  %364 = vst [vmem:[#allocation2 + $0x18] sm:$0xff] %v360
  // Predicated region
  $region18: #{lip_sync_forward.11} parent=0 // pred_check
    %p365 = pneg %p15
  $region19: #{lip_sync_forward.11} parent=0 // pred_check_branch
    %367 = sbr.rel (%p365) target = $region21
  $region20: #{lip_sync_forward.11} parent=0 // pred_region
    %v368 = vld [vmem:[#allocation2] sm:$0xff]
    %v369 = vld [vmem:[#allocation2 + $0x8] sm:$0xff]
    %v370 = vld [vmem:[#allocation2 + $0x10] sm:$0xff]
    %v371 = vld [vmem:[#allocation2 + $0x18] sm:$0xff]
    %v372 = vld [vmem:[%s2] sm:$0x1]
    %v374 = vlaneseq
    %v375 = vshrl.u32 %v374, 7
    %v376 = vsub.s32 0, %v375
    %v377 = vrot.slane %v372, %v376
    %v379 = vadd.f32 %v368, %v377
    %v380 = vadd.f32 %v369, %v377
    %v381 = vadd.f32 %v370, %v377
    %v382 = vadd.f32 %v371, %v377
    %v383 = vmax.f32 %v379, 0.0
    %v384 = vmax.f32 %v380, 0.0
    %v385 = vmax.f32 %v381, 0.0
    %v386 = vmax.f32 %v382, 0.0
    %v387 = vpack.c.bf16 %v384, %v383
    %v388 = vpack.c.bf16 %v386, %v385
    %v391 = vunpack.c.l.b16 %v387
    %v392 = vunpack.c.h.b16 %v387
    %v393 = vunpack.c.l.b16 %v388
    %v394 = vunpack.c.h.b16 %v388
    %v395 = vpack.c.b16 %v391, %v391
    %v396 = vpack.c.b16 %v392, %v392
    %v397 = vpack.c.b16 %v393, %v393
    %v398 = vpack.c.b16 %v394, %v394
    %403 = vst [vmem:[%s3] sm:$0xf] %v395
    %404 = vst [vmem:[%s3 + $0x4] sm:$0xf] %v396
    %405 = vst [vmem:[%s3 + $0x8] sm:$0xf] %v397
    %406 = vst [vmem:[%s3 + $0xc] sm:$0xf] %v398
  $region21: #{lip_sync_forward.11} parent=0 // pred_fallthru
    _
  // Predicated region
  $region22: #{lip_sync_forward.11} parent=0 // pred_check
    _
  $region23: #{lip_sync_forward.11} parent=0 // pred_check_branch
    %408 = sbr.rel (0) target = $region25
  $region24: #{lip_sync_forward.11} parent=0 // pred_region
    _
  $region25: #{lip_sync_forward.11} parent=0 // pred_fallthru
    _
  // Predicated region
  $region26: #{lip_sync_forward.11} parent=0 // pred_check
    _
  $region27: #{lip_sync_forward.11} parent=0 // pred_check_branch
    %410 = sbr.rel (0) target = $region29
  $region28: #{lip_sync_forward.11} parent=0 // pred_region
    _
  $region29: #{lip_sync_forward.11} parent=0 // pred_fallthru
    _

// kernel: lip_sync_forward.12
$region0: #{lip_sync_forward.12}
  #allocation0 [shape = 'u32[]', space=smem, size = 0x4, offset = 0x4, fixed_abs, tag = 'smem constant byte address 0x4 - core index']
  #allocation1 [shape = 'u32[144,128]{1,0:T(1,128)}', space=vmem, size = 0x12000, scoped, tag = 'internal scratch']
  #allocation2 [shape = 'f32[16,128]{1,0:T(8,128)}', space=vmem, size = 0x2000, scoped, tag = 'scratch operand']
  %s0 = inlined_call_operand.vmem [shape: bf16[16,640], index: 0, kind: input, shape index: {}]
  %s1 = inlined_call_operand.vmem [shape: bf16[640,128], index: 1, kind: input, shape index: {}]
  %s2 = inlined_call_operand.vmem [shape: f32[1,128], index: 2, kind: input, shape index: {}]
  %s3 = inlined_call_operand.vmem [shape: bf16[16,128], index: 3, kind: output, shape index: {}]
  %s4 = sld [smem:[#allocation0]]
  $region30: #{lip_sync_forward.12} parent=0
    _
  %s6 = ssub.s32 1, %s4
  %s7 = scalar_select 0, %s6, %s4
  // Predicated region
  $region2: #{lip_sync_forward.12} parent=0 // pred_check
    _
  $region3: #{lip_sync_forward.12} parent=0 // pred_check_branch
    %9 = sbr.rel (0) target = $region5
  $region4: #{lip_sync_forward.12} parent=0 // pred_region
    _
  $region5: #{lip_sync_forward.12} parent=0 // pred_fallthru
    _
  // Predicated region
  $region6: #{lip_sync_forward.12} parent=0 // pred_check
    _
  $region7: #{lip_sync_forward.12} parent=0 // pred_check_branch
    %11 = sbr.rel (0) target = $region9
  $region8: #{lip_sync_forward.12} parent=0 // pred_region
    _
  $region9: #{lip_sync_forward.12} parent=0 // pred_fallthru
    _
  // Predicated region
  $region10: #{lip_sync_forward.12} parent=0 // pred_check
    _
  $region11: #{lip_sync_forward.12} parent=0 // pred_check_branch
    %13 = sbr.rel (0) target = $region13
  $region12: #{lip_sync_forward.12} parent=0 // pred_region
    _
  $region13: #{lip_sync_forward.12} parent=0 // pred_fallthru
    _
  %p15 = scmp.eq.s32.totalorder 0, 0
  // Predicated region
  $region14: #{lip_sync_forward.12} parent=0 // pred_check
    %p16 = pneg %p15
  $region15: #{lip_sync_forward.12} parent=0 // pred_check_branch
    %18 = sbr.rel (%p16) target = $region17
  $region16: #{lip_sync_forward.12} parent=0 // pred_region
    %19 = vst [vmem:[#allocation2] sm:$0xff] 0.0
    %20 = vst [vmem:[#allocation2 + $0x8] sm:$0xff] 0.0
  $region17: #{lip_sync_forward.12} parent=0 // pred_fallthru
    _
  %v21 = vld [vmem:[#allocation2] sm:$0xff]
  %v22 = vld [vmem:[#allocation2 + $0x8] sm:$0xff]
  %v23 = vld [vmem:[%s0] sm:$0xff]
  %v24 = vld [vmem:[%s0 + $0x8] sm:$0xff]
  %v25 = vld [vmem:[%s0 + $0x10] sm:$0xf]
  %v26 = vld [vmem:[%s0 + $0x14] sm:$0xff]
  %v27 = vld [vmem:[%s0 + $0x1c] sm:$0xff]
  %v28 = vld [vmem:[%s0 + $0x24] sm:$0xf]
  %v29 = vld [vmem:[%s1] sm:$0xf]
  %v30 = vld [vmem:[%s1 + $0x4] sm:$0xf]
  %v31 = vld [vmem:[%s1 + $0x8] sm:$0xf]
  %v32 = vld [vmem:[%s1 + $0xc] sm:$0xf]
  %v33 = vld [vmem:[%s1 + $0x10] sm:$0xf]
  %v34 = vld [vmem:[%s1 + $0x14] sm:$0xf]
  %v35 = vld [vmem:[%s1 + $0x18] sm:$0xf]
  %v36 = vld [vmem:[%s1 + $0x1c] sm:$0xf]
  %v37 = vld [vmem:[%s1 + $0x20] sm:$0xf]
  %v38 = vld [vmem:[%s1 + $0x24] sm:$0xf]
  %v39 = vld [vmem:[%s1 + $0x28] sm:$0xf]
  %v40 = vld [vmem:[%s1 + $0x2c] sm:$0xf]
  %v41 = vld [vmem:[%s1 + $0x30] sm:$0xf]
  %v42 = vld [vmem:[%s1 + $0x34] sm:$0xf]
  %v43 = vld [vmem:[%s1 + $0x38] sm:$0xf]
  %v44 = vld [vmem:[%s1 + $0x3c] sm:$0xf]
  %v45 = vld [vmem:[%s1 + $0x40] sm:$0xf]
  %v46 = vld [vmem:[%s1 + $0x44] sm:$0xf]
  %v47 = vld [vmem:[%s1 + $0x48] sm:$0xf]
  %v48 = vld [vmem:[%s1 + $0x4c] sm:$0xf]
  %v49 = vld [vmem:[%s1 + $0x50] sm:$0xf]
  %v50 = vld [vmem:[%s1 + $0x54] sm:$0xf]
  %v51 = vld [vmem:[%s1 + $0x58] sm:$0xf]
  %v52 = vld [vmem:[%s1 + $0x5c] sm:$0xf]
  %v53 = vld [vmem:[%s1 + $0x60] sm:$0xf]
  %v54 = vld [vmem:[%s1 + $0x64] sm:$0xf]
  %v55 = vld [vmem:[%s1 + $0x68] sm:$0xf]
  %v56 = vld [vmem:[%s1 + $0x6c] sm:$0xf]
  %v57 = vld [vmem:[%s1 + $0x70] sm:$0xf]
  %v58 = vld [vmem:[%s1 + $0x74] sm:$0xf]
  %v59 = vld [vmem:[%s1 + $0x78] sm:$0xf]
  %v60 = vld [vmem:[%s1 + $0x7c] sm:$0xf]
  %v61 = vld [vmem:[%s1 + $0x80] sm:$0xf]
  %v62 = vld [vmem:[%s1 + $0x84] sm:$0xf]
  %v63 = vld [vmem:[%s1 + $0x88] sm:$0xf]
  %v64 = vld [vmem:[%s1 + $0x8c] sm:$0xf]
  %v65 = vld [vmem:[%s1 + $0x90] sm:$0xf]
  %v66 = vld [vmem:[%s1 + $0x94] sm:$0xf]
  %v67 = vld [vmem:[%s1 + $0x98] sm:$0xf]
  %v68 = vld [vmem:[%s1 + $0x9c] sm:$0xf]
  %v69 = vld [vmem:[%s1 + $0xa0] sm:$0xf]
  %v70 = vld [vmem:[%s1 + $0xa4] sm:$0xf]
  %v71 = vld [vmem:[%s1 + $0xa8] sm:$0xf]
  %v72 = vld [vmem:[%s1 + $0xac] sm:$0xf]
  %v73 = vld [vmem:[%s1 + $0xb0] sm:$0xf]
  %v74 = vld [vmem:[%s1 + $0xb4] sm:$0xf]
  %v75 = vld [vmem:[%s1 + $0xb8] sm:$0xf]
  %v76 = vld [vmem:[%s1 + $0xbc] sm:$0xf]
  %v77 = vld [vmem:[%s1 + $0xc0] sm:$0xf]
  %v78 = vld [vmem:[%s1 + $0xc4] sm:$0xf]
  %v79 = vld [vmem:[%s1 + $0xc8] sm:$0xf]
  %v80 = vld [vmem:[%s1 + $0xcc] sm:$0xf]
  %v81 = vld [vmem:[%s1 + $0xd0] sm:$0xf]
  %v82 = vld [vmem:[%s1 + $0xd4] sm:$0xf]
  %v83 = vld [vmem:[%s1 + $0xd8] sm:$0xf]
  %v84 = vld [vmem:[%s1 + $0xdc] sm:$0xf]
  %v85 = vld [vmem:[%s1 + $0xe0] sm:$0xf]
  %v86 = vld [vmem:[%s1 + $0xe4] sm:$0xf]
  %v87 = vld [vmem:[%s1 + $0xe8] sm:$0xf]
  %v88 = vld [vmem:[%s1 + $0xec] sm:$0xf]
  %v89 = vld [vmem:[%s1 + $0xf0] sm:$0xf]
  %v90 = vld [vmem:[%s1 + $0xf4] sm:$0xf]
  %v91 = vld [vmem:[%s1 + $0xf8] sm:$0xf]
  %v92 = vld [vmem:[%s1 + $0xfc] sm:$0xf]
  %v93 = vld [vmem:[%s1 + $0x100] sm:$0xf]
  %v94 = vld [vmem:[%s1 + $0x104] sm:$0xf]
  %v95 = vld [vmem:[%s1 + $0x108] sm:$0xf]
  %v96 = vld [vmem:[%s1 + $0x10c] sm:$0xf]
  %v97 = vld [vmem:[%s1 + $0x110] sm:$0xf]
  %v98 = vld [vmem:[%s1 + $0x114] sm:$0xf]
  %v99 = vld [vmem:[%s1 + $0x118] sm:$0xf]
  %v100 = vld [vmem:[%s1 + $0x11c] sm:$0xf]
  %v101 = vld [vmem:[%s1 + $0x120] sm:$0xf]
  %v102 = vld [vmem:[%s1 + $0x124] sm:$0xf]
  %v103 = vld [vmem:[%s1 + $0x128] sm:$0xf]
  %v104 = vld [vmem:[%s1 + $0x12c] sm:$0xf]
  %v105 = vld [vmem:[%s1 + $0x130] sm:$0xf]
  %v106 = vld [vmem:[%s1 + $0x134] sm:$0xf]
  %v107 = vld [vmem:[%s1 + $0x138] sm:$0xf]
  %v108 = vld [vmem:[%s1 + $0x13c] sm:$0xf]
  %v115 = vunpack.c.l.b16 %v23
  %v116 = vunpack.c.h.b16 %v23
  %v117 = vunpack.c.l.b16 %v24
  %v118 = vunpack.c.h.b16 %v24
  %v119 = vunpack.c.l.b16 %v25
  %v120 = vunpack.c.l.b16 %v26
  %v121 = vunpack.c.h.b16 %v26
  %v122 = vunpack.c.l.b16 %v27
  %v123 = vunpack.c.h.b16 %v27
  %v124 = vunpack.c.l.b16 %v28
  %v125 = vpack.c.b16 %v120, %v115
  %v126 = vpack.c.b16 %v121, %v116
  %v127 = vpack.c.b16 %v122, %v117
  %v128 = vpack.c.b16 %v123, %v118
  %v129 = vpack.c.b16 %v124, %v119
  %v215 = vunpack.c.l.b16 %v29
  %v216 = vunpack.c.l.b16 %v30
  %v217 = vunpack.c.l.b16 %v31
  %v218 = vunpack.c.l.b16 %v32
  %v219 = vunpack.c.l.b16 %v33
  %v220 = vunpack.c.l.b16 %v34
  %v221 = vunpack.c.l.b16 %v35
  %v222 = vunpack.c.l.b16 %v36
  %v223 = vunpack.c.l.b16 %v37
  %v224 = vunpack.c.l.b16 %v38
  %v225 = vunpack.c.l.b16 %v39
  %v226 = vunpack.c.l.b16 %v40
  %v227 = vunpack.c.l.b16 %v41
  %v228 = vunpack.c.l.b16 %v42
  %v229 = vunpack.c.l.b16 %v43
  %v230 = vunpack.c.l.b16 %v44
  %v231 = vunpack.c.l.b16 %v45
  %v232 = vunpack.c.l.b16 %v46
  %v233 = vunpack.c.l.b16 %v47
  %v234 = vunpack.c.l.b16 %v48
  %v235 = vunpack.c.l.b16 %v49
  %v236 = vunpack.c.l.b16 %v50
  %v237 = vunpack.c.l.b16 %v51
  %v238 = vunpack.c.l.b16 %v52
  %v239 = vunpack.c.l.b16 %v53
  %v240 = vunpack.c.l.b16 %v54
  %v241 = vunpack.c.l.b16 %v55
  %v242 = vunpack.c.l.b16 %v56
  %v243 = vunpack.c.l.b16 %v57
  %v244 = vunpack.c.l.b16 %v58
  %v245 = vunpack.c.l.b16 %v59
  %v246 = vunpack.c.l.b16 %v60
  %v247 = vunpack.c.l.b16 %v61
  %v248 = vunpack.c.l.b16 %v62
  %v249 = vunpack.c.l.b16 %v63
  %v250 = vunpack.c.l.b16 %v64
  %v251 = vunpack.c.l.b16 %v65
  %v252 = vunpack.c.l.b16 %v66
  %v253 = vunpack.c.l.b16 %v67
  %v254 = vunpack.c.l.b16 %v68
  %v255 = vunpack.c.l.b16 %v69
  %v256 = vunpack.c.l.b16 %v70
  %v257 = vunpack.c.l.b16 %v71
  %v258 = vunpack.c.l.b16 %v72
  %v259 = vunpack.c.l.b16 %v73
  %v260 = vunpack.c.l.b16 %v74
  %v261 = vunpack.c.l.b16 %v75
  %v262 = vunpack.c.l.b16 %v76
  %v263 = vunpack.c.l.b16 %v77
  %v264 = vunpack.c.l.b16 %v78
  %v265 = vunpack.c.l.b16 %v79
  %v266 = vunpack.c.l.b16 %v80
  %v267 = vunpack.c.l.b16 %v81
  %v268 = vunpack.c.l.b16 %v82
  %v269 = vunpack.c.l.b16 %v83
  %v270 = vunpack.c.l.b16 %v84
  %v271 = vunpack.c.l.b16 %v85
  %v272 = vunpack.c.l.b16 %v86
  %v273 = vunpack.c.l.b16 %v87
  %v274 = vunpack.c.l.b16 %v88
  %v275 = vunpack.c.l.b16 %v89
  %v276 = vunpack.c.l.b16 %v90
  %v277 = vunpack.c.l.b16 %v91
  %v278 = vunpack.c.l.b16 %v92
  %v279 = vunpack.c.l.b16 %v93
  %v280 = vunpack.c.l.b16 %v94
  %v281 = vunpack.c.l.b16 %v95
  %v282 = vunpack.c.l.b16 %v96
  %v283 = vunpack.c.l.b16 %v97
  %v284 = vunpack.c.l.b16 %v98
  %v285 = vunpack.c.l.b16 %v99
  %v286 = vunpack.c.l.b16 %v100
  %v287 = vunpack.c.l.b16 %v101
  %v288 = vunpack.c.l.b16 %v102
  %v289 = vunpack.c.l.b16 %v103
  %v290 = vunpack.c.l.b16 %v104
  %v291 = vunpack.c.l.b16 %v105
  %v292 = vunpack.c.l.b16 %v106
  %v293 = vunpack.c.l.b16 %v107
  %v294 = vunpack.c.l.b16 %v108
  %v295 = vpack.c.b16 %v216, %v215
  %v296 = vpack.c.b16 %v218, %v217
  %v297 = vpack.c.b16 %v220, %v219
  %v298 = vpack.c.b16 %v222, %v221
  %v299 = vpack.c.b16 %v224, %v223
  %v300 = vpack.c.b16 %v226, %v225
  %v301 = vpack.c.b16 %v228, %v227
  %v302 = vpack.c.b16 %v230, %v229
  %v303 = vpack.c.b16 %v232, %v231
  %v304 = vpack.c.b16 %v234, %v233
  %v305 = vpack.c.b16 %v236, %v235
  %v306 = vpack.c.b16 %v238, %v237
  %v307 = vpack.c.b16 %v240, %v239
  %v308 = vpack.c.b16 %v242, %v241
  %v309 = vpack.c.b16 %v244, %v243
  %v310 = vpack.c.b16 %v246, %v245
  %v311 = vpack.c.b16 %v248, %v247
  %v312 = vpack.c.b16 %v250, %v249
  %v313 = vpack.c.b16 %v252, %v251
  %v314 = vpack.c.b16 %v254, %v253
  %v315 = vpack.c.b16 %v256, %v255
  %v316 = vpack.c.b16 %v258, %v257
  %v317 = vpack.c.b16 %v260, %v259
  %v318 = vpack.c.b16 %v262, %v261
  %v319 = vpack.c.b16 %v264, %v263
  %v320 = vpack.c.b16 %v266, %v265
  %v321 = vpack.c.b16 %v268, %v267
  %v322 = vpack.c.b16 %v270, %v269
  %v323 = vpack.c.b16 %v272, %v271
  %v324 = vpack.c.b16 %v274, %v273
  %v325 = vpack.c.b16 %v276, %v275
  %v326 = vpack.c.b16 %v278, %v277
  %v327 = vpack.c.b16 %v280, %v279
  %v328 = vpack.c.b16 %v282, %v281
  %v329 = vpack.c.b16 %v284, %v283
  %v330 = vpack.c.b16 %v286, %v285
  %v331 = vpack.c.b16 %v288, %v287
  %v332 = vpack.c.b16 %v290, %v289
  %v333 = vpack.c.b16 %v292, %v291
  %v334 = vpack.c.b16 %v294, %v293
  %375 = vmatprep.subr.bf16.mxu0 0
  %376 = vmatpush1.bf16.msra.mxu0 %v295
  %377 = vmatprep.subr.bf16.mxu0 0
  %378 = vmatpush1.bf16.msra.mxu0 %v296
  %379 = vmatprep.subr.bf16.mxu0 0
  %380 = vmatpush1.bf16.msra.mxu0 %v297
  %381 = vmatprep.subr.bf16.mxu0 0
  %382 = vmatpush1.bf16.msra.mxu0 %v298
  %383 = vmatprep.subr.bf16.mxu0 0
  %384 = vmatpush1.bf16.msra.mxu0 %v299
  %385 = vmatprep.subr.bf16.mxu0 0
  %386 = vmatpush1.bf16.msra.mxu0 %v300
  %387 = vmatprep.subr.bf16.mxu0 0
  %388 = vmatpush1.bf16.msra.mxu0 %v301
  %389 = vmatprep.subr.bf16.mxu0 0
  %390 = vmatpush1.bf16.msra.mxu0 %v302
  %391 = vmatprep.subr.bf16.mxu0 0
  %392 = vmatpush1.bf16.msra.mxu0 %v303
  %393 = vmatprep.subr.bf16.mxu0 0
  %394 = vmatpush1.bf16.msra.mxu0 %v304
  %395 = vmatprep.subr.bf16.mxu0 0
  %396 = vmatpush1.bf16.msra.mxu0 %v305
  %397 = vmatprep.subr.bf16.mxu0 0
  %398 = vmatpush1.bf16.msra.mxu0 %v306
  %399 = vmatprep.subr.bf16.mxu0 0
  %400 = vmatpush1.bf16.msra.mxu0 %v307
  %401 = vmatprep.subr.bf16.mxu0 0
  %402 = vmatpush1.bf16.msra.mxu0 %v308
  %403 = vmatprep.subr.bf16.mxu0 0
  %404 = vmatpush1.bf16.msra.mxu0 %v309
  %405 = vmatprep.subr.bf16.mxu0 0
  %406 = vmatpush1.bf16.msra.mxu0 %v310
  %407 = vmatprep.mubr.bf16.mxu0 %v126
  %408 = vmatmul.mubr.bf16.gmra.mrb[0].mxu0 %v125
  %v409 = vpop.f32.mrb[0].mxu0
  %v410 = vadd.f32 0.0, %v409
  %v411 = vpop.f32.mrb[0].mxu0
  %v412 = vpop.f32.mrb[0].mxu0
  %v413 = vadd.f32 0.0, %v412
  %v414 = vpop.f32.mrb[0].mxu0
  %415 = vdwg.mxu0
  %416 = vmatprep.subr.bf16.mxu0 0
  %417 = vmatpush1.bf16.msra.mxu0 %v311
  %418 = vmatprep.subr.bf16.mxu0 0
  %419 = vmatpush1.bf16.msra.mxu0 %v312
  %420 = vmatprep.subr.bf16.mxu0 0
  %421 = vmatpush1.bf16.msra.mxu0 %v313
  %422 = vmatprep.subr.bf16.mxu0 0
  %423 = vmatpush1.bf16.msra.mxu0 %v314
  %424 = vmatprep.subr.bf16.mxu0 0
  %425 = vmatpush1.bf16.msra.mxu0 %v315
  %426 = vmatprep.subr.bf16.mxu0 0
  %427 = vmatpush1.bf16.msra.mxu0 %v316
  %428 = vmatprep.subr.bf16.mxu0 0
  %429 = vmatpush1.bf16.msra.mxu0 %v317
  %430 = vmatprep.subr.bf16.mxu0 0
  %431 = vmatpush1.bf16.msra.mxu0 %v318
  %432 = vmatprep.subr.bf16.mxu0 0
  %433 = vmatpush1.bf16.msra.mxu0 %v319
  %434 = vmatprep.subr.bf16.mxu0 0
  %435 = vmatpush1.bf16.msra.mxu0 %v320
  %436 = vmatprep.subr.bf16.mxu0 0
  %437 = vmatpush1.bf16.msra.mxu0 %v321
  %438 = vmatprep.subr.bf16.mxu0 0
  %439 = vmatpush1.bf16.msra.mxu0 %v322
  %440 = vmatprep.subr.bf16.mxu0 0
  %441 = vmatpush1.bf16.msra.mxu0 %v323
  %442 = vmatprep.subr.bf16.mxu0 0
  %443 = vmatpush1.bf16.msra.mxu0 %v324
  %444 = vmatprep.subr.bf16.mxu0 0
  %445 = vmatpush1.bf16.msra.mxu0 %v325
  %446 = vmatprep.subr.bf16.mxu0 0
  %447 = vmatpush1.bf16.msra.mxu0 %v326
  %448 = vmatprep.mubr.bf16.mxu0 %v128
  %449 = vmatmul.mubr.bf16.gmra.mrb[0].mxu0 %v127
  %v450 = vpop.f32.mrb[0].mxu0
  %v451 = vadd.f32 %v410, %v450
  %v452 = vpop.f32.mrb[0].mxu0
  %v453 = vpop.f32.mrb[0].mxu0
  %v454 = vadd.f32 %v413, %v453
  %v455 = vpop.f32.mrb[0].mxu0
  %456 = vdwg.mxu0
  %457 = vmatprep.subr.bf16.mxu0 0
  %458 = vmatpush1.bf16.msra.mxu0 %v327
  %459 = vmatprep.subr.bf16.mxu0 0
  %460 = vmatpush1.bf16.msra.mxu0 %v328
  %461 = vmatprep.subr.bf16.mxu0 0
  %462 = vmatpush1.bf16.msra.mxu0 %v329
  %463 = vmatprep.subr.bf16.mxu0 0
  %464 = vmatpush1.bf16.msra.mxu0 %v330
  %465 = vmatprep.subr.bf16.mxu0 0
  %466 = vmatpush1.bf16.msra.mxu0 %v331
  %467 = vmatprep.subr.bf16.mxu0 0
  %468 = vmatpush1.bf16.msra.mxu0 %v332
  %469 = vmatprep.subr.bf16.mxu0 0
  %470 = vmatpush1.bf16.msra.mxu0 %v333
  %471 = vmatprep.subr.bf16.mxu0 0
  %472 = vmatpush1.bf16.msra.mxu0 %v334
  %473 = vmatprep.subr.bf16.mxu0 0
  %474 = vmatpush1.bf16.msra.mxu0 0
  %475 = vmatprep.subr.bf16.mxu0 0
  %476 = vmatpush1.bf16.msra.mxu0 0
  %477 = vmatprep.subr.bf16.mxu0 0
  %478 = vmatpush1.bf16.msra.mxu0 0
  %479 = vmatprep.subr.bf16.mxu0 0
  %480 = vmatpush1.bf16.msra.mxu0 0
  %481 = vmatprep.subr.bf16.mxu0 0
  %482 = vmatpush1.bf16.msra.mxu0 0
  %483 = vmatprep.subr.bf16.mxu0 0
  %484 = vmatpush1.bf16.msra.mxu0 0
  %485 = vmatprep.subr.bf16.mxu0 0
  %486 = vmatpush1.bf16.msra.mxu0 0
  %487 = vmatprep.subr.bf16.mxu0 0
  %488 = vmatpush1.bf16.msra.mxu0 0
  %489 = vmatprep.mubr.bf16.mxu0 0
  %490 = vmatmul.mubr.bf16.gmra.mrb[0].mxu0 %v129
  %v491 = vpop.f32.mrb[0].mxu0
  %v492 = vadd.f32 %v451, %v491
  %v493 = vpop.f32.mrb[0].mxu0
  %v494 = vpop.f32.mrb[0].mxu0
  %v495 = vadd.f32 %v454, %v494
  %v496 = vpop.f32.mrb[0].mxu0
  %497 = vdwg.mxu0
  %v498 = vadd.f32 %v21, %v492
  %v499 = vadd.f32 %v22, %v495
  %500 = vst [vmem:[#allocation2] sm:$0xff] %v498
  %501 = vst [vmem:[#allocation2 + $0x8] sm:$0xff] %v499
  // Predicated region
  $region18: #{lip_sync_forward.12} parent=0 // pred_check
    %p502 = pneg %p15
  $region19: #{lip_sync_forward.12} parent=0 // pred_check_branch
    %504 = sbr.rel (%p502) target = $region21
  $region20: #{lip_sync_forward.12} parent=0 // pred_region
    %v505 = vld [vmem:[#allocation2] sm:$0xff]
    %v506 = vld [vmem:[#allocation2 + $0x8] sm:$0xff]
    %v507 = vld [vmem:[%s2] sm:$0x1]
    %v509 = vlaneseq
    %v510 = vshrl.u32 %v509, 7
    %v511 = vsub.s32 0, %v510
    %v512 = vrot.slane %v507, %v511
    %v514 = vadd.f32 %v505, %v512
    %v515 = vadd.f32 %v506, %v512
    %v516 = vmax.f32 %v514, 0.0
    %v517 = vmax.f32 %v515, 0.0
    %v518 = vpack.c.bf16 %v517, %v516
    %v520 = vunpack.c.l.b16 %v518
    %v521 = vunpack.c.h.b16 %v518
    %v522 = vpack.c.b16 %v520, %v520
    %v523 = vpack.c.b16 %v521, %v521
    %526 = vst [vmem:[%s3] sm:$0xf] %v522
    %527 = vst [vmem:[%s3 + $0x4] sm:$0xf] %v523
  $region21: #{lip_sync_forward.12} parent=0 // pred_fallthru
    _
  // Predicated region
  $region22: #{lip_sync_forward.12} parent=0 // pred_check
    _
  $region23: #{lip_sync_forward.12} parent=0 // pred_check_branch
    %529 = sbr.rel (0) target = $region25
  $region24: #{lip_sync_forward.12} parent=0 // pred_region
    _
  $region25: #{lip_sync_forward.12} parent=0 // pred_fallthru
    _
  // Predicated region
  $region26: #{lip_sync_forward.12} parent=0 // pred_check
    _
  $region27: #{lip_sync_forward.12} parent=0 // pred_check_branch
    %531 = sbr.rel (0) target = $region29
  $region28: #{lip_sync_forward.12} parent=0 // pred_region
    _
  $region29: #{lip_sync_forward.12} parent=0 // pred_fallthru
    _

// kernel: lip_sync_forward.16
$region0: #{lip_sync_forward.16}
  #allocation0 [shape = 'u32[]', space=smem, size = 0x4, offset = 0x4, fixed_abs, tag = 'smem constant byte address 0x4 - core index']
  #allocation1 [shape = 'u32[144,128]{1,0:T(1,128)}', space=vmem, size = 0x12000, scoped, tag = 'internal scratch']
  #allocation2 [shape = 'f32[16,128]{1,0:T(8,128)}', space=vmem, size = 0x2000, scoped, tag = 'scratch operand']
  %s0 = inlined_call_operand.vmem [shape: bf16[16,2304], index: 0, kind: input, shape index: {}]
  %s1 = inlined_call_operand.vmem [shape: bf16[2304,256], index: 1, kind: input, shape index: {}]
  %s2 = inlined_call_operand.vmem [shape: f32[1,256], index: 2, kind: input, shape index: {}]
  %s3 = inlined_call_operand.vmem [shape: bf16[16,256], index: 3, kind: output, shape index: {}]
  %s4 = sld [smem:[#allocation0]]
  $region157: #{lip_sync_forward.16} parent=0
    _
  %s6 = ssub.s32 1, %s4
  %s7 = scalar_select 0, %s6, %s4
  $region1: #{lip_sync_forward.16} parent=0
    #allocation3 [shape = 'u8[73728]{0}', space=vmem, size = 0x12000, scoped, tag = 'input window, operand 0']
    #allocation4 [shape = 'u8[589824]{0}', space=vmem, size = 0x90000, scoped, tag = 'input window, operand 1']
    #allocation5 [shape = 'u8[8192]{0}', space=vmem, size = 0x2000, scoped, tag = 'output window, operand 0']
    loop: start=0, step=1, limit=6
    $region2: #{lip_sync_forward.16} parent=1 // loop_pre_header
      _
    $region3: #{lip_sync_forward.16} parent=1 // loop_header
      %s9 = sphi 0, %s13
      %p10 = scmp.ge.s32.totalorder %s9, 6
      %s16 = sphi 0, %s35
      %s17 = sphi 0, %s31
      %s18 = sphi 0, %s27
      %s19 = sphi 0, %s16
      %s20 = sphi 0, %s17
      %s21 = sphi 0, %s18
      %s22 = sphi 0, %s19
      %s23 = sphi 0, %s20
      %s24 = sphi 0, %s21
      %s40 = sphi 0, %s42
      %s43 = sphi 0, %s40
      %s44 = sphi 0, %s43
      %s60 = sphi 0, %s44
      %s68 = sphi 0, %s70
      %s71 = sphi 0, %s68
      %s72 = sphi 0, %s71
      %s88 = sphi 0, %s72
      %s94 = sphi 0, %s96
      %s97 = sphi 0, %s94
      %s98 = sphi 0, %s97
      %s114 = sphi 0, %s98
      %s122 = sphi 0, %s124
      %s125 = sphi 0, %s122
      %s126 = sphi 0, %s125
      %s142 = sphi 0, %s126
    $region4: #{lip_sync_forward.16} parent=1 // loop_header_branch
      %12 = sbr.rel (%p10) target = $region8
    $region5: #{lip_sync_forward.16} parent=1 // loop_body
      %s14 = ssub.s32 %s9, 1
      %s15 = ssub.s32 %s9, 2
      %s25 = sadd.s32 1, %s18
      %p26 = scmp.ge.s32.totalorder %s25, 2
      %s27 = scalar_select %p26, 0, %s25
      %s28 = sadd.s32 1, %s17
      %s29 = scalar_select %p26, %s28, %s17
      %p30 = scmp.ge.s32.totalorder %s29, 2
      %s31 = scalar_select %p30, 0, %s29
      %s32 = sadd.s32 1, %s16
      %s33 = scalar_select %p30, %s32, %s16
      %p34 = scmp.ge.s32.totalorder %s33, 1
      %s35 = scalar_select %p34, 0, %s33
      %s36 = ssub.s32 %s16, %s35
      %s37 = ssub.s32 %s18, %s27
      %s38 = sor.u32 %s36, %s37
      %p39 = scmp.eq.s32.totalorder %s38, 0
      %s41 = sadd.s32 %s40, 1
      %s42 = scalar_select %p39, %s40, %s41
      %p45 = pneg %p39
      %p46 = scmp.eq.s32.totalorder %s9, 3
      %p47 = por %p45, %p46
      %p48 = scmp.ne.s32.totalorder %s40, %s43
      %p49 = scmp.eq.s32.totalorder %s9, 0
      %p50 = por %p48, %p49
      %p51 = scmp.ne.s32.totalorder %s40, %s43
      %p52 = scmp.eq.s32.totalorder %s14, 3
      %p53 = por %p51, %p52
      %p54 = scmp.ne.s32.totalorder %s43, %s44
      %p55 = scmp.eq.s32.totalorder %s14, 0
      %p56 = por %p54, %p55
      %p57 = scmp.ne.s32.totalorder %s43, %s44
      %p58 = scmp.eq.s32.totalorder %s15, 3
      %p59 = por %p57, %p58
      %p61 = scmp.ne.s32.totalorder %s44, %s60
      %p62 = scmp.eq.s32.totalorder %s15, 0
      %p63 = por %p61, %p62
      %s64 = ssub.s32 %s18, %s27
      %s65 = ssub.s32 %s17, %s31
      %s66 = sor.u32 %s64, %s65
      %p67 = scmp.eq.s32.totalorder %s66, 0
      %s69 = sadd.s32 %s68, 1
      %s70 = scalar_select %p67, %s68, %s69
      %p73 = pneg %p67
      %p74 = scmp.eq.s32.totalorder %s9, 3
      %p75 = por %p73, %p74
      %p76 = scmp.ne.s32.totalorder %s68, %s71
      %p77 = scmp.eq.s32.totalorder %s9, 0
      %p78 = por %p76, %p77
      %p79 = scmp.ne.s32.totalorder %s68, %s71
      %p80 = scmp.eq.s32.totalorder %s14, 3
      %p81 = por %p79, %p80
      %p82 = scmp.ne.s32.totalorder %s71, %s72
      %p83 = scmp.eq.s32.totalorder %s14, 0
      %p84 = por %p82, %p83
      %p85 = scmp.ne.s32.totalorder %s71, %s72
      %p86 = scmp.eq.s32.totalorder %s15, 3
      %p87 = por %p85, %p86
      %p89 = scmp.ne.s32.totalorder %s72, %s88
      %p90 = scmp.eq.s32.totalorder %s15, 0
      %p91 = por %p89, %p90
      %s92 = ssub.s32 %s17, %s31
      %p93 = scmp.eq.s32.totalorder %s92, 0
      %s95 = sadd.s32 %s94, 1
      %s96 = scalar_select %p93, %s94, %s95
      %p99 = pneg %p93
      %p100 = scmp.eq.s32.totalorder %s9, 3
      %p101 = por %p99, %p100
      %p102 = scmp.ne.s32.totalorder %s94, %s97
      %p103 = scmp.eq.s32.totalorder %s9, 0
      %p104 = por %p102, %p103
      %p105 = scmp.ne.s32.totalorder %s94, %s97
      %p106 = scmp.eq.s32.totalorder %s14, 3
      %p107 = por %p105, %p106
      %p108 = scmp.ne.s32.totalorder %s97, %s98
      %p109 = scmp.eq.s32.totalorder %s14, 0
      %p110 = por %p108, %p109
      %p111 = scmp.ne.s32.totalorder %s97, %s98
      %p112 = scmp.eq.s32.totalorder %s15, 3
      %p113 = por %p111, %p112
      %p115 = scmp.ne.s32.totalorder %s98, %s114
      %p116 = scmp.eq.s32.totalorder %s15, 0
      %p117 = por %p115, %p116
      %s118 = ssub.s32 %s16, %s35
      %s119 = ssub.s32 %s17, %s31
      %s120 = sor.u32 %s118, %s119
      %p121 = scmp.eq.s32.totalorder %s120, 0
      %s123 = sadd.s32 %s122, 1
      %s124 = scalar_select %p121, %s122, %s123
      %p127 = pneg %p121
      %p128 = scmp.eq.s32.totalorder %s9, 3
      %p129 = por %p127, %p128
      %p130 = scmp.ne.s32.totalorder %s122, %s125
      %p131 = scmp.eq.s32.totalorder %s9, 0
      %p132 = por %p130, %p131
      %p133 = scmp.ne.s32.totalorder %s122, %s125
      %p134 = scmp.eq.s32.totalorder %s14, 3
      %p135 = por %p133, %p134
      %p136 = scmp.ne.s32.totalorder %s125, %s126
      %p137 = scmp.eq.s32.totalorder %s14, 0
      %p138 = por %p136, %p137
      %p139 = scmp.ne.s32.totalorder %s125, %s126
      %p140 = scmp.eq.s32.totalorder %s15, 3
      %p141 = por %p139, %p140
      %p143 = scmp.ne.s32.totalorder %s126, %s142
      %p144 = scmp.eq.s32.totalorder %s15, 0
      %p145 = por %p143, %p144
      %p146 = scmp.le.s32.totalorder 1, %s9
      %p147 = scmp.lt.s32.totalorder %s9, 5
      %p148 = pnand %p146, %p147
      %p149 = pneg %p148
      // Predicated region
      $region9: #{lip_sync_forward.16} parent=5 // pred_check
        _
      $region10: #{lip_sync_forward.16} parent=5 // pred_check_branch
        %151 = sbr.rel (%p148) target = $region12
      $region11: #{lip_sync_forward.16} parent=5 // pred_region
        %s152 = ssub.s32 %s9, 1
      $region12: #{lip_sync_forward.16} parent=5 // pred_fallthru
        _
      %p153 = scmp.lt.s32.totalorder %s9, 4
      // Predicated region
      $region13: #{lip_sync_forward.16} parent=5 // pred_check
        %p154 = pneg %p153
      $region14: #{lip_sync_forward.16} parent=5 // pred_check_branch
        %156 = sbr.rel (%p154) target = $region16
      $region15: #{lip_sync_forward.16} parent=5 // pred_region
        // Predicated region
        $region17: #{lip_sync_forward.16} parent=15 // pred_check
          %p157 = pneg %p50
        $region18: #{lip_sync_forward.16} parent=15 // pred_check_branch
          %159 = sbr.rel (%p157) target = $region20
        $region19: #{lip_sync_forward.16} parent=15 // pred_region
          %s160 = sand.u32 %s40, 1
          %s161 = sand.u32 %s40, 1
          %s162 = smul.addr %s161, 72
          %s163 = scalar_lea.vmem [#allocation3], %s162
          %s164 = smul.u32 2, %s16
          %s165 = smul.u32 9, %s18
          %s166 = smul.addr %s164, 18
          %s167 = sadd.s32 %s165, %s166
          %s168 = smul.addr %s167, 4
          %s169 = scalar_lea.vmem %s0, %s168
          // Predicated region
          $region21: #{lip_sync_forward.16} parent=19 // pred_check
            _
          $region22: #{lip_sync_forward.16} parent=19 // pred_check_branch
            %171 = sbr.rel (0) target = $region24
          $region23: #{lip_sync_forward.16} parent=19 // pred_region
            // Predicated region
            $region25: #{lip_sync_forward.16} parent=23 // pred_check
              _
            $region26: #{lip_sync_forward.16} parent=23 // pred_check_branch
              %173 = sbr.rel (0) target = $region28
            $region27: #{lip_sync_forward.16} parent=23 // pred_region
              %s174 = scalar_lea.vmem %s169, 32
              %s175 = scalar_lea.vmem %s163, 32 [#allocation3]
              loop: start=0, step=1, limit=1
              $region29: #{lip_sync_forward.16} parent=27 // loop_pre_header
                _
              $region30: #{lip_sync_forward.16} parent=27 // loop_header
                %s177 = sphi 0, %s181
                %p178 = scmp.ge.s32.totalorder %s177, 1
                %s182 = sphi %s169, %s169
                %s183 = sphi %s163, %s163
              $region31: #{lip_sync_forward.16} parent=27 // loop_header_branch
                %180 = sbr.rel (%p178) target = $region35
              $region32: #{lip_sync_forward.16} parent=27 // loop_body
                %v184 = vld [vmem:[%s182] sm:$0xff]
                %185 = vst [vmem:[%s183] sm:$0xff] %v184
                %v186 = vld [vmem:[%s182 + $0x8] sm:$0xff]
                %187 = vst [vmem:[%s183 + $0x8] sm:$0xff] %v186
                %v188 = vld [vmem:[%s182 + $0x10] sm:$0xff]
                %189 = vst [vmem:[%s183 + $0x10] sm:$0xff] %v188
                %v190 = vld [vmem:[%s182 + $0x18] sm:$0xff]
                %191 = vst [vmem:[%s183 + $0x18] sm:$0xff] %v190
                %v192 = vld [vmem:[%s182 + $0x48] sm:$0xff]
                %193 = vst [vmem:[%s183 + $0x24] sm:$0xff] %v192
                %v194 = vld [vmem:[%s182 + $0x50] sm:$0xff]
                %195 = vst [vmem:[%s183 + $0x2c] sm:$0xff] %v194
                %v196 = vld [vmem:[%s182 + $0x58] sm:$0xff]
                %197 = vst [vmem:[%s183 + $0x34] sm:$0xff] %v196
                %v198 = vld [vmem:[%s182 + $0x60] sm:$0xff]
                %199 = vst [vmem:[%s183 + $0x3c] sm:$0xff] %v198
              $region33: #{lip_sync_forward.16} parent=27 // loop_footer
                %s181 = sadd.s32 1, %s177
              $region34: #{lip_sync_forward.16} parent=27 // loop_footer_branch
                %176 = sbr.rel target = $region30
              $region35: #{lip_sync_forward.16} parent=27 // loop_exit
                _
              loop: start=0, step=1, limit=1
              $region36: #{lip_sync_forward.16} parent=27 // loop_pre_header
                _
              $region37: #{lip_sync_forward.16} parent=27 // loop_header
                %s202 = sphi 0, %s206
                %p203 = scmp.ge.s32.totalorder %s202, 1
                %s207 = sphi %s174, %s174
                %s208 = sphi %s175, %s175
              $region38: #{lip_sync_forward.16} parent=27 // loop_header_branch
                %205 = sbr.rel (%p203) target = $region42
              $region39: #{lip_sync_forward.16} parent=27 // loop_body
                %v209 = vld [vmem:[%s207] sm:$0xf]
                %210 = vst [vmem:[%s208] sm:$0xf] %v209
                %v211 = vld [vmem:[%s207 + $0x48] sm:$0xf]
                %212 = vst [vmem:[%s208 + $0x24] sm:$0xf] %v211
              $region40: #{lip_sync_forward.16} parent=27 // loop_footer
                %s206 = sadd.s32 1, %s202
              $region41: #{lip_sync_forward.16} parent=27 // loop_footer_branch
                %201 = sbr.rel target = $region37
              $region42: #{lip_sync_forward.16} parent=27 // loop_exit
                _
            $region28: #{lip_sync_forward.16} parent=23 // pred_fallthru
              _
          $region24: #{lip_sync_forward.16} parent=19 // pred_fallthru
            _
          %213 = vnop
        $region20: #{lip_sync_forward.16} parent=15 // pred_fallthru
          _
        // Predicated region
        $region43: #{lip_sync_forward.16} parent=15 // pred_check
          %p214 = pneg %p78
        $region44: #{lip_sync_forward.16} parent=15 // pred_check_branch
          %216 = sbr.rel (%p214) target = $region46
        $region45: #{lip_sync_forward.16} parent=15 // pred_region
          %s217 = sand.u32 %s68, 1
          %s218 = sand.u32 %s68, 1
          %s219 = smul.addr %s218, 576
          %s220 = scalar_lea.vmem [#allocation4], %s219
          %s221 = smul.u32 144, %s18
          %s222 = smul.addr %s221, 2
          %s223 = sadd.s32 %s17, %s222
          %s224 = smul.addr %s223, 4
          %s225 = scalar_lea.vmem %s1, %s224
          // Predicated region
          $region47: #{lip_sync_forward.16} parent=45 // pred_check
            _
          $region48: #{lip_sync_forward.16} parent=45 // pred_check_branch
            %227 = sbr.rel (0) target = $region50
          $region49: #{lip_sync_forward.16} parent=45 // pred_region
            // Predicated region
            $region51: #{lip_sync_forward.16} parent=49 // pred_check
              _
            $region52: #{lip_sync_forward.16} parent=49 // pred_check_branch
              %229 = sbr.rel target = $region54
            $region53: #{lip_sync_forward.16} parent=49 // pred_region
              // Predicated region
              $region66: #{lip_sync_forward.16} parent=53 // pred_check
                _
              $region67: #{lip_sync_forward.16} parent=53 // pred_check_branch
                %530 = sbr.rel (0) target = $region69
              $region68: #{lip_sync_forward.16} parent=53 // pred_region
                loop: start=0, step=1, limit=1
                $region70: #{lip_sync_forward.16} parent=68 // loop_pre_header
                  _
                $region71: #{lip_sync_forward.16} parent=68 // loop_header
                  %s532 = sphi 0, %s536
                  %p533 = scmp.ge.s32.totalorder %s532, 1
                  %s537 = sphi %s225, %s225
                  %s538 = sphi %s220, %s220
                $region72: #{lip_sync_forward.16} parent=68 // loop_header_branch
                  %535 = sbr.rel (%p533) target = $region76
                $region73: #{lip_sync_forward.16} parent=68 // loop_body
                  _
                $region74: #{lip_sync_forward.16} parent=68 // loop_footer
                  %s536 = sadd.s32 1, %s532
                $region75: #{lip_sync_forward.16} parent=68 // loop_footer_branch
                  %531 = sbr.rel target = $region71
                $region76: #{lip_sync_forward.16} parent=68 // loop_exit
                  _
                loop: start=0, step=1, limit=1
                $region77: #{lip_sync_forward.16} parent=68 // loop_pre_header
                  _
                $region78: #{lip_sync_forward.16} parent=68 // loop_header
                  %s541 = sphi 0, %s545
                  %p542 = scmp.ge.s32.totalorder %s541, 1
                  %s546 = sphi %s225, %s225
                  %s547 = sphi %s220, %s220
                $region79: #{lip_sync_forward.16} parent=68 // loop_header_branch
                  %544 = sbr.rel (%p542) target = $region83
                $region80: #{lip_sync_forward.16} parent=68 // loop_body
                  %v548 = vld [vmem:[%s546] sm:$0xf]
                  %549 = vst [vmem:[%s547] sm:$0xf] %v548
                  %v550 = vld [vmem:[%s546 + $0x8] sm:$0xf]
                  %551 = vst [vmem:[%s547 + $0x4] sm:$0xf] %v550
                  %v552 = vld [vmem:[%s546 + $0x10] sm:$0xf]
                  %553 = vst [vmem:[%s547 + $0x8] sm:$0xf] %v552
                  %v554 = vld [vmem:[%s546 + $0x18] sm:$0xf]
                  %555 = vst [vmem:[%s547 + $0xc] sm:$0xf] %v554
                  %v556 = vld [vmem:[%s546 + $0x20] sm:$0xf]
                  %557 = vst [vmem:[%s547 + $0x10] sm:$0xf] %v556
                  %v558 = vld [vmem:[%s546 + $0x28] sm:$0xf]
                  %559 = vst [vmem:[%s547 + $0x14] sm:$0xf] %v558
                  %v560 = vld [vmem:[%s546 + $0x30] sm:$0xf]
                  %561 = vst [vmem:[%s547 + $0x18] sm:$0xf] %v560
                  %v562 = vld [vmem:[%s546 + $0x38] sm:$0xf]
                  %563 = vst [vmem:[%s547 + $0x1c] sm:$0xf] %v562
                  %v564 = vld [vmem:[%s546 + $0x40] sm:$0xf]
                  %565 = vst [vmem:[%s547 + $0x20] sm:$0xf] %v564
                  %v566 = vld [vmem:[%s546 + $0x48] sm:$0xf]
                  %567 = vst [vmem:[%s547 + $0x24] sm:$0xf] %v566
                  %v568 = vld [vmem:[%s546 + $0x50] sm:$0xf]
                  %569 = vst [vmem:[%s547 + $0x28] sm:$0xf] %v568
                  %v570 = vld [vmem:[%s546 + $0x58] sm:$0xf]
                  %571 = vst [vmem:[%s547 + $0x2c] sm:$0xf] %v570
                  %v572 = vld [vmem:[%s546 + $0x60] sm:$0xf]
                  %573 = vst [vmem:[%s547 + $0x30] sm:$0xf] %v572
                  %v574 = vld [vmem:[%s546 + $0x68] sm:$0xf]
                  %575 = vst [vmem:[%s547 + $0x34] sm:$0xf] %v574
                  %v576 = vld [vmem:[%s546 + $0x70] sm:$0xf]
                  %577 = vst [vmem:[%s547 + $0x38] sm:$0xf] %v576
                  %v578 = vld [vmem:[%s546 + $0x78] sm:$0xf]
                  %579 = vst [vmem:[%s547 + $0x3c] sm:$0xf] %v578
                  %v580 = vld [vmem:[%s546 + $0x80] sm:$0xf]
                  %581 = vst [vmem:[%s547 + $0x40] sm:$0xf] %v580
                  %v582 = vld [vmem:[%s546 + $0x88] sm:$0xf]
                  %583 = vst [vmem:[%s547 + $0x44] sm:$0xf] %v582
                  %v584 = vld [vmem:[%s546 + $0x90] sm:$0xf]
                  %585 = vst [vmem:[%s547 + $0x48] sm:$0xf] %v584
                  %v586 = vld [vmem:[%s546 + $0x98] sm:$0xf]
                  %587 = vst [vmem:[%s547 + $0x4c] sm:$0xf] %v586
                  %v588 = vld [vmem:[%s546 + $0xa0] sm:$0xf]
                  %589 = vst [vmem:[%s547 + $0x50] sm:$0xf] %v588
                  %v590 = vld [vmem:[%s546 + $0xa8] sm:$0xf]
                  %591 = vst [vmem:[%s547 + $0x54] sm:$0xf] %v590
                  %v592 = vld [vmem:[%s546 + $0xb0] sm:$0xf]
                  %593 = vst [vmem:[%s547 + $0x58] sm:$0xf] %v592
                  %v594 = vld [vmem:[%s546 + $0xb8] sm:$0xf]
                  %595 = vst [vmem:[%s547 + $0x5c] sm:$0xf] %v594
                  %v596 = vld [vmem:[%s546 + $0xc0] sm:$0xf]
                  %597 = vst [vmem:[%s547 + $0x60] sm:$0xf] %v596
                  %v598 = vld [vmem:[%s546 + $0xc8] sm:$0xf]
                  %599 = vst [vmem:[%s547 + $0x64] sm:$0xf] %v598
                  %v600 = vld [vmem:[%s546 + $0xd0] sm:$0xf]
                  %601 = vst [vmem:[%s547 + $0x68] sm:$0xf] %v600
                  %v602 = vld [vmem:[%s546 + $0xd8] sm:$0xf]
                  %603 = vst [vmem:[%s547 + $0x6c] sm:$0xf] %v602
                  %v604 = vld [vmem:[%s546 + $0xe0] sm:$0xf]
                  %605 = vst [vmem:[%s547 + $0x70] sm:$0xf] %v604
                  %v606 = vld [vmem:[%s546 + $0xe8] sm:$0xf]
                  %607 = vst [vmem:[%s547 + $0x74] sm:$0xf] %v606
                  %v608 = vld [vmem:[%s546 + $0xf0] sm:$0xf]
                  %609 = vst [vmem:[%s547 + $0x78] sm:$0xf] %v608
                  %v610 = vld [vmem:[%s546 + $0xf8] sm:$0xf]
                  %611 = vst [vmem:[%s547 + $0x7c] sm:$0xf] %v610
                  %v612 = vld [vmem:[%s546 + $0x100] sm:$0xf]
                  %613 = vst [vmem:[%s547 + $0x80] sm:$0xf] %v612
                  %v614 = vld [vmem:[%s546 + $0x108] sm:$0xf]
                  %615 = vst [vmem:[%s547 + $0x84] sm:$0xf] %v614
                  %v616 = vld [vmem:[%s546 + $0x110] sm:$0xf]
                  %617 = vst [vmem:[%s547 + $0x88] sm:$0xf] %v616
                  %v618 = vld [vmem:[%s546 + $0x118] sm:$0xf]
                  %619 = vst [vmem:[%s547 + $0x8c] sm:$0xf] %v618
                  %v620 = vld [vmem:[%s546 + $0x120] sm:$0xf]
                  %621 = vst [vmem:[%s547 + $0x90] sm:$0xf] %v620
                  %v622 = vld [vmem:[%s546 + $0x128] sm:$0xf]
                  %623 = vst [vmem:[%s547 + $0x94] sm:$0xf] %v622
                  %v624 = vld [vmem:[%s546 + $0x130] sm:$0xf]
                  %625 = vst [vmem:[%s547 + $0x98] sm:$0xf] %v624
                  %v626 = vld [vmem:[%s546 + $0x138] sm:$0xf]
                  %627 = vst [vmem:[%s547 + $0x9c] sm:$0xf] %v626
                  %v628 = vld [vmem:[%s546 + $0x140] sm:$0xf]
                  %629 = vst [vmem:[%s547 + $0xa0] sm:$0xf] %v628
                  %v630 = vld [vmem:[%s546 + $0x148] sm:$0xf]
                  %631 = vst [vmem:[%s547 + $0xa4] sm:$0xf] %v630
                  %v632 = vld [vmem:[%s546 + $0x150] sm:$0xf]
                  %633 = vst [vmem:[%s547 + $0xa8] sm:$0xf] %v632
                  %v634 = vld [vmem:[%s546 + $0x158] sm:$0xf]
                  %635 = vst [vmem:[%s547 + $0xac] sm:$0xf] %v634
                  %v636 = vld [vmem:[%s546 + $0x160] sm:$0xf]
                  %637 = vst [vmem:[%s547 + $0xb0] sm:$0xf] %v636
                  %v638 = vld [vmem:[%s546 + $0x168] sm:$0xf]
                  %639 = vst [vmem:[%s547 + $0xb4] sm:$0xf] %v638
                  %v640 = vld [vmem:[%s546 + $0x170] sm:$0xf]
                  %641 = vst [vmem:[%s547 + $0xb8] sm:$0xf] %v640
                  %v642 = vld [vmem:[%s546 + $0x178] sm:$0xf]
                  %643 = vst [vmem:[%s547 + $0xbc] sm:$0xf] %v642
                  %v644 = vld [vmem:[%s546 + $0x180] sm:$0xf]
                  %645 = vst [vmem:[%s547 + $0xc0] sm:$0xf] %v644
                  %v646 = vld [vmem:[%s546 + $0x188] sm:$0xf]
                  %647 = vst [vmem:[%s547 + $0xc4] sm:$0xf] %v646
                  %v648 = vld [vmem:[%s546 + $0x190] sm:$0xf]
                  %649 = vst [vmem:[%s547 + $0xc8] sm:$0xf] %v648
                  %v650 = vld [vmem:[%s546 + $0x198] sm:$0xf]
                  %651 = vst [vmem:[%s547 + $0xcc] sm:$0xf] %v650
                  %v652 = vld [vmem:[%s546 + $0x1a0] sm:$0xf]
                  %653 = vst [vmem:[%s547 + $0xd0] sm:$0xf] %v652
                  %v654 = vld [vmem:[%s546 + $0x1a8] sm:$0xf]
                  %655 = vst [vmem:[%s547 + $0xd4] sm:$0xf] %v654
                  %v656 = vld [vmem:[%s546 + $0x1b0] sm:$0xf]
                  %657 = vst [vmem:[%s547 + $0xd8] sm:$0xf] %v656
                  %v658 = vld [vmem:[%s546 + $0x1b8] sm:$0xf]
                  %659 = vst [vmem:[%s547 + $0xdc] sm:$0xf] %v658
                  %v660 = vld [vmem:[%s546 + $0x1c0] sm:$0xf]
                  %661 = vst [vmem:[%s547 + $0xe0] sm:$0xf] %v660
                  %v662 = vld [vmem:[%s546 + $0x1c8] sm:$0xf]
                  %663 = vst [vmem:[%s547 + $0xe4] sm:$0xf] %v662
                  %v664 = vld [vmem:[%s546 + $0x1d0] sm:$0xf]
                  %665 = vst [vmem:[%s547 + $0xe8] sm:$0xf] %v664
                  %v666 = vld [vmem:[%s546 + $0x1d8] sm:$0xf]
                  %667 = vst [vmem:[%s547 + $0xec] sm:$0xf] %v666
                  %v668 = vld [vmem:[%s546 + $0x1e0] sm:$0xf]
                  %669 = vst [vmem:[%s547 + $0xf0] sm:$0xf] %v668
                  %v670 = vld [vmem:[%s546 + $0x1e8] sm:$0xf]
                  %671 = vst [vmem:[%s547 + $0xf4] sm:$0xf] %v670
                  %v672 = vld [vmem:[%s546 + $0x1f0] sm:$0xf]
                  %673 = vst [vmem:[%s547 + $0xf8] sm:$0xf] %v672
                  %v674 = vld [vmem:[%s546 + $0x1f8] sm:$0xf]
                  %675 = vst [vmem:[%s547 + $0xfc] sm:$0xf] %v674
                  %v676 = vld [vmem:[%s546 + $0x200] sm:$0xf]
                  %677 = vst [vmem:[%s547 + $0x100] sm:$0xf] %v676
                  %v678 = vld [vmem:[%s546 + $0x208] sm:$0xf]
                  %679 = vst [vmem:[%s547 + $0x104] sm:$0xf] %v678
                  %v680 = vld [vmem:[%s546 + $0x210] sm:$0xf]
                  %681 = vst [vmem:[%s547 + $0x108] sm:$0xf] %v680
                  %v682 = vld [vmem:[%s546 + $0x218] sm:$0xf]
                  %683 = vst [vmem:[%s547 + $0x10c] sm:$0xf] %v682
                  %v684 = vld [vmem:[%s546 + $0x220] sm:$0xf]
                  %685 = vst [vmem:[%s547 + $0x110] sm:$0xf] %v684
                  %v686 = vld [vmem:[%s546 + $0x228] sm:$0xf]
                  %687 = vst [vmem:[%s547 + $0x114] sm:$0xf] %v686
                  %v688 = vld [vmem:[%s546 + $0x230] sm:$0xf]
                  %689 = vst [vmem:[%s547 + $0x118] sm:$0xf] %v688
                  %v690 = vld [vmem:[%s546 + $0x238] sm:$0xf]
                  %691 = vst [vmem:[%s547 + $0x11c] sm:$0xf] %v690
                  %v692 = vld [vmem:[%s546 + $0x240] sm:$0xf]
                  %693 = vst [vmem:[%s547 + $0x120] sm:$0xf] %v692
                  %v694 = vld [vmem:[%s546 + $0x248] sm:$0xf]
                  %695 = vst [vmem:[%s547 + $0x124] sm:$0xf] %v694
                  %v696 = vld [vmem:[%s546 + $0x250] sm:$0xf]
                  %697 = vst [vmem:[%s547 + $0x128] sm:$0xf] %v696
                  %v698 = vld [vmem:[%s546 + $0x258] sm:$0xf]
                  %699 = vst [vmem:[%s547 + $0x12c] sm:$0xf] %v698
                  %v700 = vld [vmem:[%s546 + $0x260] sm:$0xf]
                  %701 = vst [vmem:[%s547 + $0x130] sm:$0xf] %v700
                  %v702 = vld [vmem:[%s546 + $0x268] sm:$0xf]
                  %703 = vst [vmem:[%s547 + $0x134] sm:$0xf] %v702
                  %v704 = vld [vmem:[%s546 + $0x270] sm:$0xf]
                  %705 = vst [vmem:[%s547 + $0x138] sm:$0xf] %v704
                  %v706 = vld [vmem:[%s546 + $0x278] sm:$0xf]
                  %707 = vst [vmem:[%s547 + $0x13c] sm:$0xf] %v706
                  %v708 = vld [vmem:[%s546 + $0x280] sm:$0xf]
                  %709 = vst [vmem:[%s547 + $0x140] sm:$0xf] %v708
                  %v710 = vld [vmem:[%s546 + $0x288] sm:$0xf]
                  %711 = vst [vmem:[%s547 + $0x144] sm:$0xf] %v710
                  %v712 = vld [vmem:[%s546 + $0x290] sm:$0xf]
                  %713 = vst [vmem:[%s547 + $0x148] sm:$0xf] %v712
                  %v714 = vld [vmem:[%s546 + $0x298] sm:$0xf]
                  %715 = vst [vmem:[%s547 + $0x14c] sm:$0xf] %v714
                  %v716 = vld [vmem:[%s546 + $0x2a0] sm:$0xf]
                  %717 = vst [vmem:[%s547 + $0x150] sm:$0xf] %v716
                  %v718 = vld [vmem:[%s546 + $0x2a8] sm:$0xf]
                  %719 = vst [vmem:[%s547 + $0x154] sm:$0xf] %v718
                  %v720 = vld [vmem:[%s546 + $0x2b0] sm:$0xf]
                  %721 = vst [vmem:[%s547 + $0x158] sm:$0xf] %v720
                  %v722 = vld [vmem:[%s546 + $0x2b8] sm:$0xf]
                  %723 = vst [vmem:[%s547 + $0x15c] sm:$0xf] %v722
                  %v724 = vld [vmem:[%s546 + $0x2c0] sm:$0xf]
                  %725 = vst [vmem:[%s547 + $0x160] sm:$0xf] %v724
                  %v726 = vld [vmem:[%s546 + $0x2c8] sm:$0xf]
                  %727 = vst [vmem:[%s547 + $0x164] sm:$0xf] %v726
                  %v728 = vld [vmem:[%s546 + $0x2d0] sm:$0xf]
                  %729 = vst [vmem:[%s547 + $0x168] sm:$0xf] %v728
                  %v730 = vld [vmem:[%s546 + $0x2d8] sm:$0xf]
                  %731 = vst [vmem:[%s547 + $0x16c] sm:$0xf] %v730
                  %v732 = vld [vmem:[%s546 + $0x2e0] sm:$0xf]
                  %733 = vst [vmem:[%s547 + $0x170] sm:$0xf] %v732
                  %v734 = vld [vmem:[%s546 + $0x2e8] sm:$0xf]
                  %735 = vst [vmem:[%s547 + $0x174] sm:$0xf] %v734
                  %v736 = vld [vmem:[%s546 + $0x2f0] sm:$0xf]
                  %737 = vst [vmem:[%s547 + $0x178] sm:$0xf] %v736
                  %v738 = vld [vmem:[%s546 + $0x2f8] sm:$0xf]
                  %739 = vst [vmem:[%s547 + $0x17c] sm:$0xf] %v738
                  %v740 = vld [vmem:[%s546 + $0x300] sm:$0xf]
                  %741 = vst [vmem:[%s547 + $0x180] sm:$0xf] %v740
                  %v742 = vld [vmem:[%s546 + $0x308] sm:$0xf]
                  %743 = vst [vmem:[%s547 + $0x184] sm:$0xf] %v742
                  %v744 = vld [vmem:[%s546 + $0x310] sm:$0xf]
                  %745 = vst [vmem:[%s547 + $0x188] sm:$0xf] %v744
                  %v746 = vld [vmem:[%s546 + $0x318] sm:$0xf]
                  %747 = vst [vmem:[%s547 + $0x18c] sm:$0xf] %v746
                  %v748 = vld [vmem:[%s546 + $0x320] sm:$0xf]
                  %749 = vst [vmem:[%s547 + $0x190] sm:$0xf] %v748
                  %v750 = vld [vmem:[%s546 + $0x328] sm:$0xf]
                  %751 = vst [vmem:[%s547 + $0x194] sm:$0xf] %v750
                  %v752 = vld [vmem:[%s546 + $0x330] sm:$0xf]
                  %753 = vst [vmem:[%s547 + $0x198] sm:$0xf] %v752
                  %v754 = vld [vmem:[%s546 + $0x338] sm:$0xf]
                  %755 = vst [vmem:[%s547 + $0x19c] sm:$0xf] %v754
                  %v756 = vld [vmem:[%s546 + $0x340] sm:$0xf]
                  %757 = vst [vmem:[%s547 + $0x1a0] sm:$0xf] %v756
                  %v758 = vld [vmem:[%s546 + $0x348] sm:$0xf]
                  %759 = vst [vmem:[%s547 + $0x1a4] sm:$0xf] %v758
                  %v760 = vld [vmem:[%s546 + $0x350] sm:$0xf]
                  %761 = vst [vmem:[%s547 + $0x1a8] sm:$0xf] %v760
                  %v762 = vld [vmem:[%s546 + $0x358] sm:$0xf]
                  %763 = vst [vmem:[%s547 + $0x1ac] sm:$0xf] %v762
                  %v764 = vld [vmem:[%s546 + $0x360] sm:$0xf]
                  %765 = vst [vmem:[%s547 + $0x1b0] sm:$0xf] %v764
                  %v766 = vld [vmem:[%s546 + $0x368] sm:$0xf]
                  %767 = vst [vmem:[%s547 + $0x1b4] sm:$0xf] %v766
                  %v768 = vld [vmem:[%s546 + $0x370] sm:$0xf]
                  %769 = vst [vmem:[%s547 + $0x1b8] sm:$0xf] %v768
                  %v770 = vld [vmem:[%s546 + $0x378] sm:$0xf]
                  %771 = vst [vmem:[%s547 + $0x1bc] sm:$0xf] %v770
                  %v772 = vld [vmem:[%s546 + $0x380] sm:$0xf]
                  %773 = vst [vmem:[%s547 + $0x1c0] sm:$0xf] %v772
                  %v774 = vld [vmem:[%s546 + $0x388] sm:$0xf]
                  %775 = vst [vmem:[%s547 + $0x1c4] sm:$0xf] %v774
                  %v776 = vld [vmem:[%s546 + $0x390] sm:$0xf]
                  %777 = vst [vmem:[%s547 + $0x1c8] sm:$0xf] %v776
                  %v778 = vld [vmem:[%s546 + $0x398] sm:$0xf]
                  %779 = vst [vmem:[%s547 + $0x1cc] sm:$0xf] %v778
                  %v780 = vld [vmem:[%s546 + $0x3a0] sm:$0xf]
                  %781 = vst [vmem:[%s547 + $0x1d0] sm:$0xf] %v780
                  %v782 = vld [vmem:[%s546 + $0x3a8] sm:$0xf]
                  %783 = vst [vmem:[%s547 + $0x1d4] sm:$0xf] %v782
                  %v784 = vld [vmem:[%s546 + $0x3b0] sm:$0xf]
                  %785 = vst [vmem:[%s547 + $0x1d8] sm:$0xf] %v784
                  %v786 = vld [vmem:[%s546 + $0x3b8] sm:$0xf]
                  %787 = vst [vmem:[%s547 + $0x1dc] sm:$0xf] %v786
                  %v788 = vld [vmem:[%s546 + $0x3c0] sm:$0xf]
                  %789 = vst [vmem:[%s547 + $0x1e0] sm:$0xf] %v788
                  %v790 = vld [vmem:[%s546 + $0x3c8] sm:$0xf]
                  %791 = vst [vmem:[%s547 + $0x1e4] sm:$0xf] %v790
                  %v792 = vld [vmem:[%s546 + $0x3d0] sm:$0xf]
                  %793 = vst [vmem:[%s547 + $0x1e8] sm:$0xf] %v792
                  %v794 = vld [vmem:[%s546 + $0x3d8] sm:$0xf]
                  %795 = vst [vmem:[%s547 + $0x1ec] sm:$0xf] %v794
                  %v796 = vld [vmem:[%s546 + $0x3e0] sm:$0xf]
                  %797 = vst [vmem:[%s547 + $0x1f0] sm:$0xf] %v796
                  %v798 = vld [vmem:[%s546 + $0x3e8] sm:$0xf]
                  %799 = vst [vmem:[%s547 + $0x1f4] sm:$0xf] %v798
                  %v800 = vld [vmem:[%s546 + $0x3f0] sm:$0xf]
                  %801 = vst [vmem:[%s547 + $0x1f8] sm:$0xf] %v800
                  %v802 = vld [vmem:[%s546 + $0x3f8] sm:$0xf]
                  %803 = vst [vmem:[%s547 + $0x1fc] sm:$0xf] %v802
                  %v804 = vld [vmem:[%s546 + $0x400] sm:$0xf]
                  %805 = vst [vmem:[%s547 + $0x200] sm:$0xf] %v804
                  %v806 = vld [vmem:[%s546 + $0x408] sm:$0xf]
                  %807 = vst [vmem:[%s547 + $0x204] sm:$0xf] %v806
                  %v808 = vld [vmem:[%s546 + $0x410] sm:$0xf]
                  %809 = vst [vmem:[%s547 + $0x208] sm:$0xf] %v808
                  %v810 = vld [vmem:[%s546 + $0x418] sm:$0xf]
                  %811 = vst [vmem:[%s547 + $0x20c] sm:$0xf] %v810
                  %v812 = vld [vmem:[%s546 + $0x420] sm:$0xf]
                  %813 = vst [vmem:[%s547 + $0x210] sm:$0xf] %v812
                  %v814 = vld [vmem:[%s546 + $0x428] sm:$0xf]
                  %815 = vst [vmem:[%s547 + $0x214] sm:$0xf] %v814
                  %v816 = vld [vmem:[%s546 + $0x430] sm:$0xf]
                  %817 = vst [vmem:[%s547 + $0x218] sm:$0xf] %v816
                  %v818 = vld [vmem:[%s546 + $0x438] sm:$0xf]
                  %819 = vst [vmem:[%s547 + $0x21c] sm:$0xf] %v818
                  %v820 = vld [vmem:[%s546 + $0x440] sm:$0xf]
                  %821 = vst [vmem:[%s547 + $0x220] sm:$0xf] %v820
                  %v822 = vld [vmem:[%s546 + $0x448] sm:$0xf]
                  %823 = vst [vmem:[%s547 + $0x224] sm:$0xf] %v822
                  %v824 = vld [vmem:[%s546 + $0x450] sm:$0xf]
                  %825 = vst [vmem:[%s547 + $0x228] sm:$0xf] %v824
                  %v826 = vld [vmem:[%s546 + $0x458] sm:$0xf]
                  %827 = vst [vmem:[%s547 + $0x22c] sm:$0xf] %v826
                  %v828 = vld [vmem:[%s546 + $0x460] sm:$0xf]
                  %829 = vst [vmem:[%s547 + $0x230] sm:$0xf] %v828
                  %v830 = vld [vmem:[%s546 + $0x468] sm:$0xf]
                  %831 = vst [vmem:[%s547 + $0x234] sm:$0xf] %v830
                  %v832 = vld [vmem:[%s546 + $0x470] sm:$0xf]
                  %833 = vst [vmem:[%s547 + $0x238] sm:$0xf] %v832
                  %v834 = vld [vmem:[%s546 + $0x478] sm:$0xf]
                  %835 = vst [vmem:[%s547 + $0x23c] sm:$0xf] %v834
                $region81: #{lip_sync_forward.16} parent=68 // loop_footer
                  %s545 = sadd.s32 1, %s541
                $region82: #{lip_sync_forward.16} parent=68 // loop_footer_branch
                  %540 = sbr.rel target = $region78
                $region83: #{lip_sync_forward.16} parent=68 // loop_exit
                  _
              $region69: #{lip_sync_forward.16} parent=53 // pred_fallthru
                _
            $region54: #{lip_sync_forward.16} parent=49 // pred_fallthru
              _
            // Predicated region
            $region55: #{lip_sync_forward.16} parent=49 // pred_check
              _
            $region56: #{lip_sync_forward.16} parent=49 // pred_check_branch
              %231 = sbr.rel (0) target = $region58
            $region57: #{lip_sync_forward.16} parent=49 // pred_region
              loop: start=0, step=1, limit=1
              $region59: #{lip_sync_forward.16} parent=57 // loop_pre_header
                _
              $region60: #{lip_sync_forward.16} parent=57 // loop_header
                %s234 = sphi 0, %s238
                %p235 = scmp.ge.s32.totalorder %s234, 1
                %s239 = sphi %s225, %s225
                %s240 = sphi %s220, %s220
              $region61: #{lip_sync_forward.16} parent=57 // loop_header_branch
                %237 = sbr.rel (%p235) target = $region65
              $region62: #{lip_sync_forward.16} parent=57 // loop_body
                %v241 = vld [vmem:[%s239] sm:$0xf]
                %242 = vst [vmem:[%s240] sm:$0xf] %v241
                %v243 = vld [vmem:[%s239 + $0x8] sm:$0xf]
                %244 = vst [vmem:[%s240 + $0x4] sm:$0xf] %v243
                %v245 = vld [vmem:[%s239 + $0x10] sm:$0xf]
                %246 = vst [vmem:[%s240 + $0x8] sm:$0xf] %v245
                %v247 = vld [vmem:[%s239 + $0x18] sm:$0xf]
                %248 = vst [vmem:[%s240 + $0xc] sm:$0xf] %v247
                %v249 = vld [vmem:[%s239 + $0x20] sm:$0xf]
                %250 = vst [vmem:[%s240 + $0x10] sm:$0xf] %v249
                %v251 = vld [vmem:[%s239 + $0x28] sm:$0xf]
                %252 = vst [vmem:[%s240 + $0x14] sm:$0xf] %v251
                %v253 = vld [vmem:[%s239 + $0x30] sm:$0xf]
                %254 = vst [vmem:[%s240 + $0x18] sm:$0xf] %v253
                %v255 = vld [vmem:[%s239 + $0x38] sm:$0xf]
                %256 = vst [vmem:[%s240 + $0x1c] sm:$0xf] %v255
                %v257 = vld [vmem:[%s239 + $0x40] sm:$0xf]
                %258 = vst [vmem:[%s240 + $0x20] sm:$0xf] %v257
                %v259 = vld [vmem:[%s239 + $0x48] sm:$0xf]
                %260 = vst [vmem:[%s240 + $0x24] sm:$0xf] %v259
                %v261 = vld [vmem:[%s239 + $0x50] sm:$0xf]
                %262 = vst [vmem:[%s240 + $0x28] sm:$0xf] %v261
                %v263 = vld [vmem:[%s239 + $0x58] sm:$0xf]
                %264 = vst [vmem:[%s240 + $0x2c] sm:$0xf] %v263
                %v265 = vld [vmem:[%s239 + $0x60] sm:$0xf]
                %266 = vst [vmem:[%s240 + $0x30] sm:$0xf] %v265
                %v267 = vld [vmem:[%s239 + $0x68] sm:$0xf]
                %268 = vst [vmem:[%s240 + $0x34] sm:$0xf] %v267
                %v269 = vld [vmem:[%s239 + $0x70] sm:$0xf]
                %270 = vst [vmem:[%s240 + $0x38] sm:$0xf] %v269
                %v271 = vld [vmem:[%s239 + $0x78] sm:$0xf]
                %272 = vst [vmem:[%s240 + $0x3c] sm:$0xf] %v271
                %v273 = vld [vmem:[%s239 + $0x80] sm:$0xf]
                %274 = vst [vmem:[%s240 + $0x40] sm:$0xf] %v273
                %v275 = vld [vmem:[%s239 + $0x88] sm:$0xf]
                %276 = vst [vmem:[%s240 + $0x44] sm:$0xf] %v275
                %v277 = vld [vmem:[%s239 + $0x90] sm:$0xf]
                %278 = vst [vmem:[%s240 + $0x48] sm:$0xf] %v277
                %v279 = vld [vmem:[%s239 + $0x98] sm:$0xf]
                %280 = vst [vmem:[%s240 + $0x4c] sm:$0xf] %v279
                %v281 = vld [vmem:[%s239 + $0xa0] sm:$0xf]
                %282 = vst [vmem:[%s240 + $0x50] sm:$0xf] %v281
                %v283 = vld [vmem:[%s239 + $0xa8] sm:$0xf]
                %284 = vst [vmem:[%s240 + $0x54] sm:$0xf] %v283
                %v285 = vld [vmem:[%s239 + $0xb0] sm:$0xf]
                %286 = vst [vmem:[%s240 + $0x58] sm:$0xf] %v285
                %v287 = vld [vmem:[%s239 + $0xb8] sm:$0xf]
                %288 = vst [vmem:[%s240 + $0x5c] sm:$0xf] %v287
                %v289 = vld [vmem:[%s239 + $0xc0] sm:$0xf]
                %290 = vst [vmem:[%s240 + $0x60] sm:$0xf] %v289
                %v291 = vld [vmem:[%s239 + $0xc8] sm:$0xf]
                %292 = vst [vmem:[%s240 + $0x64] sm:$0xf] %v291
                %v293 = vld [vmem:[%s239 + $0xd0] sm:$0xf]
                %294 = vst [vmem:[%s240 + $0x68] sm:$0xf] %v293
                %v295 = vld [vmem:[%s239 + $0xd8] sm:$0xf]
                %296 = vst [vmem:[%s240 + $0x6c] sm:$0xf] %v295
                %v297 = vld [vmem:[%s239 + $0xe0] sm:$0xf]
                %298 = vst [vmem:[%s240 + $0x70] sm:$0xf] %v297
                %v299 = vld [vmem:[%s239 + $0xe8] sm:$0xf]
                %300 = vst [vmem:[%s240 + $0x74] sm:$0xf] %v299
                %v301 = vld [vmem:[%s239 + $0xf0] sm:$0xf]
                %302 = vst [vmem:[%s240 + $0x78] sm:$0xf] %v301
                %v303 = vld [vmem:[%s239 + $0xf8] sm:$0xf]
                %304 = vst [vmem:[%s240 + $0x7c] sm:$0xf] %v303
                %v305 = vld [vmem:[%s239 + $0x100] sm:$0xf]
                %306 = vst [vmem:[%s240 + $0x80] sm:$0xf] %v305
                %v307 = vld [vmem:[%s239 + $0x108] sm:$0xf]
                %308 = vst [vmem:[%s240 + $0x84] sm:$0xf] %v307
                %v309 = vld [vmem:[%s239 + $0x110] sm:$0xf]
                %310 = vst [vmem:[%s240 + $0x88] sm:$0xf] %v309
                %v311 = vld [vmem:[%s239 + $0x118] sm:$0xf]
                %312 = vst [vmem:[%s240 + $0x8c] sm:$0xf] %v311
                %v313 = vld [vmem:[%s239 + $0x120] sm:$0xf]
                %314 = vst [vmem:[%s240 + $0x90] sm:$0xf] %v313
                %v315 = vld [vmem:[%s239 + $0x128] sm:$0xf]
                %316 = vst [vmem:[%s240 + $0x94] sm:$0xf] %v315
                %v317 = vld [vmem:[%s239 + $0x130] sm:$0xf]
                %318 = vst [vmem:[%s240 + $0x98] sm:$0xf] %v317
                %v319 = vld [vmem:[%s239 + $0x138] sm:$0xf]
                %320 = vst [vmem:[%s240 + $0x9c] sm:$0xf] %v319
                %v321 = vld [vmem:[%s239 + $0x140] sm:$0xf]
                %322 = vst [vmem:[%s240 + $0xa0] sm:$0xf] %v321
                %v323 = vld [vmem:[%s239 + $0x148] sm:$0xf]
                %324 = vst [vmem:[%s240 + $0xa4] sm:$0xf] %v323
                %v325 = vld [vmem:[%s239 + $0x150] sm:$0xf]
                %326 = vst [vmem:[%s240 + $0xa8] sm:$0xf] %v325
                %v327 = vld [vmem:[%s239 + $0x158] sm:$0xf]
                %328 = vst [vmem:[%s240 + $0xac] sm:$0xf] %v327
                %v329 = vld [vmem:[%s239 + $0x160] sm:$0xf]
                %330 = vst [vmem:[%s240 + $0xb0] sm:$0xf] %v329
                %v331 = vld [vmem:[%s239 + $0x168] sm:$0xf]
                %332 = vst [vmem:[%s240 + $0xb4] sm:$0xf] %v331
                %v333 = vld [vmem:[%s239 + $0x170] sm:$0xf]
                %334 = vst [vmem:[%s240 + $0xb8] sm:$0xf] %v333
                %v335 = vld [vmem:[%s239 + $0x178] sm:$0xf]
                %336 = vst [vmem:[%s240 + $0xbc] sm:$0xf] %v335
                %v337 = vld [vmem:[%s239 + $0x180] sm:$0xf]
                %338 = vst [vmem:[%s240 + $0xc0] sm:$0xf] %v337
                %v339 = vld [vmem:[%s239 + $0x188] sm:$0xf]
                %340 = vst [vmem:[%s240 + $0xc4] sm:$0xf] %v339
                %v341 = vld [vmem:[%s239 + $0x190] sm:$0xf]
                %342 = vst [vmem:[%s240 + $0xc8] sm:$0xf] %v341
                %v343 = vld [vmem:[%s239 + $0x198] sm:$0xf]
                %344 = vst [vmem:[%s240 + $0xcc] sm:$0xf] %v343
                %v345 = vld [vmem:[%s239 + $0x1a0] sm:$0xf]
                %346 = vst [vmem:[%s240 + $0xd0] sm:$0xf] %v345
                %v347 = vld [vmem:[%s239 + $0x1a8] sm:$0xf]
                %348 = vst [vmem:[%s240 + $0xd4] sm:$0xf] %v347
                %v349 = vld [vmem:[%s239 + $0x1b0] sm:$0xf]
                %350 = vst [vmem:[%s240 + $0xd8] sm:$0xf] %v349
                %v351 = vld [vmem:[%s239 + $0x1b8] sm:$0xf]
                %352 = vst [vmem:[%s240 + $0xdc] sm:$0xf] %v351
                %v353 = vld [vmem:[%s239 + $0x1c0] sm:$0xf]
                %354 = vst [vmem:[%s240 + $0xe0] sm:$0xf] %v353
                %v355 = vld [vmem:[%s239 + $0x1c8] sm:$0xf]
                %356 = vst [vmem:[%s240 + $0xe4] sm:$0xf] %v355
                %v357 = vld [vmem:[%s239 + $0x1d0] sm:$0xf]
                %358 = vst [vmem:[%s240 + $0xe8] sm:$0xf] %v357
                %v359 = vld [vmem:[%s239 + $0x1d8] sm:$0xf]
                %360 = vst [vmem:[%s240 + $0xec] sm:$0xf] %v359
                %v361 = vld [vmem:[%s239 + $0x1e0] sm:$0xf]
                %362 = vst [vmem:[%s240 + $0xf0] sm:$0xf] %v361
                %v363 = vld [vmem:[%s239 + $0x1e8] sm:$0xf]
                %364 = vst [vmem:[%s240 + $0xf4] sm:$0xf] %v363
                %v365 = vld [vmem:[%s239 + $0x1f0] sm:$0xf]
                %366 = vst [vmem:[%s240 + $0xf8] sm:$0xf] %v365
                %v367 = vld [vmem:[%s239 + $0x1f8] sm:$0xf]
                %368 = vst [vmem:[%s240 + $0xfc] sm:$0xf] %v367
                %v369 = vld [vmem:[%s239 + $0x200] sm:$0xf]
                %370 = vst [vmem:[%s240 + $0x100] sm:$0xf] %v369
                %v371 = vld [vmem:[%s239 + $0x208] sm:$0xf]
                %372 = vst [vmem:[%s240 + $0x104] sm:$0xf] %v371
                %v373 = vld [vmem:[%s239 + $0x210] sm:$0xf]
                %374 = vst [vmem:[%s240 + $0x108] sm:$0xf] %v373
                %v375 = vld [vmem:[%s239 + $0x218] sm:$0xf]
                %376 = vst [vmem:[%s240 + $0x10c] sm:$0xf] %v375
                %v377 = vld [vmem:[%s239 + $0x220] sm:$0xf]
                %378 = vst [vmem:[%s240 + $0x110] sm:$0xf] %v377
                %v379 = vld [vmem:[%s239 + $0x228] sm:$0xf]
                %380 = vst [vmem:[%s240 + $0x114] sm:$0xf] %v379
                %v381 = vld [vmem:[%s239 + $0x230] sm:$0xf]
                %382 = vst [vmem:[%s240 + $0x118] sm:$0xf] %v381
                %v383 = vld [vmem:[%s239 + $0x238] sm:$0xf]
                %384 = vst [vmem:[%s240 + $0x11c] sm:$0xf] %v383
                %v385 = vld [vmem:[%s239 + $0x240] sm:$0xf]
                %386 = vst [vmem:[%s240 + $0x120] sm:$0xf] %v385
                %v387 = vld [vmem:[%s239 + $0x248] sm:$0xf]
                %388 = vst [vmem:[%s240 + $0x124] sm:$0xf] %v387
                %v389 = vld [vmem:[%s239 + $0x250] sm:$0xf]
                %390 = vst [vmem:[%s240 + $0x128] sm:$0xf] %v389
                %v391 = vld [vmem:[%s239 + $0x258] sm:$0xf]
                %392 = vst [vmem:[%s240 + $0x12c] sm:$0xf] %v391
                %v393 = vld [vmem:[%s239 + $0x260] sm:$0xf]
                %394 = vst [vmem:[%s240 + $0x130] sm:$0xf] %v393
                %v395 = vld [vmem:[%s239 + $0x268] sm:$0xf]
                %396 = vst [vmem:[%s240 + $0x134] sm:$0xf] %v395
                %v397 = vld [vmem:[%s239 + $0x270] sm:$0xf]
                %398 = vst [vmem:[%s240 + $0x138] sm:$0xf] %v397
                %v399 = vld [vmem:[%s239 + $0x278] sm:$0xf]
                %400 = vst [vmem:[%s240 + $0x13c] sm:$0xf] %v399
                %v401 = vld [vmem:[%s239 + $0x280] sm:$0xf]
                %402 = vst [vmem:[%s240 + $0x140] sm:$0xf] %v401
                %v403 = vld [vmem:[%s239 + $0x288] sm:$0xf]
                %404 = vst [vmem:[%s240 + $0x144] sm:$0xf] %v403
                %v405 = vld [vmem:[%s239 + $0x290] sm:$0xf]
                %406 = vst [vmem:[%s240 + $0x148] sm:$0xf] %v405
                %v407 = vld [vmem:[%s239 + $0x298] sm:$0xf]
                %408 = vst [vmem:[%s240 + $0x14c] sm:$0xf] %v407
                %v409 = vld [vmem:[%s239 + $0x2a0] sm:$0xf]
                %410 = vst [vmem:[%s240 + $0x150] sm:$0xf] %v409
                %v411 = vld [vmem:[%s239 + $0x2a8] sm:$0xf]
                %412 = vst [vmem:[%s240 + $0x154] sm:$0xf] %v411
                %v413 = vld [vmem:[%s239 + $0x2b0] sm:$0xf]
                %414 = vst [vmem:[%s240 + $0x158] sm:$0xf] %v413
                %v415 = vld [vmem:[%s239 + $0x2b8] sm:$0xf]
                %416 = vst [vmem:[%s240 + $0x15c] sm:$0xf] %v415
                %v417 = vld [vmem:[%s239 + $0x2c0] sm:$0xf]
                %418 = vst [vmem:[%s240 + $0x160] sm:$0xf] %v417
                %v419 = vld [vmem:[%s239 + $0x2c8] sm:$0xf]
                %420 = vst [vmem:[%s240 + $0x164] sm:$0xf] %v419
                %v421 = vld [vmem:[%s239 + $0x2d0] sm:$0xf]
                %422 = vst [vmem:[%s240 + $0x168] sm:$0xf] %v421
                %v423 = vld [vmem:[%s239 + $0x2d8] sm:$0xf]
                %424 = vst [vmem:[%s240 + $0x16c] sm:$0xf] %v423
                %v425 = vld [vmem:[%s239 + $0x2e0] sm:$0xf]
                %426 = vst [vmem:[%s240 + $0x170] sm:$0xf] %v425
                %v427 = vld [vmem:[%s239 + $0x2e8] sm:$0xf]
                %428 = vst [vmem:[%s240 + $0x174] sm:$0xf] %v427
                %v429 = vld [vmem:[%s239 + $0x2f0] sm:$0xf]
                %430 = vst [vmem:[%s240 + $0x178] sm:$0xf] %v429
                %v431 = vld [vmem:[%s239 + $0x2f8] sm:$0xf]
                %432 = vst [vmem:[%s240 + $0x17c] sm:$0xf] %v431
                %v433 = vld [vmem:[%s239 + $0x300] sm:$0xf]
                %434 = vst [vmem:[%s240 + $0x180] sm:$0xf] %v433
                %v435 = vld [vmem:[%s239 + $0x308] sm:$0xf]
                %436 = vst [vmem:[%s240 + $0x184] sm:$0xf] %v435
                %v437 = vld [vmem:[%s239 + $0x310] sm:$0xf]
                %438 = vst [vmem:[%s240 + $0x188] sm:$0xf] %v437
                %v439 = vld [vmem:[%s239 + $0x318] sm:$0xf]
                %440 = vst [vmem:[%s240 + $0x18c] sm:$0xf] %v439
                %v441 = vld [vmem:[%s239 + $0x320] sm:$0xf]
                %442 = vst [vmem:[%s240 + $0x190] sm:$0xf] %v441
                %v443 = vld [vmem:[%s239 + $0x328] sm:$0xf]
                %444 = vst [vmem:[%s240 + $0x194] sm:$0xf] %v443
                %v445 = vld [vmem:[%s239 + $0x330] sm:$0xf]
                %446 = vst [vmem:[%s240 + $0x198] sm:$0xf] %v445
                %v447 = vld [vmem:[%s239 + $0x338] sm:$0xf]
                %448 = vst [vmem:[%s240 + $0x19c] sm:$0xf] %v447
                %v449 = vld [vmem:[%s239 + $0x340] sm:$0xf]
                %450 = vst [vmem:[%s240 + $0x1a0] sm:$0xf] %v449
                %v451 = vld [vmem:[%s239 + $0x348] sm:$0xf]
                %452 = vst [vmem:[%s240 + $0x1a4] sm:$0xf] %v451
                %v453 = vld [vmem:[%s239 + $0x350] sm:$0xf]
                %454 = vst [vmem:[%s240 + $0x1a8] sm:$0xf] %v453
                %v455 = vld [vmem:[%s239 + $0x358] sm:$0xf]
                %456 = vst [vmem:[%s240 + $0x1ac] sm:$0xf] %v455
                %v457 = vld [vmem:[%s239 + $0x360] sm:$0xf]
                %458 = vst [vmem:[%s240 + $0x1b0] sm:$0xf] %v457
                %v459 = vld [vmem:[%s239 + $0x368] sm:$0xf]
                %460 = vst [vmem:[%s240 + $0x1b4] sm:$0xf] %v459
                %v461 = vld [vmem:[%s239 + $0x370] sm:$0xf]
                %462 = vst [vmem:[%s240 + $0x1b8] sm:$0xf] %v461
                %v463 = vld [vmem:[%s239 + $0x378] sm:$0xf]
                %464 = vst [vmem:[%s240 + $0x1bc] sm:$0xf] %v463
                %v465 = vld [vmem:[%s239 + $0x380] sm:$0xf]
                %466 = vst [vmem:[%s240 + $0x1c0] sm:$0xf] %v465
                %v467 = vld [vmem:[%s239 + $0x388] sm:$0xf]
                %468 = vst [vmem:[%s240 + $0x1c4] sm:$0xf] %v467
                %v469 = vld [vmem:[%s239 + $0x390] sm:$0xf]
                %470 = vst [vmem:[%s240 + $0x1c8] sm:$0xf] %v469
                %v471 = vld [vmem:[%s239 + $0x398] sm:$0xf]
                %472 = vst [vmem:[%s240 + $0x1cc] sm:$0xf] %v471
                %v473 = vld [vmem:[%s239 + $0x3a0] sm:$0xf]
                %474 = vst [vmem:[%s240 + $0x1d0] sm:$0xf] %v473
                %v475 = vld [vmem:[%s239 + $0x3a8] sm:$0xf]
                %476 = vst [vmem:[%s240 + $0x1d4] sm:$0xf] %v475
                %v477 = vld [vmem:[%s239 + $0x3b0] sm:$0xf]
                %478 = vst [vmem:[%s240 + $0x1d8] sm:$0xf] %v477
                %v479 = vld [vmem:[%s239 + $0x3b8] sm:$0xf]
                %480 = vst [vmem:[%s240 + $0x1dc] sm:$0xf] %v479
                %v481 = vld [vmem:[%s239 + $0x3c0] sm:$0xf]
                %482 = vst [vmem:[%s240 + $0x1e0] sm:$0xf] %v481
                %v483 = vld [vmem:[%s239 + $0x3c8] sm:$0xf]
                %484 = vst [vmem:[%s240 + $0x1e4] sm:$0xf] %v483
                %v485 = vld [vmem:[%s239 + $0x3d0] sm:$0xf]
                %486 = vst [vmem:[%s240 + $0x1e8] sm:$0xf] %v485
                %v487 = vld [vmem:[%s239 + $0x3d8] sm:$0xf]
                %488 = vst [vmem:[%s240 + $0x1ec] sm:$0xf] %v487
                %v489 = vld [vmem:[%s239 + $0x3e0] sm:$0xf]
                %490 = vst [vmem:[%s240 + $0x1f0] sm:$0xf] %v489
                %v491 = vld [vmem:[%s239 + $0x3e8] sm:$0xf]
                %492 = vst [vmem:[%s240 + $0x1f4] sm:$0xf] %v491
                %v493 = vld [vmem:[%s239 + $0x3f0] sm:$0xf]
                %494 = vst [vmem:[%s240 + $0x1f8] sm:$0xf] %v493
                %v495 = vld [vmem:[%s239 + $0x3f8] sm:$0xf]
                %496 = vst [vmem:[%s240 + $0x1fc] sm:$0xf] %v495
                %v497 = vld [vmem:[%s239 + $0x400] sm:$0xf]
                %498 = vst [vmem:[%s240 + $0x200] sm:$0xf] %v497
                %v499 = vld [vmem:[%s239 + $0x408] sm:$0xf]
                %500 = vst [vmem:[%s240 + $0x204] sm:$0xf] %v499
                %v501 = vld [vmem:[%s239 + $0x410] sm:$0xf]
                %502 = vst [vmem:[%s240 + $0x208] sm:$0xf] %v501
                %v503 = vld [vmem:[%s239 + $0x418] sm:$0xf]
                %504 = vst [vmem:[%s240 + $0x20c] sm:$0xf] %v503
                %v505 = vld [vmem:[%s239 + $0x420] sm:$0xf]
                %506 = vst [vmem:[%s240 + $0x210] sm:$0xf] %v505
                %v507 = vld [vmem:[%s239 + $0x428] sm:$0xf]
                %508 = vst [vmem:[%s240 + $0x214] sm:$0xf] %v507
                %v509 = vld [vmem:[%s239 + $0x430] sm:$0xf]
                %510 = vst [vmem:[%s240 + $0x218] sm:$0xf] %v509
                %v511 = vld [vmem:[%s239 + $0x438] sm:$0xf]
                %512 = vst [vmem:[%s240 + $0x21c] sm:$0xf] %v511
                %v513 = vld [vmem:[%s239 + $0x440] sm:$0xf]
                %514 = vst [vmem:[%s240 + $0x220] sm:$0xf] %v513
                %v515 = vld [vmem:[%s239 + $0x448] sm:$0xf]
                %516 = vst [vmem:[%s240 + $0x224] sm:$0xf] %v515
                %v517 = vld [vmem:[%s239 + $0x450] sm:$0xf]
                %518 = vst [vmem:[%s240 + $0x228] sm:$0xf] %v517
                %v519 = vld [vmem:[%s239 + $0x458] sm:$0xf]
                %520 = vst [vmem:[%s240 + $0x22c] sm:$0xf] %v519
                %v521 = vld [vmem:[%s239 + $0x460] sm:$0xf]
                %522 = vst [vmem:[%s240 + $0x230] sm:$0xf] %v521
                %v523 = vld [vmem:[%s239 + $0x468] sm:$0xf]
                %524 = vst [vmem:[%s240 + $0x234] sm:$0xf] %v523
                %v525 = vld [vmem:[%s239 + $0x470] sm:$0xf]
                %526 = vst [vmem:[%s240 + $0x238] sm:$0xf] %v525
                %v527 = vld [vmem:[%s239 + $0x478] sm:$0xf]
                %528 = vst [vmem:[%s240 + $0x23c] sm:$0xf] %v527
              $region63: #{lip_sync_forward.16} parent=57 // loop_footer
                %s238 = sadd.s32 1, %s234
              $region64: #{lip_sync_forward.16} parent=57 // loop_footer_branch
                %233 = sbr.rel target = $region60
              $region65: #{lip_sync_forward.16} parent=57 // loop_exit
                _
            $region58: #{lip_sync_forward.16} parent=49 // pred_fallthru
              _
          $region50: #{lip_sync_forward.16} parent=45 // pred_fallthru
            _
          %836 = vnop
        $region46: #{lip_sync_forward.16} parent=15 // pred_fallthru
          _
        // Predicated region
        $region84: #{lip_sync_forward.16} parent=15 // pred_check
          %p837 = pneg %p104
        $region85: #{lip_sync_forward.16} parent=15 // pred_check_branch
          %839 = sbr.rel (%p837) target = $region87
        $region86: #{lip_sync_forward.16} parent=15 // pred_region
          %p840 = scmp.lt.s32.totalorder %s17, 1
          %s841 = scalar_select %p840, %s17, 1
          %s842 = scalar_lea.vmem %s2, %s841
        $region87: #{lip_sync_forward.16} parent=15 // pred_fallthru
          _
      $region16: #{lip_sync_forward.16} parent=5 // pred_fallthru
        _
      %p843 = scmp.le.s32.totalorder 1, %s9
      %p844 = scmp.lt.s32.totalorder %s9, 5
      %p845 = pnand %p843, %p844
      %p846 = pneg %p845
      // Predicated region
      $region88: #{lip_sync_forward.16} parent=5 // pred_check
        _
      $region89: #{lip_sync_forward.16} parent=5 // pred_check_branch
        %848 = sbr.rel (%p845) target = $region91
      $region90: #{lip_sync_forward.16} parent=5 // pred_region
        %s849 = ssub.s32 %s9, 1
        %s850 = sand.u32 %s43, 1
        %s851 = sand.u32 %s43, 1
        %s852 = smul.addr %s851, 72
        %s853 = scalar_lea.vmem [#allocation3], %s852
        // Predicated region
        $region92: #{lip_sync_forward.16} parent=90 // pred_check
          %p854 = pneg %p56
        $region93: #{lip_sync_forward.16} parent=90 // pred_check_branch
          %856 = sbr.rel (%p854) target = $region95
        $region94: #{lip_sync_forward.16} parent=90 // pred_region
          _
        $region95: #{lip_sync_forward.16} parent=90 // pred_fallthru
          _
        %s857 = sand.u32 %s71, 1
        %s858 = sand.u32 %s71, 1
        %s859 = smul.addr %s858, 576
        %s860 = scalar_lea.vmem [#allocation4], %s859
        // Predicated region
        $region96: #{lip_sync_forward.16} parent=90 // pred_check
          %p861 = pneg %p84
        $region97: #{lip_sync_forward.16} parent=90 // pred_check_branch
          %863 = sbr.rel (%p861) target = $region99
        $region98: #{lip_sync_forward.16} parent=90 // pred_region
          _
        $region99: #{lip_sync_forward.16} parent=90 // pred_fallthru
          _
        %s864 = sand.u32 %s43, 1
        %s865 = sand.u32 %s43, 1
        %s866 = smul.addr %s865, 72
        %s867 = scalar_lea.vmem [#allocation3], %s866
        %p868 = pneg %p56
        %p869 = pneg %p53
        %s870 = sand.u32 %s71, 1
        %s871 = sand.u32 %s71, 1
        %s872 = smul.addr %s871, 576
        %s873 = scalar_lea.vmem [#allocation4], %s872
        %p874 = pneg %p84
        %p875 = pneg %p81
        %p876 = scmp.lt.s32.totalorder %s20, 1
        %s877 = scalar_select %p876, %s20, 1
        %s878 = scalar_lea.vmem %s2, %s877
        %p879 = pneg %p110
        %p880 = pneg %p107
        %p881 = pneg %p138
        %p882 = pneg %p135
        %s883 = sand.u32 %s125, 1
        %s884 = sand.u32 %s125, 1
        %s885 = smul.addr %s884, 8
        %s886 = scalar_lea.vmem [#allocation5], %s885
        %s887 = smul.u32 2, %s19
        %s888 = smul.u32 9, %s21
        %s889 = smul.u32 144, %s21
        %p890 = scmp.lt.s32.totalorder %s20, 1
        %s891 = scalar_select %p890, %s20, 1
        %s892 = scalar_lea.vmem %s2, %s891
        %s893 = smul.u32 2, %s19
        %p895 = scmp.eq.s32.totalorder %s21, 0
        // Predicated region
        $region100: #{lip_sync_forward.16} parent=90 // pred_check
          %p896 = pneg %p895
        $region101: #{lip_sync_forward.16} parent=90 // pred_check_branch
          %898 = sbr.rel (%p896) target = $region103
        $region102: #{lip_sync_forward.16} parent=90 // pred_region
          %899 = vst [vmem:[#allocation2] sm:$0xff] 0.0
          %900 = vst [vmem:[#allocation2 + $0x8] sm:$0xff] 0.0
        $region103: #{lip_sync_forward.16} parent=90 // pred_fallthru
          _
        %v901 = vld [vmem:[#allocation2] sm:$0xff]
        %v902 = vld [vmem:[#allocation2 + $0x8] sm:$0xff]
        %v903 = vld [vmem:[%s853] sm:$0xff]
        %v904 = vld [vmem:[%s853 + $0x8] sm:$0xff]
        %v905 = vld [vmem:[%s853 + $0x10] sm:$0xff]
        %v906 = vld [vmem:[%s853 + $0x18] sm:$0xff]
        %v907 = vld [vmem:[%s853 + $0x20] sm:$0xf]
        %v908 = vld [vmem:[%s853 + $0x24] sm:$0xff]
        %v909 = vld [vmem:[%s853 + $0x2c] sm:$0xff]
        %v910 = vld [vmem:[%s853 + $0x34] sm:$0xff]
        %v911 = vld [vmem:[%s853 + $0x3c] sm:$0xff]
        %v912 = vld [vmem:[%s853 + $0x44] sm:$0xf]
        %v913 = vld [vmem:[%s860] sm:$0xf]
        %v914 = vld [vmem:[%s860 + $0x4] sm:$0xf]
        %v915 = vld [vmem:[%s860 + $0x8] sm:$0xf]
        %v916 = vld [vmem:[%s860 + $0xc] sm:$0xf]
        %v917 = vld [vmem:[%s860 + $0x10] sm:$0xf]
        %v918 = vld [vmem:[%s860 + $0x14] sm:$0xf]
        %v919 = vld [vmem:[%s860 + $0x18] sm:$0xf]
        %v920 = vld [vmem:[%s860 + $0x1c] sm:$0xf]
        %v921 = vld [vmem:[%s860 + $0x20] sm:$0xf]
        %v922 = vld [vmem:[%s860 + $0x24] sm:$0xf]
        %v923 = vld [vmem:[%s860 + $0x28] sm:$0xf]
        %v924 = vld [vmem:[%s860 + $0x2c] sm:$0xf]
        %v925 = vld [vmem:[%s860 + $0x30] sm:$0xf]
        %v926 = vld [vmem:[%s860 + $0x34] sm:$0xf]
        %v927 = vld [vmem:[%s860 + $0x38] sm:$0xf]
        %v928 = vld [vmem:[%s860 + $0x3c] sm:$0xf]
        %v929 = vld [vmem:[%s860 + $0x40] sm:$0xf]
        %v930 = vld [vmem:[%s860 + $0x44] sm:$0xf]
        %v931 = vld [vmem:[%s860 + $0x48] sm:$0xf]
        %v932 = vld [vmem:[%s860 + $0x4c] sm:$0xf]
        %v933 = vld [vmem:[%s860 + $0x50] sm:$0xf]
        %v934 = vld [vmem:[%s860 + $0x54] sm:$0xf]
        %v935 = vld [vmem:[%s860 + $0x58] sm:$0xf]
        %v936 = vld [vmem:[%s860 + $0x5c] sm:$0xf]
        %v937 = vld [vmem:[%s860 + $0x60] sm:$0xf]
        %v938 = vld [vmem:[%s860 + $0x64] sm:$0xf]
        %v939 = vld [vmem:[%s860 + $0x68] sm:$0xf]
        %v940 = vld [vmem:[%s860 + $0x6c] sm:$0xf]
        %v941 = vld [vmem:[%s860 + $0x70] sm:$0xf]
        %v942 = vld [vmem:[%s860 + $0x74] sm:$0xf]
        %v943 = vld [vmem:[%s860 + $0x78] sm:$0xf]
        %v944 = vld [vmem:[%s860 + $0x7c] sm:$0xf]
        %v945 = vld [vmem:[%s860 + $0x80] sm:$0xf]
        %v946 = vld [vmem:[%s860 + $0x84] sm:$0xf]
        %v947 = vld [vmem:[%s860 + $0x88] sm:$0xf]
        %v948 = vld [vmem:[%s860 + $0x8c] sm:$0xf]
        %v949 = vld [vmem:[%s860 + $0x90] sm:$0xf]
        %v950 = vld [vmem:[%s860 + $0x94] sm:$0xf]
        %v951 = vld [vmem:[%s860 + $0x98] sm:$0xf]
        %v952 = vld [vmem:[%s860 + $0x9c] sm:$0xf]
        %v953 = vld [vmem:[%s860 + $0xa0] sm:$0xf]
        %v954 = vld [vmem:[%s860 + $0xa4] sm:$0xf]
        %v955 = vld [vmem:[%s860 + $0xa8] sm:$0xf]
        %v956 = vld [vmem:[%s860 + $0xac] sm:$0xf]
        %v957 = vld [vmem:[%s860 + $0xb0] sm:$0xf]
        %v958 = vld [vmem:[%s860 + $0xb4] sm:$0xf]
        %v959 = vld [vmem:[%s860 + $0xb8] sm:$0xf]
        %v960 = vld [vmem:[%s860 + $0xbc] sm:$0xf]
        %v961 = vld [vmem:[%s860 + $0xc0] sm:$0xf]
        %v962 = vld [vmem:[%s860 + $0xc4] sm:$0xf]
        %v963 = vld [vmem:[%s860 + $0xc8] sm:$0xf]
        %v964 = vld [vmem:[%s860 + $0xcc] sm:$0xf]
        %v965 = vld [vmem:[%s860 + $0xd0] sm:$0xf]
        %v966 = vld [vmem:[%s860 + $0xd4] sm:$0xf]
        %v967 = vld [vmem:[%s860 + $0xd8] sm:$0xf]
        %v968 = vld [vmem:[%s860 + $0xdc] sm:$0xf]
        %v969 = vld [vmem:[%s860 + $0xe0] sm:$0xf]
        %v970 = vld [vmem:[%s860 + $0xe4] sm:$0xf]
        %v971 = vld [vmem:[%s860 + $0xe8] sm:$0xf]
        %v972 = vld [vmem:[%s860 + $0xec] sm:$0xf]
        %v973 = vld [vmem:[%s860 + $0xf0] sm:$0xf]
        %v974 = vld [vmem:[%s860 + $0xf4] sm:$0xf]
        %v975 = vld [vmem:[%s860 + $0xf8] sm:$0xf]
        %v976 = vld [vmem:[%s860 + $0xfc] sm:$0xf]
        %v977 = vld [vmem:[%s860 + $0x100] sm:$0xf]
        %v978 = vld [vmem:[%s860 + $0x104] sm:$0xf]
        %v979 = vld [vmem:[%s860 + $0x108] sm:$0xf]
        %v980 = vld [vmem:[%s860 + $0x10c] sm:$0xf]
        %v981 = vld [vmem:[%s860 + $0x110] sm:$0xf]
        %v982 = vld [vmem:[%s860 + $0x114] sm:$0xf]
        %v983 = vld [vmem:[%s860 + $0x118] sm:$0xf]
        %v984 = vld [vmem:[%s860 + $0x11c] sm:$0xf]
        %v985 = vld [vmem:[%s860 + $0x120] sm:$0xf]
        %v986 = vld [vmem:[%s860 + $0x124] sm:$0xf]
        %v987 = vld [vmem:[%s860 + $0x128] sm:$0xf]
        %v988 = vld [vmem:[%s860 + $0x12c] sm:$0xf]
        %v989 = vld [vmem:[%s860 + $0x130] sm:$0xf]
        %v990 = vld [vmem:[%s860 + $0x134] sm:$0xf]
        %v991 = vld [vmem:[%s860 + $0x138] sm:$0xf]
        %v992 = vld [vmem:[%s860 + $0x13c] sm:$0xf]
        %v993 = vld [vmem:[%s860 + $0x140] sm:$0xf]
        %v994 = vld [vmem:[%s860 + $0x144] sm:$0xf]
        %v995 = vld [vmem:[%s860 + $0x148] sm:$0xf]
        %v996 = vld [vmem:[%s860 + $0x14c] sm:$0xf]
        %v997 = vld [vmem:[%s860 + $0x150] sm:$0xf]
        %v998 = vld [vmem:[%s860 + $0x154] sm:$0xf]
        %v999 = vld [vmem:[%s860 + $0x158] sm:$0xf]
        %v1000 = vld [vmem:[%s860 + $0x15c] sm:$0xf]
        %v1001 = vld [vmem:[%s860 + $0x160] sm:$0xf]
        %v1002 = vld [vmem:[%s860 + $0x164] sm:$0xf]
        %v1003 = vld [vmem:[%s860 + $0x168] sm:$0xf]
        %v1004 = vld [vmem:[%s860 + $0x16c] sm:$0xf]
        %v1005 = vld [vmem:[%s860 + $0x170] sm:$0xf]
        %v1006 = vld [vmem:[%s860 + $0x174] sm:$0xf]
        %v1007 = vld [vmem:[%s860 + $0x178] sm:$0xf]
        %v1008 = vld [vmem:[%s860 + $0x17c] sm:$0xf]
        %v1009 = vld [vmem:[%s860 + $0x180] sm:$0xf]
        %v1010 = vld [vmem:[%s860 + $0x184] sm:$0xf]
        %v1011 = vld [vmem:[%s860 + $0x188] sm:$0xf]
        %v1012 = vld [vmem:[%s860 + $0x18c] sm:$0xf]
        %v1013 = vld [vmem:[%s860 + $0x190] sm:$0xf]
        %v1014 = vld [vmem:[%s860 + $0x194] sm:$0xf]
        %v1015 = vld [vmem:[%s860 + $0x198] sm:$0xf]
        %v1016 = vld [vmem:[%s860 + $0x19c] sm:$0xf]
        %v1017 = vld [vmem:[%s860 + $0x1a0] sm:$0xf]
        %v1018 = vld [vmem:[%s860 + $0x1a4] sm:$0xf]
        %v1019 = vld [vmem:[%s860 + $0x1a8] sm:$0xf]
        %v1020 = vld [vmem:[%s860 + $0x1ac] sm:$0xf]
        %v1021 = vld [vmem:[%s860 + $0x1b0] sm:$0xf]
        %v1022 = vld [vmem:[%s860 + $0x1b4] sm:$0xf]
        %v1023 = vld [vmem:[%s860 + $0x1b8] sm:$0xf]
        %v1024 = vld [vmem:[%s860 + $0x1bc] sm:$0xf]
        %v1025 = vld [vmem:[%s860 + $0x1c0] sm:$0xf]
        %v1026 = vld [vmem:[%s860 + $0x1c4] sm:$0xf]
        %v1027 = vld [vmem:[%s860 + $0x1c8] sm:$0xf]
        %v1028 = vld [vmem:[%s860 + $0x1cc] sm:$0xf]
        %v1029 = vld [vmem:[%s860 + $0x1d0] sm:$0xf]
        %v1030 = vld [vmem:[%s860 + $0x1d4] sm:$0xf]
        %v1031 = vld [vmem:[%s860 + $0x1d8] sm:$0xf]
        %v1032 = vld [vmem:[%s860 + $0x1dc] sm:$0xf]
        %v1033 = vld [vmem:[%s860 + $0x1e0] sm:$0xf]
        %v1034 = vld [vmem:[%s860 + $0x1e4] sm:$0xf]
        %v1035 = vld [vmem:[%s860 + $0x1e8] sm:$0xf]
        %v1036 = vld [vmem:[%s860 + $0x1ec] sm:$0xf]
        %v1037 = vld [vmem:[%s860 + $0x1f0] sm:$0xf]
        %v1038 = vld [vmem:[%s860 + $0x1f4] sm:$0xf]
        %v1039 = vld [vmem:[%s860 + $0x1f8] sm:$0xf]
        %v1040 = vld [vmem:[%s860 + $0x1fc] sm:$0xf]
        %v1041 = vld [vmem:[%s860 + $0x200] sm:$0xf]
        %v1042 = vld [vmem:[%s860 + $0x204] sm:$0xf]
        %v1043 = vld [vmem:[%s860 + $0x208] sm:$0xf]
        %v1044 = vld [vmem:[%s860 + $0x20c] sm:$0xf]
        %v1045 = vld [vmem:[%s860 + $0x210] sm:$0xf]
        %v1046 = vld [vmem:[%s860 + $0x214] sm:$0xf]
        %v1047 = vld [vmem:[%s860 + $0x218] sm:$0xf]
        %v1048 = vld [vmem:[%s860 + $0x21c] sm:$0xf]
        %v1049 = vld [vmem:[%s860 + $0x220] sm:$0xf]
        %v1050 = vld [vmem:[%s860 + $0x224] sm:$0xf]
        %v1051 = vld [vmem:[%s860 + $0x228] sm:$0xf]
        %v1052 = vld [vmem:[%s860 + $0x22c] sm:$0xf]
        %v1053 = vld [vmem:[%s860 + $0x230] sm:$0xf]
        %v1054 = vld [vmem:[%s860 + $0x234] sm:$0xf]
        %v1055 = vld [vmem:[%s860 + $0x238] sm:$0xf]
        %v1056 = vld [vmem:[%s860 + $0x23c] sm:$0xf]
        %v1067 = vunpack.c.l.b16 %v903
        %v1068 = vunpack.c.h.b16 %v903
        %v1069 = vunpack.c.l.b16 %v904
        %v1070 = vunpack.c.h.b16 %v904
        %v1071 = vunpack.c.l.b16 %v905
        %v1072 = vunpack.c.h.b16 %v905
        %v1073 = vunpack.c.l.b16 %v906
        %v1074 = vunpack.c.h.b16 %v906
        %v1075 = vunpack.c.l.b16 %v907
        %v1076 = vunpack.c.l.b16 %v908
        %v1077 = vunpack.c.h.b16 %v908
        %v1078 = vunpack.c.l.b16 %v909
        %v1079 = vunpack.c.h.b16 %v909
        %v1080 = vunpack.c.l.b16 %v910
        %v1081 = vunpack.c.h.b16 %v910
        %v1082 = vunpack.c.l.b16 %v911
        %v1083 = vunpack.c.h.b16 %v911
        %v1084 = vunpack.c.l.b16 %v912
        %v1085 = vpack.c.b16 %v1076, %v1067
        %v1086 = vpack.c.b16 %v1077, %v1068
        %v1087 = vpack.c.b16 %v1078, %v1069
        %v1088 = vpack.c.b16 %v1079, %v1070
        %v1089 = vpack.c.b16 %v1080, %v1071
        %v1090 = vpack.c.b16 %v1081, %v1072
        %v1091 = vpack.c.b16 %v1082, %v1073
        %v1092 = vpack.c.b16 %v1083, %v1074
        %v1093 = vpack.c.b16 %v1084, %v1075
        %v1247 = vunpack.c.l.b16 %v913
        %v1248 = vunpack.c.l.b16 %v914
        %v1249 = vunpack.c.l.b16 %v915
        %v1250 = vunpack.c.l.b16 %v916
        %v1251 = vunpack.c.l.b16 %v917
        %v1252 = vunpack.c.l.b16 %v918
        %v1253 = vunpack.c.l.b16 %v919
        %v1254 = vunpack.c.l.b16 %v920
        %v1255 = vunpack.c.l.b16 %v921
        %v1256 = vunpack.c.l.b16 %v922
        %v1257 = vunpack.c.l.b16 %v923
        %v1258 = vunpack.c.l.b16 %v924
        %v1259 = vunpack.c.l.b16 %v925
        %v1260 = vunpack.c.l.b16 %v926
        %v1261 = vunpack.c.l.b16 %v927
        %v1262 = vunpack.c.l.b16 %v928
        %v1263 = vunpack.c.l.b16 %v929
        %v1264 = vunpack.c.l.b16 %v930
        %v1265 = vunpack.c.l.b16 %v931
        %v1266 = vunpack.c.l.b16 %v932
        %v1267 = vunpack.c.l.b16 %v933
        %v1268 = vunpack.c.l.b16 %v934
        %v1269 = vunpack.c.l.b16 %v935
        %v1270 = vunpack.c.l.b16 %v936
        %v1271 = vunpack.c.l.b16 %v937
        %v1272 = vunpack.c.l.b16 %v938
        %v1273 = vunpack.c.l.b16 %v939
        %v1274 = vunpack.c.l.b16 %v940
        %v1275 = vunpack.c.l.b16 %v941
        %v1276 = vunpack.c.l.b16 %v942
        %v1277 = vunpack.c.l.b16 %v943
        %v1278 = vunpack.c.l.b16 %v944
        %v1279 = vunpack.c.l.b16 %v945
        %v1280 = vunpack.c.l.b16 %v946
        %v1281 = vunpack.c.l.b16 %v947
        %v1282 = vunpack.c.l.b16 %v948
        %v1283 = vunpack.c.l.b16 %v949
        %v1284 = vunpack.c.l.b16 %v950
        %v1285 = vunpack.c.l.b16 %v951
        %v1286 = vunpack.c.l.b16 %v952
        %v1287 = vunpack.c.l.b16 %v953
        %v1288 = vunpack.c.l.b16 %v954
        %v1289 = vunpack.c.l.b16 %v955
        %v1290 = vunpack.c.l.b16 %v956
        %v1291 = vunpack.c.l.b16 %v957
        %v1292 = vunpack.c.l.b16 %v958
        %v1293 = vunpack.c.l.b16 %v959
        %v1294 = vunpack.c.l.b16 %v960
        %v1295 = vunpack.c.l.b16 %v961
        %v1296 = vunpack.c.l.b16 %v962
        %v1297 = vunpack.c.l.b16 %v963
        %v1298 = vunpack.c.l.b16 %v964
        %v1299 = vunpack.c.l.b16 %v965
        %v1300 = vunpack.c.l.b16 %v966
        %v1301 = vunpack.c.l.b16 %v967
        %v1302 = vunpack.c.l.b16 %v968
        %v1303 = vunpack.c.l.b16 %v969
        %v1304 = vunpack.c.l.b16 %v970
        %v1305 = vunpack.c.l.b16 %v971
        %v1306 = vunpack.c.l.b16 %v972
        %v1307 = vunpack.c.l.b16 %v973
        %v1308 = vunpack.c.l.b16 %v974
        %v1309 = vunpack.c.l.b16 %v975
        %v1310 = vunpack.c.l.b16 %v976
        %v1311 = vunpack.c.l.b16 %v977
        %v1312 = vunpack.c.l.b16 %v978
        %v1313 = vunpack.c.l.b16 %v979
        %v1314 = vunpack.c.l.b16 %v980
        %v1315 = vunpack.c.l.b16 %v981
        %v1316 = vunpack.c.l.b16 %v982
        %v1317 = vunpack.c.l.b16 %v983
        %v1318 = vunpack.c.l.b16 %v984
        %v1319 = vunpack.c.l.b16 %v985
        %v1320 = vunpack.c.l.b16 %v986
        %v1321 = vunpack.c.l.b16 %v987
        %v1322 = vunpack.c.l.b16 %v988
        %v1323 = vunpack.c.l.b16 %v989
        %v1324 = vunpack.c.l.b16 %v990
        %v1325 = vunpack.c.l.b16 %v991
        %v1326 = vunpack.c.l.b16 %v992
        %v1327 = vunpack.c.l.b16 %v993
        %v1328 = vunpack.c.l.b16 %v994
        %v1329 = vunpack.c.l.b16 %v995
        %v1330 = vunpack.c.l.b16 %v996
        %v1331 = vunpack.c.l.b16 %v997
        %v1332 = vunpack.c.l.b16 %v998
        %v1333 = vunpack.c.l.b16 %v999
        %v1334 = vunpack.c.l.b16 %v1000
        %v1335 = vunpack.c.l.b16 %v1001
        %v1336 = vunpack.c.l.b16 %v1002
        %v1337 = vunpack.c.l.b16 %v1003
        %v1338 = vunpack.c.l.b16 %v1004
        %v1339 = vunpack.c.l.b16 %v1005
        %v1340 = vunpack.c.l.b16 %v1006
        %v1341 = vunpack.c.l.b16 %v1007
        %v1342 = vunpack.c.l.b16 %v1008
        %v1343 = vunpack.c.l.b16 %v1009
        %v1344 = vunpack.c.l.b16 %v1010
        %v1345 = vunpack.c.l.b16 %v1011
        %v1346 = vunpack.c.l.b16 %v1012
        %v1347 = vunpack.c.l.b16 %v1013
        %v1348 = vunpack.c.l.b16 %v1014
        %v1349 = vunpack.c.l.b16 %v1015
        %v1350 = vunpack.c.l.b16 %v1016
        %v1351 = vunpack.c.l.b16 %v1017
        %v1352 = vunpack.c.l.b16 %v1018
        %v1353 = vunpack.c.l.b16 %v1019
        %v1354 = vunpack.c.l.b16 %v1020
        %v1355 = vunpack.c.l.b16 %v1021
        %v1356 = vunpack.c.l.b16 %v1022
        %v1357 = vunpack.c.l.b16 %v1023
        %v1358 = vunpack.c.l.b16 %v1024
        %v1359 = vunpack.c.l.b16 %v1025
        %v1360 = vunpack.c.l.b16 %v1026
        %v1361 = vunpack.c.l.b16 %v1027
        %v1362 = vunpack.c.l.b16 %v1028
        %v1363 = vunpack.c.l.b16 %v1029
        %v1364 = vunpack.c.l.b16 %v1030
        %v1365 = vunpack.c.l.b16 %v1031
        %v1366 = vunpack.c.l.b16 %v1032
        %v1367 = vunpack.c.l.b16 %v1033
        %v1368 = vunpack.c.l.b16 %v1034
        %v1369 = vunpack.c.l.b16 %v1035
        %v1370 = vunpack.c.l.b16 %v1036
        %v1371 = vunpack.c.l.b16 %v1037
        %v1372 = vunpack.c.l.b16 %v1038
        %v1373 = vunpack.c.l.b16 %v1039
        %v1374 = vunpack.c.l.b16 %v1040
        %v1375 = vunpack.c.l.b16 %v1041
        %v1376 = vunpack.c.l.b16 %v1042
        %v1377 = vunpack.c.l.b16 %v1043
        %v1378 = vunpack.c.l.b16 %v1044
        %v1379 = vunpack.c.l.b16 %v1045
        %v1380 = vunpack.c.l.b16 %v1046
        %v1381 = vunpack.c.l.b16 %v1047
        %v1382 = vunpack.c.l.b16 %v1048
        %v1383 = vunpack.c.l.b16 %v1049
        %v1384 = vunpack.c.l.b16 %v1050
        %v1385 = vunpack.c.l.b16 %v1051
        %v1386 = vunpack.c.l.b16 %v1052
        %v1387 = vunpack.c.l.b16 %v1053
        %v1388 = vunpack.c.l.b16 %v1054
        %v1389 = vunpack.c.l.b16 %v1055
        %v1390 = vunpack.c.l.b16 %v1056
        %v1391 = vpack.c.b16 %v1248, %v1247
        %v1392 = vpack.c.b16 %v1250, %v1249
        %v1393 = vpack.c.b16 %v1252, %v1251
        %v1394 = vpack.c.b16 %v1254, %v1253
        %v1395 = vpack.c.b16 %v1256, %v1255
        %v1396 = vpack.c.b16 %v1258, %v1257
        %v1397 = vpack.c.b16 %v1260, %v1259
        %v1398 = vpack.c.b16 %v1262, %v1261
        %v1399 = vpack.c.b16 %v1264, %v1263
        %v1400 = vpack.c.b16 %v1266, %v1265
        %v1401 = vpack.c.b16 %v1268, %v1267
        %v1402 = vpack.c.b16 %v1270, %v1269
        %v1403 = vpack.c.b16 %v1272, %v1271
        %v1404 = vpack.c.b16 %v1274, %v1273
        %v1405 = vpack.c.b16 %v1276, %v1275
        %v1406 = vpack.c.b16 %v1278, %v1277
        %v1407 = vpack.c.b16 %v1280, %v1279
        %v1408 = vpack.c.b16 %v1282, %v1281
        %v1409 = vpack.c.b16 %v1284, %v1283
        %v1410 = vpack.c.b16 %v1286, %v1285
        %v1411 = vpack.c.b16 %v1288, %v1287
        %v1412 = vpack.c.b16 %v1290, %v1289
        %v1413 = vpack.c.b16 %v1292, %v1291
        %v1414 = vpack.c.b16 %v1294, %v1293
        %v1415 = vpack.c.b16 %v1296, %v1295
        %v1416 = vpack.c.b16 %v1298, %v1297
        %v1417 = vpack.c.b16 %v1300, %v1299
        %v1418 = vpack.c.b16 %v1302, %v1301
        %v1419 = vpack.c.b16 %v1304, %v1303
        %v1420 = vpack.c.b16 %v1306, %v1305
        %v1421 = vpack.c.b16 %v1308, %v1307
        %v1422 = vpack.c.b16 %v1310, %v1309
        %v1423 = vpack.c.b16 %v1312, %v1311
        %v1424 = vpack.c.b16 %v1314, %v1313
        %v1425 = vpack.c.b16 %v1316, %v1315
        %v1426 = vpack.c.b16 %v1318, %v1317
        %v1427 = vpack.c.b16 %v1320, %v1319
        %v1428 = vpack.c.b16 %v1322, %v1321
        %v1429 = vpack.c.b16 %v1324, %v1323
        %v1430 = vpack.c.b16 %v1326, %v1325
        %v1431 = vpack.c.b16 %v1328, %v1327
        %v1432 = vpack.c.b16 %v1330, %v1329
        %v1433 = vpack.c.b16 %v1332, %v1331
        %v1434 = vpack.c.b16 %v1334, %v1333
        %v1435 = vpack.c.b16 %v1336, %v1335
        %v1436 = vpack.c.b16 %v1338, %v1337
        %v1437 = vpack.c.b16 %v1340, %v1339
        %v1438 = vpack.c.b16 %v1342, %v1341
        %v1439 = vpack.c.b16 %v1344, %v1343
        %v1440 = vpack.c.b16 %v1346, %v1345
        %v1441 = vpack.c.b16 %v1348, %v1347
        %v1442 = vpack.c.b16 %v1350, %v1349
        %v1443 = vpack.c.b16 %v1352, %v1351
        %v1444 = vpack.c.b16 %v1354, %v1353
        %v1445 = vpack.c.b16 %v1356, %v1355
        %v1446 = vpack.c.b16 %v1358, %v1357
        %v1447 = vpack.c.b16 %v1360, %v1359
        %v1448 = vpack.c.b16 %v1362, %v1361
        %v1449 = vpack.c.b16 %v1364, %v1363
        %v1450 = vpack.c.b16 %v1366, %v1365
        %v1451 = vpack.c.b16 %v1368, %v1367
        %v1452 = vpack.c.b16 %v1370, %v1369
        %v1453 = vpack.c.b16 %v1372, %v1371
        %v1454 = vpack.c.b16 %v1374, %v1373
        %v1455 = vpack.c.b16 %v1376, %v1375
        %v1456 = vpack.c.b16 %v1378, %v1377
        %v1457 = vpack.c.b16 %v1380, %v1379
        %v1458 = vpack.c.b16 %v1382, %v1381
        %v1459 = vpack.c.b16 %v1384, %v1383
        %v1460 = vpack.c.b16 %v1386, %v1385
        %v1461 = vpack.c.b16 %v1388, %v1387
        %v1462 = vpack.c.b16 %v1390, %v1389
        %1535 = vmatprep.subr.bf16.mxu0 0
        %1536 = vmatpush1.bf16.msra.mxu0 %v1391
        %1537 = vmatprep.subr.bf16.mxu0 0
        %1538 = vmatpush1.bf16.msra.mxu0 %v1392
        %1539 = vmatprep.subr.bf16.mxu0 0
        %1540 = vmatpush1.bf16.msra.mxu0 %v1393
        %1541 = vmatprep.subr.bf16.mxu0 0
        %1542 = vmatpush1.bf16.msra.mxu0 %v1394
        %1543 = vmatprep.subr.bf16.mxu0 0
        %1544 = vmatpush1.bf16.msra.mxu0 %v1395
        %1545 = vmatprep.subr.bf16.mxu0 0
        %1546 = vmatpush1.bf16.msra.mxu0 %v1396
        %1547 = vmatprep.subr.bf16.mxu0 0
        %1548 = vmatpush1.bf16.msra.mxu0 %v1397
        %1549 = vmatprep.subr.bf16.mxu0 0
        %1550 = vmatpush1.bf16.msra.mxu0 %v1398
        %1551 = vmatprep.subr.bf16.mxu0 0
        %1552 = vmatpush1.bf16.msra.mxu0 %v1399
        %1553 = vmatprep.subr.bf16.mxu0 0
        %1554 = vmatpush1.bf16.msra.mxu0 %v1400
        %1555 = vmatprep.subr.bf16.mxu0 0
        %1556 = vmatpush1.bf16.msra.mxu0 %v1401
        %1557 = vmatprep.subr.bf16.mxu0 0
        %1558 = vmatpush1.bf16.msra.mxu0 %v1402
        %1559 = vmatprep.subr.bf16.mxu0 0
        %1560 = vmatpush1.bf16.msra.mxu0 %v1403
        %1561 = vmatprep.subr.bf16.mxu0 0
        %1562 = vmatpush1.bf16.msra.mxu0 %v1404
        %1563 = vmatprep.subr.bf16.mxu0 0
        %1564 = vmatpush1.bf16.msra.mxu0 %v1405
        %1565 = vmatprep.subr.bf16.mxu0 0
        %1566 = vmatpush1.bf16.msra.mxu0 %v1406
        %1567 = vmatprep.mubr.bf16.mxu0 %v1086
        %1568 = vmatmul.mubr.bf16.gmra.mrb[0].mxu0 %v1085
        %v1569 = vpop.f32.mrb[0].mxu0
        %v1570 = vadd.f32 0.0, %v1569
        %v1571 = vpop.f32.mrb[0].mxu0
        %v1572 = vpop.f32.mrb[0].mxu0
        %v1573 = vadd.f32 0.0, %v1572
        %v1574 = vpop.f32.mrb[0].mxu0
        %1575 = vdwg.mxu0
        %1576 = vmatprep.subr.bf16.mxu0 0
        %1577 = vmatpush1.bf16.msra.mxu0 %v1407
        %1578 = vmatprep.subr.bf16.mxu0 0
        %1579 = vmatpush1.bf16.msra.mxu0 %v1408
        %1580 = vmatprep.subr.bf16.mxu0 0
        %1581 = vmatpush1.bf16.msra.mxu0 %v1409
        %1582 = vmatprep.subr.bf16.mxu0 0
        %1583 = vmatpush1.bf16.msra.mxu0 %v1410
        %1584 = vmatprep.subr.bf16.mxu0 0
        %1585 = vmatpush1.bf16.msra.mxu0 %v1411
        %1586 = vmatprep.subr.bf16.mxu0 0
        %1587 = vmatpush1.bf16.msra.mxu0 %v1412
        %1588 = vmatprep.subr.bf16.mxu0 0
        %1589 = vmatpush1.bf16.msra.mxu0 %v1413
        %1590 = vmatprep.subr.bf16.mxu0 0
        %1591 = vmatpush1.bf16.msra.mxu0 %v1414
        %1592 = vmatprep.subr.bf16.mxu0 0
        %1593 = vmatpush1.bf16.msra.mxu0 %v1415
        %1594 = vmatprep.subr.bf16.mxu0 0
        %1595 = vmatpush1.bf16.msra.mxu0 %v1416
        %1596 = vmatprep.subr.bf16.mxu0 0
        %1597 = vmatpush1.bf16.msra.mxu0 %v1417
        %1598 = vmatprep.subr.bf16.mxu0 0
        %1599 = vmatpush1.bf16.msra.mxu0 %v1418
        %1600 = vmatprep.subr.bf16.mxu0 0
        %1601 = vmatpush1.bf16.msra.mxu0 %v1419
        %1602 = vmatprep.subr.bf16.mxu0 0
        %1603 = vmatpush1.bf16.msra.mxu0 %v1420
        %1604 = vmatprep.subr.bf16.mxu0 0
        %1605 = vmatpush1.bf16.msra.mxu0 %v1421
        %1606 = vmatprep.subr.bf16.mxu0 0
        %1607 = vmatpush1.bf16.msra.mxu0 %v1422
        %1608 = vmatprep.mubr.bf16.mxu0 %v1088
        %1609 = vmatmul.mubr.bf16.gmra.mrb[0].mxu0 %v1087
        %v1610 = vpop.f32.mrb[0].mxu0
        %v1611 = vadd.f32 %v1570, %v1610
        %v1612 = vpop.f32.mrb[0].mxu0
        %v1613 = vpop.f32.mrb[0].mxu0
        %v1614 = vadd.f32 %v1573, %v1613
        %v1615 = vpop.f32.mrb[0].mxu0
        %1616 = vdwg.mxu0
        %1617 = vmatprep.subr.bf16.mxu0 0
        %1618 = vmatpush1.bf16.msra.mxu0 %v1423
        %1619 = vmatprep.subr.bf16.mxu0 0
        %1620 = vmatpush1.bf16.msra.mxu0 %v1424
        %1621 = vmatprep.subr.bf16.mxu0 0
        %1622 = vmatpush1.bf16.msra.mxu0 %v1425
        %1623 = vmatprep.subr.bf16.mxu0 0
        %1624 = vmatpush1.bf16.msra.mxu0 %v1426
        %1625 = vmatprep.subr.bf16.mxu0 0
        %1626 = vmatpush1.bf16.msra.mxu0 %v1427
        %1627 = vmatprep.subr.bf16.mxu0 0
        %1628 = vmatpush1.bf16.msra.mxu0 %v1428
        %1629 = vmatprep.subr.bf16.mxu0 0
        %1630 = vmatpush1.bf16.msra.mxu0 %v1429
        %1631 = vmatprep.subr.bf16.mxu0 0
        %1632 = vmatpush1.bf16.msra.mxu0 %v1430
        %1633 = vmatprep.subr.bf16.mxu0 0
        %1634 = vmatpush1.bf16.msra.mxu0 %v1431
        %1635 = vmatprep.subr.bf16.mxu0 0
        %1636 = vmatpush1.bf16.msra.mxu0 %v1432
        %1637 = vmatprep.subr.bf16.mxu0 0
        %1638 = vmatpush1.bf16.msra.mxu0 %v1433
        %1639 = vmatprep.subr.bf16.mxu0 0
        %1640 = vmatpush1.bf16.msra.mxu0 %v1434
        %1641 = vmatprep.subr.bf16.mxu0 0
        %1642 = vmatpush1.bf16.msra.mxu0 %v1435
        %1643 = vmatprep.subr.bf16.mxu0 0
        %1644 = vmatpush1.bf16.msra.mxu0 %v1436
        %1645 = vmatprep.subr.bf16.mxu0 0
        %1646 = vmatpush1.bf16.msra.mxu0 %v1437
        %1647 = vmatprep.subr.bf16.mxu0 0
        %1648 = vmatpush1.bf16.msra.mxu0 %v1438
        %1649 = vmatprep.mubr.bf16.mxu0 %v1090
        %1650 = vmatmul.mubr.bf16.gmra.mrb[0].mxu0 %v1089
        %v1651 = vpop.f32.mrb[0].mxu0
        %v1652 = vadd.f32 %v1611, %v1651
        %v1653 = vpop.f32.mrb[0].mxu0
        %v1654 = vpop.f32.mrb[0].mxu0
        %v1655 = vadd.f32 %v1614, %v1654
        %v1656 = vpop.f32.mrb[0].mxu0
        %1657 = vdwg.mxu0
        %1658 = vmatprep.subr.bf16.mxu0 0
        %1659 = vmatpush1.bf16.msra.mxu0 %v1439
        %1660 = vmatprep.subr.bf16.mxu0 0
        %1661 = vmatpush1.bf16.msra.mxu0 %v1440
        %1662 = vmatprep.subr.bf16.mxu0 0
        %1663 = vmatpush1.bf16.msra.mxu0 %v1441
        %1664 = vmatprep.subr.bf16.mxu0 0
        %1665 = vmatpush1.bf16.msra.mxu0 %v1442
        %1666 = vmatprep.subr.bf16.mxu0 0
        %1667 = vmatpush1.bf16.msra.mxu0 %v1443
        %1668 = vmatprep.subr.bf16.mxu0 0
        %1669 = vmatpush1.bf16.msra.mxu0 %v1444
        %1670 = vmatprep.subr.bf16.mxu0 0
        %1671 = vmatpush1.bf16.msra.mxu0 %v1445
        %1672 = vmatprep.subr.bf16.mxu0 0
        %1673 = vmatpush1.bf16.msra.mxu0 %v1446
        %1674 = vmatprep.subr.bf16.mxu0 0
        %1675 = vmatpush1.bf16.msra.mxu0 %v1447
        %1676 = vmatprep.subr.bf16.mxu0 0
        %1677 = vmatpush1.bf16.msra.mxu0 %v1448
        %1678 = vmatprep.subr.bf16.mxu0 0
        %1679 = vmatpush1.bf16.msra.mxu0 %v1449
        %1680 = vmatprep.subr.bf16.mxu0 0
        %1681 = vmatpush1.bf16.msra.mxu0 %v1450
        %1682 = vmatprep.subr.bf16.mxu0 0
        %1683 = vmatpush1.bf16.msra.mxu0 %v1451
        %1684 = vmatprep.subr.bf16.mxu0 0
        %1685 = vmatpush1.bf16.msra.mxu0 %v1452
        %1686 = vmatprep.subr.bf16.mxu0 0
        %1687 = vmatpush1.bf16.msra.mxu0 %v1453
        %1688 = vmatprep.subr.bf16.mxu0 0
        %1689 = vmatpush1.bf16.msra.mxu0 %v1454
        %1690 = vmatprep.mubr.bf16.mxu0 %v1092
        %1691 = vmatmul.mubr.bf16.gmra.mrb[0].mxu0 %v1091
        %v1692 = vpop.f32.mrb[0].mxu0
        %v1693 = vadd.f32 %v1652, %v1692
        %v1694 = vpop.f32.mrb[0].mxu0
        %v1695 = vpop.f32.mrb[0].mxu0
        %v1696 = vadd.f32 %v1655, %v1695
        %v1697 = vpop.f32.mrb[0].mxu0
        %1698 = vdwg.mxu0
        %1699 = vmatprep.subr.bf16.mxu0 0
        %1700 = vmatpush1.bf16.msra.mxu0 %v1455
        %1701 = vmatprep.subr.bf16.mxu0 0
        %1702 = vmatpush1.bf16.msra.mxu0 %v1456
        %1703 = vmatprep.subr.bf16.mxu0 0
        %1704 = vmatpush1.bf16.msra.mxu0 %v1457
        %1705 = vmatprep.subr.bf16.mxu0 0
        %1706 = vmatpush1.bf16.msra.mxu0 %v1458
        %1707 = vmatprep.subr.bf16.mxu0 0
        %1708 = vmatpush1.bf16.msra.mxu0 %v1459
        %1709 = vmatprep.subr.bf16.mxu0 0
        %1710 = vmatpush1.bf16.msra.mxu0 %v1460
        %1711 = vmatprep.subr.bf16.mxu0 0
        %1712 = vmatpush1.bf16.msra.mxu0 %v1461
        %1713 = vmatprep.subr.bf16.mxu0 0
        %1714 = vmatpush1.bf16.msra.mxu0 %v1462
        %1715 = vmatprep.subr.bf16.mxu0 0
        %1716 = vmatpush1.bf16.msra.mxu0 0
        %1717 = vmatprep.subr.bf16.mxu0 0
        %1718 = vmatpush1.bf16.msra.mxu0 0
        %1719 = vmatprep.subr.bf16.mxu0 0
        %1720 = vmatpush1.bf16.msra.mxu0 0
        %1721 = vmatprep.subr.bf16.mxu0 0
        %1722 = vmatpush1.bf16.msra.mxu0 0
        %1723 = vmatprep.subr.bf16.mxu0 0
        %1724 = vmatpush1.bf16.msra.mxu0 0
        %1725 = vmatprep.subr.bf16.mxu0 0
        %1726 = vmatpush1.bf16.msra.mxu0 0
        %1727 = vmatprep.subr.bf16.mxu0 0
        %1728 = vmatpush1.bf16.msra.mxu0 0
        %1729 = vmatprep.subr.bf16.mxu0 0
        %1730 = vmatpush1.bf16.msra.mxu0 0
        %1731 = vmatprep.mubr.bf16.mxu0 0
        %1732 = vmatmul.mubr.bf16.gmra.mrb[0].mxu0 %v1093
        %v1733 = vpop.f32.mrb[0].mxu0
        %v1734 = vadd.f32 %v1693, %v1733
        %v1735 = vpop.f32.mrb[0].mxu0
        %v1736 = vpop.f32.mrb[0].mxu0
        %v1737 = vadd.f32 %v1696, %v1736
        %v1738 = vpop.f32.mrb[0].mxu0
        %1739 = vdwg.mxu0
        %v1740 = vadd.f32 %v901, %v1734
        %v1741 = vadd.f32 %v902, %v1737
        %1742 = vst [vmem:[#allocation2] sm:$0xff] %v1740
        %1743 = vst [vmem:[#allocation2 + $0x8] sm:$0xff] %v1741
        %p1744 = scmp.eq.s32.totalorder %s21, 1
        // Predicated region
        $region104: #{lip_sync_forward.16} parent=90 // pred_check
          %p1745 = pneg %p1744
        $region105: #{lip_sync_forward.16} parent=90 // pred_check_branch
          %1747 = sbr.rel (%p1745) target = $region107
        $region106: #{lip_sync_forward.16} parent=90 // pred_region
          %v1748 = vld [vmem:[#allocation2] sm:$0xff]
          %v1749 = vld [vmem:[#allocation2 + $0x8] sm:$0xff]
          %v1750 = vld [vmem:[%s892] sm:$0x1]
          %v1752 = vlaneseq
          %v1753 = vshrl.u32 %v1752, 7
          %v1754 = vsub.s32 0, %v1753
          %v1755 = vrot.slane %v1750, %v1754
          %v1757 = vadd.f32 %v1748, %v1755
          %v1758 = vadd.f32 %v1749, %v1755
          %v1759 = vmax.f32 %v1757, 0.0
          %v1760 = vmax.f32 %v1758, 0.0
          %v1761 = vpack.c.bf16 %v1760, %v1759
          %v1763 = vunpack.c.l.b16 %v1761
          %v1764 = vunpack.c.h.b16 %v1761
          %v1765 = vpack.c.b16 %v1763, %v1763
          %v1766 = vpack.c.b16 %v1764, %v1764
          %1769 = vst [vmem:[%s886] sm:$0xf] %v1765
          %1770 = vst [vmem:[%s886 + $0x4] sm:$0xf] %v1766
        $region107: #{lip_sync_forward.16} parent=90 // pred_fallthru
          _
        %s1771 = sand.u32 %s125, 1
        %s1772 = sand.u32 %s125, 1
        %s1773 = smul.addr %s1772, 8
        %s1774 = scalar_lea.vmem [#allocation5], %s1773
        // Predicated region
        $region108: #{lip_sync_forward.16} parent=90 // pred_check
          %p1775 = pneg %p135
        $region109: #{lip_sync_forward.16} parent=90 // pred_check_branch
          %1777 = sbr.rel (%p1775) target = $region111
        $region110: #{lip_sync_forward.16} parent=90 // pred_region
          %s1778 = smul.u32 2, %s19
          %s1779 = smul.addr %s1778, 2
          %s1780 = sadd.s32 %s20, %s1779
          %s1781 = smul.addr %s1780, 4
          %s1782 = scalar_lea.vmem %s3, %s1781
          // Predicated region
          $region112: #{lip_sync_forward.16} parent=110 // pred_check
            _
          $region113: #{lip_sync_forward.16} parent=110 // pred_check_branch
            %1784 = sbr.rel (0) target = $region115
          $region114: #{lip_sync_forward.16} parent=110 // pred_region
            // Predicated region
            $region116: #{lip_sync_forward.16} parent=114 // pred_check
              _
            $region117: #{lip_sync_forward.16} parent=114 // pred_check_branch
              %1786 = sbr.rel target = $region119
            $region118: #{lip_sync_forward.16} parent=114 // pred_region
              // Predicated region
              $region131: #{lip_sync_forward.16} parent=118 // pred_check
                _
              $region132: #{lip_sync_forward.16} parent=118 // pred_check_branch
                %1803 = sbr.rel (0) target = $region134
              $region133: #{lip_sync_forward.16} parent=118 // pred_region
                loop: start=0, step=1, limit=1
                $region135: #{lip_sync_forward.16} parent=133 // loop_pre_header
                  _
                $region136: #{lip_sync_forward.16} parent=133 // loop_header
                  %s1805 = sphi 0, %s1809
                  %p1806 = scmp.ge.s32.totalorder %s1805, 1
                  %s1810 = sphi %s1774, %s1774
                  %s1811 = sphi %s1782, %s1782
                $region137: #{lip_sync_forward.16} parent=133 // loop_header_branch
                  %1808 = sbr.rel (%p1806) target = $region141
                $region138: #{lip_sync_forward.16} parent=133 // loop_body
                  _
                $region139: #{lip_sync_forward.16} parent=133 // loop_footer
                  %s1809 = sadd.s32 1, %s1805
                $region140: #{lip_sync_forward.16} parent=133 // loop_footer_branch
                  %1804 = sbr.rel target = $region136
                $region141: #{lip_sync_forward.16} parent=133 // loop_exit
                  _
                loop: start=0, step=1, limit=1
                $region142: #{lip_sync_forward.16} parent=133 // loop_pre_header
                  _
                $region143: #{lip_sync_forward.16} parent=133 // loop_header
                  %s1814 = sphi 0, %s1818
                  %p1815 = scmp.ge.s32.totalorder %s1814, 1
                  %s1819 = sphi %s1774, %s1774
                  %s1820 = sphi %s1782, %s1782
                $region144: #{lip_sync_forward.16} parent=133 // loop_header_branch
                  %1817 = sbr.rel (%p1815) target = $region148
                $region145: #{lip_sync_forward.16} parent=133 // loop_body
                  %v1821 = vld [vmem:[%s1819] sm:$0xf]
                  %1822 = vst [vmem:[%s1820] sm:$0xf] %v1821
                  %v1823 = vld [vmem:[%s1819 + $0x4] sm:$0xf]
                  %1824 = vst [vmem:[%s1820 + $0x8] sm:$0xf] %v1823
                $region146: #{lip_sync_forward.16} parent=133 // loop_footer
                  %s1818 = sadd.s32 1, %s1814
                $region147: #{lip_sync_forward.16} parent=133 // loop_footer_branch
                  %1813 = sbr.rel target = $region143
                $region148: #{lip_sync_forward.16} parent=133 // loop_exit
                  _
              $region134: #{lip_sync_forward.16} parent=118 // pred_fallthru
                _
            $region119: #{lip_sync_forward.16} parent=114 // pred_fallthru
              _
            // Predicated region
            $region120: #{lip_sync_forward.16} parent=114 // pred_check
              _
            $region121: #{lip_sync_forward.16} parent=114 // pred_check_branch
              %1788 = sbr.rel (0) target = $region123
            $region122: #{lip_sync_forward.16} parent=114 // pred_region
              loop: start=0, step=1, limit=1
              $region124: #{lip_sync_forward.16} parent=122 // loop_pre_header
                _
              $region125: #{lip_sync_forward.16} parent=122 // loop_header
                %s1791 = sphi 0, %s1795
                %p1792 = scmp.ge.s32.totalorder %s1791, 1
                %s1796 = sphi %s1774, %s1774
                %s1797 = sphi %s1782, %s1782
              $region126: #{lip_sync_forward.16} parent=122 // loop_header_branch
                %1794 = sbr.rel (%p1792) target = $region130
              $region127: #{lip_sync_forward.16} parent=122 // loop_body
                %v1798 = vld [vmem:[%s1796] sm:$0xf]
                %1799 = vst [vmem:[%s1797] sm:$0xf] %v1798
                %v1800 = vld [vmem:[%s1796 + $0x4] sm:$0xf]
                %1801 = vst [vmem:[%s1797 + $0x8] sm:$0xf] %v1800
              $region128: #{lip_sync_forward.16} parent=122 // loop_footer
                %s1795 = sadd.s32 1, %s1791
              $region129: #{lip_sync_forward.16} parent=122 // loop_footer_branch
                %1790 = sbr.rel target = $region125
              $region130: #{lip_sync_forward.16} parent=122 // loop_exit
                _
            $region123: #{lip_sync_forward.16} parent=114 // pred_fallthru
              _
          $region115: #{lip_sync_forward.16} parent=110 // pred_fallthru
            _
          %1825 = vnop
        $region111: #{lip_sync_forward.16} parent=90 // pred_fallthru
          _
      $region91: #{lip_sync_forward.16} parent=5 // pred_fallthru
        _
      %p1826 = scmp.le.s32.totalorder 2, %s9
      // Predicated region
      $region149: #{lip_sync_forward.16} parent=5 // pred_check
        %p1827 = pneg %p1826
      $region150: #{lip_sync_forward.16} parent=5 // pred_check_branch
        %1829 = sbr.rel (%p1827) target = $region152
      $region151: #{lip_sync_forward.16} parent=5 // pred_region
        %s1830 = ssub.s32 %s9, 2
        // Predicated region
        $region153: #{lip_sync_forward.16} parent=151 // pred_check
          %p1831 = pneg %p141
        $region154: #{lip_sync_forward.16} parent=151 // pred_check_branch
          %1833 = sbr.rel (%p1831) target = $region156
        $region155: #{lip_sync_forward.16} parent=151 // pred_region
          %s1834 = sand.u32 %s126, 1
          %s1835 = sand.u32 %s126, 1
          %s1836 = smul.addr %s1835, 8
          %s1837 = scalar_lea.vmem [#allocation5], %s1836
        $region156: #{lip_sync_forward.16} parent=151 // pred_fallthru
          _
      $region152: #{lip_sync_forward.16} parent=5 // pred_fallthru
        _
    $region6: #{lip_sync_forward.16} parent=1 // loop_footer
      %s13 = sadd.s32 1, %s9
    $region7: #{lip_sync_forward.16} parent=1 // loop_footer_branch
      %8 = sbr.rel target = $region3
    $region8: #{lip_sync_forward.16} parent=1 // loop_exit
      _

// kernel: lip_sync_forward.17
$region0: #{lip_sync_forward.17}
  #allocation0 [shape = 'u32[]', space=smem, size = 0x4, offset = 0x4, fixed_abs, tag = 'smem constant byte address 0x4 - core index']
  #allocation1 [shape = 'u32[144,128]{1,0:T(1,128)}', space=vmem, size = 0x12000, scoped, tag = 'internal scratch']
  #allocation2 [shape = 'f32[16,128]{1,0:T(8,128)}', space=vmem, size = 0x2000, scoped, tag = 'scratch operand']
  %s0 = inlined_call_operand.vmem [shape: bf16[16,2304], index: 0, kind: input, shape index: {}]
  %s1 = inlined_call_operand.vmem [shape: bf16[2304,512], index: 1, kind: input, shape index: {}]
  %s2 = inlined_call_operand.vmem [shape: f32[1,512], index: 2, kind: input, shape index: {}]
  %s3 = inlined_call_operand.vmem [shape: bf16[16,512], index: 3, kind: output, shape index: {}]
  %s4 = sld [smem:[#allocation0]]
  $region157: #{lip_sync_forward.17} parent=0
    _
  %s6 = ssub.s32 1, %s4
  %s7 = scalar_select 0, %s6, %s4
  $region1: #{lip_sync_forward.17} parent=0
    #allocation3 [shape = 'u8[73728]{0}', space=vmem, size = 0x12000, scoped, tag = 'input window, operand 0']
    #allocation4 [shape = 'u8[589824]{0}', space=vmem, size = 0x90000, scoped, tag = 'input window, operand 1']
    #allocation5 [shape = 'u8[8192]{0}', space=vmem, size = 0x2000, scoped, tag = 'output window, operand 0']
    loop: start=0, step=1, limit=10
    $region2: #{lip_sync_forward.17} parent=1 // loop_pre_header
      _
    $region3: #{lip_sync_forward.17} parent=1 // loop_header
      %s9 = sphi 0, %s13
      %p10 = scmp.ge.s32.totalorder %s9, 10
      %s16 = sphi 0, %s35
      %s17 = sphi 0, %s31
      %s18 = sphi 0, %s27
      %s19 = sphi 0, %s16
      %s20 = sphi 0, %s17
      %s21 = sphi 0, %s18
      %s22 = sphi 0, %s19
      %s23 = sphi 0, %s20
      %s24 = sphi 0, %s21
      %s40 = sphi 0, %s42
      %s43 = sphi 0, %s40
      %s44 = sphi 0, %s43
      %s60 = sphi 0, %s44
      %s68 = sphi 0, %s70
      %s71 = sphi 0, %s68
      %s72 = sphi 0, %s71
      %s88 = sphi 0, %s72
      %s94 = sphi 0, %s96
      %s97 = sphi 0, %s94
      %s98 = sphi 0, %s97
      %s114 = sphi 0, %s98
      %s122 = sphi 0, %s124
      %s125 = sphi 0, %s122
      %s126 = sphi 0, %s125
      %s142 = sphi 0, %s126
    $region4: #{lip_sync_forward.17} parent=1 // loop_header_branch
      %12 = sbr.rel (%p10) target = $region8
    $region5: #{lip_sync_forward.17} parent=1 // loop_body
      %s14 = ssub.s32 %s9, 1
      %s15 = ssub.s32 %s9, 2
      %s25 = sadd.s32 1, %s18
      %p26 = scmp.ge.s32.totalorder %s25, 2
      %s27 = scalar_select %p26, 0, %s25
      %s28 = sadd.s32 1, %s17
      %s29 = scalar_select %p26, %s28, %s17
      %p30 = scmp.ge.s32.totalorder %s29, 4
      %s31 = scalar_select %p30, 0, %s29
      %s32 = sadd.s32 1, %s16
      %s33 = scalar_select %p30, %s32, %s16
      %p34 = scmp.ge.s32.totalorder %s33, 1
      %s35 = scalar_select %p34, 0, %s33
      %s36 = ssub.s32 %s16, %s35
      %s37 = ssub.s32 %s18, %s27
      %s38 = sor.u32 %s36, %s37
      %p39 = scmp.eq.s32.totalorder %s38, 0
      %s41 = sadd.s32 %s40, 1
      %s42 = scalar_select %p39, %s40, %s41
      %p45 = pneg %p39
      %p46 = scmp.eq.s32.totalorder %s9, 7
      %p47 = por %p45, %p46
      %p48 = scmp.ne.s32.totalorder %s40, %s43
      %p49 = scmp.eq.s32.totalorder %s9, 0
      %p50 = por %p48, %p49
      %p51 = scmp.ne.s32.totalorder %s40, %s43
      %p52 = scmp.eq.s32.totalorder %s14, 7
      %p53 = por %p51, %p52
      %p54 = scmp.ne.s32.totalorder %s43, %s44
      %p55 = scmp.eq.s32.totalorder %s14, 0
      %p56 = por %p54, %p55
      %p57 = scmp.ne.s32.totalorder %s43, %s44
      %p58 = scmp.eq.s32.totalorder %s15, 7
      %p59 = por %p57, %p58
      %p61 = scmp.ne.s32.totalorder %s44, %s60
      %p62 = scmp.eq.s32.totalorder %s15, 0
      %p63 = por %p61, %p62
      %s64 = ssub.s32 %s18, %s27
      %s65 = ssub.s32 %s17, %s31
      %s66 = sor.u32 %s64, %s65
      %p67 = scmp.eq.s32.totalorder %s66, 0
      %s69 = sadd.s32 %s68, 1
      %s70 = scalar_select %p67, %s68, %s69
      %p73 = pneg %p67
      %p74 = scmp.eq.s32.totalorder %s9, 7
      %p75 = por %p73, %p74
      %p76 = scmp.ne.s32.totalorder %s68, %s71
      %p77 = scmp.eq.s32.totalorder %s9, 0
      %p78 = por %p76, %p77
      %p79 = scmp.ne.s32.totalorder %s68, %s71
      %p80 = scmp.eq.s32.totalorder %s14, 7
      %p81 = por %p79, %p80
      %p82 = scmp.ne.s32.totalorder %s71, %s72
      %p83 = scmp.eq.s32.totalorder %s14, 0
      %p84 = por %p82, %p83
      %p85 = scmp.ne.s32.totalorder %s71, %s72
      %p86 = scmp.eq.s32.totalorder %s15, 7
      %p87 = por %p85, %p86
      %p89 = scmp.ne.s32.totalorder %s72, %s88
      %p90 = scmp.eq.s32.totalorder %s15, 0
      %p91 = por %p89, %p90
      %s92 = ssub.s32 %s17, %s31
      %p93 = scmp.eq.s32.totalorder %s92, 0
      %s95 = sadd.s32 %s94, 1
      %s96 = scalar_select %p93, %s94, %s95
      %p99 = pneg %p93
      %p100 = scmp.eq.s32.totalorder %s9, 7
      %p101 = por %p99, %p100
      %p102 = scmp.ne.s32.totalorder %s94, %s97
      %p103 = scmp.eq.s32.totalorder %s9, 0
      %p104 = por %p102, %p103
      %p105 = scmp.ne.s32.totalorder %s94, %s97
      %p106 = scmp.eq.s32.totalorder %s14, 7
      %p107 = por %p105, %p106
      %p108 = scmp.ne.s32.totalorder %s97, %s98
      %p109 = scmp.eq.s32.totalorder %s14, 0
      %p110 = por %p108, %p109
      %p111 = scmp.ne.s32.totalorder %s97, %s98
      %p112 = scmp.eq.s32.totalorder %s15, 7
      %p113 = por %p111, %p112
      %p115 = scmp.ne.s32.totalorder %s98, %s114
      %p116 = scmp.eq.s32.totalorder %s15, 0
      %p117 = por %p115, %p116
      %s118 = ssub.s32 %s16, %s35
      %s119 = ssub.s32 %s17, %s31
      %s120 = sor.u32 %s118, %s119
      %p121 = scmp.eq.s32.totalorder %s120, 0
      %s123 = sadd.s32 %s122, 1
      %s124 = scalar_select %p121, %s122, %s123
      %p127 = pneg %p121
      %p128 = scmp.eq.s32.totalorder %s9, 7
      %p129 = por %p127, %p128
      %p130 = scmp.ne.s32.totalorder %s122, %s125
      %p131 = scmp.eq.s32.totalorder %s9, 0
      %p132 = por %p130, %p131
      %p133 = scmp.ne.s32.totalorder %s122, %s125
      %p134 = scmp.eq.s32.totalorder %s14, 7
      %p135 = por %p133, %p134
      %p136 = scmp.ne.s32.totalorder %s125, %s126
      %p137 = scmp.eq.s32.totalorder %s14, 0
      %p138 = por %p136, %p137
      %p139 = scmp.ne.s32.totalorder %s125, %s126
      %p140 = scmp.eq.s32.totalorder %s15, 7
      %p141 = por %p139, %p140
      %p143 = scmp.ne.s32.totalorder %s126, %s142
      %p144 = scmp.eq.s32.totalorder %s15, 0
      %p145 = por %p143, %p144
      %p146 = scmp.le.s32.totalorder 1, %s9
      %p147 = scmp.lt.s32.totalorder %s9, 9
      %p148 = pnand %p146, %p147
      %p149 = pneg %p148
      // Predicated region
      $region9: #{lip_sync_forward.17} parent=5 // pred_check
        _
      $region10: #{lip_sync_forward.17} parent=5 // pred_check_branch
        %151 = sbr.rel (%p148) target = $region12
      $region11: #{lip_sync_forward.17} parent=5 // pred_region
        %s152 = ssub.s32 %s9, 1
      $region12: #{lip_sync_forward.17} parent=5 // pred_fallthru
        _
      %p153 = scmp.lt.s32.totalorder %s9, 8
      // Predicated region
      $region13: #{lip_sync_forward.17} parent=5 // pred_check
        %p154 = pneg %p153
      $region14: #{lip_sync_forward.17} parent=5 // pred_check_branch
        %156 = sbr.rel (%p154) target = $region16
      $region15: #{lip_sync_forward.17} parent=5 // pred_region
        // Predicated region
        $region17: #{lip_sync_forward.17} parent=15 // pred_check
          %p157 = pneg %p50
        $region18: #{lip_sync_forward.17} parent=15 // pred_check_branch
          %159 = sbr.rel (%p157) target = $region20
        $region19: #{lip_sync_forward.17} parent=15 // pred_region
          %s160 = sand.u32 %s40, 1
          %s161 = sand.u32 %s40, 1
          %s162 = smul.addr %s161, 72
          %s163 = scalar_lea.vmem [#allocation3], %s162
          %s164 = smul.u32 2, %s16
          %s165 = smul.u32 9, %s18
          %s166 = smul.addr %s164, 18
          %s167 = sadd.s32 %s165, %s166
          %s168 = smul.addr %s167, 4
          %s169 = scalar_lea.vmem %s0, %s168
          // Predicated region
          $region21: #{lip_sync_forward.17} parent=19 // pred_check
            _
          $region22: #{lip_sync_forward.17} parent=19 // pred_check_branch
            %171 = sbr.rel (0) target = $region24
          $region23: #{lip_sync_forward.17} parent=19 // pred_region
            // Predicated region
            $region25: #{lip_sync_forward.17} parent=23 // pred_check
              _
            $region26: #{lip_sync_forward.17} parent=23 // pred_check_branch
              %173 = sbr.rel (0) target = $region28
            $region27: #{lip_sync_forward.17} parent=23 // pred_region
              %s174 = scalar_lea.vmem %s169, 32
              %s175 = scalar_lea.vmem %s163, 32 [#allocation3]
              loop: start=0, step=1, limit=1
              $region29: #{lip_sync_forward.17} parent=27 // loop_pre_header
                _
              $region30: #{lip_sync_forward.17} parent=27 // loop_header
                %s177 = sphi 0, %s181
                %p178 = scmp.ge.s32.totalorder %s177, 1
                %s182 = sphi %s169, %s169
                %s183 = sphi %s163, %s163
              $region31: #{lip_sync_forward.17} parent=27 // loop_header_branch
                %180 = sbr.rel (%p178) target = $region35
              $region32: #{lip_sync_forward.17} parent=27 // loop_body
                %v184 = vld [vmem:[%s182] sm:$0xff]
                %185 = vst [vmem:[%s183] sm:$0xff] %v184
                %v186 = vld [vmem:[%s182 + $0x8] sm:$0xff]
                %187 = vst [vmem:[%s183 + $0x8] sm:$0xff] %v186
                %v188 = vld [vmem:[%s182 + $0x10] sm:$0xff]
                %189 = vst [vmem:[%s183 + $0x10] sm:$0xff] %v188
                %v190 = vld [vmem:[%s182 + $0x18] sm:$0xff]
                %191 = vst [vmem:[%s183 + $0x18] sm:$0xff] %v190
                %v192 = vld [vmem:[%s182 + $0x48] sm:$0xff]
                %193 = vst [vmem:[%s183 + $0x24] sm:$0xff] %v192
                %v194 = vld [vmem:[%s182 + $0x50] sm:$0xff]
                %195 = vst [vmem:[%s183 + $0x2c] sm:$0xff] %v194
                %v196 = vld [vmem:[%s182 + $0x58] sm:$0xff]
                %197 = vst [vmem:[%s183 + $0x34] sm:$0xff] %v196
                %v198 = vld [vmem:[%s182 + $0x60] sm:$0xff]
                %199 = vst [vmem:[%s183 + $0x3c] sm:$0xff] %v198
              $region33: #{lip_sync_forward.17} parent=27 // loop_footer
                %s181 = sadd.s32 1, %s177
              $region34: #{lip_sync_forward.17} parent=27 // loop_footer_branch
                %176 = sbr.rel target = $region30
              $region35: #{lip_sync_forward.17} parent=27 // loop_exit
                _
              loop: start=0, step=1, limit=1
              $region36: #{lip_sync_forward.17} parent=27 // loop_pre_header
                _
              $region37: #{lip_sync_forward.17} parent=27 // loop_header
                %s202 = sphi 0, %s206
                %p203 = scmp.ge.s32.totalorder %s202, 1
                %s207 = sphi %s174, %s174
                %s208 = sphi %s175, %s175
              $region38: #{lip_sync_forward.17} parent=27 // loop_header_branch
                %205 = sbr.rel (%p203) target = $region42
              $region39: #{lip_sync_forward.17} parent=27 // loop_body
                %v209 = vld [vmem:[%s207] sm:$0xf]
                %210 = vst [vmem:[%s208] sm:$0xf] %v209
                %v211 = vld [vmem:[%s207 + $0x48] sm:$0xf]
                %212 = vst [vmem:[%s208 + $0x24] sm:$0xf] %v211
              $region40: #{lip_sync_forward.17} parent=27 // loop_footer
                %s206 = sadd.s32 1, %s202
              $region41: #{lip_sync_forward.17} parent=27 // loop_footer_branch
                %201 = sbr.rel target = $region37
              $region42: #{lip_sync_forward.17} parent=27 // loop_exit
                _
            $region28: #{lip_sync_forward.17} parent=23 // pred_fallthru
              _
          $region24: #{lip_sync_forward.17} parent=19 // pred_fallthru
            _
          %213 = vnop
        $region20: #{lip_sync_forward.17} parent=15 // pred_fallthru
          _
        // Predicated region
        $region43: #{lip_sync_forward.17} parent=15 // pred_check
          %p214 = pneg %p78
        $region44: #{lip_sync_forward.17} parent=15 // pred_check_branch
          %216 = sbr.rel (%p214) target = $region46
        $region45: #{lip_sync_forward.17} parent=15 // pred_region
          %s217 = sand.u32 %s68, 1
          %s218 = sand.u32 %s68, 1
          %s219 = smul.addr %s218, 576
          %s220 = scalar_lea.vmem [#allocation4], %s219
          %s221 = smul.u32 144, %s18
          %s222 = smul.addr %s221, 4
          %s223 = sadd.s32 %s17, %s222
          %s224 = smul.addr %s223, 4
          %s225 = scalar_lea.vmem %s1, %s224
          // Predicated region
          $region47: #{lip_sync_forward.17} parent=45 // pred_check
            _
          $region48: #{lip_sync_forward.17} parent=45 // pred_check_branch
            %227 = sbr.rel (0) target = $region50
          $region49: #{lip_sync_forward.17} parent=45 // pred_region
            // Predicated region
            $region51: #{lip_sync_forward.17} parent=49 // pred_check
              _
            $region52: #{lip_sync_forward.17} parent=49 // pred_check_branch
              %229 = sbr.rel target = $region54
            $region53: #{lip_sync_forward.17} parent=49 // pred_region
              // Predicated region
              $region66: #{lip_sync_forward.17} parent=53 // pred_check
                _
              $region67: #{lip_sync_forward.17} parent=53 // pred_check_branch
                %530 = sbr.rel (0) target = $region69
              $region68: #{lip_sync_forward.17} parent=53 // pred_region
                loop: start=0, step=1, limit=1
                $region70: #{lip_sync_forward.17} parent=68 // loop_pre_header
                  _
                $region71: #{lip_sync_forward.17} parent=68 // loop_header
                  %s532 = sphi 0, %s536
                  %p533 = scmp.ge.s32.totalorder %s532, 1
                  %s537 = sphi %s225, %s225
                  %s538 = sphi %s220, %s220
                $region72: #{lip_sync_forward.17} parent=68 // loop_header_branch
                  %535 = sbr.rel (%p533) target = $region76
                $region73: #{lip_sync_forward.17} parent=68 // loop_body
                  _
                $region74: #{lip_sync_forward.17} parent=68 // loop_footer
                  %s536 = sadd.s32 1, %s532
                $region75: #{lip_sync_forward.17} parent=68 // loop_footer_branch
                  %531 = sbr.rel target = $region71
                $region76: #{lip_sync_forward.17} parent=68 // loop_exit
                  _
                loop: start=0, step=1, limit=1
                $region77: #{lip_sync_forward.17} parent=68 // loop_pre_header
                  _
                $region78: #{lip_sync_forward.17} parent=68 // loop_header
                  %s541 = sphi 0, %s545
                  %p542 = scmp.ge.s32.totalorder %s541, 1
                  %s546 = sphi %s225, %s225
                  %s547 = sphi %s220, %s220
                $region79: #{lip_sync_forward.17} parent=68 // loop_header_branch
                  %544 = sbr.rel (%p542) target = $region83
                $region80: #{lip_sync_forward.17} parent=68 // loop_body
                  %v548 = vld [vmem:[%s546] sm:$0xf]
                  %549 = vst [vmem:[%s547] sm:$0xf] %v548
                  %v550 = vld [vmem:[%s546 + $0x10] sm:$0xf]
                  %551 = vst [vmem:[%s547 + $0x4] sm:$0xf] %v550
                  %v552 = vld [vmem:[%s546 + $0x20] sm:$0xf]
                  %553 = vst [vmem:[%s547 + $0x8] sm:$0xf] %v552
                  %v554 = vld [vmem:[%s546 + $0x30] sm:$0xf]
                  %555 = vst [vmem:[%s547 + $0xc] sm:$0xf] %v554
                  %v556 = vld [vmem:[%s546 + $0x40] sm:$0xf]
                  %557 = vst [vmem:[%s547 + $0x10] sm:$0xf] %v556
                  %v558 = vld [vmem:[%s546 + $0x50] sm:$0xf]
                  %559 = vst [vmem:[%s547 + $0x14] sm:$0xf] %v558
                  %v560 = vld [vmem:[%s546 + $0x60] sm:$0xf]
                  %561 = vst [vmem:[%s547 + $0x18] sm:$0xf] %v560
                  %v562 = vld [vmem:[%s546 + $0x70] sm:$0xf]
                  %563 = vst [vmem:[%s547 + $0x1c] sm:$0xf] %v562
                  %v564 = vld [vmem:[%s546 + $0x80] sm:$0xf]
                  %565 = vst [vmem:[%s547 + $0x20] sm:$0xf] %v564
                  %v566 = vld [vmem:[%s546 + $0x90] sm:$0xf]
                  %567 = vst [vmem:[%s547 + $0x24] sm:$0xf] %v566
                  %v568 = vld [vmem:[%s546 + $0xa0] sm:$0xf]
                  %569 = vst [vmem:[%s547 + $0x28] sm:$0xf] %v568
                  %v570 = vld [vmem:[%s546 + $0xb0] sm:$0xf]
                  %571 = vst [vmem:[%s547 + $0x2c] sm:$0xf] %v570
                  %v572 = vld [vmem:[%s546 + $0xc0] sm:$0xf]
                  %573 = vst [vmem:[%s547 + $0x30] sm:$0xf] %v572
                  %v574 = vld [vmem:[%s546 + $0xd0] sm:$0xf]
                  %575 = vst [vmem:[%s547 + $0x34] sm:$0xf] %v574
                  %v576 = vld [vmem:[%s546 + $0xe0] sm:$0xf]
                  %577 = vst [vmem:[%s547 + $0x38] sm:$0xf] %v576
                  %v578 = vld [vmem:[%s546 + $0xf0] sm:$0xf]
                  %579 = vst [vmem:[%s547 + $0x3c] sm:$0xf] %v578
                  %v580 = vld [vmem:[%s546 + $0x100] sm:$0xf]
                  %581 = vst [vmem:[%s547 + $0x40] sm:$0xf] %v580
                  %v582 = vld [vmem:[%s546 + $0x110] sm:$0xf]
                  %583 = vst [vmem:[%s547 + $0x44] sm:$0xf] %v582
                  %v584 = vld [vmem:[%s546 + $0x120] sm:$0xf]
                  %585 = vst [vmem:[%s547 + $0x48] sm:$0xf] %v584
                  %v586 = vld [vmem:[%s546 + $0x130] sm:$0xf]
                  %587 = vst [vmem:[%s547 + $0x4c] sm:$0xf] %v586
                  %v588 = vld [vmem:[%s546 + $0x140] sm:$0xf]
                  %589 = vst [vmem:[%s547 + $0x50] sm:$0xf] %v588
                  %v590 = vld [vmem:[%s546 + $0x150] sm:$0xf]
                  %591 = vst [vmem:[%s547 + $0x54] sm:$0xf] %v590
                  %v592 = vld [vmem:[%s546 + $0x160] sm:$0xf]
                  %593 = vst [vmem:[%s547 + $0x58] sm:$0xf] %v592
                  %v594 = vld [vmem:[%s546 + $0x170] sm:$0xf]
                  %595 = vst [vmem:[%s547 + $0x5c] sm:$0xf] %v594
                  %v596 = vld [vmem:[%s546 + $0x180] sm:$0xf]
                  %597 = vst [vmem:[%s547 + $0x60] sm:$0xf] %v596
                  %v598 = vld [vmem:[%s546 + $0x190] sm:$0xf]
                  %599 = vst [vmem:[%s547 + $0x64] sm:$0xf] %v598
                  %v600 = vld [vmem:[%s546 + $0x1a0] sm:$0xf]
                  %601 = vst [vmem:[%s547 + $0x68] sm:$0xf] %v600
                  %v602 = vld [vmem:[%s546 + $0x1b0] sm:$0xf]
                  %603 = vst [vmem:[%s547 + $0x6c] sm:$0xf] %v602
                  %v604 = vld [vmem:[%s546 + $0x1c0] sm:$0xf]
                  %605 = vst [vmem:[%s547 + $0x70] sm:$0xf] %v604
                  %v606 = vld [vmem:[%s546 + $0x1d0] sm:$0xf]
                  %607 = vst [vmem:[%s547 + $0x74] sm:$0xf] %v606
                  %v608 = vld [vmem:[%s546 + $0x1e0] sm:$0xf]
                  %609 = vst [vmem:[%s547 + $0x78] sm:$0xf] %v608
                  %v610 = vld [vmem:[%s546 + $0x1f0] sm:$0xf]
                  %611 = vst [vmem:[%s547 + $0x7c] sm:$0xf] %v610
                  %v612 = vld [vmem:[%s546 + $0x200] sm:$0xf]
                  %613 = vst [vmem:[%s547 + $0x80] sm:$0xf] %v612
                  %v614 = vld [vmem:[%s546 + $0x210] sm:$0xf]
                  %615 = vst [vmem:[%s547 + $0x84] sm:$0xf] %v614
                  %v616 = vld [vmem:[%s546 + $0x220] sm:$0xf]
                  %617 = vst [vmem:[%s547 + $0x88] sm:$0xf] %v616
                  %v618 = vld [vmem:[%s546 + $0x230] sm:$0xf]
                  %619 = vst [vmem:[%s547 + $0x8c] sm:$0xf] %v618
                  %v620 = vld [vmem:[%s546 + $0x240] sm:$0xf]
                  %621 = vst [vmem:[%s547 + $0x90] sm:$0xf] %v620
                  %v622 = vld [vmem:[%s546 + $0x250] sm:$0xf]
                  %623 = vst [vmem:[%s547 + $0x94] sm:$0xf] %v622
                  %v624 = vld [vmem:[%s546 + $0x260] sm:$0xf]
                  %625 = vst [vmem:[%s547 + $0x98] sm:$0xf] %v624
                  %v626 = vld [vmem:[%s546 + $0x270] sm:$0xf]
                  %627 = vst [vmem:[%s547 + $0x9c] sm:$0xf] %v626
                  %v628 = vld [vmem:[%s546 + $0x280] sm:$0xf]
                  %629 = vst [vmem:[%s547 + $0xa0] sm:$0xf] %v628
                  %v630 = vld [vmem:[%s546 + $0x290] sm:$0xf]
                  %631 = vst [vmem:[%s547 + $0xa4] sm:$0xf] %v630
                  %v632 = vld [vmem:[%s546 + $0x2a0] sm:$0xf]
                  %633 = vst [vmem:[%s547 + $0xa8] sm:$0xf] %v632
                  %v634 = vld [vmem:[%s546 + $0x2b0] sm:$0xf]
                  %635 = vst [vmem:[%s547 + $0xac] sm:$0xf] %v634
                  %v636 = vld [vmem:[%s546 + $0x2c0] sm:$0xf]
                  %637 = vst [vmem:[%s547 + $0xb0] sm:$0xf] %v636
                  %v638 = vld [vmem:[%s546 + $0x2d0] sm:$0xf]
                  %639 = vst [vmem:[%s547 + $0xb4] sm:$0xf] %v638
                  %v640 = vld [vmem:[%s546 + $0x2e0] sm:$0xf]
                  %641 = vst [vmem:[%s547 + $0xb8] sm:$0xf] %v640
                  %v642 = vld [vmem:[%s546 + $0x2f0] sm:$0xf]
                  %643 = vst [vmem:[%s547 + $0xbc] sm:$0xf] %v642
                  %v644 = vld [vmem:[%s546 + $0x300] sm:$0xf]
                  %645 = vst [vmem:[%s547 + $0xc0] sm:$0xf] %v644
                  %v646 = vld [vmem:[%s546 + $0x310] sm:$0xf]
                  %647 = vst [vmem:[%s547 + $0xc4] sm:$0xf] %v646
                  %v648 = vld [vmem:[%s546 + $0x320] sm:$0xf]
                  %649 = vst [vmem:[%s547 + $0xc8] sm:$0xf] %v648
                  %v650 = vld [vmem:[%s546 + $0x330] sm:$0xf]
                  %651 = vst [vmem:[%s547 + $0xcc] sm:$0xf] %v650
                  %v652 = vld [vmem:[%s546 + $0x340] sm:$0xf]
                  %653 = vst [vmem:[%s547 + $0xd0] sm:$0xf] %v652
                  %v654 = vld [vmem:[%s546 + $0x350] sm:$0xf]
                  %655 = vst [vmem:[%s547 + $0xd4] sm:$0xf] %v654
                  %v656 = vld [vmem:[%s546 + $0x360] sm:$0xf]
                  %657 = vst [vmem:[%s547 + $0xd8] sm:$0xf] %v656
                  %v658 = vld [vmem:[%s546 + $0x370] sm:$0xf]
                  %659 = vst [vmem:[%s547 + $0xdc] sm:$0xf] %v658
                  %v660 = vld [vmem:[%s546 + $0x380] sm:$0xf]
                  %661 = vst [vmem:[%s547 + $0xe0] sm:$0xf] %v660
                  %v662 = vld [vmem:[%s546 + $0x390] sm:$0xf]
                  %663 = vst [vmem:[%s547 + $0xe4] sm:$0xf] %v662
                  %v664 = vld [vmem:[%s546 + $0x3a0] sm:$0xf]
                  %665 = vst [vmem:[%s547 + $0xe8] sm:$0xf] %v664
                  %v666 = vld [vmem:[%s546 + $0x3b0] sm:$0xf]
                  %667 = vst [vmem:[%s547 + $0xec] sm:$0xf] %v666
                  %v668 = vld [vmem:[%s546 + $0x3c0] sm:$0xf]
                  %669 = vst [vmem:[%s547 + $0xf0] sm:$0xf] %v668
                  %v670 = vld [vmem:[%s546 + $0x3d0] sm:$0xf]
                  %671 = vst [vmem:[%s547 + $0xf4] sm:$0xf] %v670
                  %v672 = vld [vmem:[%s546 + $0x3e0] sm:$0xf]
                  %673 = vst [vmem:[%s547 + $0xf8] sm:$0xf] %v672
                  %v674 = vld [vmem:[%s546 + $0x3f0] sm:$0xf]
                  %675 = vst [vmem:[%s547 + $0xfc] sm:$0xf] %v674
                  %v676 = vld [vmem:[%s546 + $0x400] sm:$0xf]
                  %677 = vst [vmem:[%s547 + $0x100] sm:$0xf] %v676
                  %v678 = vld [vmem:[%s546 + $0x410] sm:$0xf]
                  %679 = vst [vmem:[%s547 + $0x104] sm:$0xf] %v678
                  %v680 = vld [vmem:[%s546 + $0x420] sm:$0xf]
                  %681 = vst [vmem:[%s547 + $0x108] sm:$0xf] %v680
                  %v682 = vld [vmem:[%s546 + $0x430] sm:$0xf]
                  %683 = vst [vmem:[%s547 + $0x10c] sm:$0xf] %v682
                  %v684 = vld [vmem:[%s546 + $0x440] sm:$0xf]
                  %685 = vst [vmem:[%s547 + $0x110] sm:$0xf] %v684
                  %v686 = vld [vmem:[%s546 + $0x450] sm:$0xf]
                  %687 = vst [vmem:[%s547 + $0x114] sm:$0xf] %v686
                  %v688 = vld [vmem:[%s546 + $0x460] sm:$0xf]
                  %689 = vst [vmem:[%s547 + $0x118] sm:$0xf] %v688
                  %v690 = vld [vmem:[%s546 + $0x470] sm:$0xf]
                  %691 = vst [vmem:[%s547 + $0x11c] sm:$0xf] %v690
                  %v692 = vld [vmem:[%s546 + $0x480] sm:$0xf]
                  %693 = vst [vmem:[%s547 + $0x120] sm:$0xf] %v692
                  %v694 = vld [vmem:[%s546 + $0x490] sm:$0xf]
                  %695 = vst [vmem:[%s547 + $0x124] sm:$0xf] %v694
                  %v696 = vld [vmem:[%s546 + $0x4a0] sm:$0xf]
                  %697 = vst [vmem:[%s547 + $0x128] sm:$0xf] %v696
                  %v698 = vld [vmem:[%s546 + $0x4b0] sm:$0xf]
                  %699 = vst [vmem:[%s547 + $0x12c] sm:$0xf] %v698
                  %v700 = vld [vmem:[%s546 + $0x4c0] sm:$0xf]
                  %701 = vst [vmem:[%s547 + $0x130] sm:$0xf] %v700
                  %v702 = vld [vmem:[%s546 + $0x4d0] sm:$0xf]
                  %703 = vst [vmem:[%s547 + $0x134] sm:$0xf] %v702
                  %v704 = vld [vmem:[%s546 + $0x4e0] sm:$0xf]
                  %705 = vst [vmem:[%s547 + $0x138] sm:$0xf] %v704
                  %v706 = vld [vmem:[%s546 + $0x4f0] sm:$0xf]
                  %707 = vst [vmem:[%s547 + $0x13c] sm:$0xf] %v706
                  %v708 = vld [vmem:[%s546 + $0x500] sm:$0xf]
                  %709 = vst [vmem:[%s547 + $0x140] sm:$0xf] %v708
                  %v710 = vld [vmem:[%s546 + $0x510] sm:$0xf]
                  %711 = vst [vmem:[%s547 + $0x144] sm:$0xf] %v710
                  %v712 = vld [vmem:[%s546 + $0x520] sm:$0xf]
                  %713 = vst [vmem:[%s547 + $0x148] sm:$0xf] %v712
                  %v714 = vld [vmem:[%s546 + $0x530] sm:$0xf]
                  %715 = vst [vmem:[%s547 + $0x14c] sm:$0xf] %v714
                  %v716 = vld [vmem:[%s546 + $0x540] sm:$0xf]
                  %717 = vst [vmem:[%s547 + $0x150] sm:$0xf] %v716
                  %v718 = vld [vmem:[%s546 + $0x550] sm:$0xf]
                  %719 = vst [vmem:[%s547 + $0x154] sm:$0xf] %v718
                  %v720 = vld [vmem:[%s546 + $0x560] sm:$0xf]
                  %721 = vst [vmem:[%s547 + $0x158] sm:$0xf] %v720
                  %v722 = vld [vmem:[%s546 + $0x570] sm:$0xf]
                  %723 = vst [vmem:[%s547 + $0x15c] sm:$0xf] %v722
                  %v724 = vld [vmem:[%s546 + $0x580] sm:$0xf]
                  %725 = vst [vmem:[%s547 + $0x160] sm:$0xf] %v724
                  %v726 = vld [vmem:[%s546 + $0x590] sm:$0xf]
                  %727 = vst [vmem:[%s547 + $0x164] sm:$0xf] %v726
                  %v728 = vld [vmem:[%s546 + $0x5a0] sm:$0xf]
                  %729 = vst [vmem:[%s547 + $0x168] sm:$0xf] %v728
                  %v730 = vld [vmem:[%s546 + $0x5b0] sm:$0xf]
                  %731 = vst [vmem:[%s547 + $0x16c] sm:$0xf] %v730
                  %v732 = vld [vmem:[%s546 + $0x5c0] sm:$0xf]
                  %733 = vst [vmem:[%s547 + $0x170] sm:$0xf] %v732
                  %v734 = vld [vmem:[%s546 + $0x5d0] sm:$0xf]
                  %735 = vst [vmem:[%s547 + $0x174] sm:$0xf] %v734
                  %v736 = vld [vmem:[%s546 + $0x5e0] sm:$0xf]
                  %737 = vst [vmem:[%s547 + $0x178] sm:$0xf] %v736
                  %v738 = vld [vmem:[%s546 + $0x5f0] sm:$0xf]
                  %739 = vst [vmem:[%s547 + $0x17c] sm:$0xf] %v738
                  %v740 = vld [vmem:[%s546 + $0x600] sm:$0xf]
                  %741 = vst [vmem:[%s547 + $0x180] sm:$0xf] %v740
                  %v742 = vld [vmem:[%s546 + $0x610] sm:$0xf]
                  %743 = vst [vmem:[%s547 + $0x184] sm:$0xf] %v742
                  %v744 = vld [vmem:[%s546 + $0x620] sm:$0xf]
                  %745 = vst [vmem:[%s547 + $0x188] sm:$0xf] %v744
                  %v746 = vld [vmem:[%s546 + $0x630] sm:$0xf]
                  %747 = vst [vmem:[%s547 + $0x18c] sm:$0xf] %v746
                  %v748 = vld [vmem:[%s546 + $0x640] sm:$0xf]
                  %749 = vst [vmem:[%s547 + $0x190] sm:$0xf] %v748
                  %v750 = vld [vmem:[%s546 + $0x650] sm:$0xf]
                  %751 = vst [vmem:[%s547 + $0x194] sm:$0xf] %v750
                  %v752 = vld [vmem:[%s546 + $0x660] sm:$0xf]
                  %753 = vst [vmem:[%s547 + $0x198] sm:$0xf] %v752
                  %v754 = vld [vmem:[%s546 + $0x670] sm:$0xf]
                  %755 = vst [vmem:[%s547 + $0x19c] sm:$0xf] %v754
                  %v756 = vld [vmem:[%s546 + $0x680] sm:$0xf]
                  %757 = vst [vmem:[%s547 + $0x1a0] sm:$0xf] %v756
                  %v758 = vld [vmem:[%s546 + $0x690] sm:$0xf]
                  %759 = vst [vmem:[%s547 + $0x1a4] sm:$0xf] %v758
                  %v760 = vld [vmem:[%s546 + $0x6a0] sm:$0xf]
                  %761 = vst [vmem:[%s547 + $0x1a8] sm:$0xf] %v760
                  %v762 = vld [vmem:[%s546 + $0x6b0] sm:$0xf]
                  %763 = vst [vmem:[%s547 + $0x1ac] sm:$0xf] %v762
                  %v764 = vld [vmem:[%s546 + $0x6c0] sm:$0xf]
                  %765 = vst [vmem:[%s547 + $0x1b0] sm:$0xf] %v764
                  %v766 = vld [vmem:[%s546 + $0x6d0] sm:$0xf]
                  %767 = vst [vmem:[%s547 + $0x1b4] sm:$0xf] %v766
                  %v768 = vld [vmem:[%s546 + $0x6e0] sm:$0xf]
                  %769 = vst [vmem:[%s547 + $0x1b8] sm:$0xf] %v768
                  %v770 = vld [vmem:[%s546 + $0x6f0] sm:$0xf]
                  %771 = vst [vmem:[%s547 + $0x1bc] sm:$0xf] %v770
                  %v772 = vld [vmem:[%s546 + $0x700] sm:$0xf]
                  %773 = vst [vmem:[%s547 + $0x1c0] sm:$0xf] %v772
                  %v774 = vld [vmem:[%s546 + $0x710] sm:$0xf]
                  %775 = vst [vmem:[%s547 + $0x1c4] sm:$0xf] %v774
                  %v776 = vld [vmem:[%s546 + $0x720] sm:$0xf]
                  %777 = vst [vmem:[%s547 + $0x1c8] sm:$0xf] %v776
                  %v778 = vld [vmem:[%s546 + $0x730] sm:$0xf]
                  %779 = vst [vmem:[%s547 + $0x1cc] sm:$0xf] %v778
                  %v780 = vld [vmem:[%s546 + $0x740] sm:$0xf]
                  %781 = vst [vmem:[%s547 + $0x1d0] sm:$0xf] %v780
                  %v782 = vld [vmem:[%s546 + $0x750] sm:$0xf]
                  %783 = vst [vmem:[%s547 + $0x1d4] sm:$0xf] %v782
                  %v784 = vld [vmem:[%s546 + $0x760] sm:$0xf]
                  %785 = vst [vmem:[%s547 + $0x1d8] sm:$0xf] %v784
                  %v786 = vld [vmem:[%s546 + $0x770] sm:$0xf]
                  %787 = vst [vmem:[%s547 + $0x1dc] sm:$0xf] %v786
                  %v788 = vld [vmem:[%s546 + $0x780] sm:$0xf]
                  %789 = vst [vmem:[%s547 + $0x1e0] sm:$0xf] %v788
                  %v790 = vld [vmem:[%s546 + $0x790] sm:$0xf]
                  %791 = vst [vmem:[%s547 + $0x1e4] sm:$0xf] %v790
                  %v792 = vld [vmem:[%s546 + $0x7a0] sm:$0xf]
                  %793 = vst [vmem:[%s547 + $0x1e8] sm:$0xf] %v792
                  %v794 = vld [vmem:[%s546 + $0x7b0] sm:$0xf]
                  %795 = vst [vmem:[%s547 + $0x1ec] sm:$0xf] %v794
                  %v796 = vld [vmem:[%s546 + $0x7c0] sm:$0xf]
                  %797 = vst [vmem:[%s547 + $0x1f0] sm:$0xf] %v796
                  %v798 = vld [vmem:[%s546 + $0x7d0] sm:$0xf]
                  %799 = vst [vmem:[%s547 + $0x1f4] sm:$0xf] %v798
                  %v800 = vld [vmem:[%s546 + $0x7e0] sm:$0xf]
                  %801 = vst [vmem:[%s547 + $0x1f8] sm:$0xf] %v800
                  %v802 = vld [vmem:[%s546 + $0x7f0] sm:$0xf]
                  %803 = vst [vmem:[%s547 + $0x1fc] sm:$0xf] %v802
                  %v804 = vld [vmem:[%s546 + $0x800] sm:$0xf]
                  %805 = vst [vmem:[%s547 + $0x200] sm:$0xf] %v804
                  %v806 = vld [vmem:[%s546 + $0x810] sm:$0xf]
                  %807 = vst [vmem:[%s547 + $0x204] sm:$0xf] %v806
                  %v808 = vld [vmem:[%s546 + $0x820] sm:$0xf]
                  %809 = vst [vmem:[%s547 + $0x208] sm:$0xf] %v808
                  %v810 = vld [vmem:[%s546 + $0x830] sm:$0xf]
                  %811 = vst [vmem:[%s547 + $0x20c] sm:$0xf] %v810
                  %v812 = vld [vmem:[%s546 + $0x840] sm:$0xf]
                  %813 = vst [vmem:[%s547 + $0x210] sm:$0xf] %v812
                  %v814 = vld [vmem:[%s546 + $0x850] sm:$0xf]
                  %815 = vst [vmem:[%s547 + $0x214] sm:$0xf] %v814
                  %v816 = vld [vmem:[%s546 + $0x860] sm:$0xf]
                  %817 = vst [vmem:[%s547 + $0x218] sm:$0xf] %v816
                  %v818 = vld [vmem:[%s546 + $0x870] sm:$0xf]
                  %819 = vst [vmem:[%s547 + $0x21c] sm:$0xf] %v818
                  %v820 = vld [vmem:[%s546 + $0x880] sm:$0xf]
                  %821 = vst [vmem:[%s547 + $0x220] sm:$0xf] %v820
                  %v822 = vld [vmem:[%s546 + $0x890] sm:$0xf]
                  %823 = vst [vmem:[%s547 + $0x224] sm:$0xf] %v822
                  %v824 = vld [vmem:[%s546 + $0x8a0] sm:$0xf]
                  %825 = vst [vmem:[%s547 + $0x228] sm:$0xf] %v824
                  %v826 = vld [vmem:[%s546 + $0x8b0] sm:$0xf]
                  %827 = vst [vmem:[%s547 + $0x22c] sm:$0xf] %v826
                  %v828 = vld [vmem:[%s546 + $0x8c0] sm:$0xf]
                  %829 = vst [vmem:[%s547 + $0x230] sm:$0xf] %v828
                  %v830 = vld [vmem:[%s546 + $0x8d0] sm:$0xf]
                  %831 = vst [vmem:[%s547 + $0x234] sm:$0xf] %v830
                  %v832 = vld [vmem:[%s546 + $0x8e0] sm:$0xf]
                  %833 = vst [vmem:[%s547 + $0x238] sm:$0xf] %v832
                  %v834 = vld [vmem:[%s546 + $0x8f0] sm:$0xf]
                  %835 = vst [vmem:[%s547 + $0x23c] sm:$0xf] %v834
                $region81: #{lip_sync_forward.17} parent=68 // loop_footer
                  %s545 = sadd.s32 1, %s541
                $region82: #{lip_sync_forward.17} parent=68 // loop_footer_branch
                  %540 = sbr.rel target = $region78
                $region83: #{lip_sync_forward.17} parent=68 // loop_exit
                  _
              $region69: #{lip_sync_forward.17} parent=53 // pred_fallthru
                _
            $region54: #{lip_sync_forward.17} parent=49 // pred_fallthru
              _
            // Predicated region
            $region55: #{lip_sync_forward.17} parent=49 // pred_check
              _
            $region56: #{lip_sync_forward.17} parent=49 // pred_check_branch
              %231 = sbr.rel (0) target = $region58
            $region57: #{lip_sync_forward.17} parent=49 // pred_region
              loop: start=0, step=1, limit=1
              $region59: #{lip_sync_forward.17} parent=57 // loop_pre_header
                _
              $region60: #{lip_sync_forward.17} parent=57 // loop_header
                %s234 = sphi 0, %s238
                %p235 = scmp.ge.s32.totalorder %s234, 1
                %s239 = sphi %s225, %s225
                %s240 = sphi %s220, %s220
              $region61: #{lip_sync_forward.17} parent=57 // loop_header_branch
                %237 = sbr.rel (%p235) target = $region65
              $region62: #{lip_sync_forward.17} parent=57 // loop_body
                %v241 = vld [vmem:[%s239] sm:$0xf]
                %242 = vst [vmem:[%s240] sm:$0xf] %v241
                %v243 = vld [vmem:[%s239 + $0x10] sm:$0xf]
                %244 = vst [vmem:[%s240 + $0x4] sm:$0xf] %v243
                %v245 = vld [vmem:[%s239 + $0x20] sm:$0xf]
                %246 = vst [vmem:[%s240 + $0x8] sm:$0xf] %v245
                %v247 = vld [vmem:[%s239 + $0x30] sm:$0xf]
                %248 = vst [vmem:[%s240 + $0xc] sm:$0xf] %v247
                %v249 = vld [vmem:[%s239 + $0x40] sm:$0xf]
                %250 = vst [vmem:[%s240 + $0x10] sm:$0xf] %v249
                %v251 = vld [vmem:[%s239 + $0x50] sm:$0xf]
                %252 = vst [vmem:[%s240 + $0x14] sm:$0xf] %v251
                %v253 = vld [vmem:[%s239 + $0x60] sm:$0xf]
                %254 = vst [vmem:[%s240 + $0x18] sm:$0xf] %v253
                %v255 = vld [vmem:[%s239 + $0x70] sm:$0xf]
                %256 = vst [vmem:[%s240 + $0x1c] sm:$0xf] %v255
                %v257 = vld [vmem:[%s239 + $0x80] sm:$0xf]
                %258 = vst [vmem:[%s240 + $0x20] sm:$0xf] %v257
                %v259 = vld [vmem:[%s239 + $0x90] sm:$0xf]
                %260 = vst [vmem:[%s240 + $0x24] sm:$0xf] %v259
                %v261 = vld [vmem:[%s239 + $0xa0] sm:$0xf]
                %262 = vst [vmem:[%s240 + $0x28] sm:$0xf] %v261
                %v263 = vld [vmem:[%s239 + $0xb0] sm:$0xf]
                %264 = vst [vmem:[%s240 + $0x2c] sm:$0xf] %v263
                %v265 = vld [vmem:[%s239 + $0xc0] sm:$0xf]
                %266 = vst [vmem:[%s240 + $0x30] sm:$0xf] %v265
                %v267 = vld [vmem:[%s239 + $0xd0] sm:$0xf]
                %268 = vst [vmem:[%s240 + $0x34] sm:$0xf] %v267
                %v269 = vld [vmem:[%s239 + $0xe0] sm:$0xf]
                %270 = vst [vmem:[%s240 + $0x38] sm:$0xf] %v269
                %v271 = vld [vmem:[%s239 + $0xf0] sm:$0xf]
                %272 = vst [vmem:[%s240 + $0x3c] sm:$0xf] %v271
                %v273 = vld [vmem:[%s239 + $0x100] sm:$0xf]
                %274 = vst [vmem:[%s240 + $0x40] sm:$0xf] %v273
                %v275 = vld [vmem:[%s239 + $0x110] sm:$0xf]
                %276 = vst [vmem:[%s240 + $0x44] sm:$0xf] %v275
                %v277 = vld [vmem:[%s239 + $0x120] sm:$0xf]
                %278 = vst [vmem:[%s240 + $0x48] sm:$0xf] %v277
                %v279 = vld [vmem:[%s239 + $0x130] sm:$0xf]
                %280 = vst [vmem:[%s240 + $0x4c] sm:$0xf] %v279
                %v281 = vld [vmem:[%s239 + $0x140] sm:$0xf]
                %282 = vst [vmem:[%s240 + $0x50] sm:$0xf] %v281
                %v283 = vld [vmem:[%s239 + $0x150] sm:$0xf]
                %284 = vst [vmem:[%s240 + $0x54] sm:$0xf] %v283
                %v285 = vld [vmem:[%s239 + $0x160] sm:$0xf]
                %286 = vst [vmem:[%s240 + $0x58] sm:$0xf] %v285
                %v287 = vld [vmem:[%s239 + $0x170] sm:$0xf]
                %288 = vst [vmem:[%s240 + $0x5c] sm:$0xf] %v287
                %v289 = vld [vmem:[%s239 + $0x180] sm:$0xf]
                %290 = vst [vmem:[%s240 + $0x60] sm:$0xf] %v289
                %v291 = vld [vmem:[%s239 + $0x190] sm:$0xf]
                %292 = vst [vmem:[%s240 + $0x64] sm:$0xf] %v291
                %v293 = vld [vmem:[%s239 + $0x1a0] sm:$0xf]
                %294 = vst [vmem:[%s240 + $0x68] sm:$0xf] %v293
                %v295 = vld [vmem:[%s239 + $0x1b0] sm:$0xf]
                %296 = vst [vmem:[%s240 + $0x6c] sm:$0xf] %v295
                %v297 = vld [vmem:[%s239 + $0x1c0] sm:$0xf]
                %298 = vst [vmem:[%s240 + $0x70] sm:$0xf] %v297
                %v299 = vld [vmem:[%s239 + $0x1d0] sm:$0xf]
                %300 = vst [vmem:[%s240 + $0x74] sm:$0xf] %v299
                %v301 = vld [vmem:[%s239 + $0x1e0] sm:$0xf]
                %302 = vst [vmem:[%s240 + $0x78] sm:$0xf] %v301
                %v303 = vld [vmem:[%s239 + $0x1f0] sm:$0xf]
                %304 = vst [vmem:[%s240 + $0x7c] sm:$0xf] %v303
                %v305 = vld [vmem:[%s239 + $0x200] sm:$0xf]
                %306 = vst [vmem:[%s240 + $0x80] sm:$0xf] %v305
                %v307 = vld [vmem:[%s239 + $0x210] sm:$0xf]
                %308 = vst [vmem:[%s240 + $0x84] sm:$0xf] %v307
                %v309 = vld [vmem:[%s239 + $0x220] sm:$0xf]
                %310 = vst [vmem:[%s240 + $0x88] sm:$0xf] %v309
                %v311 = vld [vmem:[%s239 + $0x230] sm:$0xf]
                %312 = vst [vmem:[%s240 + $0x8c] sm:$0xf] %v311
                %v313 = vld [vmem:[%s239 + $0x240] sm:$0xf]
                %314 = vst [vmem:[%s240 + $0x90] sm:$0xf] %v313
                %v315 = vld [vmem:[%s239 + $0x250] sm:$0xf]
                %316 = vst [vmem:[%s240 + $0x94] sm:$0xf] %v315
                %v317 = vld [vmem:[%s239 + $0x260] sm:$0xf]
                %318 = vst [vmem:[%s240 + $0x98] sm:$0xf] %v317
                %v319 = vld [vmem:[%s239 + $0x270] sm:$0xf]
                %320 = vst [vmem:[%s240 + $0x9c] sm:$0xf] %v319
                %v321 = vld [vmem:[%s239 + $0x280] sm:$0xf]
                %322 = vst [vmem:[%s240 + $0xa0] sm:$0xf] %v321
                %v323 = vld [vmem:[%s239 + $0x290] sm:$0xf]
                %324 = vst [vmem:[%s240 + $0xa4] sm:$0xf] %v323
                %v325 = vld [vmem:[%s239 + $0x2a0] sm:$0xf]
                %326 = vst [vmem:[%s240 + $0xa8] sm:$0xf] %v325
                %v327 = vld [vmem:[%s239 + $0x2b0] sm:$0xf]
                %328 = vst [vmem:[%s240 + $0xac] sm:$0xf] %v327
                %v329 = vld [vmem:[%s239 + $0x2c0] sm:$0xf]
                %330 = vst [vmem:[%s240 + $0xb0] sm:$0xf] %v329
                %v331 = vld [vmem:[%s239 + $0x2d0] sm:$0xf]
                %332 = vst [vmem:[%s240 + $0xb4] sm:$0xf] %v331
                %v333 = vld [vmem:[%s239 + $0x2e0] sm:$0xf]
                %334 = vst [vmem:[%s240 + $0xb8] sm:$0xf] %v333
                %v335 = vld [vmem:[%s239 + $0x2f0] sm:$0xf]
                %336 = vst [vmem:[%s240 + $0xbc] sm:$0xf] %v335
                %v337 = vld [vmem:[%s239 + $0x300] sm:$0xf]
                %338 = vst [vmem:[%s240 + $0xc0] sm:$0xf] %v337
                %v339 = vld [vmem:[%s239 + $0x310] sm:$0xf]
                %340 = vst [vmem:[%s240 + $0xc4] sm:$0xf] %v339
                %v341 = vld [vmem:[%s239 + $0x320] sm:$0xf]
                %342 = vst [vmem:[%s240 + $0xc8] sm:$0xf] %v341
                %v343 = vld [vmem:[%s239 + $0x330] sm:$0xf]
                %344 = vst [vmem:[%s240 + $0xcc] sm:$0xf] %v343
                %v345 = vld [vmem:[%s239 + $0x340] sm:$0xf]
                %346 = vst [vmem:[%s240 + $0xd0] sm:$0xf] %v345
                %v347 = vld [vmem:[%s239 + $0x350] sm:$0xf]
                %348 = vst [vmem:[%s240 + $0xd4] sm:$0xf] %v347
                %v349 = vld [vmem:[%s239 + $0x360] sm:$0xf]
                %350 = vst [vmem:[%s240 + $0xd8] sm:$0xf] %v349
                %v351 = vld [vmem:[%s239 + $0x370] sm:$0xf]
                %352 = vst [vmem:[%s240 + $0xdc] sm:$0xf] %v351
                %v353 = vld [vmem:[%s239 + $0x380] sm:$0xf]
                %354 = vst [vmem:[%s240 + $0xe0] sm:$0xf] %v353
                %v355 = vld [vmem:[%s239 + $0x390] sm:$0xf]
                %356 = vst [vmem:[%s240 + $0xe4] sm:$0xf] %v355
                %v357 = vld [vmem:[%s239 + $0x3a0] sm:$0xf]
                %358 = vst [vmem:[%s240 + $0xe8] sm:$0xf] %v357
                %v359 = vld [vmem:[%s239 + $0x3b0] sm:$0xf]
                %360 = vst [vmem:[%s240 + $0xec] sm:$0xf] %v359
                %v361 = vld [vmem:[%s239 + $0x3c0] sm:$0xf]
                %362 = vst [vmem:[%s240 + $0xf0] sm:$0xf] %v361
                %v363 = vld [vmem:[%s239 + $0x3d0] sm:$0xf]
                %364 = vst [vmem:[%s240 + $0xf4] sm:$0xf] %v363
                %v365 = vld [vmem:[%s239 + $0x3e0] sm:$0xf]
                %366 = vst [vmem:[%s240 + $0xf8] sm:$0xf] %v365
                %v367 = vld [vmem:[%s239 + $0x3f0] sm:$0xf]
                %368 = vst [vmem:[%s240 + $0xfc] sm:$0xf] %v367
                %v369 = vld [vmem:[%s239 + $0x400] sm:$0xf]
                %370 = vst [vmem:[%s240 + $0x100] sm:$0xf] %v369
                %v371 = vld [vmem:[%s239 + $0x410] sm:$0xf]
                %372 = vst [vmem:[%s240 + $0x104] sm:$0xf] %v371
                %v373 = vld [vmem:[%s239 + $0x420] sm:$0xf]
                %374 = vst [vmem:[%s240 + $0x108] sm:$0xf] %v373
                %v375 = vld [vmem:[%s239 + $0x430] sm:$0xf]
                %376 = vst [vmem:[%s240 + $0x10c] sm:$0xf] %v375
                %v377 = vld [vmem:[%s239 + $0x440] sm:$0xf]
                %378 = vst [vmem:[%s240 + $0x110] sm:$0xf] %v377
                %v379 = vld [vmem:[%s239 + $0x450] sm:$0xf]
                %380 = vst [vmem:[%s240 + $0x114] sm:$0xf] %v379
                %v381 = vld [vmem:[%s239 + $0x460] sm:$0xf]
                %382 = vst [vmem:[%s240 + $0x118] sm:$0xf] %v381
                %v383 = vld [vmem:[%s239 + $0x470] sm:$0xf]
                %384 = vst [vmem:[%s240 + $0x11c] sm:$0xf] %v383
                %v385 = vld [vmem:[%s239 + $0x480] sm:$0xf]
                %386 = vst [vmem:[%s240 + $0x120] sm:$0xf] %v385
                %v387 = vld [vmem:[%s239 + $0x490] sm:$0xf]
                %388 = vst [vmem:[%s240 + $0x124] sm:$0xf] %v387
                %v389 = vld [vmem:[%s239 + $0x4a0] sm:$0xf]
                %390 = vst [vmem:[%s240 + $0x128] sm:$0xf] %v389
                %v391 = vld [vmem:[%s239 + $0x4b0] sm:$0xf]
                %392 = vst [vmem:[%s240 + $0x12c] sm:$0xf] %v391
                %v393 = vld [vmem:[%s239 + $0x4c0] sm:$0xf]
                %394 = vst [vmem:[%s240 + $0x130] sm:$0xf] %v393
                %v395 = vld [vmem:[%s239 + $0x4d0] sm:$0xf]
                %396 = vst [vmem:[%s240 + $0x134] sm:$0xf] %v395
                %v397 = vld [vmem:[%s239 + $0x4e0] sm:$0xf]
                %398 = vst [vmem:[%s240 + $0x138] sm:$0xf] %v397
                %v399 = vld [vmem:[%s239 + $0x4f0] sm:$0xf]
                %400 = vst [vmem:[%s240 + $0x13c] sm:$0xf] %v399
                %v401 = vld [vmem:[%s239 + $0x500] sm:$0xf]
                %402 = vst [vmem:[%s240 + $0x140] sm:$0xf] %v401
                %v403 = vld [vmem:[%s239 + $0x510] sm:$0xf]
                %404 = vst [vmem:[%s240 + $0x144] sm:$0xf] %v403
                %v405 = vld [vmem:[%s239 + $0x520] sm:$0xf]
                %406 = vst [vmem:[%s240 + $0x148] sm:$0xf] %v405
                %v407 = vld [vmem:[%s239 + $0x530] sm:$0xf]
                %408 = vst [vmem:[%s240 + $0x14c] sm:$0xf] %v407
                %v409 = vld [vmem:[%s239 + $0x540] sm:$0xf]
                %410 = vst [vmem:[%s240 + $0x150] sm:$0xf] %v409
                %v411 = vld [vmem:[%s239 + $0x550] sm:$0xf]
                %412 = vst [vmem:[%s240 + $0x154] sm:$0xf] %v411
                %v413 = vld [vmem:[%s239 + $0x560] sm:$0xf]
                %414 = vst [vmem:[%s240 + $0x158] sm:$0xf] %v413
                %v415 = vld [vmem:[%s239 + $0x570] sm:$0xf]
                %416 = vst [vmem:[%s240 + $0x15c] sm:$0xf] %v415
                %v417 = vld [vmem:[%s239 + $0x580] sm:$0xf]
                %418 = vst [vmem:[%s240 + $0x160] sm:$0xf] %v417
                %v419 = vld [vmem:[%s239 + $0x590] sm:$0xf]
                %420 = vst [vmem:[%s240 + $0x164] sm:$0xf] %v419
                %v421 = vld [vmem:[%s239 + $0x5a0] sm:$0xf]
                %422 = vst [vmem:[%s240 + $0x168] sm:$0xf] %v421
                %v423 = vld [vmem:[%s239 + $0x5b0] sm:$0xf]
                %424 = vst [vmem:[%s240 + $0x16c] sm:$0xf] %v423
                %v425 = vld [vmem:[%s239 + $0x5c0] sm:$0xf]
                %426 = vst [vmem:[%s240 + $0x170] sm:$0xf] %v425
                %v427 = vld [vmem:[%s239 + $0x5d0] sm:$0xf]
                %428 = vst [vmem:[%s240 + $0x174] sm:$0xf] %v427
                %v429 = vld [vmem:[%s239 + $0x5e0] sm:$0xf]
                %430 = vst [vmem:[%s240 + $0x178] sm:$0xf] %v429
                %v431 = vld [vmem:[%s239 + $0x5f0] sm:$0xf]
                %432 = vst [vmem:[%s240 + $0x17c] sm:$0xf] %v431
                %v433 = vld [vmem:[%s239 + $0x600] sm:$0xf]
                %434 = vst [vmem:[%s240 + $0x180] sm:$0xf] %v433
                %v435 = vld [vmem:[%s239 + $0x610] sm:$0xf]
                %436 = vst [vmem:[%s240 + $0x184] sm:$0xf] %v435
                %v437 = vld [vmem:[%s239 + $0x620] sm:$0xf]
                %438 = vst [vmem:[%s240 + $0x188] sm:$0xf] %v437
                %v439 = vld [vmem:[%s239 + $0x630] sm:$0xf]
                %440 = vst [vmem:[%s240 + $0x18c] sm:$0xf] %v439
                %v441 = vld [vmem:[%s239 + $0x640] sm:$0xf]
                %442 = vst [vmem:[%s240 + $0x190] sm:$0xf] %v441
                %v443 = vld [vmem:[%s239 + $0x650] sm:$0xf]
                %444 = vst [vmem:[%s240 + $0x194] sm:$0xf] %v443
                %v445 = vld [vmem:[%s239 + $0x660] sm:$0xf]
                %446 = vst [vmem:[%s240 + $0x198] sm:$0xf] %v445
                %v447 = vld [vmem:[%s239 + $0x670] sm:$0xf]
                %448 = vst [vmem:[%s240 + $0x19c] sm:$0xf] %v447
                %v449 = vld [vmem:[%s239 + $0x680] sm:$0xf]
                %450 = vst [vmem:[%s240 + $0x1a0] sm:$0xf] %v449
                %v451 = vld [vmem:[%s239 + $0x690] sm:$0xf]
                %452 = vst [vmem:[%s240 + $0x1a4] sm:$0xf] %v451
                %v453 = vld [vmem:[%s239 + $0x6a0] sm:$0xf]
                %454 = vst [vmem:[%s240 + $0x1a8] sm:$0xf] %v453
                %v455 = vld [vmem:[%s239 + $0x6b0] sm:$0xf]
                %456 = vst [vmem:[%s240 + $0x1ac] sm:$0xf] %v455
                %v457 = vld [vmem:[%s239 + $0x6c0] sm:$0xf]
                %458 = vst [vmem:[%s240 + $0x1b0] sm:$0xf] %v457
                %v459 = vld [vmem:[%s239 + $0x6d0] sm:$0xf]
                %460 = vst [vmem:[%s240 + $0x1b4] sm:$0xf] %v459
                %v461 = vld [vmem:[%s239 + $0x6e0] sm:$0xf]
                %462 = vst [vmem:[%s240 + $0x1b8] sm:$0xf] %v461
                %v463 = vld [vmem:[%s239 + $0x6f0] sm:$0xf]
                %464 = vst [vmem:[%s240 + $0x1bc] sm:$0xf] %v463
                %v465 = vld [vmem:[%s239 + $0x700] sm:$0xf]
                %466 = vst [vmem:[%s240 + $0x1c0] sm:$0xf] %v465
                %v467 = vld [vmem:[%s239 + $0x710] sm:$0xf]
                %468 = vst [vmem:[%s240 + $0x1c4] sm:$0xf] %v467
                %v469 = vld [vmem:[%s239 + $0x720] sm:$0xf]
                %470 = vst [vmem:[%s240 + $0x1c8] sm:$0xf] %v469
                %v471 = vld [vmem:[%s239 + $0x730] sm:$0xf]
                %472 = vst [vmem:[%s240 + $0x1cc] sm:$0xf] %v471
                %v473 = vld [vmem:[%s239 + $0x740] sm:$0xf]
                %474 = vst [vmem:[%s240 + $0x1d0] sm:$0xf] %v473
                %v475 = vld [vmem:[%s239 + $0x750] sm:$0xf]
                %476 = vst [vmem:[%s240 + $0x1d4] sm:$0xf] %v475
                %v477 = vld [vmem:[%s239 + $0x760] sm:$0xf]
                %478 = vst [vmem:[%s240 + $0x1d8] sm:$0xf] %v477
                %v479 = vld [vmem:[%s239 + $0x770] sm:$0xf]
                %480 = vst [vmem:[%s240 + $0x1dc] sm:$0xf] %v479
                %v481 = vld [vmem:[%s239 + $0x780] sm:$0xf]
                %482 = vst [vmem:[%s240 + $0x1e0] sm:$0xf] %v481
                %v483 = vld [vmem:[%s239 + $0x790] sm:$0xf]
                %484 = vst [vmem:[%s240 + $0x1e4] sm:$0xf] %v483
                %v485 = vld [vmem:[%s239 + $0x7a0] sm:$0xf]
                %486 = vst [vmem:[%s240 + $0x1e8] sm:$0xf] %v485
                %v487 = vld [vmem:[%s239 + $0x7b0] sm:$0xf]
                %488 = vst [vmem:[%s240 + $0x1ec] sm:$0xf] %v487
                %v489 = vld [vmem:[%s239 + $0x7c0] sm:$0xf]
                %490 = vst [vmem:[%s240 + $0x1f0] sm:$0xf] %v489
                %v491 = vld [vmem:[%s239 + $0x7d0] sm:$0xf]
                %492 = vst [vmem:[%s240 + $0x1f4] sm:$0xf] %v491
                %v493 = vld [vmem:[%s239 + $0x7e0] sm:$0xf]
                %494 = vst [vmem:[%s240 + $0x1f8] sm:$0xf] %v493
                %v495 = vld [vmem:[%s239 + $0x7f0] sm:$0xf]
                %496 = vst [vmem:[%s240 + $0x1fc] sm:$0xf] %v495
                %v497 = vld [vmem:[%s239 + $0x800] sm:$0xf]
                %498 = vst [vmem:[%s240 + $0x200] sm:$0xf] %v497
                %v499 = vld [vmem:[%s239 + $0x810] sm:$0xf]
                %500 = vst [vmem:[%s240 + $0x204] sm:$0xf] %v499
                %v501 = vld [vmem:[%s239 + $0x820] sm:$0xf]
                %502 = vst [vmem:[%s240 + $0x208] sm:$0xf] %v501
                %v503 = vld [vmem:[%s239 + $0x830] sm:$0xf]
                %504 = vst [vmem:[%s240 + $0x20c] sm:$0xf] %v503
                %v505 = vld [vmem:[%s239 + $0x840] sm:$0xf]
                %506 = vst [vmem:[%s240 + $0x210] sm:$0xf] %v505
                %v507 = vld [vmem:[%s239 + $0x850] sm:$0xf]
                %508 = vst [vmem:[%s240 + $0x214] sm:$0xf] %v507
                %v509 = vld [vmem:[%s239 + $0x860] sm:$0xf]
                %510 = vst [vmem:[%s240 + $0x218] sm:$0xf] %v509
                %v511 = vld [vmem:[%s239 + $0x870] sm:$0xf]
                %512 = vst [vmem:[%s240 + $0x21c] sm:$0xf] %v511
                %v513 = vld [vmem:[%s239 + $0x880] sm:$0xf]
                %514 = vst [vmem:[%s240 + $0x220] sm:$0xf] %v513
                %v515 = vld [vmem:[%s239 + $0x890] sm:$0xf]
                %516 = vst [vmem:[%s240 + $0x224] sm:$0xf] %v515
                %v517 = vld [vmem:[%s239 + $0x8a0] sm:$0xf]
                %518 = vst [vmem:[%s240 + $0x228] sm:$0xf] %v517
                %v519 = vld [vmem:[%s239 + $0x8b0] sm:$0xf]
                %520 = vst [vmem:[%s240 + $0x22c] sm:$0xf] %v519
                %v521 = vld [vmem:[%s239 + $0x8c0] sm:$0xf]
                %522 = vst [vmem:[%s240 + $0x230] sm:$0xf] %v521
                %v523 = vld [vmem:[%s239 + $0x8d0] sm:$0xf]
                %524 = vst [vmem:[%s240 + $0x234] sm:$0xf] %v523
                %v525 = vld [vmem:[%s239 + $0x8e0] sm:$0xf]
                %526 = vst [vmem:[%s240 + $0x238] sm:$0xf] %v525
                %v527 = vld [vmem:[%s239 + $0x8f0] sm:$0xf]
                %528 = vst [vmem:[%s240 + $0x23c] sm:$0xf] %v527
              $region63: #{lip_sync_forward.17} parent=57 // loop_footer
                %s238 = sadd.s32 1, %s234
              $region64: #{lip_sync_forward.17} parent=57 // loop_footer_branch
                %233 = sbr.rel target = $region60
              $region65: #{lip_sync_forward.17} parent=57 // loop_exit
                _
            $region58: #{lip_sync_forward.17} parent=49 // pred_fallthru
              _
          $region50: #{lip_sync_forward.17} parent=45 // pred_fallthru
            _
          %836 = vnop
        $region46: #{lip_sync_forward.17} parent=15 // pred_fallthru
          _
        // Predicated region
        $region84: #{lip_sync_forward.17} parent=15 // pred_check
          %p837 = pneg %p104
        $region85: #{lip_sync_forward.17} parent=15 // pred_check_branch
          %839 = sbr.rel (%p837) target = $region87
        $region86: #{lip_sync_forward.17} parent=15 // pred_region
          %p840 = scmp.lt.s32.totalorder %s17, 3
          %s841 = scalar_select %p840, %s17, 3
          %s842 = scalar_lea.vmem %s2, %s841
        $region87: #{lip_sync_forward.17} parent=15 // pred_fallthru
          _
      $region16: #{lip_sync_forward.17} parent=5 // pred_fallthru
        _
      %p843 = scmp.le.s32.totalorder 1, %s9
      %p844 = scmp.lt.s32.totalorder %s9, 9
      %p845 = pnand %p843, %p844
      %p846 = pneg %p845
      // Predicated region
      $region88: #{lip_sync_forward.17} parent=5 // pred_check
        _
      $region89: #{lip_sync_forward.17} parent=5 // pred_check_branch
        %848 = sbr.rel (%p845) target = $region91
      $region90: #{lip_sync_forward.17} parent=5 // pred_region
        %s849 = ssub.s32 %s9, 1
        %s850 = sand.u32 %s43, 1
        %s851 = sand.u32 %s43, 1
        %s852 = smul.addr %s851, 72
        %s853 = scalar_lea.vmem [#allocation3], %s852
        // Predicated region
        $region92: #{lip_sync_forward.17} parent=90 // pred_check
          %p854 = pneg %p56
        $region93: #{lip_sync_forward.17} parent=90 // pred_check_branch
          %856 = sbr.rel (%p854) target = $region95
        $region94: #{lip_sync_forward.17} parent=90 // pred_region
          _
        $region95: #{lip_sync_forward.17} parent=90 // pred_fallthru
          _
        %s857 = sand.u32 %s71, 1
        %s858 = sand.u32 %s71, 1
        %s859 = smul.addr %s858, 576
        %s860 = scalar_lea.vmem [#allocation4], %s859
        // Predicated region
        $region96: #{lip_sync_forward.17} parent=90 // pred_check
          %p861 = pneg %p84
        $region97: #{lip_sync_forward.17} parent=90 // pred_check_branch
          %863 = sbr.rel (%p861) target = $region99
        $region98: #{lip_sync_forward.17} parent=90 // pred_region
          _
        $region99: #{lip_sync_forward.17} parent=90 // pred_fallthru
          _
        %s864 = sand.u32 %s43, 1
        %s865 = sand.u32 %s43, 1
        %s866 = smul.addr %s865, 72
        %s867 = scalar_lea.vmem [#allocation3], %s866
        %p868 = pneg %p56
        %p869 = pneg %p53
        %s870 = sand.u32 %s71, 1
        %s871 = sand.u32 %s71, 1
        %s872 = smul.addr %s871, 576
        %s873 = scalar_lea.vmem [#allocation4], %s872
        %p874 = pneg %p84
        %p875 = pneg %p81
        %p876 = scmp.lt.s32.totalorder %s20, 3
        %s877 = scalar_select %p876, %s20, 3
        %s878 = scalar_lea.vmem %s2, %s877
        %p879 = pneg %p110
        %p880 = pneg %p107
        %p881 = pneg %p138
        %p882 = pneg %p135
        %s883 = sand.u32 %s125, 1
        %s884 = sand.u32 %s125, 1
        %s885 = smul.addr %s884, 8
        %s886 = scalar_lea.vmem [#allocation5], %s885
        %s887 = smul.u32 2, %s19
        %s888 = smul.u32 9, %s21
        %s889 = smul.u32 144, %s21
        %p890 = scmp.lt.s32.totalorder %s20, 3
        %s891 = scalar_select %p890, %s20, 3
        %s892 = scalar_lea.vmem %s2, %s891
        %s893 = smul.u32 2, %s19
        %p895 = scmp.eq.s32.totalorder %s21, 0
        // Predicated region
        $region100: #{lip_sync_forward.17} parent=90 // pred_check
          %p896 = pneg %p895
        $region101: #{lip_sync_forward.17} parent=90 // pred_check_branch
          %898 = sbr.rel (%p896) target = $region103
        $region102: #{lip_sync_forward.17} parent=90 // pred_region
          %899 = vst [vmem:[#allocation2] sm:$0xff] 0.0
          %900 = vst [vmem:[#allocation2 + $0x8] sm:$0xff] 0.0
        $region103: #{lip_sync_forward.17} parent=90 // pred_fallthru
          _
        %v901 = vld [vmem:[#allocation2] sm:$0xff]
        %v902 = vld [vmem:[#allocation2 + $0x8] sm:$0xff]
        %v903 = vld [vmem:[%s853] sm:$0xff]
        %v904 = vld [vmem:[%s853 + $0x8] sm:$0xff]
        %v905 = vld [vmem:[%s853 + $0x10] sm:$0xff]
        %v906 = vld [vmem:[%s853 + $0x18] sm:$0xff]
        %v907 = vld [vmem:[%s853 + $0x20] sm:$0xf]
        %v908 = vld [vmem:[%s853 + $0x24] sm:$0xff]
        %v909 = vld [vmem:[%s853 + $0x2c] sm:$0xff]
        %v910 = vld [vmem:[%s853 + $0x34] sm:$0xff]
        %v911 = vld [vmem:[%s853 + $0x3c] sm:$0xff]
        %v912 = vld [vmem:[%s853 + $0x44] sm:$0xf]
        %v913 = vld [vmem:[%s860] sm:$0xf]
        %v914 = vld [vmem:[%s860 + $0x4] sm:$0xf]
        %v915 = vld [vmem:[%s860 + $0x8] sm:$0xf]
        %v916 = vld [vmem:[%s860 + $0xc] sm:$0xf]
        %v917 = vld [vmem:[%s860 + $0x10] sm:$0xf]
        %v918 = vld [vmem:[%s860 + $0x14] sm:$0xf]
        %v919 = vld [vmem:[%s860 + $0x18] sm:$0xf]
        %v920 = vld [vmem:[%s860 + $0x1c] sm:$0xf]
        %v921 = vld [vmem:[%s860 + $0x20] sm:$0xf]
        %v922 = vld [vmem:[%s860 + $0x24] sm:$0xf]
        %v923 = vld [vmem:[%s860 + $0x28] sm:$0xf]
        %v924 = vld [vmem:[%s860 + $0x2c] sm:$0xf]
        %v925 = vld [vmem:[%s860 + $0x30] sm:$0xf]
        %v926 = vld [vmem:[%s860 + $0x34] sm:$0xf]
        %v927 = vld [vmem:[%s860 + $0x38] sm:$0xf]
        %v928 = vld [vmem:[%s860 + $0x3c] sm:$0xf]
        %v929 = vld [vmem:[%s860 + $0x40] sm:$0xf]
        %v930 = vld [vmem:[%s860 + $0x44] sm:$0xf]
        %v931 = vld [vmem:[%s860 + $0x48] sm:$0xf]
        %v932 = vld [vmem:[%s860 + $0x4c] sm:$0xf]
        %v933 = vld [vmem:[%s860 + $0x50] sm:$0xf]
        %v934 = vld [vmem:[%s860 + $0x54] sm:$0xf]
        %v935 = vld [vmem:[%s860 + $0x58] sm:$0xf]
        %v936 = vld [vmem:[%s860 + $0x5c] sm:$0xf]
        %v937 = vld [vmem:[%s860 + $0x60] sm:$0xf]
        %v938 = vld [vmem:[%s860 + $0x64] sm:$0xf]
        %v939 = vld [vmem:[%s860 + $0x68] sm:$0xf]
        %v940 = vld [vmem:[%s860 + $0x6c] sm:$0xf]
        %v941 = vld [vmem:[%s860 + $0x70] sm:$0xf]
        %v942 = vld [vmem:[%s860 + $0x74] sm:$0xf]
        %v943 = vld [vmem:[%s860 + $0x78] sm:$0xf]
        %v944 = vld [vmem:[%s860 + $0x7c] sm:$0xf]
        %v945 = vld [vmem:[%s860 + $0x80] sm:$0xf]
        %v946 = vld [vmem:[%s860 + $0x84] sm:$0xf]
        %v947 = vld [vmem:[%s860 + $0x88] sm:$0xf]
        %v948 = vld [vmem:[%s860 + $0x8c] sm:$0xf]
        %v949 = vld [vmem:[%s860 + $0x90] sm:$0xf]
        %v950 = vld [vmem:[%s860 + $0x94] sm:$0xf]
        %v951 = vld [vmem:[%s860 + $0x98] sm:$0xf]
        %v952 = vld [vmem:[%s860 + $0x9c] sm:$0xf]
        %v953 = vld [vmem:[%s860 + $0xa0] sm:$0xf]
        %v954 = vld [vmem:[%s860 + $0xa4] sm:$0xf]
        %v955 = vld [vmem:[%s860 + $0xa8] sm:$0xf]
        %v956 = vld [vmem:[%s860 + $0xac] sm:$0xf]
        %v957 = vld [vmem:[%s860 + $0xb0] sm:$0xf]
        %v958 = vld [vmem:[%s860 + $0xb4] sm:$0xf]
        %v959 = vld [vmem:[%s860 + $0xb8] sm:$0xf]
        %v960 = vld [vmem:[%s860 + $0xbc] sm:$0xf]
        %v961 = vld [vmem:[%s860 + $0xc0] sm:$0xf]
        %v962 = vld [vmem:[%s860 + $0xc4] sm:$0xf]
        %v963 = vld [vmem:[%s860 + $0xc8] sm:$0xf]
        %v964 = vld [vmem:[%s860 + $0xcc] sm:$0xf]
        %v965 = vld [vmem:[%s860 + $0xd0] sm:$0xf]
        %v966 = vld [vmem:[%s860 + $0xd4] sm:$0xf]
        %v967 = vld [vmem:[%s860 + $0xd8] sm:$0xf]
        %v968 = vld [vmem:[%s860 + $0xdc] sm:$0xf]
        %v969 = vld [vmem:[%s860 + $0xe0] sm:$0xf]
        %v970 = vld [vmem:[%s860 + $0xe4] sm:$0xf]
        %v971 = vld [vmem:[%s860 + $0xe8] sm:$0xf]
        %v972 = vld [vmem:[%s860 + $0xec] sm:$0xf]
        %v973 = vld [vmem:[%s860 + $0xf0] sm:$0xf]
        %v974 = vld [vmem:[%s860 + $0xf4] sm:$0xf]
        %v975 = vld [vmem:[%s860 + $0xf8] sm:$0xf]
        %v976 = vld [vmem:[%s860 + $0xfc] sm:$0xf]
        %v977 = vld [vmem:[%s860 + $0x100] sm:$0xf]
        %v978 = vld [vmem:[%s860 + $0x104] sm:$0xf]
        %v979 = vld [vmem:[%s860 + $0x108] sm:$0xf]
        %v980 = vld [vmem:[%s860 + $0x10c] sm:$0xf]
        %v981 = vld [vmem:[%s860 + $0x110] sm:$0xf]
        %v982 = vld [vmem:[%s860 + $0x114] sm:$0xf]
        %v983 = vld [vmem:[%s860 + $0x118] sm:$0xf]
        %v984 = vld [vmem:[%s860 + $0x11c] sm:$0xf]
        %v985 = vld [vmem:[%s860 + $0x120] sm:$0xf]
        %v986 = vld [vmem:[%s860 + $0x124] sm:$0xf]
        %v987 = vld [vmem:[%s860 + $0x128] sm:$0xf]
        %v988 = vld [vmem:[%s860 + $0x12c] sm:$0xf]
        %v989 = vld [vmem:[%s860 + $0x130] sm:$0xf]
        %v990 = vld [vmem:[%s860 + $0x134] sm:$0xf]
        %v991 = vld [vmem:[%s860 + $0x138] sm:$0xf]
        %v992 = vld [vmem:[%s860 + $0x13c] sm:$0xf]
        %v993 = vld [vmem:[%s860 + $0x140] sm:$0xf]
        %v994 = vld [vmem:[%s860 + $0x144] sm:$0xf]
        %v995 = vld [vmem:[%s860 + $0x148] sm:$0xf]
        %v996 = vld [vmem:[%s860 + $0x14c] sm:$0xf]
        %v997 = vld [vmem:[%s860 + $0x150] sm:$0xf]
        %v998 = vld [vmem:[%s860 + $0x154] sm:$0xf]
        %v999 = vld [vmem:[%s860 + $0x158] sm:$0xf]
        %v1000 = vld [vmem:[%s860 + $0x15c] sm:$0xf]
        %v1001 = vld [vmem:[%s860 + $0x160] sm:$0xf]
        %v1002 = vld [vmem:[%s860 + $0x164] sm:$0xf]
        %v1003 = vld [vmem:[%s860 + $0x168] sm:$0xf]
        %v1004 = vld [vmem:[%s860 + $0x16c] sm:$0xf]
        %v1005 = vld [vmem:[%s860 + $0x170] sm:$0xf]
        %v1006 = vld [vmem:[%s860 + $0x174] sm:$0xf]
        %v1007 = vld [vmem:[%s860 + $0x178] sm:$0xf]
        %v1008 = vld [vmem:[%s860 + $0x17c] sm:$0xf]
        %v1009 = vld [vmem:[%s860 + $0x180] sm:$0xf]
        %v1010 = vld [vmem:[%s860 + $0x184] sm:$0xf]
        %v1011 = vld [vmem:[%s860 + $0x188] sm:$0xf]
        %v1012 = vld [vmem:[%s860 + $0x18c] sm:$0xf]
        %v1013 = vld [vmem:[%s860 + $0x190] sm:$0xf]
        %v1014 = vld [vmem:[%s860 + $0x194] sm:$0xf]
        %v1015 = vld [vmem:[%s860 + $0x198] sm:$0xf]
        %v1016 = vld [vmem:[%s860 + $0x19c] sm:$0xf]
        %v1017 = vld [vmem:[%s860 + $0x1a0] sm:$0xf]
        %v1018 = vld [vmem:[%s860 + $0x1a4] sm:$0xf]
        %v1019 = vld [vmem:[%s860 + $0x1a8] sm:$0xf]
        %v1020 = vld [vmem:[%s860 + $0x1ac] sm:$0xf]
        %v1021 = vld [vmem:[%s860 + $0x1b0] sm:$0xf]
        %v1022 = vld [vmem:[%s860 + $0x1b4] sm:$0xf]
        %v1023 = vld [vmem:[%s860 + $0x1b8] sm:$0xf]
        %v1024 = vld [vmem:[%s860 + $0x1bc] sm:$0xf]
        %v1025 = vld [vmem:[%s860 + $0x1c0] sm:$0xf]
        %v1026 = vld [vmem:[%s860 + $0x1c4] sm:$0xf]
        %v1027 = vld [vmem:[%s860 + $0x1c8] sm:$0xf]
        %v1028 = vld [vmem:[%s860 + $0x1cc] sm:$0xf]
        %v1029 = vld [vmem:[%s860 + $0x1d0] sm:$0xf]
        %v1030 = vld [vmem:[%s860 + $0x1d4] sm:$0xf]
        %v1031 = vld [vmem:[%s860 + $0x1d8] sm:$0xf]
        %v1032 = vld [vmem:[%s860 + $0x1dc] sm:$0xf]
        %v1033 = vld [vmem:[%s860 + $0x1e0] sm:$0xf]
        %v1034 = vld [vmem:[%s860 + $0x1e4] sm:$0xf]
        %v1035 = vld [vmem:[%s860 + $0x1e8] sm:$0xf]
        %v1036 = vld [vmem:[%s860 + $0x1ec] sm:$0xf]
        %v1037 = vld [vmem:[%s860 + $0x1f0] sm:$0xf]
        %v1038 = vld [vmem:[%s860 + $0x1f4] sm:$0xf]
        %v1039 = vld [vmem:[%s860 + $0x1f8] sm:$0xf]
        %v1040 = vld [vmem:[%s860 + $0x1fc] sm:$0xf]
        %v1041 = vld [vmem:[%s860 + $0x200] sm:$0xf]
        %v1042 = vld [vmem:[%s860 + $0x204] sm:$0xf]
        %v1043 = vld [vmem:[%s860 + $0x208] sm:$0xf]
        %v1044 = vld [vmem:[%s860 + $0x20c] sm:$0xf]
        %v1045 = vld [vmem:[%s860 + $0x210] sm:$0xf]
        %v1046 = vld [vmem:[%s860 + $0x214] sm:$0xf]
        %v1047 = vld [vmem:[%s860 + $0x218] sm:$0xf]
        %v1048 = vld [vmem:[%s860 + $0x21c] sm:$0xf]
        %v1049 = vld [vmem:[%s860 + $0x220] sm:$0xf]
        %v1050 = vld [vmem:[%s860 + $0x224] sm:$0xf]
        %v1051 = vld [vmem:[%s860 + $0x228] sm:$0xf]
        %v1052 = vld [vmem:[%s860 + $0x22c] sm:$0xf]
        %v1053 = vld [vmem:[%s860 + $0x230] sm:$0xf]
        %v1054 = vld [vmem:[%s860 + $0x234] sm:$0xf]
        %v1055 = vld [vmem:[%s860 + $0x238] sm:$0xf]
        %v1056 = vld [vmem:[%s860 + $0x23c] sm:$0xf]
        %v1067 = vunpack.c.l.b16 %v903
        %v1068 = vunpack.c.h.b16 %v903
        %v1069 = vunpack.c.l.b16 %v904
        %v1070 = vunpack.c.h.b16 %v904
        %v1071 = vunpack.c.l.b16 %v905
        %v1072 = vunpack.c.h.b16 %v905
        %v1073 = vunpack.c.l.b16 %v906
        %v1074 = vunpack.c.h.b16 %v906
        %v1075 = vunpack.c.l.b16 %v907
        %v1076 = vunpack.c.l.b16 %v908
        %v1077 = vunpack.c.h.b16 %v908
        %v1078 = vunpack.c.l.b16 %v909
        %v1079 = vunpack.c.h.b16 %v909
        %v1080 = vunpack.c.l.b16 %v910
        %v1081 = vunpack.c.h.b16 %v910
        %v1082 = vunpack.c.l.b16 %v911
        %v1083 = vunpack.c.h.b16 %v911
        %v1084 = vunpack.c.l.b16 %v912
        %v1085 = vpack.c.b16 %v1076, %v1067
        %v1086 = vpack.c.b16 %v1077, %v1068
        %v1087 = vpack.c.b16 %v1078, %v1069
        %v1088 = vpack.c.b16 %v1079, %v1070
        %v1089 = vpack.c.b16 %v1080, %v1071
        %v1090 = vpack.c.b16 %v1081, %v1072
        %v1091 = vpack.c.b16 %v1082, %v1073
        %v1092 = vpack.c.b16 %v1083, %v1074
        %v1093 = vpack.c.b16 %v1084, %v1075
        %v1247 = vunpack.c.l.b16 %v913
        %v1248 = vunpack.c.l.b16 %v914
        %v1249 = vunpack.c.l.b16 %v915
        %v1250 = vunpack.c.l.b16 %v916
        %v1251 = vunpack.c.l.b16 %v917
        %v1252 = vunpack.c.l.b16 %v918
        %v1253 = vunpack.c.l.b16 %v919
        %v1254 = vunpack.c.l.b16 %v920
        %v1255 = vunpack.c.l.b16 %v921
        %v1256 = vunpack.c.l.b16 %v922
        %v1257 = vunpack.c.l.b16 %v923
        %v1258 = vunpack.c.l.b16 %v924
        %v1259 = vunpack.c.l.b16 %v925
        %v1260 = vunpack.c.l.b16 %v926
        %v1261 = vunpack.c.l.b16 %v927
        %v1262 = vunpack.c.l.b16 %v928
        %v1263 = vunpack.c.l.b16 %v929
        %v1264 = vunpack.c.l.b16 %v930
        %v1265 = vunpack.c.l.b16 %v931
        %v1266 = vunpack.c.l.b16 %v932
        %v1267 = vunpack.c.l.b16 %v933
        %v1268 = vunpack.c.l.b16 %v934
        %v1269 = vunpack.c.l.b16 %v935
        %v1270 = vunpack.c.l.b16 %v936
        %v1271 = vunpack.c.l.b16 %v937
        %v1272 = vunpack.c.l.b16 %v938
        %v1273 = vunpack.c.l.b16 %v939
        %v1274 = vunpack.c.l.b16 %v940
        %v1275 = vunpack.c.l.b16 %v941
        %v1276 = vunpack.c.l.b16 %v942
        %v1277 = vunpack.c.l.b16 %v943
        %v1278 = vunpack.c.l.b16 %v944
        %v1279 = vunpack.c.l.b16 %v945
        %v1280 = vunpack.c.l.b16 %v946
        %v1281 = vunpack.c.l.b16 %v947
        %v1282 = vunpack.c.l.b16 %v948
        %v1283 = vunpack.c.l.b16 %v949
        %v1284 = vunpack.c.l.b16 %v950
        %v1285 = vunpack.c.l.b16 %v951
        %v1286 = vunpack.c.l.b16 %v952
        %v1287 = vunpack.c.l.b16 %v953
        %v1288 = vunpack.c.l.b16 %v954
        %v1289 = vunpack.c.l.b16 %v955
        %v1290 = vunpack.c.l.b16 %v956
        %v1291 = vunpack.c.l.b16 %v957
        %v1292 = vunpack.c.l.b16 %v958
        %v1293 = vunpack.c.l.b16 %v959
        %v1294 = vunpack.c.l.b16 %v960
        %v1295 = vunpack.c.l.b16 %v961
        %v1296 = vunpack.c.l.b16 %v962
        %v1297 = vunpack.c.l.b16 %v963
        %v1298 = vunpack.c.l.b16 %v964
        %v1299 = vunpack.c.l.b16 %v965
        %v1300 = vunpack.c.l.b16 %v966
        %v1301 = vunpack.c.l.b16 %v967
        %v1302 = vunpack.c.l.b16 %v968
        %v1303 = vunpack.c.l.b16 %v969
        %v1304 = vunpack.c.l.b16 %v970
        %v1305 = vunpack.c.l.b16 %v971
        %v1306 = vunpack.c.l.b16 %v972
        %v1307 = vunpack.c.l.b16 %v973
        %v1308 = vunpack.c.l.b16 %v974
        %v1309 = vunpack.c.l.b16 %v975
        %v1310 = vunpack.c.l.b16 %v976
        %v1311 = vunpack.c.l.b16 %v977
        %v1312 = vunpack.c.l.b16 %v978
        %v1313 = vunpack.c.l.b16 %v979
        %v1314 = vunpack.c.l.b16 %v980
        %v1315 = vunpack.c.l.b16 %v981
        %v1316 = vunpack.c.l.b16 %v982
        %v1317 = vunpack.c.l.b16 %v983
        %v1318 = vunpack.c.l.b16 %v984
        %v1319 = vunpack.c.l.b16 %v985
        %v1320 = vunpack.c.l.b16 %v986
        %v1321 = vunpack.c.l.b16 %v987
        %v1322 = vunpack.c.l.b16 %v988
        %v1323 = vunpack.c.l.b16 %v989
        %v1324 = vunpack.c.l.b16 %v990
        %v1325 = vunpack.c.l.b16 %v991
        %v1326 = vunpack.c.l.b16 %v992
        %v1327 = vunpack.c.l.b16 %v993
        %v1328 = vunpack.c.l.b16 %v994
        %v1329 = vunpack.c.l.b16 %v995
        %v1330 = vunpack.c.l.b16 %v996
        %v1331 = vunpack.c.l.b16 %v997
        %v1332 = vunpack.c.l.b16 %v998
        %v1333 = vunpack.c.l.b16 %v999
        %v1334 = vunpack.c.l.b16 %v1000
        %v1335 = vunpack.c.l.b16 %v1001
        %v1336 = vunpack.c.l.b16 %v1002
        %v1337 = vunpack.c.l.b16 %v1003
        %v1338 = vunpack.c.l.b16 %v1004
        %v1339 = vunpack.c.l.b16 %v1005
        %v1340 = vunpack.c.l.b16 %v1006
        %v1341 = vunpack.c.l.b16 %v1007
        %v1342 = vunpack.c.l.b16 %v1008
        %v1343 = vunpack.c.l.b16 %v1009
        %v1344 = vunpack.c.l.b16 %v1010
        %v1345 = vunpack.c.l.b16 %v1011
        %v1346 = vunpack.c.l.b16 %v1012
        %v1347 = vunpack.c.l.b16 %v1013
        %v1348 = vunpack.c.l.b16 %v1014
        %v1349 = vunpack.c.l.b16 %v1015
        %v1350 = vunpack.c.l.b16 %v1016
        %v1351 = vunpack.c.l.b16 %v1017
        %v1352 = vunpack.c.l.b16 %v1018
        %v1353 = vunpack.c.l.b16 %v1019
        %v1354 = vunpack.c.l.b16 %v1020
        %v1355 = vunpack.c.l.b16 %v1021
        %v1356 = vunpack.c.l.b16 %v1022
        %v1357 = vunpack.c.l.b16 %v1023
        %v1358 = vunpack.c.l.b16 %v1024
        %v1359 = vunpack.c.l.b16 %v1025
        %v1360 = vunpack.c.l.b16 %v1026
        %v1361 = vunpack.c.l.b16 %v1027
        %v1362 = vunpack.c.l.b16 %v1028
        %v1363 = vunpack.c.l.b16 %v1029
        %v1364 = vunpack.c.l.b16 %v1030
        %v1365 = vunpack.c.l.b16 %v1031
        %v1366 = vunpack.c.l.b16 %v1032
        %v1367 = vunpack.c.l.b16 %v1033
        %v1368 = vunpack.c.l.b16 %v1034
        %v1369 = vunpack.c.l.b16 %v1035
        %v1370 = vunpack.c.l.b16 %v1036
        %v1371 = vunpack.c.l.b16 %v1037
        %v1372 = vunpack.c.l.b16 %v1038
        %v1373 = vunpack.c.l.b16 %v1039
        %v1374 = vunpack.c.l.b16 %v1040
        %v1375 = vunpack.c.l.b16 %v1041
        %v1376 = vunpack.c.l.b16 %v1042
        %v1377 = vunpack.c.l.b16 %v1043
        %v1378 = vunpack.c.l.b16 %v1044
        %v1379 = vunpack.c.l.b16 %v1045
        %v1380 = vunpack.c.l.b16 %v1046
        %v1381 = vunpack.c.l.b16 %v1047
        %v1382 = vunpack.c.l.b16 %v1048
        %v1383 = vunpack.c.l.b16 %v1049
        %v1384 = vunpack.c.l.b16 %v1050
        %v1385 = vunpack.c.l.b16 %v1051
        %v1386 = vunpack.c.l.b16 %v1052
        %v1387 = vunpack.c.l.b16 %v1053
        %v1388 = vunpack.c.l.b16 %v1054
        %v1389 = vunpack.c.l.b16 %v1055
        %v1390 = vunpack.c.l.b16 %v1056
        %v1391 = vpack.c.b16 %v1248, %v1247
        %v1392 = vpack.c.b16 %v1250, %v1249
        %v1393 = vpack.c.b16 %v1252, %v1251
        %v1394 = vpack.c.b16 %v1254, %v1253
        %v1395 = vpack.c.b16 %v1256, %v1255
        %v1396 = vpack.c.b16 %v1258, %v1257
        %v1397 = vpack.c.b16 %v1260, %v1259
        %v1398 = vpack.c.b16 %v1262, %v1261
        %v1399 = vpack.c.b16 %v1264, %v1263
        %v1400 = vpack.c.b16 %v1266, %v1265
        %v1401 = vpack.c.b16 %v1268, %v1267
        %v1402 = vpack.c.b16 %v1270, %v1269
        %v1403 = vpack.c.b16 %v1272, %v1271
        %v1404 = vpack.c.b16 %v1274, %v1273
        %v1405 = vpack.c.b16 %v1276, %v1275
        %v1406 = vpack.c.b16 %v1278, %v1277
        %v1407 = vpack.c.b16 %v1280, %v1279
        %v1408 = vpack.c.b16 %v1282, %v1281
        %v1409 = vpack.c.b16 %v1284, %v1283
        %v1410 = vpack.c.b16 %v1286, %v1285
        %v1411 = vpack.c.b16 %v1288, %v1287
        %v1412 = vpack.c.b16 %v1290, %v1289
        %v1413 = vpack.c.b16 %v1292, %v1291
        %v1414 = vpack.c.b16 %v1294, %v1293
        %v1415 = vpack.c.b16 %v1296, %v1295
        %v1416 = vpack.c.b16 %v1298, %v1297
        %v1417 = vpack.c.b16 %v1300, %v1299
        %v1418 = vpack.c.b16 %v1302, %v1301
        %v1419 = vpack.c.b16 %v1304, %v1303
        %v1420 = vpack.c.b16 %v1306, %v1305
        %v1421 = vpack.c.b16 %v1308, %v1307
        %v1422 = vpack.c.b16 %v1310, %v1309
        %v1423 = vpack.c.b16 %v1312, %v1311
        %v1424 = vpack.c.b16 %v1314, %v1313
        %v1425 = vpack.c.b16 %v1316, %v1315
        %v1426 = vpack.c.b16 %v1318, %v1317
        %v1427 = vpack.c.b16 %v1320, %v1319
        %v1428 = vpack.c.b16 %v1322, %v1321
        %v1429 = vpack.c.b16 %v1324, %v1323
        %v1430 = vpack.c.b16 %v1326, %v1325
        %v1431 = vpack.c.b16 %v1328, %v1327
        %v1432 = vpack.c.b16 %v1330, %v1329
        %v1433 = vpack.c.b16 %v1332, %v1331
        %v1434 = vpack.c.b16 %v1334, %v1333
        %v1435 = vpack.c.b16 %v1336, %v1335
        %v1436 = vpack.c.b16 %v1338, %v1337
        %v1437 = vpack.c.b16 %v1340, %v1339
        %v1438 = vpack.c.b16 %v1342, %v1341
        %v1439 = vpack.c.b16 %v1344, %v1343
        %v1440 = vpack.c.b16 %v1346, %v1345
        %v1441 = vpack.c.b16 %v1348, %v1347
        %v1442 = vpack.c.b16 %v1350, %v1349
        %v1443 = vpack.c.b16 %v1352, %v1351
        %v1444 = vpack.c.b16 %v1354, %v1353
        %v1445 = vpack.c.b16 %v1356, %v1355
        %v1446 = vpack.c.b16 %v1358, %v1357
        %v1447 = vpack.c.b16 %v1360, %v1359
        %v1448 = vpack.c.b16 %v1362, %v1361
        %v1449 = vpack.c.b16 %v1364, %v1363
        %v1450 = vpack.c.b16 %v1366, %v1365
        %v1451 = vpack.c.b16 %v1368, %v1367
        %v1452 = vpack.c.b16 %v1370, %v1369
        %v1453 = vpack.c.b16 %v1372, %v1371
        %v1454 = vpack.c.b16 %v1374, %v1373
        %v1455 = vpack.c.b16 %v1376, %v1375
        %v1456 = vpack.c.b16 %v1378, %v1377
        %v1457 = vpack.c.b16 %v1380, %v1379
        %v1458 = vpack.c.b16 %v1382, %v1381
        %v1459 = vpack.c.b16 %v1384, %v1383
        %v1460 = vpack.c.b16 %v1386, %v1385
        %v1461 = vpack.c.b16 %v1388, %v1387
        %v1462 = vpack.c.b16 %v1390, %v1389
        %1535 = vmatprep.subr.bf16.mxu0 0
        %1536 = vmatpush1.bf16.msra.mxu0 %v1391
        %1537 = vmatprep.subr.bf16.mxu0 0
        %1538 = vmatpush1.bf16.msra.mxu0 %v1392
        %1539 = vmatprep.subr.bf16.mxu0 0
        %1540 = vmatpush1.bf16.msra.mxu0 %v1393
        %1541 = vmatprep.subr.bf16.mxu0 0
        %1542 = vmatpush1.bf16.msra.mxu0 %v1394
        %1543 = vmatprep.subr.bf16.mxu0 0
        %1544 = vmatpush1.bf16.msra.mxu0 %v1395
        %1545 = vmatprep.subr.bf16.mxu0 0
        %1546 = vmatpush1.bf16.msra.mxu0 %v1396
        %1547 = vmatprep.subr.bf16.mxu0 0
        %1548 = vmatpush1.bf16.msra.mxu0 %v1397
        %1549 = vmatprep.subr.bf16.mxu0 0
        %1550 = vmatpush1.bf16.msra.mxu0 %v1398
        %1551 = vmatprep.subr.bf16.mxu0 0
        %1552 = vmatpush1.bf16.msra.mxu0 %v1399
        %1553 = vmatprep.subr.bf16.mxu0 0
        %1554 = vmatpush1.bf16.msra.mxu0 %v1400
        %1555 = vmatprep.subr.bf16.mxu0 0
        %1556 = vmatpush1.bf16.msra.mxu0 %v1401
        %1557 = vmatprep.subr.bf16.mxu0 0
        %1558 = vmatpush1.bf16.msra.mxu0 %v1402
        %1559 = vmatprep.subr.bf16.mxu0 0
        %1560 = vmatpush1.bf16.msra.mxu0 %v1403
        %1561 = vmatprep.subr.bf16.mxu0 0
        %1562 = vmatpush1.bf16.msra.mxu0 %v1404
        %1563 = vmatprep.subr.bf16.mxu0 0
        %1564 = vmatpush1.bf16.msra.mxu0 %v1405
        %1565 = vmatprep.subr.bf16.mxu0 0
        %1566 = vmatpush1.bf16.msra.mxu0 %v1406
        %1567 = vmatprep.mubr.bf16.mxu0 %v1086
        %1568 = vmatmul.mubr.bf16.gmra.mrb[0].mxu0 %v1085
        %v1569 = vpop.f32.mrb[0].mxu0
        %v1570 = vadd.f32 0.0, %v1569
        %v1571 = vpop.f32.mrb[0].mxu0
        %v1572 = vpop.f32.mrb[0].mxu0
        %v1573 = vadd.f32 0.0, %v1572
        %v1574 = vpop.f32.mrb[0].mxu0
        %1575 = vdwg.mxu0
        %1576 = vmatprep.subr.bf16.mxu0 0
        %1577 = vmatpush1.bf16.msra.mxu0 %v1407
        %1578 = vmatprep.subr.bf16.mxu0 0
        %1579 = vmatpush1.bf16.msra.mxu0 %v1408
        %1580 = vmatprep.subr.bf16.mxu0 0
        %1581 = vmatpush1.bf16.msra.mxu0 %v1409
        %1582 = vmatprep.subr.bf16.mxu0 0
        %1583 = vmatpush1.bf16.msra.mxu0 %v1410
        %1584 = vmatprep.subr.bf16.mxu0 0
        %1585 = vmatpush1.bf16.msra.mxu0 %v1411
        %1586 = vmatprep.subr.bf16.mxu0 0
        %1587 = vmatpush1.bf16.msra.mxu0 %v1412
        %1588 = vmatprep.subr.bf16.mxu0 0
        %1589 = vmatpush1.bf16.msra.mxu0 %v1413
        %1590 = vmatprep.subr.bf16.mxu0 0
        %1591 = vmatpush1.bf16.msra.mxu0 %v1414
        %1592 = vmatprep.subr.bf16.mxu0 0
        %1593 = vmatpush1.bf16.msra.mxu0 %v1415
        %1594 = vmatprep.subr.bf16.mxu0 0
        %1595 = vmatpush1.bf16.msra.mxu0 %v1416
        %1596 = vmatprep.subr.bf16.mxu0 0
        %1597 = vmatpush1.bf16.msra.mxu0 %v1417
        %1598 = vmatprep.subr.bf16.mxu0 0
        %1599 = vmatpush1.bf16.msra.mxu0 %v1418
        %1600 = vmatprep.subr.bf16.mxu0 0
        %1601 = vmatpush1.bf16.msra.mxu0 %v1419
        %1602 = vmatprep.subr.bf16.mxu0 0
        %1603 = vmatpush1.bf16.msra.mxu0 %v1420
        %1604 = vmatprep.subr.bf16.mxu0 0
        %1605 = vmatpush1.bf16.msra.mxu0 %v1421
        %1606 = vmatprep.subr.bf16.mxu0 0
        %1607 = vmatpush1.bf16.msra.mxu0 %v1422
        %1608 = vmatprep.mubr.bf16.mxu0 %v1088
        %1609 = vmatmul.mubr.bf16.gmra.mrb[0].mxu0 %v1087
        %v1610 = vpop.f32.mrb[0].mxu0
        %v1611 = vadd.f32 %v1570, %v1610
        %v1612 = vpop.f32.mrb[0].mxu0
        %v1613 = vpop.f32.mrb[0].mxu0
        %v1614 = vadd.f32 %v1573, %v1613
        %v1615 = vpop.f32.mrb[0].mxu0
        %1616 = vdwg.mxu0
        %1617 = vmatprep.subr.bf16.mxu0 0
        %1618 = vmatpush1.bf16.msra.mxu0 %v1423
        %1619 = vmatprep.subr.bf16.mxu0 0
        %1620 = vmatpush1.bf16.msra.mxu0 %v1424
        %1621 = vmatprep.subr.bf16.mxu0 0
        %1622 = vmatpush1.bf16.msra.mxu0 %v1425
        %1623 = vmatprep.subr.bf16.mxu0 0
        %1624 = vmatpush1.bf16.msra.mxu0 %v1426
        %1625 = vmatprep.subr.bf16.mxu0 0
        %1626 = vmatpush1.bf16.msra.mxu0 %v1427
        %1627 = vmatprep.subr.bf16.mxu0 0
        %1628 = vmatpush1.bf16.msra.mxu0 %v1428
        %1629 = vmatprep.subr.bf16.mxu0 0
        %1630 = vmatpush1.bf16.msra.mxu0 %v1429
        %1631 = vmatprep.subr.bf16.mxu0 0
        %1632 = vmatpush1.bf16.msra.mxu0 %v1430
        %1633 = vmatprep.subr.bf16.mxu0 0
        %1634 = vmatpush1.bf16.msra.mxu0 %v1431
        %1635 = vmatprep.subr.bf16.mxu0 0
        %1636 = vmatpush1.bf16.msra.mxu0 %v1432
        %1637 = vmatprep.subr.bf16.mxu0 0
        %1638 = vmatpush1.bf16.msra.mxu0 %v1433
        %1639 = vmatprep.subr.bf16.mxu0 0
        %1640 = vmatpush1.bf16.msra.mxu0 %v1434
        %1641 = vmatprep.subr.bf16.mxu0 0
        %1642 = vmatpush1.bf16.msra.mxu0 %v1435
        %1643 = vmatprep.subr.bf16.mxu0 0
        %1644 = vmatpush1.bf16.msra.mxu0 %v1436
        %1645 = vmatprep.subr.bf16.mxu0 0
        %1646 = vmatpush1.bf16.msra.mxu0 %v1437
        %1647 = vmatprep.subr.bf16.mxu0 0
        %1648 = vmatpush1.bf16.msra.mxu0 %v1438
        %1649 = vmatprep.mubr.bf16.mxu0 %v1090
        %1650 = vmatmul.mubr.bf16.gmra.mrb[0].mxu0 %v1089
        %v1651 = vpop.f32.mrb[0].mxu0
        %v1652 = vadd.f32 %v1611, %v1651
        %v1653 = vpop.f32.mrb[0].mxu0
        %v1654 = vpop.f32.mrb[0].mxu0
        %v1655 = vadd.f32 %v1614, %v1654
        %v1656 = vpop.f32.mrb[0].mxu0
        %1657 = vdwg.mxu0
        %1658 = vmatprep.subr.bf16.mxu0 0
        %1659 = vmatpush1.bf16.msra.mxu0 %v1439
        %1660 = vmatprep.subr.bf16.mxu0 0
        %1661 = vmatpush1.bf16.msra.mxu0 %v1440
        %1662 = vmatprep.subr.bf16.mxu0 0
        %1663 = vmatpush1.bf16.msra.mxu0 %v1441
        %1664 = vmatprep.subr.bf16.mxu0 0
        %1665 = vmatpush1.bf16.msra.mxu0 %v1442
        %1666 = vmatprep.subr.bf16.mxu0 0
        %1667 = vmatpush1.bf16.msra.mxu0 %v1443
        %1668 = vmatprep.subr.bf16.mxu0 0
        %1669 = vmatpush1.bf16.msra.mxu0 %v1444
        %1670 = vmatprep.subr.bf16.mxu0 0
        %1671 = vmatpush1.bf16.msra.mxu0 %v1445
        %1672 = vmatprep.subr.bf16.mxu0 0
        %1673 = vmatpush1.bf16.msra.mxu0 %v1446
        %1674 = vmatprep.subr.bf16.mxu0 0
        %1675 = vmatpush1.bf16.msra.mxu0 %v1447
        %1676 = vmatprep.subr.bf16.mxu0 0
        %1677 = vmatpush1.bf16.msra.mxu0 %v1448
        %1678 = vmatprep.subr.bf16.mxu0 0
        %1679 = vmatpush1.bf16.msra.mxu0 %v1449
        %1680 = vmatprep.subr.bf16.mxu0 0
        %1681 = vmatpush1.bf16.msra.mxu0 %v1450
        %1682 = vmatprep.subr.bf16.mxu0 0
        %1683 = vmatpush1.bf16.msra.mxu0 %v1451
        %1684 = vmatprep.subr.bf16.mxu0 0
        %1685 = vmatpush1.bf16.msra.mxu0 %v1452
        %1686 = vmatprep.subr.bf16.mxu0 0
        %1687 = vmatpush1.bf16.msra.mxu0 %v1453
        %1688 = vmatprep.subr.bf16.mxu0 0
        %1689 = vmatpush1.bf16.msra.mxu0 %v1454
        %1690 = vmatprep.mubr.bf16.mxu0 %v1092
        %1691 = vmatmul.mubr.bf16.gmra.mrb[0].mxu0 %v1091
        %v1692 = vpop.f32.mrb[0].mxu0
        %v1693 = vadd.f32 %v1652, %v1692
        %v1694 = vpop.f32.mrb[0].mxu0
        %v1695 = vpop.f32.mrb[0].mxu0
        %v1696 = vadd.f32 %v1655, %v1695
        %v1697 = vpop.f32.mrb[0].mxu0
        %1698 = vdwg.mxu0
        %1699 = vmatprep.subr.bf16.mxu0 0
        %1700 = vmatpush1.bf16.msra.mxu0 %v1455
        %1701 = vmatprep.subr.bf16.mxu0 0
        %1702 = vmatpush1.bf16.msra.mxu0 %v1456
        %1703 = vmatprep.subr.bf16.mxu0 0
        %1704 = vmatpush1.bf16.msra.mxu0 %v1457
        %1705 = vmatprep.subr.bf16.mxu0 0
        %1706 = vmatpush1.bf16.msra.mxu0 %v1458
        %1707 = vmatprep.subr.bf16.mxu0 0
        %1708 = vmatpush1.bf16.msra.mxu0 %v1459
        %1709 = vmatprep.subr.bf16.mxu0 0
        %1710 = vmatpush1.bf16.msra.mxu0 %v1460
        %1711 = vmatprep.subr.bf16.mxu0 0
        %1712 = vmatpush1.bf16.msra.mxu0 %v1461
        %1713 = vmatprep.subr.bf16.mxu0 0
        %1714 = vmatpush1.bf16.msra.mxu0 %v1462
        %1715 = vmatprep.subr.bf16.mxu0 0
        %1716 = vmatpush1.bf16.msra.mxu0 0
        %1717 = vmatprep.subr.bf16.mxu0 0
        %1718 = vmatpush1.bf16.msra.mxu0 0
        %1719 = vmatprep.subr.bf16.mxu0 0
        %1720 = vmatpush1.bf16.msra.mxu0 0
        %1721 = vmatprep.subr.bf16.mxu0 0
        %1722 = vmatpush1.bf16.msra.mxu0 0
        %1723 = vmatprep.subr.bf16.mxu0 0
        %1724 = vmatpush1.bf16.msra.mxu0 0
        %1725 = vmatprep.subr.bf16.mxu0 0
        %1726 = vmatpush1.bf16.msra.mxu0 0
        %1727 = vmatprep.subr.bf16.mxu0 0
        %1728 = vmatpush1.bf16.msra.mxu0 0
        %1729 = vmatprep.subr.bf16.mxu0 0
        %1730 = vmatpush1.bf16.msra.mxu0 0
        %1731 = vmatprep.mubr.bf16.mxu0 0
        %1732 = vmatmul.mubr.bf16.gmra.mrb[0].mxu0 %v1093
        %v1733 = vpop.f32.mrb[0].mxu0
        %v1734 = vadd.f32 %v1693, %v1733
        %v1735 = vpop.f32.mrb[0].mxu0
        %v1736 = vpop.f32.mrb[0].mxu0
        %v1737 = vadd.f32 %v1696, %v1736
        %v1738 = vpop.f32.mrb[0].mxu0
        %1739 = vdwg.mxu0
        %v1740 = vadd.f32 %v901, %v1734
        %v1741 = vadd.f32 %v902, %v1737
        %1742 = vst [vmem:[#allocation2] sm:$0xff] %v1740
        %1743 = vst [vmem:[#allocation2 + $0x8] sm:$0xff] %v1741
        %p1744 = scmp.eq.s32.totalorder %s21, 1
        // Predicated region
        $region104: #{lip_sync_forward.17} parent=90 // pred_check
          %p1745 = pneg %p1744
        $region105: #{lip_sync_forward.17} parent=90 // pred_check_branch
          %1747 = sbr.rel (%p1745) target = $region107
        $region106: #{lip_sync_forward.17} parent=90 // pred_region
          %v1748 = vld [vmem:[#allocation2] sm:$0xff]
          %v1749 = vld [vmem:[#allocation2 + $0x8] sm:$0xff]
          %v1750 = vld [vmem:[%s892] sm:$0x1]
          %v1752 = vlaneseq
          %v1753 = vshrl.u32 %v1752, 7
          %v1754 = vsub.s32 0, %v1753
          %v1755 = vrot.slane %v1750, %v1754
          %v1757 = vadd.f32 %v1748, %v1755
          %v1758 = vadd.f32 %v1749, %v1755
          %v1759 = vmax.f32 %v1757, 0.0
          %v1760 = vmax.f32 %v1758, 0.0
          %v1761 = vpack.c.bf16 %v1760, %v1759
          %v1763 = vunpack.c.l.b16 %v1761
          %v1764 = vunpack.c.h.b16 %v1761
          %v1765 = vpack.c.b16 %v1763, %v1763
          %v1766 = vpack.c.b16 %v1764, %v1764
          %1769 = vst [vmem:[%s886] sm:$0xf] %v1765
          %1770 = vst [vmem:[%s886 + $0x4] sm:$0xf] %v1766
        $region107: #{lip_sync_forward.17} parent=90 // pred_fallthru
          _
        %s1771 = sand.u32 %s125, 1
        %s1772 = sand.u32 %s125, 1
        %s1773 = smul.addr %s1772, 8
        %s1774 = scalar_lea.vmem [#allocation5], %s1773
        // Predicated region
        $region108: #{lip_sync_forward.17} parent=90 // pred_check
          %p1775 = pneg %p135
        $region109: #{lip_sync_forward.17} parent=90 // pred_check_branch
          %1777 = sbr.rel (%p1775) target = $region111
        $region110: #{lip_sync_forward.17} parent=90 // pred_region
          %s1778 = smul.u32 2, %s19
          %s1779 = smul.addr %s1778, 4
          %s1780 = sadd.s32 %s20, %s1779
          %s1781 = smul.addr %s1780, 4
          %s1782 = scalar_lea.vmem %s3, %s1781
          // Predicated region
          $region112: #{lip_sync_forward.17} parent=110 // pred_check
            _
          $region113: #{lip_sync_forward.17} parent=110 // pred_check_branch
            %1784 = sbr.rel (0) target = $region115
          $region114: #{lip_sync_forward.17} parent=110 // pred_region
            // Predicated region
            $region116: #{lip_sync_forward.17} parent=114 // pred_check
              _
            $region117: #{lip_sync_forward.17} parent=114 // pred_check_branch
              %1786 = sbr.rel target = $region119
            $region118: #{lip_sync_forward.17} parent=114 // pred_region
              // Predicated region
              $region131: #{lip_sync_forward.17} parent=118 // pred_check
                _
              $region132: #{lip_sync_forward.17} parent=118 // pred_check_branch
                %1803 = sbr.rel (0) target = $region134
              $region133: #{lip_sync_forward.17} parent=118 // pred_region
                loop: start=0, step=1, limit=1
                $region135: #{lip_sync_forward.17} parent=133 // loop_pre_header
                  _
                $region136: #{lip_sync_forward.17} parent=133 // loop_header
                  %s1805 = sphi 0, %s1809
                  %p1806 = scmp.ge.s32.totalorder %s1805, 1
                  %s1810 = sphi %s1774, %s1774
                  %s1811 = sphi %s1782, %s1782
                $region137: #{lip_sync_forward.17} parent=133 // loop_header_branch
                  %1808 = sbr.rel (%p1806) target = $region141
                $region138: #{lip_sync_forward.17} parent=133 // loop_body
                  _
                $region139: #{lip_sync_forward.17} parent=133 // loop_footer
                  %s1809 = sadd.s32 1, %s1805
                $region140: #{lip_sync_forward.17} parent=133 // loop_footer_branch
                  %1804 = sbr.rel target = $region136
                $region141: #{lip_sync_forward.17} parent=133 // loop_exit
                  _
                loop: start=0, step=1, limit=1
                $region142: #{lip_sync_forward.17} parent=133 // loop_pre_header
                  _
                $region143: #{lip_sync_forward.17} parent=133 // loop_header
                  %s1814 = sphi 0, %s1818
                  %p1815 = scmp.ge.s32.totalorder %s1814, 1
                  %s1819 = sphi %s1774, %s1774
                  %s1820 = sphi %s1782, %s1782
                $region144: #{lip_sync_forward.17} parent=133 // loop_header_branch
                  %1817 = sbr.rel (%p1815) target = $region148
                $region145: #{lip_sync_forward.17} parent=133 // loop_body
                  %v1821 = vld [vmem:[%s1819] sm:$0xf]
                  %1822 = vst [vmem:[%s1820] sm:$0xf] %v1821
                  %v1823 = vld [vmem:[%s1819 + $0x4] sm:$0xf]
                  %1824 = vst [vmem:[%s1820 + $0x10] sm:$0xf] %v1823
                $region146: #{lip_sync_forward.17} parent=133 // loop_footer
                  %s1818 = sadd.s32 1, %s1814
                $region147: #{lip_sync_forward.17} parent=133 // loop_footer_branch
                  %1813 = sbr.rel target = $region143
                $region148: #{lip_sync_forward.17} parent=133 // loop_exit
                  _
              $region134: #{lip_sync_forward.17} parent=118 // pred_fallthru
                _
            $region119: #{lip_sync_forward.17} parent=114 // pred_fallthru
              _
            // Predicated region
            $region120: #{lip_sync_forward.17} parent=114 // pred_check
              _
            $region121: #{lip_sync_forward.17} parent=114 // pred_check_branch
              %1788 = sbr.rel (0) target = $region123
            $region122: #{lip_sync_forward.17} parent=114 // pred_region
              loop: start=0, step=1, limit=1
              $region124: #{lip_sync_forward.17} parent=122 // loop_pre_header
                _
              $region125: #{lip_sync_forward.17} parent=122 // loop_header
                %s1791 = sphi 0, %s1795
                %p1792 = scmp.ge.s32.totalorder %s1791, 1
                %s1796 = sphi %s1774, %s1774
                %s1797 = sphi %s1782, %s1782
              $region126: #{lip_sync_forward.17} parent=122 // loop_header_branch
                %1794 = sbr.rel (%p1792) target = $region130
              $region127: #{lip_sync_forward.17} parent=122 // loop_body
                %v1798 = vld [vmem:[%s1796] sm:$0xf]
                %1799 = vst [vmem:[%s1797] sm:$0xf] %v1798
                %v1800 = vld [vmem:[%s1796 + $0x4] sm:$0xf]
                %1801 = vst [vmem:[%s1797 + $0x10] sm:$0xf] %v1800
              $region128: #{lip_sync_forward.17} parent=122 // loop_footer
                %s1795 = sadd.s32 1, %s1791
              $region129: #{lip_sync_forward.17} parent=122 // loop_footer_branch
                %1790 = sbr.rel target = $region125
              $region130: #{lip_sync_forward.17} parent=122 // loop_exit
                _
            $region123: #{lip_sync_forward.17} parent=114 // pred_fallthru
              _
          $region115: #{lip_sync_forward.17} parent=110 // pred_fallthru
            _
          %1825 = vnop
        $region111: #{lip_sync_forward.17} parent=90 // pred_fallthru
          _
      $region91: #{lip_sync_forward.17} parent=5 // pred_fallthru
        _
      %p1826 = scmp.le.s32.totalorder 2, %s9
      // Predicated region
      $region149: #{lip_sync_forward.17} parent=5 // pred_check
        %p1827 = pneg %p1826
      $region150: #{lip_sync_forward.17} parent=5 // pred_check_branch
        %1829 = sbr.rel (%p1827) target = $region152
      $region151: #{lip_sync_forward.17} parent=5 // pred_region
        %s1830 = ssub.s32 %s9, 2
        // Predicated region
        $region153: #{lip_sync_forward.17} parent=151 // pred_check
          %p1831 = pneg %p141
        $region154: #{lip_sync_forward.17} parent=151 // pred_check_branch
          %1833 = sbr.rel (%p1831) target = $region156
        $region155: #{lip_sync_forward.17} parent=151 // pred_region
          %s1834 = sand.u32 %s126, 1
          %s1835 = sand.u32 %s126, 1
          %s1836 = smul.addr %s1835, 8
          %s1837 = scalar_lea.vmem [#allocation5], %s1836
        $region156: #{lip_sync_forward.17} parent=151 // pred_fallthru
          _
      $region152: #{lip_sync_forward.17} parent=5 // pred_fallthru
        _
    $region6: #{lip_sync_forward.17} parent=1 // loop_footer
      %s13 = sadd.s32 1, %s9
    $region7: #{lip_sync_forward.17} parent=1 // loop_footer_branch
      %8 = sbr.rel target = $region3
    $region8: #{lip_sync_forward.17} parent=1 // loop_exit
      _

// kernel: lip_sync_forward.18
$region0: #{lip_sync_forward.18}
  #allocation0 [shape = 'u32[]', space=smem, size = 0x4, offset = 0x4, fixed_abs, tag = 'smem constant byte address 0x4 - core index']
  #allocation1 [shape = 'u32[144,128]{1,0:T(1,128)}', space=vmem, size = 0x12000, scoped, tag = 'internal scratch']
  #allocation2 [shape = 'f32[32,128]{1,0:T(8,128)}', space=vmem, size = 0x4000, scoped, tag = 'scratch operand']
  %s0 = inlined_call_operand.vmem [shape: bf16[32,1280], index: 0, kind: input, shape index: {}]
  %s1 = inlined_call_operand.vmem [shape: bf16[1280,256], index: 1, kind: input, shape index: {}]
  %s2 = inlined_call_operand.vmem [shape: f32[1,256], index: 2, kind: input, shape index: {}]
  %s3 = inlined_call_operand.vmem [shape: bf16[32,256], index: 3, kind: output, shape index: {}]
  %s4 = sld [smem:[#allocation0]]
  $region157: #{lip_sync_forward.18} parent=0
    _
  %s6 = ssub.s32 1, %s4
  %s7 = scalar_select 0, %s6, %s4
  $region1: #{lip_sync_forward.18} parent=0
    #allocation3 [shape = 'u8[81920]{0}', space=vmem, size = 0x14000, scoped, tag = 'input window, operand 0']
    #allocation4 [shape = 'u8[327680]{0}', space=vmem, size = 0x50000, scoped, tag = 'input window, operand 1']
    #allocation5 [shape = 'u8[16384]{0}', space=vmem, size = 0x4000, scoped, tag = 'output window, operand 0']
    loop: start=0, step=1, limit=6
    $region2: #{lip_sync_forward.18} parent=1 // loop_pre_header
      _
    $region3: #{lip_sync_forward.18} parent=1 // loop_header
      %s9 = sphi 0, %s13
      %p10 = scmp.ge.s32.totalorder %s9, 6
      %s16 = sphi 0, %s35
      %s17 = sphi 0, %s31
      %s18 = sphi 0, %s27
      %s19 = sphi 0, %s16
      %s20 = sphi 0, %s17
      %s21 = sphi 0, %s18
      %s22 = sphi 0, %s19
      %s23 = sphi 0, %s20
      %s24 = sphi 0, %s21
      %s40 = sphi 0, %s42
      %s43 = sphi 0, %s40
      %s44 = sphi 0, %s43
      %s60 = sphi 0, %s44
      %s68 = sphi 0, %s70
      %s71 = sphi 0, %s68
      %s72 = sphi 0, %s71
      %s88 = sphi 0, %s72
      %s94 = sphi 0, %s96
      %s97 = sphi 0, %s94
      %s98 = sphi 0, %s97
      %s114 = sphi 0, %s98
      %s122 = sphi 0, %s124
      %s125 = sphi 0, %s122
      %s126 = sphi 0, %s125
      %s142 = sphi 0, %s126
    $region4: #{lip_sync_forward.18} parent=1 // loop_header_branch
      %12 = sbr.rel (%p10) target = $region8
    $region5: #{lip_sync_forward.18} parent=1 // loop_body
      %s14 = ssub.s32 %s9, 1
      %s15 = ssub.s32 %s9, 2
      %s25 = sadd.s32 1, %s18
      %p26 = scmp.ge.s32.totalorder %s25, 2
      %s27 = scalar_select %p26, 0, %s25
      %s28 = sadd.s32 1, %s17
      %s29 = scalar_select %p26, %s28, %s17
      %p30 = scmp.ge.s32.totalorder %s29, 2
      %s31 = scalar_select %p30, 0, %s29
      %s32 = sadd.s32 1, %s16
      %s33 = scalar_select %p30, %s32, %s16
      %p34 = scmp.ge.s32.totalorder %s33, 1
      %s35 = scalar_select %p34, 0, %s33
      %s36 = ssub.s32 %s16, %s35
      %s37 = ssub.s32 %s18, %s27
      %s38 = sor.u32 %s36, %s37
      %p39 = scmp.eq.s32.totalorder %s38, 0
      %s41 = sadd.s32 %s40, 1
      %s42 = scalar_select %p39, %s40, %s41
      %p45 = pneg %p39
      %p46 = scmp.eq.s32.totalorder %s9, 3
      %p47 = por %p45, %p46
      %p48 = scmp.ne.s32.totalorder %s40, %s43
      %p49 = scmp.eq.s32.totalorder %s9, 0
      %p50 = por %p48, %p49
      %p51 = scmp.ne.s32.totalorder %s40, %s43
      %p52 = scmp.eq.s32.totalorder %s14, 3
      %p53 = por %p51, %p52
      %p54 = scmp.ne.s32.totalorder %s43, %s44
      %p55 = scmp.eq.s32.totalorder %s14, 0
      %p56 = por %p54, %p55
      %p57 = scmp.ne.s32.totalorder %s43, %s44
      %p58 = scmp.eq.s32.totalorder %s15, 3
      %p59 = por %p57, %p58
      %p61 = scmp.ne.s32.totalorder %s44, %s60
      %p62 = scmp.eq.s32.totalorder %s15, 0
      %p63 = por %p61, %p62
      %s64 = ssub.s32 %s18, %s27
      %s65 = ssub.s32 %s17, %s31
      %s66 = sor.u32 %s64, %s65
      %p67 = scmp.eq.s32.totalorder %s66, 0
      %s69 = sadd.s32 %s68, 1
      %s70 = scalar_select %p67, %s68, %s69
      %p73 = pneg %p67
      %p74 = scmp.eq.s32.totalorder %s9, 3
      %p75 = por %p73, %p74
      %p76 = scmp.ne.s32.totalorder %s68, %s71
      %p77 = scmp.eq.s32.totalorder %s9, 0
      %p78 = por %p76, %p77
      %p79 = scmp.ne.s32.totalorder %s68, %s71
      %p80 = scmp.eq.s32.totalorder %s14, 3
      %p81 = por %p79, %p80
      %p82 = scmp.ne.s32.totalorder %s71, %s72
      %p83 = scmp.eq.s32.totalorder %s14, 0
      %p84 = por %p82, %p83
      %p85 = scmp.ne.s32.totalorder %s71, %s72
      %p86 = scmp.eq.s32.totalorder %s15, 3
      %p87 = por %p85, %p86
      %p89 = scmp.ne.s32.totalorder %s72, %s88
      %p90 = scmp.eq.s32.totalorder %s15, 0
      %p91 = por %p89, %p90
      %s92 = ssub.s32 %s17, %s31
      %p93 = scmp.eq.s32.totalorder %s92, 0
      %s95 = sadd.s32 %s94, 1
      %s96 = scalar_select %p93, %s94, %s95
      %p99 = pneg %p93
      %p100 = scmp.eq.s32.totalorder %s9, 3
      %p101 = por %p99, %p100
      %p102 = scmp.ne.s32.totalorder %s94, %s97
      %p103 = scmp.eq.s32.totalorder %s9, 0
      %p104 = por %p102, %p103
      %p105 = scmp.ne.s32.totalorder %s94, %s97
      %p106 = scmp.eq.s32.totalorder %s14, 3
      %p107 = por %p105, %p106
      %p108 = scmp.ne.s32.totalorder %s97, %s98
      %p109 = scmp.eq.s32.totalorder %s14, 0
      %p110 = por %p108, %p109
      %p111 = scmp.ne.s32.totalorder %s97, %s98
      %p112 = scmp.eq.s32.totalorder %s15, 3
      %p113 = por %p111, %p112
      %p115 = scmp.ne.s32.totalorder %s98, %s114
      %p116 = scmp.eq.s32.totalorder %s15, 0
      %p117 = por %p115, %p116
      %s118 = ssub.s32 %s16, %s35
      %s119 = ssub.s32 %s17, %s31
      %s120 = sor.u32 %s118, %s119
      %p121 = scmp.eq.s32.totalorder %s120, 0
      %s123 = sadd.s32 %s122, 1
      %s124 = scalar_select %p121, %s122, %s123
      %p127 = pneg %p121
      %p128 = scmp.eq.s32.totalorder %s9, 3
      %p129 = por %p127, %p128
      %p130 = scmp.ne.s32.totalorder %s122, %s125
      %p131 = scmp.eq.s32.totalorder %s9, 0
      %p132 = por %p130, %p131
      %p133 = scmp.ne.s32.totalorder %s122, %s125
      %p134 = scmp.eq.s32.totalorder %s14, 3
      %p135 = por %p133, %p134
      %p136 = scmp.ne.s32.totalorder %s125, %s126
      %p137 = scmp.eq.s32.totalorder %s14, 0
      %p138 = por %p136, %p137
      %p139 = scmp.ne.s32.totalorder %s125, %s126
      %p140 = scmp.eq.s32.totalorder %s15, 3
      %p141 = por %p139, %p140
      %p143 = scmp.ne.s32.totalorder %s126, %s142
      %p144 = scmp.eq.s32.totalorder %s15, 0
      %p145 = por %p143, %p144
      %p146 = scmp.le.s32.totalorder 1, %s9
      %p147 = scmp.lt.s32.totalorder %s9, 5
      %p148 = pnand %p146, %p147
      %p149 = pneg %p148
      // Predicated region
      $region9: #{lip_sync_forward.18} parent=5 // pred_check
        _
      $region10: #{lip_sync_forward.18} parent=5 // pred_check_branch
        %151 = sbr.rel (%p148) target = $region12
      $region11: #{lip_sync_forward.18} parent=5 // pred_region
        %s152 = ssub.s32 %s9, 1
      $region12: #{lip_sync_forward.18} parent=5 // pred_fallthru
        _
      %p153 = scmp.lt.s32.totalorder %s9, 4
      // Predicated region
      $region13: #{lip_sync_forward.18} parent=5 // pred_check
        %p154 = pneg %p153
      $region14: #{lip_sync_forward.18} parent=5 // pred_check_branch
        %156 = sbr.rel (%p154) target = $region16
      $region15: #{lip_sync_forward.18} parent=5 // pred_region
        // Predicated region
        $region17: #{lip_sync_forward.18} parent=15 // pred_check
          %p157 = pneg %p50
        $region18: #{lip_sync_forward.18} parent=15 // pred_check_branch
          %159 = sbr.rel (%p157) target = $region20
        $region19: #{lip_sync_forward.18} parent=15 // pred_region
          %s160 = sand.u32 %s40, 1
          %s161 = sand.u32 %s40, 1
          %s162 = smul.addr %s161, 80
          %s163 = scalar_lea.vmem [#allocation3], %s162
          %s164 = smul.u32 4, %s16
          %s165 = smul.u32 5, %s18
          %s166 = smul.addr %s164, 10
          %s167 = sadd.s32 %s165, %s166
          %s168 = smul.addr %s167, 4
          %s169 = scalar_lea.vmem %s0, %s168
          // Predicated region
          $region21: #{lip_sync_forward.18} parent=19 // pred_check
            _
          $region22: #{lip_sync_forward.18} parent=19 // pred_check_branch
            %171 = sbr.rel (0) target = $region24
          $region23: #{lip_sync_forward.18} parent=19 // pred_region
            // Predicated region
            $region25: #{lip_sync_forward.18} parent=23 // pred_check
              _
            $region26: #{lip_sync_forward.18} parent=23 // pred_check_branch
              %173 = sbr.rel (0) target = $region28
            $region27: #{lip_sync_forward.18} parent=23 // pred_region
              %s174 = scalar_lea.vmem %s169, 16
              %s175 = scalar_lea.vmem %s163, 16 [#allocation3]
              loop: start=0, step=1, limit=1
              $region29: #{lip_sync_forward.18} parent=27 // loop_pre_header
                _
              $region30: #{lip_sync_forward.18} parent=27 // loop_header
                %s177 = sphi 0, %s181
                %p178 = scmp.ge.s32.totalorder %s177, 1
                %s182 = sphi %s169, %s169
                %s183 = sphi %s163, %s163
              $region31: #{lip_sync_forward.18} parent=27 // loop_header_branch
                %180 = sbr.rel (%p178) target = $region35
              $region32: #{lip_sync_forward.18} parent=27 // loop_body
                %v184 = vld [vmem:[%s182] sm:$0xff]
                %185 = vst [vmem:[%s183] sm:$0xff] %v184
                %v186 = vld [vmem:[%s182 + $0x8] sm:$0xff]
                %187 = vst [vmem:[%s183 + $0x8] sm:$0xff] %v186
                %v188 = vld [vmem:[%s182 + $0x28] sm:$0xff]
                %189 = vst [vmem:[%s183 + $0x14] sm:$0xff] %v188
                %v190 = vld [vmem:[%s182 + $0x30] sm:$0xff]
                %191 = vst [vmem:[%s183 + $0x1c] sm:$0xff] %v190
                %v192 = vld [vmem:[%s182 + $0x50] sm:$0xff]
                %193 = vst [vmem:[%s183 + $0x28] sm:$0xff] %v192
                %v194 = vld [vmem:[%s182 + $0x58] sm:$0xff]
                %195 = vst [vmem:[%s183 + $0x30] sm:$0xff] %v194
                %v196 = vld [vmem:[%s182 + $0x78] sm:$0xff]
                %197 = vst [vmem:[%s183 + $0x3c] sm:$0xff] %v196
                %v198 = vld [vmem:[%s182 + $0x80] sm:$0xff]
                %199 = vst [vmem:[%s183 + $0x44] sm:$0xff] %v198
              $region33: #{lip_sync_forward.18} parent=27 // loop_footer
                %s181 = sadd.s32 1, %s177
              $region34: #{lip_sync_forward.18} parent=27 // loop_footer_branch
                %176 = sbr.rel target = $region30
              $region35: #{lip_sync_forward.18} parent=27 // loop_exit
                _
              loop: start=0, step=1, limit=1
              $region36: #{lip_sync_forward.18} parent=27 // loop_pre_header
                _
              $region37: #{lip_sync_forward.18} parent=27 // loop_header
                %s202 = sphi 0, %s206
                %p203 = scmp.ge.s32.totalorder %s202, 1
                %s207 = sphi %s174, %s174
                %s208 = sphi %s175, %s175
              $region38: #{lip_sync_forward.18} parent=27 // loop_header_branch
                %205 = sbr.rel (%p203) target = $region42
              $region39: #{lip_sync_forward.18} parent=27 // loop_body
                %v209 = vld [vmem:[%s207] sm:$0xf]
                %210 = vst [vmem:[%s208] sm:$0xf] %v209
                %v211 = vld [vmem:[%s207 + $0x28] sm:$0xf]
                %212 = vst [vmem:[%s208 + $0x14] sm:$0xf] %v211
                %v213 = vld [vmem:[%s207 + $0x50] sm:$0xf]
                %214 = vst [vmem:[%s208 + $0x28] sm:$0xf] %v213
                %v215 = vld [vmem:[%s207 + $0x78] sm:$0xf]
                %216 = vst [vmem:[%s208 + $0x3c] sm:$0xf] %v215
              $region40: #{lip_sync_forward.18} parent=27 // loop_footer
                %s206 = sadd.s32 1, %s202
              $region41: #{lip_sync_forward.18} parent=27 // loop_footer_branch
                %201 = sbr.rel target = $region37
              $region42: #{lip_sync_forward.18} parent=27 // loop_exit
                _
            $region28: #{lip_sync_forward.18} parent=23 // pred_fallthru
              _
          $region24: #{lip_sync_forward.18} parent=19 // pred_fallthru
            _
          %217 = vnop
        $region20: #{lip_sync_forward.18} parent=15 // pred_fallthru
          _
        // Predicated region
        $region43: #{lip_sync_forward.18} parent=15 // pred_check
          %p218 = pneg %p78
        $region44: #{lip_sync_forward.18} parent=15 // pred_check_branch
          %220 = sbr.rel (%p218) target = $region46
        $region45: #{lip_sync_forward.18} parent=15 // pred_region
          %s221 = sand.u32 %s68, 1
          %s222 = sand.u32 %s68, 1
          %s223 = smul.addr %s222, 320
          %s224 = scalar_lea.vmem [#allocation4], %s223
          %s225 = smul.u32 80, %s18
          %s226 = smul.addr %s225, 2
          %s227 = sadd.s32 %s17, %s226
          %s228 = smul.addr %s227, 4
          %s229 = scalar_lea.vmem %s1, %s228
          // Predicated region
          $region47: #{lip_sync_forward.18} parent=45 // pred_check
            _
          $region48: #{lip_sync_forward.18} parent=45 // pred_check_branch
            %231 = sbr.rel (0) target = $region50
          $region49: #{lip_sync_forward.18} parent=45 // pred_region
            // Predicated region
            $region51: #{lip_sync_forward.18} parent=49 // pred_check
              _
            $region52: #{lip_sync_forward.18} parent=49 // pred_check_branch
              %233 = sbr.rel target = $region54
            $region53: #{lip_sync_forward.18} parent=49 // pred_region
              // Predicated region
              $region66: #{lip_sync_forward.18} parent=53 // pred_check
                _
              $region67: #{lip_sync_forward.18} parent=53 // pred_check_branch
                %406 = sbr.rel (0) target = $region69
              $region68: #{lip_sync_forward.18} parent=53 // pred_region
                loop: start=0, step=1, limit=1
                $region70: #{lip_sync_forward.18} parent=68 // loop_pre_header
                  _
                $region71: #{lip_sync_forward.18} parent=68 // loop_header
                  %s408 = sphi 0, %s412
                  %p409 = scmp.ge.s32.totalorder %s408, 1
                  %s413 = sphi %s229, %s229
                  %s414 = sphi %s224, %s224
                $region72: #{lip_sync_forward.18} parent=68 // loop_header_branch
                  %411 = sbr.rel (%p409) target = $region76
                $region73: #{lip_sync_forward.18} parent=68 // loop_body
                  _
                $region74: #{lip_sync_forward.18} parent=68 // loop_footer
                  %s412 = sadd.s32 1, %s408
                $region75: #{lip_sync_forward.18} parent=68 // loop_footer_branch
                  %407 = sbr.rel target = $region71
                $region76: #{lip_sync_forward.18} parent=68 // loop_exit
                  _
                loop: start=0, step=1, limit=1
                $region77: #{lip_sync_forward.18} parent=68 // loop_pre_header
                  _
                $region78: #{lip_sync_forward.18} parent=68 // loop_header
                  %s417 = sphi 0, %s421
                  %p418 = scmp.ge.s32.totalorder %s417, 1
                  %s422 = sphi %s229, %s229
                  %s423 = sphi %s224, %s224
                $region79: #{lip_sync_forward.18} parent=68 // loop_header_branch
                  %420 = sbr.rel (%p418) target = $region83
                $region80: #{lip_sync_forward.18} parent=68 // loop_body
                  %v424 = vld [vmem:[%s422] sm:$0xf]
                  %425 = vst [vmem:[%s423] sm:$0xf] %v424
                  %v426 = vld [vmem:[%s422 + $0x8] sm:$0xf]
                  %427 = vst [vmem:[%s423 + $0x4] sm:$0xf] %v426
                  %v428 = vld [vmem:[%s422 + $0x10] sm:$0xf]
                  %429 = vst [vmem:[%s423 + $0x8] sm:$0xf] %v428
                  %v430 = vld [vmem:[%s422 + $0x18] sm:$0xf]
                  %431 = vst [vmem:[%s423 + $0xc] sm:$0xf] %v430
                  %v432 = vld [vmem:[%s422 + $0x20] sm:$0xf]
                  %433 = vst [vmem:[%s423 + $0x10] sm:$0xf] %v432
                  %v434 = vld [vmem:[%s422 + $0x28] sm:$0xf]
                  %435 = vst [vmem:[%s423 + $0x14] sm:$0xf] %v434
                  %v436 = vld [vmem:[%s422 + $0x30] sm:$0xf]
                  %437 = vst [vmem:[%s423 + $0x18] sm:$0xf] %v436
                  %v438 = vld [vmem:[%s422 + $0x38] sm:$0xf]
                  %439 = vst [vmem:[%s423 + $0x1c] sm:$0xf] %v438
                  %v440 = vld [vmem:[%s422 + $0x40] sm:$0xf]
                  %441 = vst [vmem:[%s423 + $0x20] sm:$0xf] %v440
                  %v442 = vld [vmem:[%s422 + $0x48] sm:$0xf]
                  %443 = vst [vmem:[%s423 + $0x24] sm:$0xf] %v442
                  %v444 = vld [vmem:[%s422 + $0x50] sm:$0xf]
                  %445 = vst [vmem:[%s423 + $0x28] sm:$0xf] %v444
                  %v446 = vld [vmem:[%s422 + $0x58] sm:$0xf]
                  %447 = vst [vmem:[%s423 + $0x2c] sm:$0xf] %v446
                  %v448 = vld [vmem:[%s422 + $0x60] sm:$0xf]
                  %449 = vst [vmem:[%s423 + $0x30] sm:$0xf] %v448
                  %v450 = vld [vmem:[%s422 + $0x68] sm:$0xf]
                  %451 = vst [vmem:[%s423 + $0x34] sm:$0xf] %v450
                  %v452 = vld [vmem:[%s422 + $0x70] sm:$0xf]
                  %453 = vst [vmem:[%s423 + $0x38] sm:$0xf] %v452
                  %v454 = vld [vmem:[%s422 + $0x78] sm:$0xf]
                  %455 = vst [vmem:[%s423 + $0x3c] sm:$0xf] %v454
                  %v456 = vld [vmem:[%s422 + $0x80] sm:$0xf]
                  %457 = vst [vmem:[%s423 + $0x40] sm:$0xf] %v456
                  %v458 = vld [vmem:[%s422 + $0x88] sm:$0xf]
                  %459 = vst [vmem:[%s423 + $0x44] sm:$0xf] %v458
                  %v460 = vld [vmem:[%s422 + $0x90] sm:$0xf]
                  %461 = vst [vmem:[%s423 + $0x48] sm:$0xf] %v460
                  %v462 = vld [vmem:[%s422 + $0x98] sm:$0xf]
                  %463 = vst [vmem:[%s423 + $0x4c] sm:$0xf] %v462
                  %v464 = vld [vmem:[%s422 + $0xa0] sm:$0xf]
                  %465 = vst [vmem:[%s423 + $0x50] sm:$0xf] %v464
                  %v466 = vld [vmem:[%s422 + $0xa8] sm:$0xf]
                  %467 = vst [vmem:[%s423 + $0x54] sm:$0xf] %v466
                  %v468 = vld [vmem:[%s422 + $0xb0] sm:$0xf]
                  %469 = vst [vmem:[%s423 + $0x58] sm:$0xf] %v468
                  %v470 = vld [vmem:[%s422 + $0xb8] sm:$0xf]
                  %471 = vst [vmem:[%s423 + $0x5c] sm:$0xf] %v470
                  %v472 = vld [vmem:[%s422 + $0xc0] sm:$0xf]
                  %473 = vst [vmem:[%s423 + $0x60] sm:$0xf] %v472
                  %v474 = vld [vmem:[%s422 + $0xc8] sm:$0xf]
                  %475 = vst [vmem:[%s423 + $0x64] sm:$0xf] %v474
                  %v476 = vld [vmem:[%s422 + $0xd0] sm:$0xf]
                  %477 = vst [vmem:[%s423 + $0x68] sm:$0xf] %v476
                  %v478 = vld [vmem:[%s422 + $0xd8] sm:$0xf]
                  %479 = vst [vmem:[%s423 + $0x6c] sm:$0xf] %v478
                  %v480 = vld [vmem:[%s422 + $0xe0] sm:$0xf]
                  %481 = vst [vmem:[%s423 + $0x70] sm:$0xf] %v480
                  %v482 = vld [vmem:[%s422 + $0xe8] sm:$0xf]
                  %483 = vst [vmem:[%s423 + $0x74] sm:$0xf] %v482
                  %v484 = vld [vmem:[%s422 + $0xf0] sm:$0xf]
                  %485 = vst [vmem:[%s423 + $0x78] sm:$0xf] %v484
                  %v486 = vld [vmem:[%s422 + $0xf8] sm:$0xf]
                  %487 = vst [vmem:[%s423 + $0x7c] sm:$0xf] %v486
                  %v488 = vld [vmem:[%s422 + $0x100] sm:$0xf]
                  %489 = vst [vmem:[%s423 + $0x80] sm:$0xf] %v488
                  %v490 = vld [vmem:[%s422 + $0x108] sm:$0xf]
                  %491 = vst [vmem:[%s423 + $0x84] sm:$0xf] %v490
                  %v492 = vld [vmem:[%s422 + $0x110] sm:$0xf]
                  %493 = vst [vmem:[%s423 + $0x88] sm:$0xf] %v492
                  %v494 = vld [vmem:[%s422 + $0x118] sm:$0xf]
                  %495 = vst [vmem:[%s423 + $0x8c] sm:$0xf] %v494
                  %v496 = vld [vmem:[%s422 + $0x120] sm:$0xf]
                  %497 = vst [vmem:[%s423 + $0x90] sm:$0xf] %v496
                  %v498 = vld [vmem:[%s422 + $0x128] sm:$0xf]
                  %499 = vst [vmem:[%s423 + $0x94] sm:$0xf] %v498
                  %v500 = vld [vmem:[%s422 + $0x130] sm:$0xf]
                  %501 = vst [vmem:[%s423 + $0x98] sm:$0xf] %v500
                  %v502 = vld [vmem:[%s422 + $0x138] sm:$0xf]
                  %503 = vst [vmem:[%s423 + $0x9c] sm:$0xf] %v502
                  %v504 = vld [vmem:[%s422 + $0x140] sm:$0xf]
                  %505 = vst [vmem:[%s423 + $0xa0] sm:$0xf] %v504
                  %v506 = vld [vmem:[%s422 + $0x148] sm:$0xf]
                  %507 = vst [vmem:[%s423 + $0xa4] sm:$0xf] %v506
                  %v508 = vld [vmem:[%s422 + $0x150] sm:$0xf]
                  %509 = vst [vmem:[%s423 + $0xa8] sm:$0xf] %v508
                  %v510 = vld [vmem:[%s422 + $0x158] sm:$0xf]
                  %511 = vst [vmem:[%s423 + $0xac] sm:$0xf] %v510
                  %v512 = vld [vmem:[%s422 + $0x160] sm:$0xf]
                  %513 = vst [vmem:[%s423 + $0xb0] sm:$0xf] %v512
                  %v514 = vld [vmem:[%s422 + $0x168] sm:$0xf]
                  %515 = vst [vmem:[%s423 + $0xb4] sm:$0xf] %v514
                  %v516 = vld [vmem:[%s422 + $0x170] sm:$0xf]
                  %517 = vst [vmem:[%s423 + $0xb8] sm:$0xf] %v516
                  %v518 = vld [vmem:[%s422 + $0x178] sm:$0xf]
                  %519 = vst [vmem:[%s423 + $0xbc] sm:$0xf] %v518
                  %v520 = vld [vmem:[%s422 + $0x180] sm:$0xf]
                  %521 = vst [vmem:[%s423 + $0xc0] sm:$0xf] %v520
                  %v522 = vld [vmem:[%s422 + $0x188] sm:$0xf]
                  %523 = vst [vmem:[%s423 + $0xc4] sm:$0xf] %v522
                  %v524 = vld [vmem:[%s422 + $0x190] sm:$0xf]
                  %525 = vst [vmem:[%s423 + $0xc8] sm:$0xf] %v524
                  %v526 = vld [vmem:[%s422 + $0x198] sm:$0xf]
                  %527 = vst [vmem:[%s423 + $0xcc] sm:$0xf] %v526
                  %v528 = vld [vmem:[%s422 + $0x1a0] sm:$0xf]
                  %529 = vst [vmem:[%s423 + $0xd0] sm:$0xf] %v528
                  %v530 = vld [vmem:[%s422 + $0x1a8] sm:$0xf]
                  %531 = vst [vmem:[%s423 + $0xd4] sm:$0xf] %v530
                  %v532 = vld [vmem:[%s422 + $0x1b0] sm:$0xf]
                  %533 = vst [vmem:[%s423 + $0xd8] sm:$0xf] %v532
                  %v534 = vld [vmem:[%s422 + $0x1b8] sm:$0xf]
                  %535 = vst [vmem:[%s423 + $0xdc] sm:$0xf] %v534
                  %v536 = vld [vmem:[%s422 + $0x1c0] sm:$0xf]
                  %537 = vst [vmem:[%s423 + $0xe0] sm:$0xf] %v536
                  %v538 = vld [vmem:[%s422 + $0x1c8] sm:$0xf]
                  %539 = vst [vmem:[%s423 + $0xe4] sm:$0xf] %v538
                  %v540 = vld [vmem:[%s422 + $0x1d0] sm:$0xf]
                  %541 = vst [vmem:[%s423 + $0xe8] sm:$0xf] %v540
                  %v542 = vld [vmem:[%s422 + $0x1d8] sm:$0xf]
                  %543 = vst [vmem:[%s423 + $0xec] sm:$0xf] %v542
                  %v544 = vld [vmem:[%s422 + $0x1e0] sm:$0xf]
                  %545 = vst [vmem:[%s423 + $0xf0] sm:$0xf] %v544
                  %v546 = vld [vmem:[%s422 + $0x1e8] sm:$0xf]
                  %547 = vst [vmem:[%s423 + $0xf4] sm:$0xf] %v546
                  %v548 = vld [vmem:[%s422 + $0x1f0] sm:$0xf]
                  %549 = vst [vmem:[%s423 + $0xf8] sm:$0xf] %v548
                  %v550 = vld [vmem:[%s422 + $0x1f8] sm:$0xf]
                  %551 = vst [vmem:[%s423 + $0xfc] sm:$0xf] %v550
                  %v552 = vld [vmem:[%s422 + $0x200] sm:$0xf]
                  %553 = vst [vmem:[%s423 + $0x100] sm:$0xf] %v552
                  %v554 = vld [vmem:[%s422 + $0x208] sm:$0xf]
                  %555 = vst [vmem:[%s423 + $0x104] sm:$0xf] %v554
                  %v556 = vld [vmem:[%s422 + $0x210] sm:$0xf]
                  %557 = vst [vmem:[%s423 + $0x108] sm:$0xf] %v556
                  %v558 = vld [vmem:[%s422 + $0x218] sm:$0xf]
                  %559 = vst [vmem:[%s423 + $0x10c] sm:$0xf] %v558
                  %v560 = vld [vmem:[%s422 + $0x220] sm:$0xf]
                  %561 = vst [vmem:[%s423 + $0x110] sm:$0xf] %v560
                  %v562 = vld [vmem:[%s422 + $0x228] sm:$0xf]
                  %563 = vst [vmem:[%s423 + $0x114] sm:$0xf] %v562
                  %v564 = vld [vmem:[%s422 + $0x230] sm:$0xf]
                  %565 = vst [vmem:[%s423 + $0x118] sm:$0xf] %v564
                  %v566 = vld [vmem:[%s422 + $0x238] sm:$0xf]
                  %567 = vst [vmem:[%s423 + $0x11c] sm:$0xf] %v566
                  %v568 = vld [vmem:[%s422 + $0x240] sm:$0xf]
                  %569 = vst [vmem:[%s423 + $0x120] sm:$0xf] %v568
                  %v570 = vld [vmem:[%s422 + $0x248] sm:$0xf]
                  %571 = vst [vmem:[%s423 + $0x124] sm:$0xf] %v570
                  %v572 = vld [vmem:[%s422 + $0x250] sm:$0xf]
                  %573 = vst [vmem:[%s423 + $0x128] sm:$0xf] %v572
                  %v574 = vld [vmem:[%s422 + $0x258] sm:$0xf]
                  %575 = vst [vmem:[%s423 + $0x12c] sm:$0xf] %v574
                  %v576 = vld [vmem:[%s422 + $0x260] sm:$0xf]
                  %577 = vst [vmem:[%s423 + $0x130] sm:$0xf] %v576
                  %v578 = vld [vmem:[%s422 + $0x268] sm:$0xf]
                  %579 = vst [vmem:[%s423 + $0x134] sm:$0xf] %v578
                  %v580 = vld [vmem:[%s422 + $0x270] sm:$0xf]
                  %581 = vst [vmem:[%s423 + $0x138] sm:$0xf] %v580
                  %v582 = vld [vmem:[%s422 + $0x278] sm:$0xf]
                  %583 = vst [vmem:[%s423 + $0x13c] sm:$0xf] %v582
                $region81: #{lip_sync_forward.18} parent=68 // loop_footer
                  %s421 = sadd.s32 1, %s417
                $region82: #{lip_sync_forward.18} parent=68 // loop_footer_branch
                  %416 = sbr.rel target = $region78
                $region83: #{lip_sync_forward.18} parent=68 // loop_exit
                  _
              $region69: #{lip_sync_forward.18} parent=53 // pred_fallthru
                _
            $region54: #{lip_sync_forward.18} parent=49 // pred_fallthru
              _
            // Predicated region
            $region55: #{lip_sync_forward.18} parent=49 // pred_check
              _
            $region56: #{lip_sync_forward.18} parent=49 // pred_check_branch
              %235 = sbr.rel (0) target = $region58
            $region57: #{lip_sync_forward.18} parent=49 // pred_region
              loop: start=0, step=1, limit=1
              $region59: #{lip_sync_forward.18} parent=57 // loop_pre_header
                _
              $region60: #{lip_sync_forward.18} parent=57 // loop_header
                %s238 = sphi 0, %s242
                %p239 = scmp.ge.s32.totalorder %s238, 1
                %s243 = sphi %s229, %s229
                %s244 = sphi %s224, %s224
              $region61: #{lip_sync_forward.18} parent=57 // loop_header_branch
                %241 = sbr.rel (%p239) target = $region65
              $region62: #{lip_sync_forward.18} parent=57 // loop_body
                %v245 = vld [vmem:[%s243] sm:$0xf]
                %246 = vst [vmem:[%s244] sm:$0xf] %v245
                %v247 = vld [vmem:[%s243 + $0x8] sm:$0xf]
                %248 = vst [vmem:[%s244 + $0x4] sm:$0xf] %v247
                %v249 = vld [vmem:[%s243 + $0x10] sm:$0xf]
                %250 = vst [vmem:[%s244 + $0x8] sm:$0xf] %v249
                %v251 = vld [vmem:[%s243 + $0x18] sm:$0xf]
                %252 = vst [vmem:[%s244 + $0xc] sm:$0xf] %v251
                %v253 = vld [vmem:[%s243 + $0x20] sm:$0xf]
                %254 = vst [vmem:[%s244 + $0x10] sm:$0xf] %v253
                %v255 = vld [vmem:[%s243 + $0x28] sm:$0xf]
                %256 = vst [vmem:[%s244 + $0x14] sm:$0xf] %v255
                %v257 = vld [vmem:[%s243 + $0x30] sm:$0xf]
                %258 = vst [vmem:[%s244 + $0x18] sm:$0xf] %v257
                %v259 = vld [vmem:[%s243 + $0x38] sm:$0xf]
                %260 = vst [vmem:[%s244 + $0x1c] sm:$0xf] %v259
                %v261 = vld [vmem:[%s243 + $0x40] sm:$0xf]
                %262 = vst [vmem:[%s244 + $0x20] sm:$0xf] %v261
                %v263 = vld [vmem:[%s243 + $0x48] sm:$0xf]
                %264 = vst [vmem:[%s244 + $0x24] sm:$0xf] %v263
                %v265 = vld [vmem:[%s243 + $0x50] sm:$0xf]
                %266 = vst [vmem:[%s244 + $0x28] sm:$0xf] %v265
                %v267 = vld [vmem:[%s243 + $0x58] sm:$0xf]
                %268 = vst [vmem:[%s244 + $0x2c] sm:$0xf] %v267
                %v269 = vld [vmem:[%s243 + $0x60] sm:$0xf]
                %270 = vst [vmem:[%s244 + $0x30] sm:$0xf] %v269
                %v271 = vld [vmem:[%s243 + $0x68] sm:$0xf]
                %272 = vst [vmem:[%s244 + $0x34] sm:$0xf] %v271
                %v273 = vld [vmem:[%s243 + $0x70] sm:$0xf]
                %274 = vst [vmem:[%s244 + $0x38] sm:$0xf] %v273
                %v275 = vld [vmem:[%s243 + $0x78] sm:$0xf]
                %276 = vst [vmem:[%s244 + $0x3c] sm:$0xf] %v275
                %v277 = vld [vmem:[%s243 + $0x80] sm:$0xf]
                %278 = vst [vmem:[%s244 + $0x40] sm:$0xf] %v277
                %v279 = vld [vmem:[%s243 + $0x88] sm:$0xf]
                %280 = vst [vmem:[%s244 + $0x44] sm:$0xf] %v279
                %v281 = vld [vmem:[%s243 + $0x90] sm:$0xf]
                %282 = vst [vmem:[%s244 + $0x48] sm:$0xf] %v281
                %v283 = vld [vmem:[%s243 + $0x98] sm:$0xf]
                %284 = vst [vmem:[%s244 + $0x4c] sm:$0xf] %v283
                %v285 = vld [vmem:[%s243 + $0xa0] sm:$0xf]
                %286 = vst [vmem:[%s244 + $0x50] sm:$0xf] %v285
                %v287 = vld [vmem:[%s243 + $0xa8] sm:$0xf]
                %288 = vst [vmem:[%s244 + $0x54] sm:$0xf] %v287
                %v289 = vld [vmem:[%s243 + $0xb0] sm:$0xf]
                %290 = vst [vmem:[%s244 + $0x58] sm:$0xf] %v289
                %v291 = vld [vmem:[%s243 + $0xb8] sm:$0xf]
                %292 = vst [vmem:[%s244 + $0x5c] sm:$0xf] %v291
                %v293 = vld [vmem:[%s243 + $0xc0] sm:$0xf]
                %294 = vst [vmem:[%s244 + $0x60] sm:$0xf] %v293
                %v295 = vld [vmem:[%s243 + $0xc8] sm:$0xf]
                %296 = vst [vmem:[%s244 + $0x64] sm:$0xf] %v295
                %v297 = vld [vmem:[%s243 + $0xd0] sm:$0xf]
                %298 = vst [vmem:[%s244 + $0x68] sm:$0xf] %v297
                %v299 = vld [vmem:[%s243 + $0xd8] sm:$0xf]
                %300 = vst [vmem:[%s244 + $0x6c] sm:$0xf] %v299
                %v301 = vld [vmem:[%s243 + $0xe0] sm:$0xf]
                %302 = vst [vmem:[%s244 + $0x70] sm:$0xf] %v301
                %v303 = vld [vmem:[%s243 + $0xe8] sm:$0xf]
                %304 = vst [vmem:[%s244 + $0x74] sm:$0xf] %v303
                %v305 = vld [vmem:[%s243 + $0xf0] sm:$0xf]
                %306 = vst [vmem:[%s244 + $0x78] sm:$0xf] %v305
                %v307 = vld [vmem:[%s243 + $0xf8] sm:$0xf]
                %308 = vst [vmem:[%s244 + $0x7c] sm:$0xf] %v307
                %v309 = vld [vmem:[%s243 + $0x100] sm:$0xf]
                %310 = vst [vmem:[%s244 + $0x80] sm:$0xf] %v309
                %v311 = vld [vmem:[%s243 + $0x108] sm:$0xf]
                %312 = vst [vmem:[%s244 + $0x84] sm:$0xf] %v311
                %v313 = vld [vmem:[%s243 + $0x110] sm:$0xf]
                %314 = vst [vmem:[%s244 + $0x88] sm:$0xf] %v313
                %v315 = vld [vmem:[%s243 + $0x118] sm:$0xf]
                %316 = vst [vmem:[%s244 + $0x8c] sm:$0xf] %v315
                %v317 = vld [vmem:[%s243 + $0x120] sm:$0xf]
                %318 = vst [vmem:[%s244 + $0x90] sm:$0xf] %v317
                %v319 = vld [vmem:[%s243 + $0x128] sm:$0xf]
                %320 = vst [vmem:[%s244 + $0x94] sm:$0xf] %v319
                %v321 = vld [vmem:[%s243 + $0x130] sm:$0xf]
                %322 = vst [vmem:[%s244 + $0x98] sm:$0xf] %v321
                %v323 = vld [vmem:[%s243 + $0x138] sm:$0xf]
                %324 = vst [vmem:[%s244 + $0x9c] sm:$0xf] %v323
                %v325 = vld [vmem:[%s243 + $0x140] sm:$0xf]
                %326 = vst [vmem:[%s244 + $0xa0] sm:$0xf] %v325
                %v327 = vld [vmem:[%s243 + $0x148] sm:$0xf]
                %328 = vst [vmem:[%s244 + $0xa4] sm:$0xf] %v327
                %v329 = vld [vmem:[%s243 + $0x150] sm:$0xf]
                %330 = vst [vmem:[%s244 + $0xa8] sm:$0xf] %v329
                %v331 = vld [vmem:[%s243 + $0x158] sm:$0xf]
                %332 = vst [vmem:[%s244 + $0xac] sm:$0xf] %v331
                %v333 = vld [vmem:[%s243 + $0x160] sm:$0xf]
                %334 = vst [vmem:[%s244 + $0xb0] sm:$0xf] %v333
                %v335 = vld [vmem:[%s243 + $0x168] sm:$0xf]
                %336 = vst [vmem:[%s244 + $0xb4] sm:$0xf] %v335
                %v337 = vld [vmem:[%s243 + $0x170] sm:$0xf]
                %338 = vst [vmem:[%s244 + $0xb8] sm:$0xf] %v337
                %v339 = vld [vmem:[%s243 + $0x178] sm:$0xf]
                %340 = vst [vmem:[%s244 + $0xbc] sm:$0xf] %v339
                %v341 = vld [vmem:[%s243 + $0x180] sm:$0xf]
                %342 = vst [vmem:[%s244 + $0xc0] sm:$0xf] %v341
                %v343 = vld [vmem:[%s243 + $0x188] sm:$0xf]
                %344 = vst [vmem:[%s244 + $0xc4] sm:$0xf] %v343
                %v345 = vld [vmem:[%s243 + $0x190] sm:$0xf]
                %346 = vst [vmem:[%s244 + $0xc8] sm:$0xf] %v345
                %v347 = vld [vmem:[%s243 + $0x198] sm:$0xf]
                %348 = vst [vmem:[%s244 + $0xcc] sm:$0xf] %v347
                %v349 = vld [vmem:[%s243 + $0x1a0] sm:$0xf]
                %350 = vst [vmem:[%s244 + $0xd0] sm:$0xf] %v349
                %v351 = vld [vmem:[%s243 + $0x1a8] sm:$0xf]
                %352 = vst [vmem:[%s244 + $0xd4] sm:$0xf] %v351
                %v353 = vld [vmem:[%s243 + $0x1b0] sm:$0xf]
                %354 = vst [vmem:[%s244 + $0xd8] sm:$0xf] %v353
                %v355 = vld [vmem:[%s243 + $0x1b8] sm:$0xf]
                %356 = vst [vmem:[%s244 + $0xdc] sm:$0xf] %v355
                %v357 = vld [vmem:[%s243 + $0x1c0] sm:$0xf]
                %358 = vst [vmem:[%s244 + $0xe0] sm:$0xf] %v357
                %v359 = vld [vmem:[%s243 + $0x1c8] sm:$0xf]
                %360 = vst [vmem:[%s244 + $0xe4] sm:$0xf] %v359
                %v361 = vld [vmem:[%s243 + $0x1d0] sm:$0xf]
                %362 = vst [vmem:[%s244 + $0xe8] sm:$0xf] %v361
                %v363 = vld [vmem:[%s243 + $0x1d8] sm:$0xf]
                %364 = vst [vmem:[%s244 + $0xec] sm:$0xf] %v363
                %v365 = vld [vmem:[%s243 + $0x1e0] sm:$0xf]
                %366 = vst [vmem:[%s244 + $0xf0] sm:$0xf] %v365
                %v367 = vld [vmem:[%s243 + $0x1e8] sm:$0xf]
                %368 = vst [vmem:[%s244 + $0xf4] sm:$0xf] %v367
                %v369 = vld [vmem:[%s243 + $0x1f0] sm:$0xf]
                %370 = vst [vmem:[%s244 + $0xf8] sm:$0xf] %v369
                %v371 = vld [vmem:[%s243 + $0x1f8] sm:$0xf]
                %372 = vst [vmem:[%s244 + $0xfc] sm:$0xf] %v371
                %v373 = vld [vmem:[%s243 + $0x200] sm:$0xf]
                %374 = vst [vmem:[%s244 + $0x100] sm:$0xf] %v373
                %v375 = vld [vmem:[%s243 + $0x208] sm:$0xf]
                %376 = vst [vmem:[%s244 + $0x104] sm:$0xf] %v375
                %v377 = vld [vmem:[%s243 + $0x210] sm:$0xf]
                %378 = vst [vmem:[%s244 + $0x108] sm:$0xf] %v377
                %v379 = vld [vmem:[%s243 + $0x218] sm:$0xf]
                %380 = vst [vmem:[%s244 + $0x10c] sm:$0xf] %v379
                %v381 = vld [vmem:[%s243 + $0x220] sm:$0xf]
                %382 = vst [vmem:[%s244 + $0x110] sm:$0xf] %v381
                %v383 = vld [vmem:[%s243 + $0x228] sm:$0xf]
                %384 = vst [vmem:[%s244 + $0x114] sm:$0xf] %v383
                %v385 = vld [vmem:[%s243 + $0x230] sm:$0xf]
                %386 = vst [vmem:[%s244 + $0x118] sm:$0xf] %v385
                %v387 = vld [vmem:[%s243 + $0x238] sm:$0xf]
                %388 = vst [vmem:[%s244 + $0x11c] sm:$0xf] %v387
                %v389 = vld [vmem:[%s243 + $0x240] sm:$0xf]
                %390 = vst [vmem:[%s244 + $0x120] sm:$0xf] %v389
                %v391 = vld [vmem:[%s243 + $0x248] sm:$0xf]
                %392 = vst [vmem:[%s244 + $0x124] sm:$0xf] %v391
                %v393 = vld [vmem:[%s243 + $0x250] sm:$0xf]
                %394 = vst [vmem:[%s244 + $0x128] sm:$0xf] %v393
                %v395 = vld [vmem:[%s243 + $0x258] sm:$0xf]
                %396 = vst [vmem:[%s244 + $0x12c] sm:$0xf] %v395
                %v397 = vld [vmem:[%s243 + $0x260] sm:$0xf]
                %398 = vst [vmem:[%s244 + $0x130] sm:$0xf] %v397
                %v399 = vld [vmem:[%s243 + $0x268] sm:$0xf]
                %400 = vst [vmem:[%s244 + $0x134] sm:$0xf] %v399
                %v401 = vld [vmem:[%s243 + $0x270] sm:$0xf]
                %402 = vst [vmem:[%s244 + $0x138] sm:$0xf] %v401
                %v403 = vld [vmem:[%s243 + $0x278] sm:$0xf]
                %404 = vst [vmem:[%s244 + $0x13c] sm:$0xf] %v403
              $region63: #{lip_sync_forward.18} parent=57 // loop_footer
                %s242 = sadd.s32 1, %s238
              $region64: #{lip_sync_forward.18} parent=57 // loop_footer_branch
                %237 = sbr.rel target = $region60
              $region65: #{lip_sync_forward.18} parent=57 // loop_exit
                _
            $region58: #{lip_sync_forward.18} parent=49 // pred_fallthru
              _
          $region50: #{lip_sync_forward.18} parent=45 // pred_fallthru
            _
          %584 = vnop
        $region46: #{lip_sync_forward.18} parent=15 // pred_fallthru
          _
        // Predicated region
        $region84: #{lip_sync_forward.18} parent=15 // pred_check
          %p585 = pneg %p104
        $region85: #{lip_sync_forward.18} parent=15 // pred_check_branch
          %587 = sbr.rel (%p585) target = $region87
        $region86: #{lip_sync_forward.18} parent=15 // pred_region
          %p588 = scmp.lt.s32.totalorder %s17, 1
          %s589 = scalar_select %p588, %s17, 1
          %s590 = scalar_lea.vmem %s2, %s589
        $region87: #{lip_sync_forward.18} parent=15 // pred_fallthru
          _
      $region16: #{lip_sync_forward.18} parent=5 // pred_fallthru
        _
      %p591 = scmp.le.s32.totalorder 1, %s9
      %p592 = scmp.lt.s32.totalorder %s9, 5
      %p593 = pnand %p591, %p592
      %p594 = pneg %p593
      // Predicated region
      $region88: #{lip_sync_forward.18} parent=5 // pred_check
        _
      $region89: #{lip_sync_forward.18} parent=5 // pred_check_branch
        %596 = sbr.rel (%p593) target = $region91
      $region90: #{lip_sync_forward.18} parent=5 // pred_region
        %s597 = ssub.s32 %s9, 1
        %s598 = sand.u32 %s43, 1
        %s599 = sand.u32 %s43, 1
        %s600 = smul.addr %s599, 80
        %s601 = scalar_lea.vmem [#allocation3], %s600
        // Predicated region
        $region92: #{lip_sync_forward.18} parent=90 // pred_check
          %p602 = pneg %p56
        $region93: #{lip_sync_forward.18} parent=90 // pred_check_branch
          %604 = sbr.rel (%p602) target = $region95
        $region94: #{lip_sync_forward.18} parent=90 // pred_region
          _
        $region95: #{lip_sync_forward.18} parent=90 // pred_fallthru
          _
        %s605 = sand.u32 %s71, 1
        %s606 = sand.u32 %s71, 1
        %s607 = smul.addr %s606, 320
        %s608 = scalar_lea.vmem [#allocation4], %s607
        // Predicated region
        $region96: #{lip_sync_forward.18} parent=90 // pred_check
          %p609 = pneg %p84
        $region97: #{lip_sync_forward.18} parent=90 // pred_check_branch
          %611 = sbr.rel (%p609) target = $region99
        $region98: #{lip_sync_forward.18} parent=90 // pred_region
          _
        $region99: #{lip_sync_forward.18} parent=90 // pred_fallthru
          _
        %s612 = sand.u32 %s43, 1
        %s613 = sand.u32 %s43, 1
        %s614 = smul.addr %s613, 80
        %s615 = scalar_lea.vmem [#allocation3], %s614
        %p616 = pneg %p56
        %p617 = pneg %p53
        %s618 = sand.u32 %s71, 1
        %s619 = sand.u32 %s71, 1
        %s620 = smul.addr %s619, 320
        %s621 = scalar_lea.vmem [#allocation4], %s620
        %p622 = pneg %p84
        %p623 = pneg %p81
        %p624 = scmp.lt.s32.totalorder %s20, 1
        %s625 = scalar_select %p624, %s20, 1
        %s626 = scalar_lea.vmem %s2, %s625
        %p627 = pneg %p110
        %p628 = pneg %p107
        %p629 = pneg %p138
        %p630 = pneg %p135
        %s631 = sand.u32 %s125, 1
        %s632 = sand.u32 %s125, 1
        %s633 = smul.addr %s632, 16
        %s634 = scalar_lea.vmem [#allocation5], %s633
        %s635 = smul.u32 4, %s19
        %s636 = smul.u32 5, %s21
        %s637 = smul.u32 80, %s21
        %p638 = scmp.lt.s32.totalorder %s20, 1
        %s639 = scalar_select %p638, %s20, 1
        %s640 = scalar_lea.vmem %s2, %s639
        %s641 = smul.u32 4, %s19
        %p643 = scmp.eq.s32.totalorder %s21, 0
        // Predicated region
        $region100: #{lip_sync_forward.18} parent=90 // pred_check
          %p644 = pneg %p643
        $region101: #{lip_sync_forward.18} parent=90 // pred_check_branch
          %646 = sbr.rel (%p644) target = $region103
        $region102: #{lip_sync_forward.18} parent=90 // pred_region
          %647 = vst [vmem:[#allocation2] sm:$0xff] 0.0
          %648 = vst [vmem:[#allocation2 + $0x8] sm:$0xff] 0.0
          %649 = vst [vmem:[#allocation2 + $0x10] sm:$0xff] 0.0
          %650 = vst [vmem:[#allocation2 + $0x18] sm:$0xff] 0.0
        $region103: #{lip_sync_forward.18} parent=90 // pred_fallthru
          _
        %v651 = vld [vmem:[#allocation2] sm:$0xff]
        %v652 = vld [vmem:[#allocation2 + $0x8] sm:$0xff]
        %v653 = vld [vmem:[#allocation2 + $0x10] sm:$0xff]
        %v654 = vld [vmem:[#allocation2 + $0x18] sm:$0xff]
        %v655 = vld [vmem:[%s601] sm:$0xff]
        %v656 = vld [vmem:[%s601 + $0x8] sm:$0xff]
        %v657 = vld [vmem:[%s601 + $0x10] sm:$0xf]
        %v658 = vld [vmem:[%s601 + $0x14] sm:$0xff]
        %v659 = vld [vmem:[%s601 + $0x1c] sm:$0xff]
        %v660 = vld [vmem:[%s601 + $0x24] sm:$0xf]
        %v661 = vld [vmem:[%s601 + $0x28] sm:$0xff]
        %v662 = vld [vmem:[%s601 + $0x30] sm:$0xff]
        %v663 = vld [vmem:[%s601 + $0x38] sm:$0xf]
        %v664 = vld [vmem:[%s601 + $0x3c] sm:$0xff]
        %v665 = vld [vmem:[%s601 + $0x44] sm:$0xff]
        %v666 = vld [vmem:[%s601 + $0x4c] sm:$0xf]
        %v667 = vld [vmem:[%s608] sm:$0xf]
        %v668 = vld [vmem:[%s608 + $0x4] sm:$0xf]
        %v669 = vld [vmem:[%s608 + $0x8] sm:$0xf]
        %v670 = vld [vmem:[%s608 + $0xc] sm:$0xf]
        %v671 = vld [vmem:[%s608 + $0x10] sm:$0xf]
        %v672 = vld [vmem:[%s608 + $0x14] sm:$0xf]
        %v673 = vld [vmem:[%s608 + $0x18] sm:$0xf]
        %v674 = vld [vmem:[%s608 + $0x1c] sm:$0xf]
        %v675 = vld [vmem:[%s608 + $0x20] sm:$0xf]
        %v676 = vld [vmem:[%s608 + $0x24] sm:$0xf]
        %v677 = vld [vmem:[%s608 + $0x28] sm:$0xf]
        %v678 = vld [vmem:[%s608 + $0x2c] sm:$0xf]
        %v679 = vld [vmem:[%s608 + $0x30] sm:$0xf]
        %v680 = vld [vmem:[%s608 + $0x34] sm:$0xf]
        %v681 = vld [vmem:[%s608 + $0x38] sm:$0xf]
        %v682 = vld [vmem:[%s608 + $0x3c] sm:$0xf]
        %v683 = vld [vmem:[%s608 + $0x40] sm:$0xf]
        %v684 = vld [vmem:[%s608 + $0x44] sm:$0xf]
        %v685 = vld [vmem:[%s608 + $0x48] sm:$0xf]
        %v686 = vld [vmem:[%s608 + $0x4c] sm:$0xf]
        %v687 = vld [vmem:[%s608 + $0x50] sm:$0xf]
        %v688 = vld [vmem:[%s608 + $0x54] sm:$0xf]
        %v689 = vld [vmem:[%s608 + $0x58] sm:$0xf]
        %v690 = vld [vmem:[%s608 + $0x5c] sm:$0xf]
        %v691 = vld [vmem:[%s608 + $0x60] sm:$0xf]
        %v692 = vld [vmem:[%s608 + $0x64] sm:$0xf]
        %v693 = vld [vmem:[%s608 + $0x68] sm:$0xf]
        %v694 = vld [vmem:[%s608 + $0x6c] sm:$0xf]
        %v695 = vld [vmem:[%s608 + $0x70] sm:$0xf]
        %v696 = vld [vmem:[%s608 + $0x74] sm:$0xf]
        %v697 = vld [vmem:[%s608 + $0x78] sm:$0xf]
        %v698 = vld [vmem:[%s608 + $0x7c] sm:$0xf]
        %v699 = vld [vmem:[%s608 + $0x80] sm:$0xf]
        %v700 = vld [vmem:[%s608 + $0x84] sm:$0xf]
        %v701 = vld [vmem:[%s608 + $0x88] sm:$0xf]
        %v702 = vld [vmem:[%s608 + $0x8c] sm:$0xf]
        %v703 = vld [vmem:[%s608 + $0x90] sm:$0xf]
        %v704 = vld [vmem:[%s608 + $0x94] sm:$0xf]
        %v705 = vld [vmem:[%s608 + $0x98] sm:$0xf]
        %v706 = vld [vmem:[%s608 + $0x9c] sm:$0xf]
        %v707 = vld [vmem:[%s608 + $0xa0] sm:$0xf]
        %v708 = vld [vmem:[%s608 + $0xa4] sm:$0xf]
        %v709 = vld [vmem:[%s608 + $0xa8] sm:$0xf]
        %v710 = vld [vmem:[%s608 + $0xac] sm:$0xf]
        %v711 = vld [vmem:[%s608 + $0xb0] sm:$0xf]
        %v712 = vld [vmem:[%s608 + $0xb4] sm:$0xf]
        %v713 = vld [vmem:[%s608 + $0xb8] sm:$0xf]
        %v714 = vld [vmem:[%s608 + $0xbc] sm:$0xf]
        %v715 = vld [vmem:[%s608 + $0xc0] sm:$0xf]
        %v716 = vld [vmem:[%s608 + $0xc4] sm:$0xf]
        %v717 = vld [vmem:[%s608 + $0xc8] sm:$0xf]
        %v718 = vld [vmem:[%s608 + $0xcc] sm:$0xf]
        %v719 = vld [vmem:[%s608 + $0xd0] sm:$0xf]
        %v720 = vld [vmem:[%s608 + $0xd4] sm:$0xf]
        %v721 = vld [vmem:[%s608 + $0xd8] sm:$0xf]
        %v722 = vld [vmem:[%s608 + $0xdc] sm:$0xf]
        %v723 = vld [vmem:[%s608 + $0xe0] sm:$0xf]
        %v724 = vld [vmem:[%s608 + $0xe4] sm:$0xf]
        %v725 = vld [vmem:[%s608 + $0xe8] sm:$0xf]
        %v726 = vld [vmem:[%s608 + $0xec] sm:$0xf]
        %v727 = vld [vmem:[%s608 + $0xf0] sm:$0xf]
        %v728 = vld [vmem:[%s608 + $0xf4] sm:$0xf]
        %v729 = vld [vmem:[%s608 + $0xf8] sm:$0xf]
        %v730 = vld [vmem:[%s608 + $0xfc] sm:$0xf]
        %v731 = vld [vmem:[%s608 + $0x100] sm:$0xf]
        %v732 = vld [vmem:[%s608 + $0x104] sm:$0xf]
        %v733 = vld [vmem:[%s608 + $0x108] sm:$0xf]
        %v734 = vld [vmem:[%s608 + $0x10c] sm:$0xf]
        %v735 = vld [vmem:[%s608 + $0x110] sm:$0xf]
        %v736 = vld [vmem:[%s608 + $0x114] sm:$0xf]
        %v737 = vld [vmem:[%s608 + $0x118] sm:$0xf]
        %v738 = vld [vmem:[%s608 + $0x11c] sm:$0xf]
        %v739 = vld [vmem:[%s608 + $0x120] sm:$0xf]
        %v740 = vld [vmem:[%s608 + $0x124] sm:$0xf]
        %v741 = vld [vmem:[%s608 + $0x128] sm:$0xf]
        %v742 = vld [vmem:[%s608 + $0x12c] sm:$0xf]
        %v743 = vld [vmem:[%s608 + $0x130] sm:$0xf]
        %v744 = vld [vmem:[%s608 + $0x134] sm:$0xf]
        %v745 = vld [vmem:[%s608 + $0x138] sm:$0xf]
        %v746 = vld [vmem:[%s608 + $0x13c] sm:$0xf]
        %v759 = vunpack.c.l.b16 %v655
        %v760 = vunpack.c.h.b16 %v655
        %v761 = vunpack.c.l.b16 %v656
        %v762 = vunpack.c.h.b16 %v656
        %v763 = vunpack.c.l.b16 %v657
        %v764 = vunpack.c.l.b16 %v658
        %v765 = vunpack.c.h.b16 %v658
        %v766 = vunpack.c.l.b16 %v659
        %v767 = vunpack.c.h.b16 %v659
        %v768 = vunpack.c.l.b16 %v660
        %v769 = vunpack.c.l.b16 %v661
        %v770 = vunpack.c.h.b16 %v661
        %v771 = vunpack.c.l.b16 %v662
        %v772 = vunpack.c.h.b16 %v662
        %v773 = vunpack.c.l.b16 %v663
        %v774 = vunpack.c.l.b16 %v664
        %v775 = vunpack.c.h.b16 %v664
        %v776 = vunpack.c.l.b16 %v665
        %v777 = vunpack.c.h.b16 %v665
        %v778 = vunpack.c.l.b16 %v666
        %v779 = vpack.c.b16 %v764, %v759
        %v780 = vpack.c.b16 %v765, %v760
        %v781 = vpack.c.b16 %v766, %v761
        %v782 = vpack.c.b16 %v767, %v762
        %v783 = vpack.c.b16 %v768, %v763
        %v784 = vpack.c.b16 %v774, %v769
        %v785 = vpack.c.b16 %v775, %v770
        %v786 = vpack.c.b16 %v776, %v771
        %v787 = vpack.c.b16 %v777, %v772
        %v788 = vpack.c.b16 %v778, %v773
        %v879 = vunpack.c.l.b16 %v667
        %v880 = vunpack.c.l.b16 %v668
        %v881 = vunpack.c.l.b16 %v669
        %v882 = vunpack.c.l.b16 %v670
        %v883 = vunpack.c.l.b16 %v671
        %v884 = vunpack.c.l.b16 %v672
        %v885 = vunpack.c.l.b16 %v673
        %v886 = vunpack.c.l.b16 %v674
        %v887 = vunpack.c.l.b16 %v675
        %v888 = vunpack.c.l.b16 %v676
        %v889 = vunpack.c.l.b16 %v677
        %v890 = vunpack.c.l.b16 %v678
        %v891 = vunpack.c.l.b16 %v679
        %v892 = vunpack.c.l.b16 %v680
        %v893 = vunpack.c.l.b16 %v681
        %v894 = vunpack.c.l.b16 %v682
        %v895 = vunpack.c.l.b16 %v683
        %v896 = vunpack.c.l.b16 %v684
        %v897 = vunpack.c.l.b16 %v685
        %v898 = vunpack.c.l.b16 %v686
        %v899 = vunpack.c.l.b16 %v687
        %v900 = vunpack.c.l.b16 %v688
        %v901 = vunpack.c.l.b16 %v689
        %v902 = vunpack.c.l.b16 %v690
        %v903 = vunpack.c.l.b16 %v691
        %v904 = vunpack.c.l.b16 %v692
        %v905 = vunpack.c.l.b16 %v693
        %v906 = vunpack.c.l.b16 %v694
        %v907 = vunpack.c.l.b16 %v695
        %v908 = vunpack.c.l.b16 %v696
        %v909 = vunpack.c.l.b16 %v697
        %v910 = vunpack.c.l.b16 %v698
        %v911 = vunpack.c.l.b16 %v699
        %v912 = vunpack.c.l.b16 %v700
        %v913 = vunpack.c.l.b16 %v701
        %v914 = vunpack.c.l.b16 %v702
        %v915 = vunpack.c.l.b16 %v703
        %v916 = vunpack.c.l.b16 %v704
        %v917 = vunpack.c.l.b16 %v705
        %v918 = vunpack.c.l.b16 %v706
        %v919 = vunpack.c.l.b16 %v707
        %v920 = vunpack.c.l.b16 %v708
        %v921 = vunpack.c.l.b16 %v709
        %v922 = vunpack.c.l.b16 %v710
        %v923 = vunpack.c.l.b16 %v711
        %v924 = vunpack.c.l.b16 %v712
        %v925 = vunpack.c.l.b16 %v713
        %v926 = vunpack.c.l.b16 %v714
        %v927 = vunpack.c.l.b16 %v715
        %v928 = vunpack.c.l.b16 %v716
        %v929 = vunpack.c.l.b16 %v717
        %v930 = vunpack.c.l.b16 %v718
        %v931 = vunpack.c.l.b16 %v719
        %v932 = vunpack.c.l.b16 %v720
        %v933 = vunpack.c.l.b16 %v721
        %v934 = vunpack.c.l.b16 %v722
        %v935 = vunpack.c.l.b16 %v723
        %v936 = vunpack.c.l.b16 %v724
        %v937 = vunpack.c.l.b16 %v725
        %v938 = vunpack.c.l.b16 %v726
        %v939 = vunpack.c.l.b16 %v727
        %v940 = vunpack.c.l.b16 %v728
        %v941 = vunpack.c.l.b16 %v729
        %v942 = vunpack.c.l.b16 %v730
        %v943 = vunpack.c.l.b16 %v731
        %v944 = vunpack.c.l.b16 %v732
        %v945 = vunpack.c.l.b16 %v733
        %v946 = vunpack.c.l.b16 %v734
        %v947 = vunpack.c.l.b16 %v735
        %v948 = vunpack.c.l.b16 %v736
        %v949 = vunpack.c.l.b16 %v737
        %v950 = vunpack.c.l.b16 %v738
        %v951 = vunpack.c.l.b16 %v739
        %v952 = vunpack.c.l.b16 %v740
        %v953 = vunpack.c.l.b16 %v741
        %v954 = vunpack.c.l.b16 %v742
        %v955 = vunpack.c.l.b16 %v743
        %v956 = vunpack.c.l.b16 %v744
        %v957 = vunpack.c.l.b16 %v745
        %v958 = vunpack.c.l.b16 %v746
        %v959 = vpack.c.b16 %v880, %v879
        %v960 = vpack.c.b16 %v882, %v881
        %v961 = vpack.c.b16 %v884, %v883
        %v962 = vpack.c.b16 %v886, %v885
        %v963 = vpack.c.b16 %v888, %v887
        %v964 = vpack.c.b16 %v890, %v889
        %v965 = vpack.c.b16 %v892, %v891
        %v966 = vpack.c.b16 %v894, %v893
        %v967 = vpack.c.b16 %v896, %v895
        %v968 = vpack.c.b16 %v898, %v897
        %v969 = vpack.c.b16 %v900, %v899
        %v970 = vpack.c.b16 %v902, %v901
        %v971 = vpack.c.b16 %v904, %v903
        %v972 = vpack.c.b16 %v906, %v905
        %v973 = vpack.c.b16 %v908, %v907
        %v974 = vpack.c.b16 %v910, %v909
        %v975 = vpack.c.b16 %v912, %v911
        %v976 = vpack.c.b16 %v914, %v913
        %v977 = vpack.c.b16 %v916, %v915
        %v978 = vpack.c.b16 %v918, %v917
        %v979 = vpack.c.b16 %v920, %v919
        %v980 = vpack.c.b16 %v922, %v921
        %v981 = vpack.c.b16 %v924, %v923
        %v982 = vpack.c.b16 %v926, %v925
        %v983 = vpack.c.b16 %v928, %v927
        %v984 = vpack.c.b16 %v930, %v929
        %v985 = vpack.c.b16 %v932, %v931
        %v986 = vpack.c.b16 %v934, %v933
        %v987 = vpack.c.b16 %v936, %v935
        %v988 = vpack.c.b16 %v938, %v937
        %v989 = vpack.c.b16 %v940, %v939
        %v990 = vpack.c.b16 %v942, %v941
        %v991 = vpack.c.b16 %v944, %v943
        %v992 = vpack.c.b16 %v946, %v945
        %v993 = vpack.c.b16 %v948, %v947
        %v994 = vpack.c.b16 %v950, %v949
        %v995 = vpack.c.b16 %v952, %v951
        %v996 = vpack.c.b16 %v954, %v953
        %v997 = vpack.c.b16 %v956, %v955
        %v998 = vpack.c.b16 %v958, %v957
        %1039 = vmatprep.subr.bf16.mxu0 0
        %1040 = vmatpush1.bf16.msra.mxu0 %v959
        %1041 = vmatprep.subr.bf16.mxu0 0
        %1042 = vmatpush1.bf16.msra.mxu0 %v960
        %1043 = vmatprep.subr.bf16.mxu0 0
        %1044 = vmatpush1.bf16.msra.mxu0 %v961
        %1045 = vmatprep.subr.bf16.mxu0 0
        %1046 = vmatpush1.bf16.msra.mxu0 %v962
        %1047 = vmatprep.subr.bf16.mxu0 0
        %1048 = vmatpush1.bf16.msra.mxu0 %v963
        %1049 = vmatprep.subr.bf16.mxu0 0
        %1050 = vmatpush1.bf16.msra.mxu0 %v964
        %1051 = vmatprep.subr.bf16.mxu0 0
        %1052 = vmatpush1.bf16.msra.mxu0 %v965
        %1053 = vmatprep.subr.bf16.mxu0 0
        %1054 = vmatpush1.bf16.msra.mxu0 %v966
        %1055 = vmatprep.subr.bf16.mxu0 0
        %1056 = vmatpush1.bf16.msra.mxu0 %v967
        %1057 = vmatprep.subr.bf16.mxu0 0
        %1058 = vmatpush1.bf16.msra.mxu0 %v968
        %1059 = vmatprep.subr.bf16.mxu0 0
        %1060 = vmatpush1.bf16.msra.mxu0 %v969
        %1061 = vmatprep.subr.bf16.mxu0 0
        %1062 = vmatpush1.bf16.msra.mxu0 %v970
        %1063 = vmatprep.subr.bf16.mxu0 0
        %1064 = vmatpush1.bf16.msra.mxu0 %v971
        %1065 = vmatprep.subr.bf16.mxu0 0
        %1066 = vmatpush1.bf16.msra.mxu0 %v972
        %1067 = vmatprep.subr.bf16.mxu0 0
        %1068 = vmatpush1.bf16.msra.mxu0 %v973
        %1069 = vmatprep.subr.bf16.mxu0 0
        %1070 = vmatpush1.bf16.msra.mxu0 %v974
        %1071 = vmatprep.mubr.bf16.mxu0 %v780
        %1072 = vmatmul.mubr.bf16.gmra.mrb[0].mxu0 %v779
        %v1073 = vpop.f32.mrb[0].mxu0
        %v1074 = vadd.f32 0.0, %v1073
        %v1075 = vpop.f32.mrb[0].mxu0
        %v1076 = vpop.f32.mrb[0].mxu0
        %v1077 = vadd.f32 0.0, %v1076
        %v1078 = vpop.f32.mrb[0].mxu0
        %1079 = vmatprep.mubr.bf16.mxu0 %v785
        %1080 = vmatmul.mubr.bf16.gmra.mrb[0].mxu0 %v784
        %v1081 = vpop.f32.mrb[0].mxu0
        %v1082 = vadd.f32 0.0, %v1081
        %v1083 = vpop.f32.mrb[0].mxu0
        %v1084 = vpop.f32.mrb[0].mxu0
        %v1085 = vadd.f32 0.0, %v1084
        %v1086 = vpop.f32.mrb[0].mxu0
        %1087 = vdwg.mxu0
        %1088 = vmatprep.subr.bf16.mxu0 0
        %1089 = vmatpush1.bf16.msra.mxu0 %v975
        %1090 = vmatprep.subr.bf16.mxu0 0
        %1091 = vmatpush1.bf16.msra.mxu0 %v976
        %1092 = vmatprep.subr.bf16.mxu0 0
        %1093 = vmatpush1.bf16.msra.mxu0 %v977
        %1094 = vmatprep.subr.bf16.mxu0 0
        %1095 = vmatpush1.bf16.msra.mxu0 %v978
        %1096 = vmatprep.subr.bf16.mxu0 0
        %1097 = vmatpush1.bf16.msra.mxu0 %v979
        %1098 = vmatprep.subr.bf16.mxu0 0
        %1099 = vmatpush1.bf16.msra.mxu0 %v980
        %1100 = vmatprep.subr.bf16.mxu0 0
        %1101 = vmatpush1.bf16.msra.mxu0 %v981
        %1102 = vmatprep.subr.bf16.mxu0 0
        %1103 = vmatpush1.bf16.msra.mxu0 %v982
        %1104 = vmatprep.subr.bf16.mxu0 0
        %1105 = vmatpush1.bf16.msra.mxu0 %v983
        %1106 = vmatprep.subr.bf16.mxu0 0
        %1107 = vmatpush1.bf16.msra.mxu0 %v984
        %1108 = vmatprep.subr.bf16.mxu0 0
        %1109 = vmatpush1.bf16.msra.mxu0 %v985
        %1110 = vmatprep.subr.bf16.mxu0 0
        %1111 = vmatpush1.bf16.msra.mxu0 %v986
        %1112 = vmatprep.subr.bf16.mxu0 0
        %1113 = vmatpush1.bf16.msra.mxu0 %v987
        %1114 = vmatprep.subr.bf16.mxu0 0
        %1115 = vmatpush1.bf16.msra.mxu0 %v988
        %1116 = vmatprep.subr.bf16.mxu0 0
        %1117 = vmatpush1.bf16.msra.mxu0 %v989
        %1118 = vmatprep.subr.bf16.mxu0 0
        %1119 = vmatpush1.bf16.msra.mxu0 %v990
        %1120 = vmatprep.mubr.bf16.mxu0 %v782
        %1121 = vmatmul.mubr.bf16.gmra.mrb[0].mxu0 %v781
        %v1122 = vpop.f32.mrb[0].mxu0
        %v1123 = vadd.f32 %v1074, %v1122
        %v1124 = vpop.f32.mrb[0].mxu0
        %v1125 = vpop.f32.mrb[0].mxu0
        %v1126 = vadd.f32 %v1077, %v1125
        %v1127 = vpop.f32.mrb[0].mxu0
        %1128 = vmatprep.mubr.bf16.mxu0 %v787
        %1129 = vmatmul.mubr.bf16.gmra.mrb[0].mxu0 %v786
        %v1130 = vpop.f32.mrb[0].mxu0
        %v1131 = vadd.f32 %v1082, %v1130
        %v1132 = vpop.f32.mrb[0].mxu0
        %v1133 = vpop.f32.mrb[0].mxu0
        %v1134 = vadd.f32 %v1085, %v1133
        %v1135 = vpop.f32.mrb[0].mxu0
        %1136 = vdwg.mxu0
        %1137 = vmatprep.subr.bf16.mxu0 0
        %1138 = vmatpush1.bf16.msra.mxu0 %v991
        %1139 = vmatprep.subr.bf16.mxu0 0
        %1140 = vmatpush1.bf16.msra.mxu0 %v992
        %1141 = vmatprep.subr.bf16.mxu0 0
        %1142 = vmatpush1.bf16.msra.mxu0 %v993
        %1143 = vmatprep.subr.bf16.mxu0 0
        %1144 = vmatpush1.bf16.msra.mxu0 %v994
        %1145 = vmatprep.subr.bf16.mxu0 0
        %1146 = vmatpush1.bf16.msra.mxu0 %v995
        %1147 = vmatprep.subr.bf16.mxu0 0
        %1148 = vmatpush1.bf16.msra.mxu0 %v996
        %1149 = vmatprep.subr.bf16.mxu0 0
        %1150 = vmatpush1.bf16.msra.mxu0 %v997
        %1151 = vmatprep.subr.bf16.mxu0 0
        %1152 = vmatpush1.bf16.msra.mxu0 %v998
        %1153 = vmatprep.subr.bf16.mxu0 0
        %1154 = vmatpush1.bf16.msra.mxu0 0
        %1155 = vmatprep.subr.bf16.mxu0 0
        %1156 = vmatpush1.bf16.msra.mxu0 0
        %1157 = vmatprep.subr.bf16.mxu0 0
        %1158 = vmatpush1.bf16.msra.mxu0 0
        %1159 = vmatprep.subr.bf16.mxu0 0
        %1160 = vmatpush1.bf16.msra.mxu0 0
        %1161 = vmatprep.subr.bf16.mxu0 0
        %1162 = vmatpush1.bf16.msra.mxu0 0
        %1163 = vmatprep.subr.bf16.mxu0 0
        %1164 = vmatpush1.bf16.msra.mxu0 0
        %1165 = vmatprep.subr.bf16.mxu0 0
        %1166 = vmatpush1.bf16.msra.mxu0 0
        %1167 = vmatprep.subr.bf16.mxu0 0
        %1168 = vmatpush1.bf16.msra.mxu0 0
        %1169 = vmatprep.mubr.bf16.mxu0 0
        %1170 = vmatmul.mubr.bf16.gmra.mrb[0].mxu0 %v783
        %v1171 = vpop.f32.mrb[0].mxu0
        %v1172 = vadd.f32 %v1123, %v1171
        %v1173 = vpop.f32.mrb[0].mxu0
        %v1174 = vpop.f32.mrb[0].mxu0
        %v1175 = vadd.f32 %v1126, %v1174
        %v1176 = vpop.f32.mrb[0].mxu0
        %1177 = vmatprep.mubr.bf16.mxu0 0
        %1178 = vmatmul.mubr.bf16.gmra.mrb[0].mxu0 %v788
        %v1179 = vpop.f32.mrb[0].mxu0
        %v1180 = vadd.f32 %v1131, %v1179
        %v1181 = vpop.f32.mrb[0].mxu0
        %v1182 = vpop.f32.mrb[0].mxu0
        %v1183 = vadd.f32 %v1134, %v1182
        %v1184 = vpop.f32.mrb[0].mxu0
        %1185 = vdwg.mxu0
        %v1186 = vadd.f32 %v651, %v1172
        %v1187 = vadd.f32 %v652, %v1175
        %v1188 = vadd.f32 %v653, %v1180
        %v1189 = vadd.f32 %v654, %v1183
        %1190 = vst [vmem:[#allocation2] sm:$0xff] %v1186
        %1191 = vst [vmem:[#allocation2 + $0x8] sm:$0xff] %v1187
        %1192 = vst [vmem:[#allocation2 + $0x10] sm:$0xff] %v1188
        %1193 = vst [vmem:[#allocation2 + $0x18] sm:$0xff] %v1189
        %p1194 = scmp.eq.s32.totalorder %s21, 1
        // Predicated region
        $region104: #{lip_sync_forward.18} parent=90 // pred_check
          %p1195 = pneg %p1194
        $region105: #{lip_sync_forward.18} parent=90 // pred_check_branch
          %1197 = sbr.rel (%p1195) target = $region107
        $region106: #{lip_sync_forward.18} parent=90 // pred_region
          %v1198 = vld [vmem:[#allocation2] sm:$0xff]
          %v1199 = vld [vmem:[#allocation2 + $0x8] sm:$0xff]
          %v1200 = vld [vmem:[#allocation2 + $0x10] sm:$0xff]
          %v1201 = vld [vmem:[#allocation2 + $0x18] sm:$0xff]
          %v1202 = vld [vmem:[%s640] sm:$0x1]
          %v1204 = vlaneseq
          %v1205 = vshrl.u32 %v1204, 7
          %v1206 = vsub.s32 0, %v1205
          %v1207 = vrot.slane %v1202, %v1206
          %v1209 = vadd.f32 %v1198, %v1207
          %v1210 = vadd.f32 %v1199, %v1207
          %v1211 = vadd.f32 %v1200, %v1207
          %v1212 = vadd.f32 %v1201, %v1207
          %v1213 = vmax.f32 %v1209, 0.0
          %v1214 = vmax.f32 %v1210, 0.0
          %v1215 = vmax.f32 %v1211, 0.0
          %v1216 = vmax.f32 %v1212, 0.0
          %v1217 = vpack.c.bf16 %v1214, %v1213
          %v1218 = vpack.c.bf16 %v1216, %v1215
          %v1221 = vunpack.c.l.b16 %v1217
          %v1222 = vunpack.c.h.b16 %v1217
          %v1223 = vunpack.c.l.b16 %v1218
          %v1224 = vunpack.c.h.b16 %v1218
          %v1225 = vpack.c.b16 %v1221, %v1221
          %v1226 = vpack.c.b16 %v1222, %v1222
          %v1227 = vpack.c.b16 %v1223, %v1223
          %v1228 = vpack.c.b16 %v1224, %v1224
          %1233 = vst [vmem:[%s634] sm:$0xf] %v1225
          %1234 = vst [vmem:[%s634 + $0x4] sm:$0xf] %v1226
          %1235 = vst [vmem:[%s634 + $0x8] sm:$0xf] %v1227
          %1236 = vst [vmem:[%s634 + $0xc] sm:$0xf] %v1228
        $region107: #{lip_sync_forward.18} parent=90 // pred_fallthru
          _
        %s1237 = sand.u32 %s125, 1
        %s1238 = sand.u32 %s125, 1
        %s1239 = smul.addr %s1238, 16
        %s1240 = scalar_lea.vmem [#allocation5], %s1239
        // Predicated region
        $region108: #{lip_sync_forward.18} parent=90 // pred_check
          %p1241 = pneg %p135
        $region109: #{lip_sync_forward.18} parent=90 // pred_check_branch
          %1243 = sbr.rel (%p1241) target = $region111
        $region110: #{lip_sync_forward.18} parent=90 // pred_region
          %s1244 = smul.u32 4, %s19
          %s1245 = smul.addr %s1244, 2
          %s1246 = sadd.s32 %s20, %s1245
          %s1247 = smul.addr %s1246, 4
          %s1248 = scalar_lea.vmem %s3, %s1247
          // Predicated region
          $region112: #{lip_sync_forward.18} parent=110 // pred_check
            _
          $region113: #{lip_sync_forward.18} parent=110 // pred_check_branch
            %1250 = sbr.rel (0) target = $region115
          $region114: #{lip_sync_forward.18} parent=110 // pred_region
            // Predicated region
            $region116: #{lip_sync_forward.18} parent=114 // pred_check
              _
            $region117: #{lip_sync_forward.18} parent=114 // pred_check_branch
              %1252 = sbr.rel target = $region119
            $region118: #{lip_sync_forward.18} parent=114 // pred_region
              // Predicated region
              $region131: #{lip_sync_forward.18} parent=118 // pred_check
                _
              $region132: #{lip_sync_forward.18} parent=118 // pred_check_branch
                %1273 = sbr.rel (0) target = $region134
              $region133: #{lip_sync_forward.18} parent=118 // pred_region
                loop: start=0, step=1, limit=1
                $region135: #{lip_sync_forward.18} parent=133 // loop_pre_header
                  _
                $region136: #{lip_sync_forward.18} parent=133 // loop_header
                  %s1275 = sphi 0, %s1279
                  %p1276 = scmp.ge.s32.totalorder %s1275, 1
                  %s1280 = sphi %s1240, %s1240
                  %s1281 = sphi %s1248, %s1248
                $region137: #{lip_sync_forward.18} parent=133 // loop_header_branch
                  %1278 = sbr.rel (%p1276) target = $region141
                $region138: #{lip_sync_forward.18} parent=133 // loop_body
                  _
                $region139: #{lip_sync_forward.18} parent=133 // loop_footer
                  %s1279 = sadd.s32 1, %s1275
                $region140: #{lip_sync_forward.18} parent=133 // loop_footer_branch
                  %1274 = sbr.rel target = $region136
                $region141: #{lip_sync_forward.18} parent=133 // loop_exit
                  _
                loop: start=0, step=1, limit=1
                $region142: #{lip_sync_forward.18} parent=133 // loop_pre_header
                  _
                $region143: #{lip_sync_forward.18} parent=133 // loop_header
                  %s1284 = sphi 0, %s1288
                  %p1285 = scmp.ge.s32.totalorder %s1284, 1
                  %s1289 = sphi %s1240, %s1240
                  %s1290 = sphi %s1248, %s1248
                $region144: #{lip_sync_forward.18} parent=133 // loop_header_branch
                  %1287 = sbr.rel (%p1285) target = $region148
                $region145: #{lip_sync_forward.18} parent=133 // loop_body
                  %v1291 = vld [vmem:[%s1289] sm:$0xf]
                  %1292 = vst [vmem:[%s1290] sm:$0xf] %v1291
                  %v1293 = vld [vmem:[%s1289 + $0x4] sm:$0xf]
                  %1294 = vst [vmem:[%s1290 + $0x8] sm:$0xf] %v1293
                  %v1295 = vld [vmem:[%s1289 + $0x8] sm:$0xf]
                  %1296 = vst [vmem:[%s1290 + $0x10] sm:$0xf] %v1295
                  %v1297 = vld [vmem:[%s1289 + $0xc] sm:$0xf]
                  %1298 = vst [vmem:[%s1290 + $0x18] sm:$0xf] %v1297
                $region146: #{lip_sync_forward.18} parent=133 // loop_footer
                  %s1288 = sadd.s32 1, %s1284
                $region147: #{lip_sync_forward.18} parent=133 // loop_footer_branch
                  %1283 = sbr.rel target = $region143
                $region148: #{lip_sync_forward.18} parent=133 // loop_exit
                  _
              $region134: #{lip_sync_forward.18} parent=118 // pred_fallthru
                _
            $region119: #{lip_sync_forward.18} parent=114 // pred_fallthru
              _
            // Predicated region
            $region120: #{lip_sync_forward.18} parent=114 // pred_check
              _
            $region121: #{lip_sync_forward.18} parent=114 // pred_check_branch
              %1254 = sbr.rel (0) target = $region123
            $region122: #{lip_sync_forward.18} parent=114 // pred_region
              loop: start=0, step=1, limit=1
              $region124: #{lip_sync_forward.18} parent=122 // loop_pre_header
                _
              $region125: #{lip_sync_forward.18} parent=122 // loop_header
                %s1257 = sphi 0, %s1261
                %p1258 = scmp.ge.s32.totalorder %s1257, 1
                %s1262 = sphi %s1240, %s1240
                %s1263 = sphi %s1248, %s1248
              $region126: #{lip_sync_forward.18} parent=122 // loop_header_branch
                %1260 = sbr.rel (%p1258) target = $region130
              $region127: #{lip_sync_forward.18} parent=122 // loop_body
                %v1264 = vld [vmem:[%s1262] sm:$0xf]
                %1265 = vst [vmem:[%s1263] sm:$0xf] %v1264
                %v1266 = vld [vmem:[%s1262 + $0x4] sm:$0xf]
                %1267 = vst [vmem:[%s1263 + $0x8] sm:$0xf] %v1266
                %v1268 = vld [vmem:[%s1262 + $0x8] sm:$0xf]
                %1269 = vst [vmem:[%s1263 + $0x10] sm:$0xf] %v1268
                %v1270 = vld [vmem:[%s1262 + $0xc] sm:$0xf]
                %1271 = vst [vmem:[%s1263 + $0x18] sm:$0xf] %v1270
              $region128: #{lip_sync_forward.18} parent=122 // loop_footer
                %s1261 = sadd.s32 1, %s1257
              $region129: #{lip_sync_forward.18} parent=122 // loop_footer_branch
                %1256 = sbr.rel target = $region125
              $region130: #{lip_sync_forward.18} parent=122 // loop_exit
                _
            $region123: #{lip_sync_forward.18} parent=114 // pred_fallthru
              _
          $region115: #{lip_sync_forward.18} parent=110 // pred_fallthru
            _
          %1299 = vnop
        $region111: #{lip_sync_forward.18} parent=90 // pred_fallthru
          _
      $region91: #{lip_sync_forward.18} parent=5 // pred_fallthru
        _
      %p1300 = scmp.le.s32.totalorder 2, %s9
      // Predicated region
      $region149: #{lip_sync_forward.18} parent=5 // pred_check
        %p1301 = pneg %p1300
      $region150: #{lip_sync_forward.18} parent=5 // pred_check_branch
        %1303 = sbr.rel (%p1301) target = $region152
      $region151: #{lip_sync_forward.18} parent=5 // pred_region
        %s1304 = ssub.s32 %s9, 2
        // Predicated region
        $region153: #{lip_sync_forward.18} parent=151 // pred_check
          %p1305 = pneg %p141
        $region154: #{lip_sync_forward.18} parent=151 // pred_check_branch
          %1307 = sbr.rel (%p1305) target = $region156
        $region155: #{lip_sync_forward.18} parent=151 // pred_region
          %s1308 = sand.u32 %s126, 1
          %s1309 = sand.u32 %s126, 1
          %s1310 = smul.addr %s1309, 16
          %s1311 = scalar_lea.vmem [#allocation5], %s1310
        $region156: #{lip_sync_forward.18} parent=151 // pred_fallthru
          _
      $region152: #{lip_sync_forward.18} parent=5 // pred_fallthru
        _
    $region6: #{lip_sync_forward.18} parent=1 // loop_footer
      %s13 = sadd.s32 1, %s9
    $region7: #{lip_sync_forward.18} parent=1 // loop_footer_branch
      %8 = sbr.rel target = $region3
    $region8: #{lip_sync_forward.18} parent=1 // loop_exit
      _

// kernel: lip_sync_forward.19
$region0: #{lip_sync_forward.19}
  #allocation0 [shape = 'u32[]', space=smem, size = 0x4, offset = 0x4, fixed_abs, tag = 'smem constant byte address 0x4 - core index']
  #allocation1 [shape = 'u32[144,128]{1,0:T(1,128)}', space=vmem, size = 0x12000, scoped, tag = 'internal scratch']
  #allocation2 [shape = 'f32[128,128]{1,0:T(8,128)}', space=vmem, size = 0x10000, scoped, tag = 'scratch operand']
  %s0 = inlined_call_operand.vmem [shape: bf16[128,640], index: 0, kind: input, shape index: {}]
  %s1 = inlined_call_operand.vmem [shape: bf16[640,128], index: 1, kind: input, shape index: {}]
  %s2 = inlined_call_operand.vmem [shape: f32[1,128], index: 2, kind: input, shape index: {}]
  %s3 = inlined_call_operand.vmem [shape: f32[128,128], index: 3, kind: output, shape index: {}]
  %s4 = sld [smem:[#allocation0]]
  $region30: #{lip_sync_forward.19} parent=0
    _
  %s6 = ssub.s32 1, %s4
  %s7 = scalar_select 0, %s6, %s4
  // Predicated region
  $region2: #{lip_sync_forward.19} parent=0 // pred_check
    _
  $region3: #{lip_sync_forward.19} parent=0 // pred_check_branch
    %9 = sbr.rel (0) target = $region5
  $region4: #{lip_sync_forward.19} parent=0 // pred_region
    _
  $region5: #{lip_sync_forward.19} parent=0 // pred_fallthru
    _
  // Predicated region
  $region6: #{lip_sync_forward.19} parent=0 // pred_check
    _
  $region7: #{lip_sync_forward.19} parent=0 // pred_check_branch
    %11 = sbr.rel (0) target = $region9
  $region8: #{lip_sync_forward.19} parent=0 // pred_region
    _
  $region9: #{lip_sync_forward.19} parent=0 // pred_fallthru
    _
  // Predicated region
  $region10: #{lip_sync_forward.19} parent=0 // pred_check
    _
  $region11: #{lip_sync_forward.19} parent=0 // pred_check_branch
    %13 = sbr.rel (0) target = $region13
  $region12: #{lip_sync_forward.19} parent=0 // pred_region
    _
  $region13: #{lip_sync_forward.19} parent=0 // pred_fallthru
    _
  %p15 = scmp.eq.s32.totalorder 0, 0
  // Predicated region
  $region14: #{lip_sync_forward.19} parent=0 // pred_check
    %p16 = pneg %p15
  $region15: #{lip_sync_forward.19} parent=0 // pred_check_branch
    %18 = sbr.rel (%p16) target = $region17
  $region16: #{lip_sync_forward.19} parent=0 // pred_region
    %19 = vst [vmem:[#allocation2] sm:$0xff] 0.0
    %20 = vst [vmem:[#allocation2 + $0x8] sm:$0xff] 0.0
    %21 = vst [vmem:[#allocation2 + $0x10] sm:$0xff] 0.0
    %22 = vst [vmem:[#allocation2 + $0x18] sm:$0xff] 0.0
    %23 = vst [vmem:[#allocation2 + $0x20] sm:$0xff] 0.0
    %24 = vst [vmem:[#allocation2 + $0x28] sm:$0xff] 0.0
    %25 = vst [vmem:[#allocation2 + $0x30] sm:$0xff] 0.0
    %26 = vst [vmem:[#allocation2 + $0x38] sm:$0xff] 0.0
    %27 = vst [vmem:[#allocation2 + $0x40] sm:$0xff] 0.0
    %28 = vst [vmem:[#allocation2 + $0x48] sm:$0xff] 0.0
    %29 = vst [vmem:[#allocation2 + $0x50] sm:$0xff] 0.0
    %30 = vst [vmem:[#allocation2 + $0x58] sm:$0xff] 0.0
    %31 = vst [vmem:[#allocation2 + $0x60] sm:$0xff] 0.0
    %32 = vst [vmem:[#allocation2 + $0x68] sm:$0xff] 0.0
    %33 = vst [vmem:[#allocation2 + $0x70] sm:$0xff] 0.0
    %34 = vst [vmem:[#allocation2 + $0x78] sm:$0xff] 0.0
  $region17: #{lip_sync_forward.19} parent=0 // pred_fallthru
    _
  %v35 = vld [vmem:[#allocation2] sm:$0xff]
  %v36 = vld [vmem:[#allocation2 + $0x8] sm:$0xff]
  %v37 = vld [vmem:[#allocation2 + $0x10] sm:$0xff]
  %v38 = vld [vmem:[#allocation2 + $0x18] sm:$0xff]
  %v39 = vld [vmem:[#allocation2 + $0x20] sm:$0xff]
  %v40 = vld [vmem:[#allocation2 + $0x28] sm:$0xff]
  %v41 = vld [vmem:[#allocation2 + $0x30] sm:$0xff]
  %v42 = vld [vmem:[#allocation2 + $0x38] sm:$0xff]
  %v43 = vld [vmem:[#allocation2 + $0x40] sm:$0xff]
  %v44 = vld [vmem:[#allocation2 + $0x48] sm:$0xff]
  %v45 = vld [vmem:[#allocation2 + $0x50] sm:$0xff]
  %v46 = vld [vmem:[#allocation2 + $0x58] sm:$0xff]
  %v47 = vld [vmem:[#allocation2 + $0x60] sm:$0xff]
  %v48 = vld [vmem:[#allocation2 + $0x68] sm:$0xff]
  %v49 = vld [vmem:[#allocation2 + $0x70] sm:$0xff]
  %v50 = vld [vmem:[#allocation2 + $0x78] sm:$0xff]
  %v51 = vld [vmem:[%s0] sm:$0xff]
  %v52 = vld [vmem:[%s0 + $0x8] sm:$0xff]
  %v53 = vld [vmem:[%s0 + $0x10] sm:$0xf]
  %v54 = vld [vmem:[%s0 + $0x14] sm:$0xff]
  %v55 = vld [vmem:[%s0 + $0x1c] sm:$0xff]
  %v56 = vld [vmem:[%s0 + $0x24] sm:$0xf]
  %v57 = vld [vmem:[%s0 + $0x28] sm:$0xff]
  %v58 = vld [vmem:[%s0 + $0x30] sm:$0xff]
  %v59 = vld [vmem:[%s0 + $0x38] sm:$0xf]
  %v60 = vld [vmem:[%s0 + $0x3c] sm:$0xff]
  %v61 = vld [vmem:[%s0 + $0x44] sm:$0xff]
  %v62 = vld [vmem:[%s0 + $0x4c] sm:$0xf]
  %v63 = vld [vmem:[%s0 + $0x50] sm:$0xff]
  %v64 = vld [vmem:[%s0 + $0x58] sm:$0xff]
  %v65 = vld [vmem:[%s0 + $0x60] sm:$0xf]
  %v66 = vld [vmem:[%s0 + $0x64] sm:$0xff]
  %v67 = vld [vmem:[%s0 + $0x6c] sm:$0xff]
  %v68 = vld [vmem:[%s0 + $0x74] sm:$0xf]
  %v69 = vld [vmem:[%s0 + $0x78] sm:$0xff]
  %v70 = vld [vmem:[%s0 + $0x80] sm:$0xff]
  %v71 = vld [vmem:[%s0 + $0x88] sm:$0xf]
  %v72 = vld [vmem:[%s0 + $0x8c] sm:$0xff]
  %v73 = vld [vmem:[%s0 + $0x94] sm:$0xff]
  %v74 = vld [vmem:[%s0 + $0x9c] sm:$0xf]
  %v75 = vld [vmem:[%s0 + $0xa0] sm:$0xff]
  %v76 = vld [vmem:[%s0 + $0xa8] sm:$0xff]
  %v77 = vld [vmem:[%s0 + $0xb0] sm:$0xf]
  %v78 = vld [vmem:[%s0 + $0xb4] sm:$0xff]
  %v79 = vld [vmem:[%s0 + $0xbc] sm:$0xff]
  %v80 = vld [vmem:[%s0 + $0xc4] sm:$0xf]
  %v81 = vld [vmem:[%s0 + $0xc8] sm:$0xff]
  %v82 = vld [vmem:[%s0 + $0xd0] sm:$0xff]
  %v83 = vld [vmem:[%s0 + $0xd8] sm:$0xf]
  %v84 = vld [vmem:[%s0 + $0xdc] sm:$0xff]
  %v85 = vld [vmem:[%s0 + $0xe4] sm:$0xff]
  %v86 = vld [vmem:[%s0 + $0xec] sm:$0xf]
  %v87 = vld [vmem:[%s0 + $0xf0] sm:$0xff]
  %v88 = vld [vmem:[%s0 + $0xf8] sm:$0xff]
  %v89 = vld [vmem:[%s0 + $0x100] sm:$0xf]
  %v90 = vld [vmem:[%s0 + $0x104] sm:$0xff]
  %v91 = vld [vmem:[%s0 + $0x10c] sm:$0xff]
  %v92 = vld [vmem:[%s0 + $0x114] sm:$0xf]
  %v93 = vld [vmem:[%s0 + $0x118] sm:$0xff]
  %v94 = vld [vmem:[%s0 + $0x120] sm:$0xff]
  %v95 = vld [vmem:[%s0 + $0x128] sm:$0xf]
  %v96 = vld [vmem:[%s0 + $0x12c] sm:$0xff]
  %v97 = vld [vmem:[%s0 + $0x134] sm:$0xff]
  %v98 = vld [vmem:[%s0 + $0x13c] sm:$0xf]
  %v99 = vld [vmem:[%s1] sm:$0xf]
  %v100 = vld [vmem:[%s1 + $0x4] sm:$0xf]
  %v101 = vld [vmem:[%s1 + $0x8] sm:$0xf]
  %v102 = vld [vmem:[%s1 + $0xc] sm:$0xf]
  %v103 = vld [vmem:[%s1 + $0x10] sm:$0xf]
  %v104 = vld [vmem:[%s1 + $0x14] sm:$0xf]
  %v105 = vld [vmem:[%s1 + $0x18] sm:$0xf]
  %v106 = vld [vmem:[%s1 + $0x1c] sm:$0xf]
  %v107 = vld [vmem:[%s1 + $0x20] sm:$0xf]
  %v108 = vld [vmem:[%s1 + $0x24] sm:$0xf]
  %v109 = vld [vmem:[%s1 + $0x28] sm:$0xf]
  %v110 = vld [vmem:[%s1 + $0x2c] sm:$0xf]
  %v111 = vld [vmem:[%s1 + $0x30] sm:$0xf]
  %v112 = vld [vmem:[%s1 + $0x34] sm:$0xf]
  %v113 = vld [vmem:[%s1 + $0x38] sm:$0xf]
  %v114 = vld [vmem:[%s1 + $0x3c] sm:$0xf]
  %v115 = vld [vmem:[%s1 + $0x40] sm:$0xf]
  %v116 = vld [vmem:[%s1 + $0x44] sm:$0xf]
  %v117 = vld [vmem:[%s1 + $0x48] sm:$0xf]
  %v118 = vld [vmem:[%s1 + $0x4c] sm:$0xf]
  %v119 = vld [vmem:[%s1 + $0x50] sm:$0xf]
  %v120 = vld [vmem:[%s1 + $0x54] sm:$0xf]
  %v121 = vld [vmem:[%s1 + $0x58] sm:$0xf]
  %v122 = vld [vmem:[%s1 + $0x5c] sm:$0xf]
  %v123 = vld [vmem:[%s1 + $0x60] sm:$0xf]
  %v124 = vld [vmem:[%s1 + $0x64] sm:$0xf]
  %v125 = vld [vmem:[%s1 + $0x68] sm:$0xf]
  %v126 = vld [vmem:[%s1 + $0x6c] sm:$0xf]
  %v127 = vld [vmem:[%s1 + $0x70] sm:$0xf]
  %v128 = vld [vmem:[%s1 + $0x74] sm:$0xf]
  %v129 = vld [vmem:[%s1 + $0x78] sm:$0xf]
  %v130 = vld [vmem:[%s1 + $0x7c] sm:$0xf]
  %v131 = vld [vmem:[%s1 + $0x80] sm:$0xf]
  %v132 = vld [vmem:[%s1 + $0x84] sm:$0xf]
  %v133 = vld [vmem:[%s1 + $0x88] sm:$0xf]
  %v134 = vld [vmem:[%s1 + $0x8c] sm:$0xf]
  %v135 = vld [vmem:[%s1 + $0x90] sm:$0xf]
  %v136 = vld [vmem:[%s1 + $0x94] sm:$0xf]
  %v137 = vld [vmem:[%s1 + $0x98] sm:$0xf]
  %v138 = vld [vmem:[%s1 + $0x9c] sm:$0xf]
  %v139 = vld [vmem:[%s1 + $0xa0] sm:$0xf]
  %v140 = vld [vmem:[%s1 + $0xa4] sm:$0xf]
  %v141 = vld [vmem:[%s1 + $0xa8] sm:$0xf]
  %v142 = vld [vmem:[%s1 + $0xac] sm:$0xf]
  %v143 = vld [vmem:[%s1 + $0xb0] sm:$0xf]
  %v144 = vld [vmem:[%s1 + $0xb4] sm:$0xf]
  %v145 = vld [vmem:[%s1 + $0xb8] sm:$0xf]
  %v146 = vld [vmem:[%s1 + $0xbc] sm:$0xf]
  %v147 = vld [vmem:[%s1 + $0xc0] sm:$0xf]
  %v148 = vld [vmem:[%s1 + $0xc4] sm:$0xf]
  %v149 = vld [vmem:[%s1 + $0xc8] sm:$0xf]
  %v150 = vld [vmem:[%s1 + $0xcc] sm:$0xf]
  %v151 = vld [vmem:[%s1 + $0xd0] sm:$0xf]
  %v152 = vld [vmem:[%s1 + $0xd4] sm:$0xf]
  %v153 = vld [vmem:[%s1 + $0xd8] sm:$0xf]
  %v154 = vld [vmem:[%s1 + $0xdc] sm:$0xf]
  %v155 = vld [vmem:[%s1 + $0xe0] sm:$0xf]
  %v156 = vld [vmem:[%s1 + $0xe4] sm:$0xf]
  %v157 = vld [vmem:[%s1 + $0xe8] sm:$0xf]
  %v158 = vld [vmem:[%s1 + $0xec] sm:$0xf]
  %v159 = vld [vmem:[%s1 + $0xf0] sm:$0xf]
  %v160 = vld [vmem:[%s1 + $0xf4] sm:$0xf]
  %v161 = vld [vmem:[%s1 + $0xf8] sm:$0xf]
  %v162 = vld [vmem:[%s1 + $0xfc] sm:$0xf]
  %v163 = vld [vmem:[%s1 + $0x100] sm:$0xf]
  %v164 = vld [vmem:[%s1 + $0x104] sm:$0xf]
  %v165 = vld [vmem:[%s1 + $0x108] sm:$0xf]
  %v166 = vld [vmem:[%s1 + $0x10c] sm:$0xf]
  %v167 = vld [vmem:[%s1 + $0x110] sm:$0xf]
  %v168 = vld [vmem:[%s1 + $0x114] sm:$0xf]
  %v169 = vld [vmem:[%s1 + $0x118] sm:$0xf]
  %v170 = vld [vmem:[%s1 + $0x11c] sm:$0xf]
  %v171 = vld [vmem:[%s1 + $0x120] sm:$0xf]
  %v172 = vld [vmem:[%s1 + $0x124] sm:$0xf]
  %v173 = vld [vmem:[%s1 + $0x128] sm:$0xf]
  %v174 = vld [vmem:[%s1 + $0x12c] sm:$0xf]
  %v175 = vld [vmem:[%s1 + $0x130] sm:$0xf]
  %v176 = vld [vmem:[%s1 + $0x134] sm:$0xf]
  %v177 = vld [vmem:[%s1 + $0x138] sm:$0xf]
  %v178 = vld [vmem:[%s1 + $0x13c] sm:$0xf]
  %v227 = vunpack.c.l.b16 %v51
  %v228 = vunpack.c.h.b16 %v51
  %v229 = vunpack.c.l.b16 %v52
  %v230 = vunpack.c.h.b16 %v52
  %v231 = vunpack.c.l.b16 %v53
  %v232 = vunpack.c.l.b16 %v54
  %v233 = vunpack.c.h.b16 %v54
  %v234 = vunpack.c.l.b16 %v55
  %v235 = vunpack.c.h.b16 %v55
  %v236 = vunpack.c.l.b16 %v56
  %v237 = vunpack.c.l.b16 %v57
  %v238 = vunpack.c.h.b16 %v57
  %v239 = vunpack.c.l.b16 %v58
  %v240 = vunpack.c.h.b16 %v58
  %v241 = vunpack.c.l.b16 %v59
  %v242 = vunpack.c.l.b16 %v60
  %v243 = vunpack.c.h.b16 %v60
  %v244 = vunpack.c.l.b16 %v61
  %v245 = vunpack.c.h.b16 %v61
  %v246 = vunpack.c.l.b16 %v62
  %v247 = vunpack.c.l.b16 %v63
  %v248 = vunpack.c.h.b16 %v63
  %v249 = vunpack.c.l.b16 %v64
  %v250 = vunpack.c.h.b16 %v64
  %v251 = vunpack.c.l.b16 %v65
  %v252 = vunpack.c.l.b16 %v66
  %v253 = vunpack.c.h.b16 %v66
  %v254 = vunpack.c.l.b16 %v67
  %v255 = vunpack.c.h.b16 %v67
  %v256 = vunpack.c.l.b16 %v68
  %v257 = vunpack.c.l.b16 %v69
  %v258 = vunpack.c.h.b16 %v69
  %v259 = vunpack.c.l.b16 %v70
  %v260 = vunpack.c.h.b16 %v70
  %v261 = vunpack.c.l.b16 %v71
  %v262 = vunpack.c.l.b16 %v72
  %v263 = vunpack.c.h.b16 %v72
  %v264 = vunpack.c.l.b16 %v73
  %v265 = vunpack.c.h.b16 %v73
  %v266 = vunpack.c.l.b16 %v74
  %v267 = vunpack.c.l.b16 %v75
  %v268 = vunpack.c.h.b16 %v75
  %v269 = vunpack.c.l.b16 %v76
  %v270 = vunpack.c.h.b16 %v76
  %v271 = vunpack.c.l.b16 %v77
  %v272 = vunpack.c.l.b16 %v78
  %v273 = vunpack.c.h.b16 %v78
  %v274 = vunpack.c.l.b16 %v79
  %v275 = vunpack.c.h.b16 %v79
  %v276 = vunpack.c.l.b16 %v80
  %v277 = vunpack.c.l.b16 %v81
  %v278 = vunpack.c.h.b16 %v81
  %v279 = vunpack.c.l.b16 %v82
  %v280 = vunpack.c.h.b16 %v82
  %v281 = vunpack.c.l.b16 %v83
  %v282 = vunpack.c.l.b16 %v84
  %v283 = vunpack.c.h.b16 %v84
  %v284 = vunpack.c.l.b16 %v85
  %v285 = vunpack.c.h.b16 %v85
  %v286 = vunpack.c.l.b16 %v86
  %v287 = vunpack.c.l.b16 %v87
  %v288 = vunpack.c.h.b16 %v87
  %v289 = vunpack.c.l.b16 %v88
  %v290 = vunpack.c.h.b16 %v88
  %v291 = vunpack.c.l.b16 %v89
  %v292 = vunpack.c.l.b16 %v90
  %v293 = vunpack.c.h.b16 %v90
  %v294 = vunpack.c.l.b16 %v91
  %v295 = vunpack.c.h.b16 %v91
  %v296 = vunpack.c.l.b16 %v92
  %v297 = vunpack.c.l.b16 %v93
  %v298 = vunpack.c.h.b16 %v93
  %v299 = vunpack.c.l.b16 %v94
  %v300 = vunpack.c.h.b16 %v94
  %v301 = vunpack.c.l.b16 %v95
  %v302 = vunpack.c.l.b16 %v96
  %v303 = vunpack.c.h.b16 %v96
  %v304 = vunpack.c.l.b16 %v97
  %v305 = vunpack.c.h.b16 %v97
  %v306 = vunpack.c.l.b16 %v98
  %v307 = vpack.c.b16 %v232, %v227
  %v308 = vpack.c.b16 %v233, %v228
  %v309 = vpack.c.b16 %v234, %v229
  %v310 = vpack.c.b16 %v235, %v230
  %v311 = vpack.c.b16 %v236, %v231
  %v312 = vpack.c.b16 %v242, %v237
  %v313 = vpack.c.b16 %v243, %v238
  %v314 = vpack.c.b16 %v244, %v239
  %v315 = vpack.c.b16 %v245, %v240
  %v316 = vpack.c.b16 %v246, %v241
  %v317 = vpack.c.b16 %v252, %v247
  %v318 = vpack.c.b16 %v253, %v248
  %v319 = vpack.c.b16 %v254, %v249
  %v320 = vpack.c.b16 %v255, %v250
  %v321 = vpack.c.b16 %v256, %v251
  %v322 = vpack.c.b16 %v262, %v257
  %v323 = vpack.c.b16 %v263, %v258
  %v324 = vpack.c.b16 %v264, %v259
  %v325 = vpack.c.b16 %v265, %v260
  %v326 = vpack.c.b16 %v266, %v261
  %v327 = vpack.c.b16 %v272, %v267
  %v328 = vpack.c.b16 %v273, %v268
  %v329 = vpack.c.b16 %v274, %v269
  %v330 = vpack.c.b16 %v275, %v270
  %v331 = vpack.c.b16 %v276, %v271
  %v332 = vpack.c.b16 %v282, %v277
  %v333 = vpack.c.b16 %v283, %v278
  %v334 = vpack.c.b16 %v284, %v279
  %v335 = vpack.c.b16 %v285, %v280
  %v336 = vpack.c.b16 %v286, %v281
  %v337 = vpack.c.b16 %v292, %v287
  %v338 = vpack.c.b16 %v293, %v288
  %v339 = vpack.c.b16 %v294, %v289
  %v340 = vpack.c.b16 %v295, %v290
  %v341 = vpack.c.b16 %v296, %v291
  %v342 = vpack.c.b16 %v302, %v297
  %v343 = vpack.c.b16 %v303, %v298
  %v344 = vpack.c.b16 %v304, %v299
  %v345 = vpack.c.b16 %v305, %v300
  %v346 = vpack.c.b16 %v306, %v301
  %v467 = vunpack.c.l.b16 %v99
  %v468 = vunpack.c.l.b16 %v100
  %v469 = vunpack.c.l.b16 %v101
  %v470 = vunpack.c.l.b16 %v102
  %v471 = vunpack.c.l.b16 %v103
  %v472 = vunpack.c.l.b16 %v104
  %v473 = vunpack.c.l.b16 %v105
  %v474 = vunpack.c.l.b16 %v106
  %v475 = vunpack.c.l.b16 %v107
  %v476 = vunpack.c.l.b16 %v108
  %v477 = vunpack.c.l.b16 %v109
  %v478 = vunpack.c.l.b16 %v110
  %v479 = vunpack.c.l.b16 %v111
  %v480 = vunpack.c.l.b16 %v112
  %v481 = vunpack.c.l.b16 %v113
  %v482 = vunpack.c.l.b16 %v114
  %v483 = vunpack.c.l.b16 %v115
  %v484 = vunpack.c.l.b16 %v116
  %v485 = vunpack.c.l.b16 %v117
  %v486 = vunpack.c.l.b16 %v118
  %v487 = vunpack.c.l.b16 %v119
  %v488 = vunpack.c.l.b16 %v120
  %v489 = vunpack.c.l.b16 %v121
  %v490 = vunpack.c.l.b16 %v122
  %v491 = vunpack.c.l.b16 %v123
  %v492 = vunpack.c.l.b16 %v124
  %v493 = vunpack.c.l.b16 %v125
  %v494 = vunpack.c.l.b16 %v126
  %v495 = vunpack.c.l.b16 %v127
  %v496 = vunpack.c.l.b16 %v128
  %v497 = vunpack.c.l.b16 %v129
  %v498 = vunpack.c.l.b16 %v130
  %v499 = vunpack.c.l.b16 %v131
  %v500 = vunpack.c.l.b16 %v132
  %v501 = vunpack.c.l.b16 %v133
  %v502 = vunpack.c.l.b16 %v134
  %v503 = vunpack.c.l.b16 %v135
  %v504 = vunpack.c.l.b16 %v136
  %v505 = vunpack.c.l.b16 %v137
  %v506 = vunpack.c.l.b16 %v138
  %v507 = vunpack.c.l.b16 %v139
  %v508 = vunpack.c.l.b16 %v140
  %v509 = vunpack.c.l.b16 %v141
  %v510 = vunpack.c.l.b16 %v142
  %v511 = vunpack.c.l.b16 %v143
  %v512 = vunpack.c.l.b16 %v144
  %v513 = vunpack.c.l.b16 %v145
  %v514 = vunpack.c.l.b16 %v146
  %v515 = vunpack.c.l.b16 %v147
  %v516 = vunpack.c.l.b16 %v148
  %v517 = vunpack.c.l.b16 %v149
  %v518 = vunpack.c.l.b16 %v150
  %v519 = vunpack.c.l.b16 %v151
  %v520 = vunpack.c.l.b16 %v152
  %v521 = vunpack.c.l.b16 %v153
  %v522 = vunpack.c.l.b16 %v154
  %v523 = vunpack.c.l.b16 %v155
  %v524 = vunpack.c.l.b16 %v156
  %v525 = vunpack.c.l.b16 %v157
  %v526 = vunpack.c.l.b16 %v158
  %v527 = vunpack.c.l.b16 %v159
  %v528 = vunpack.c.l.b16 %v160
  %v529 = vunpack.c.l.b16 %v161
  %v530 = vunpack.c.l.b16 %v162
  %v531 = vunpack.c.l.b16 %v163
  %v532 = vunpack.c.l.b16 %v164
  %v533 = vunpack.c.l.b16 %v165
  %v534 = vunpack.c.l.b16 %v166
  %v535 = vunpack.c.l.b16 %v167
  %v536 = vunpack.c.l.b16 %v168
  %v537 = vunpack.c.l.b16 %v169
  %v538 = vunpack.c.l.b16 %v170
  %v539 = vunpack.c.l.b16 %v171
  %v540 = vunpack.c.l.b16 %v172
  %v541 = vunpack.c.l.b16 %v173
  %v542 = vunpack.c.l.b16 %v174
  %v543 = vunpack.c.l.b16 %v175
  %v544 = vunpack.c.l.b16 %v176
  %v545 = vunpack.c.l.b16 %v177
  %v546 = vunpack.c.l.b16 %v178
  %v547 = vpack.c.b16 %v468, %v467
  %v548 = vpack.c.b16 %v470, %v469
  %v549 = vpack.c.b16 %v472, %v471
  %v550 = vpack.c.b16 %v474, %v473
  %v551 = vpack.c.b16 %v476, %v475
  %v552 = vpack.c.b16 %v478, %v477
  %v553 = vpack.c.b16 %v480, %v479
  %v554 = vpack.c.b16 %v482, %v481
  %v555 = vpack.c.b16 %v484, %v483
  %v556 = vpack.c.b16 %v486, %v485
  %v557 = vpack.c.b16 %v488, %v487
  %v558 = vpack.c.b16 %v490, %v489
  %v559 = vpack.c.b16 %v492, %v491
  %v560 = vpack.c.b16 %v494, %v493
  %v561 = vpack.c.b16 %v496, %v495
  %v562 = vpack.c.b16 %v498, %v497
  %v563 = vpack.c.b16 %v500, %v499
  %v564 = vpack.c.b16 %v502, %v501
  %v565 = vpack.c.b16 %v504, %v503
  %v566 = vpack.c.b16 %v506, %v505
  %v567 = vpack.c.b16 %v508, %v507
  %v568 = vpack.c.b16 %v510, %v509
  %v569 = vpack.c.b16 %v512, %v511
  %v570 = vpack.c.b16 %v514, %v513
  %v571 = vpack.c.b16 %v516, %v515
  %v572 = vpack.c.b16 %v518, %v517
  %v573 = vpack.c.b16 %v520, %v519
  %v574 = vpack.c.b16 %v522, %v521
  %v575 = vpack.c.b16 %v524, %v523
  %v576 = vpack.c.b16 %v526, %v525
  %v577 = vpack.c.b16 %v528, %v527
  %v578 = vpack.c.b16 %v530, %v529
  %v579 = vpack.c.b16 %v532, %v531
  %v580 = vpack.c.b16 %v534, %v533
  %v581 = vpack.c.b16 %v536, %v535
  %v582 = vpack.c.b16 %v538, %v537
  %v583 = vpack.c.b16 %v540, %v539
  %v584 = vpack.c.b16 %v542, %v541
  %v585 = vpack.c.b16 %v544, %v543
  %v586 = vpack.c.b16 %v546, %v545
  %627 = vmatprep.subr.bf16.mxu0 0
  %628 = vmatpush1.bf16.msra.mxu0 %v547
  %629 = vmatprep.subr.bf16.mxu0 0
  %630 = vmatpush1.bf16.msra.mxu0 %v548
  %631 = vmatprep.subr.bf16.mxu0 0
  %632 = vmatpush1.bf16.msra.mxu0 %v549
  %633 = vmatprep.subr.bf16.mxu0 0
  %634 = vmatpush1.bf16.msra.mxu0 %v550
  %635 = vmatprep.subr.bf16.mxu0 0
  %636 = vmatpush1.bf16.msra.mxu0 %v551
  %637 = vmatprep.subr.bf16.mxu0 0
  %638 = vmatpush1.bf16.msra.mxu0 %v552
  %639 = vmatprep.subr.bf16.mxu0 0
  %640 = vmatpush1.bf16.msra.mxu0 %v553
  %641 = vmatprep.subr.bf16.mxu0 0
  %642 = vmatpush1.bf16.msra.mxu0 %v554
  %643 = vmatprep.subr.bf16.mxu0 0
  %644 = vmatpush1.bf16.msra.mxu0 %v555
  %645 = vmatprep.subr.bf16.mxu0 0
  %646 = vmatpush1.bf16.msra.mxu0 %v556
  %647 = vmatprep.subr.bf16.mxu0 0
  %648 = vmatpush1.bf16.msra.mxu0 %v557
  %649 = vmatprep.subr.bf16.mxu0 0
  %650 = vmatpush1.bf16.msra.mxu0 %v558
  %651 = vmatprep.subr.bf16.mxu0 0
  %652 = vmatpush1.bf16.msra.mxu0 %v559
  %653 = vmatprep.subr.bf16.mxu0 0
  %654 = vmatpush1.bf16.msra.mxu0 %v560
  %655 = vmatprep.subr.bf16.mxu0 0
  %656 = vmatpush1.bf16.msra.mxu0 %v561
  %657 = vmatprep.subr.bf16.mxu0 0
  %658 = vmatpush1.bf16.msra.mxu0 %v562
  %659 = vmatprep.mubr.bf16.mxu0 %v308
  %660 = vmatmul.mubr.bf16.gmra.mrb[0].mxu0 %v307
  %v661 = vpop.f32.mrb[0].mxu0
  %v662 = vadd.f32 0.0, %v661
  %v663 = vpop.f32.mrb[0].mxu0
  %v664 = vpop.f32.mrb[0].mxu0
  %v665 = vadd.f32 0.0, %v664
  %v666 = vpop.f32.mrb[0].mxu0
  %667 = vmatprep.mubr.bf16.mxu0 %v313
  %668 = vmatmul.mubr.bf16.gmra.mrb[0].mxu0 %v312
  %v669 = vpop.f32.mrb[0].mxu0
  %v670 = vadd.f32 0.0, %v669
  %v671 = vpop.f32.mrb[0].mxu0
  %v672 = vpop.f32.mrb[0].mxu0
  %v673 = vadd.f32 0.0, %v672
  %v674 = vpop.f32.mrb[0].mxu0
  %675 = vmatprep.mubr.bf16.mxu0 %v318
  %676 = vmatmul.mubr.bf16.gmra.mrb[0].mxu0 %v317
  %v677 = vpop.f32.mrb[0].mxu0
  %v678 = vadd.f32 0.0, %v677
  %v679 = vpop.f32.mrb[0].mxu0
  %v680 = vpop.f32.mrb[0].mxu0
  %v681 = vadd.f32 0.0, %v680
  %v682 = vpop.f32.mrb[0].mxu0
  %683 = vmatprep.mubr.bf16.mxu0 %v323
  %684 = vmatmul.mubr.bf16.gmra.mrb[0].mxu0 %v322
  %v685 = vpop.f32.mrb[0].mxu0
  %v686 = vadd.f32 0.0, %v685
  %v687 = vpop.f32.mrb[0].mxu0
  %v688 = vpop.f32.mrb[0].mxu0
  %v689 = vadd.f32 0.0, %v688
  %v690 = vpop.f32.mrb[0].mxu0
  %691 = vmatprep.mubr.bf16.mxu0 %v328
  %692 = vmatmul.mubr.bf16.gmra.mrb[0].mxu0 %v327
  %v693 = vpop.f32.mrb[0].mxu0
  %v694 = vadd.f32 0.0, %v693
  %v695 = vpop.f32.mrb[0].mxu0
  %v696 = vpop.f32.mrb[0].mxu0
  %v697 = vadd.f32 0.0, %v696
  %v698 = vpop.f32.mrb[0].mxu0
  %699 = vmatprep.mubr.bf16.mxu0 %v333
  %700 = vmatmul.mubr.bf16.gmra.mrb[0].mxu0 %v332
  %v701 = vpop.f32.mrb[0].mxu0
  %v702 = vadd.f32 0.0, %v701
  %v703 = vpop.f32.mrb[0].mxu0
  %v704 = vpop.f32.mrb[0].mxu0
  %v705 = vadd.f32 0.0, %v704
  %v706 = vpop.f32.mrb[0].mxu0
  %707 = vmatprep.mubr.bf16.mxu0 %v338
  %708 = vmatmul.mubr.bf16.gmra.mrb[0].mxu0 %v337
  %v709 = vpop.f32.mrb[0].mxu0
  %v710 = vadd.f32 0.0, %v709
  %v711 = vpop.f32.mrb[0].mxu0
  %v712 = vpop.f32.mrb[0].mxu0
  %v713 = vadd.f32 0.0, %v712
  %v714 = vpop.f32.mrb[0].mxu0
  %715 = vmatprep.mubr.bf16.mxu0 %v343
  %716 = vmatmul.mubr.bf16.gmra.mrb[0].mxu0 %v342
  %v717 = vpop.f32.mrb[0].mxu0
  %v718 = vadd.f32 0.0, %v717
  %v719 = vpop.f32.mrb[0].mxu0
  %v720 = vpop.f32.mrb[0].mxu0
  %v721 = vadd.f32 0.0, %v720
  %v722 = vpop.f32.mrb[0].mxu0
  %723 = vdwg.mxu0
  %724 = vmatprep.subr.bf16.mxu0 0
  %725 = vmatpush1.bf16.msra.mxu0 %v563
  %726 = vmatprep.subr.bf16.mxu0 0
  %727 = vmatpush1.bf16.msra.mxu0 %v564
  %728 = vmatprep.subr.bf16.mxu0 0
  %729 = vmatpush1.bf16.msra.mxu0 %v565
  %730 = vmatprep.subr.bf16.mxu0 0
  %731 = vmatpush1.bf16.msra.mxu0 %v566
  %732 = vmatprep.subr.bf16.mxu0 0
  %733 = vmatpush1.bf16.msra.mxu0 %v567
  %734 = vmatprep.subr.bf16.mxu0 0
  %735 = vmatpush1.bf16.msra.mxu0 %v568
  %736 = vmatprep.subr.bf16.mxu0 0
  %737 = vmatpush1.bf16.msra.mxu0 %v569
  %738 = vmatprep.subr.bf16.mxu0 0
  %739 = vmatpush1.bf16.msra.mxu0 %v570
  %740 = vmatprep.subr.bf16.mxu0 0
  %741 = vmatpush1.bf16.msra.mxu0 %v571
  %742 = vmatprep.subr.bf16.mxu0 0
  %743 = vmatpush1.bf16.msra.mxu0 %v572
  %744 = vmatprep.subr.bf16.mxu0 0
  %745 = vmatpush1.bf16.msra.mxu0 %v573
  %746 = vmatprep.subr.bf16.mxu0 0
  %747 = vmatpush1.bf16.msra.mxu0 %v574
  %748 = vmatprep.subr.bf16.mxu0 0
  %749 = vmatpush1.bf16.msra.mxu0 %v575
  %750 = vmatprep.subr.bf16.mxu0 0
  %751 = vmatpush1.bf16.msra.mxu0 %v576
  %752 = vmatprep.subr.bf16.mxu0 0
  %753 = vmatpush1.bf16.msra.mxu0 %v577
  %754 = vmatprep.subr.bf16.mxu0 0
  %755 = vmatpush1.bf16.msra.mxu0 %v578
  %756 = vmatprep.mubr.bf16.mxu0 %v310
  %757 = vmatmul.mubr.bf16.gmra.mrb[0].mxu0 %v309
  %v758 = vpop.f32.mrb[0].mxu0
  %v759 = vadd.f32 %v662, %v758
  %v760 = vpop.f32.mrb[0].mxu0
  %v761 = vpop.f32.mrb[0].mxu0
  %v762 = vadd.f32 %v665, %v761
  %v763 = vpop.f32.mrb[0].mxu0
  %764 = vmatprep.mubr.bf16.mxu0 %v315
  %765 = vmatmul.mubr.bf16.gmra.mrb[0].mxu0 %v314
  %v766 = vpop.f32.mrb[0].mxu0
  %v767 = vadd.f32 %v670, %v766
  %v768 = vpop.f32.mrb[0].mxu0
  %v769 = vpop.f32.mrb[0].mxu0
  %v770 = vadd.f32 %v673, %v769
  %v771 = vpop.f32.mrb[0].mxu0
  %772 = vmatprep.mubr.bf16.mxu0 %v320
  %773 = vmatmul.mubr.bf16.gmra.mrb[0].mxu0 %v319
  %v774 = vpop.f32.mrb[0].mxu0
  %v775 = vadd.f32 %v678, %v774
  %v776 = vpop.f32.mrb[0].mxu0
  %v777 = vpop.f32.mrb[0].mxu0
  %v778 = vadd.f32 %v681, %v777
  %v779 = vpop.f32.mrb[0].mxu0
  %780 = vmatprep.mubr.bf16.mxu0 %v325
  %781 = vmatmul.mubr.bf16.gmra.mrb[0].mxu0 %v324
  %v782 = vpop.f32.mrb[0].mxu0
  %v783 = vadd.f32 %v686, %v782
  %v784 = vpop.f32.mrb[0].mxu0
  %v785 = vpop.f32.mrb[0].mxu0
  %v786 = vadd.f32 %v689, %v785
  %v787 = vpop.f32.mrb[0].mxu0
  %788 = vmatprep.mubr.bf16.mxu0 %v330
  %789 = vmatmul.mubr.bf16.gmra.mrb[0].mxu0 %v329
  %v790 = vpop.f32.mrb[0].mxu0
  %v791 = vadd.f32 %v694, %v790
  %v792 = vpop.f32.mrb[0].mxu0
  %v793 = vpop.f32.mrb[0].mxu0
  %v794 = vadd.f32 %v697, %v793
  %v795 = vpop.f32.mrb[0].mxu0
  %796 = vmatprep.mubr.bf16.mxu0 %v335
  %797 = vmatmul.mubr.bf16.gmra.mrb[0].mxu0 %v334
  %v798 = vpop.f32.mrb[0].mxu0
  %v799 = vadd.f32 %v702, %v798
  %v800 = vpop.f32.mrb[0].mxu0
  %v801 = vpop.f32.mrb[0].mxu0
  %v802 = vadd.f32 %v705, %v801
  %v803 = vpop.f32.mrb[0].mxu0
  %804 = vmatprep.mubr.bf16.mxu0 %v340
  %805 = vmatmul.mubr.bf16.gmra.mrb[0].mxu0 %v339
  %v806 = vpop.f32.mrb[0].mxu0
  %v807 = vadd.f32 %v710, %v806
  %v808 = vpop.f32.mrb[0].mxu0
  %v809 = vpop.f32.mrb[0].mxu0
  %v810 = vadd.f32 %v713, %v809
  %v811 = vpop.f32.mrb[0].mxu0
  %812 = vmatprep.mubr.bf16.mxu0 %v345
  %813 = vmatmul.mubr.bf16.gmra.mrb[0].mxu0 %v344
  %v814 = vpop.f32.mrb[0].mxu0
  %v815 = vadd.f32 %v718, %v814
  %v816 = vpop.f32.mrb[0].mxu0
  %v817 = vpop.f32.mrb[0].mxu0
  %v818 = vadd.f32 %v721, %v817
  %v819 = vpop.f32.mrb[0].mxu0
  %820 = vdwg.mxu0
  %821 = vmatprep.subr.bf16.mxu0 0
  %822 = vmatpush1.bf16.msra.mxu0 %v579
  %823 = vmatprep.subr.bf16.mxu0 0
  %824 = vmatpush1.bf16.msra.mxu0 %v580
  %825 = vmatprep.subr.bf16.mxu0 0
  %826 = vmatpush1.bf16.msra.mxu0 %v581
  %827 = vmatprep.subr.bf16.mxu0 0
  %828 = vmatpush1.bf16.msra.mxu0 %v582
  %829 = vmatprep.subr.bf16.mxu0 0
  %830 = vmatpush1.bf16.msra.mxu0 %v583
  %831 = vmatprep.subr.bf16.mxu0 0
  %832 = vmatpush1.bf16.msra.mxu0 %v584
  %833 = vmatprep.subr.bf16.mxu0 0
  %834 = vmatpush1.bf16.msra.mxu0 %v585
  %835 = vmatprep.subr.bf16.mxu0 0
  %836 = vmatpush1.bf16.msra.mxu0 %v586
  %837 = vmatprep.subr.bf16.mxu0 0
  %838 = vmatpush1.bf16.msra.mxu0 0
  %839 = vmatprep.subr.bf16.mxu0 0
  %840 = vmatpush1.bf16.msra.mxu0 0
  %841 = vmatprep.subr.bf16.mxu0 0
  %842 = vmatpush1.bf16.msra.mxu0 0
  %843 = vmatprep.subr.bf16.mxu0 0
  %844 = vmatpush1.bf16.msra.mxu0 0
  %845 = vmatprep.subr.bf16.mxu0 0
  %846 = vmatpush1.bf16.msra.mxu0 0
  %847 = vmatprep.subr.bf16.mxu0 0
  %848 = vmatpush1.bf16.msra.mxu0 0
  %849 = vmatprep.subr.bf16.mxu0 0
  %850 = vmatpush1.bf16.msra.mxu0 0
  %851 = vmatprep.subr.bf16.mxu0 0
  %852 = vmatpush1.bf16.msra.mxu0 0
  %853 = vmatprep.mubr.bf16.mxu0 0
  %854 = vmatmul.mubr.bf16.gmra.mrb[0].mxu0 %v311
  %v855 = vpop.f32.mrb[0].mxu0
  %v856 = vadd.f32 %v759, %v855
  %v857 = vpop.f32.mrb[0].mxu0
  %v858 = vpop.f32.mrb[0].mxu0
  %v859 = vadd.f32 %v762, %v858
  %v860 = vpop.f32.mrb[0].mxu0
  %861 = vmatprep.mubr.bf16.mxu0 0
  %862 = vmatmul.mubr.bf16.gmra.mrb[0].mxu0 %v316
  %v863 = vpop.f32.mrb[0].mxu0
  %v864 = vadd.f32 %v767, %v863
  %v865 = vpop.f32.mrb[0].mxu0
  %v866 = vpop.f32.mrb[0].mxu0
  %v867 = vadd.f32 %v770, %v866
  %v868 = vpop.f32.mrb[0].mxu0
  %869 = vmatprep.mubr.bf16.mxu0 0
  %870 = vmatmul.mubr.bf16.gmra.mrb[0].mxu0 %v321
  %v871 = vpop.f32.mrb[0].mxu0
  %v872 = vadd.f32 %v775, %v871
  %v873 = vpop.f32.mrb[0].mxu0
  %v874 = vpop.f32.mrb[0].mxu0
  %v875 = vadd.f32 %v778, %v874
  %v876 = vpop.f32.mrb[0].mxu0
  %877 = vmatprep.mubr.bf16.mxu0 0
  %878 = vmatmul.mubr.bf16.gmra.mrb[0].mxu0 %v326
  %v879 = vpop.f32.mrb[0].mxu0
  %v880 = vadd.f32 %v783, %v879
  %v881 = vpop.f32.mrb[0].mxu0
  %v882 = vpop.f32.mrb[0].mxu0
  %v883 = vadd.f32 %v786, %v882
  %v884 = vpop.f32.mrb[0].mxu0
  %885 = vmatprep.mubr.bf16.mxu0 0
  %886 = vmatmul.mubr.bf16.gmra.mrb[0].mxu0 %v331
  %v887 = vpop.f32.mrb[0].mxu0
  %v888 = vadd.f32 %v791, %v887
  %v889 = vpop.f32.mrb[0].mxu0
  %v890 = vpop.f32.mrb[0].mxu0
  %v891 = vadd.f32 %v794, %v890
  %v892 = vpop.f32.mrb[0].mxu0
  %893 = vmatprep.mubr.bf16.mxu0 0
  %894 = vmatmul.mubr.bf16.gmra.mrb[0].mxu0 %v336
  %v895 = vpop.f32.mrb[0].mxu0
  %v896 = vadd.f32 %v799, %v895
  %v897 = vpop.f32.mrb[0].mxu0
  %v898 = vpop.f32.mrb[0].mxu0
  %v899 = vadd.f32 %v802, %v898
  %v900 = vpop.f32.mrb[0].mxu0
  %901 = vmatprep.mubr.bf16.mxu0 0
  %902 = vmatmul.mubr.bf16.gmra.mrb[0].mxu0 %v341
  %v903 = vpop.f32.mrb[0].mxu0
  %v904 = vadd.f32 %v807, %v903
  %v905 = vpop.f32.mrb[0].mxu0
  %v906 = vpop.f32.mrb[0].mxu0
  %v907 = vadd.f32 %v810, %v906
  %v908 = vpop.f32.mrb[0].mxu0
  %909 = vmatprep.mubr.bf16.mxu0 0
  %910 = vmatmul.mubr.bf16.gmra.mrb[0].mxu0 %v346
  %v911 = vpop.f32.mrb[0].mxu0
  %v912 = vadd.f32 %v815, %v911
  %v913 = vpop.f32.mrb[0].mxu0
  %v914 = vpop.f32.mrb[0].mxu0
  %v915 = vadd.f32 %v818, %v914
  %v916 = vpop.f32.mrb[0].mxu0
  %917 = vdwg.mxu0
  %v918 = vadd.f32 %v35, %v856
  %v919 = vadd.f32 %v36, %v859
  %v920 = vadd.f32 %v37, %v864
  %v921 = vadd.f32 %v38, %v867
  %v922 = vadd.f32 %v39, %v872
  %v923 = vadd.f32 %v40, %v875
  %v924 = vadd.f32 %v41, %v880
  %v925 = vadd.f32 %v42, %v883
  %v926 = vadd.f32 %v43, %v888
  %v927 = vadd.f32 %v44, %v891
  %v928 = vadd.f32 %v45, %v896
  %v929 = vadd.f32 %v46, %v899
  %v930 = vadd.f32 %v47, %v904
  %v931 = vadd.f32 %v48, %v907
  %v932 = vadd.f32 %v49, %v912
  %v933 = vadd.f32 %v50, %v915
  %934 = vst [vmem:[#allocation2] sm:$0xff] %v918
  %935 = vst [vmem:[#allocation2 + $0x8] sm:$0xff] %v919
  %936 = vst [vmem:[#allocation2 + $0x10] sm:$0xff] %v920
  %937 = vst [vmem:[#allocation2 + $0x18] sm:$0xff] %v921
  %938 = vst [vmem:[#allocation2 + $0x20] sm:$0xff] %v922
  %939 = vst [vmem:[#allocation2 + $0x28] sm:$0xff] %v923
  %940 = vst [vmem:[#allocation2 + $0x30] sm:$0xff] %v924
  %941 = vst [vmem:[#allocation2 + $0x38] sm:$0xff] %v925
  %942 = vst [vmem:[#allocation2 + $0x40] sm:$0xff] %v926
  %943 = vst [vmem:[#allocation2 + $0x48] sm:$0xff] %v927
  %944 = vst [vmem:[#allocation2 + $0x50] sm:$0xff] %v928
  %945 = vst [vmem:[#allocation2 + $0x58] sm:$0xff] %v929
  %946 = vst [vmem:[#allocation2 + $0x60] sm:$0xff] %v930
  %947 = vst [vmem:[#allocation2 + $0x68] sm:$0xff] %v931
  %948 = vst [vmem:[#allocation2 + $0x70] sm:$0xff] %v932
  %949 = vst [vmem:[#allocation2 + $0x78] sm:$0xff] %v933
  // Predicated region
  $region18: #{lip_sync_forward.19} parent=0 // pred_check
    %p950 = pneg %p15
  $region19: #{lip_sync_forward.19} parent=0 // pred_check_branch
    %952 = sbr.rel (%p950) target = $region21
  $region20: #{lip_sync_forward.19} parent=0 // pred_region
    %v953 = vld [vmem:[#allocation2] sm:$0xff]
    %v954 = vld [vmem:[#allocation2 + $0x8] sm:$0xff]
    %v955 = vld [vmem:[#allocation2 + $0x10] sm:$0xff]
    %v956 = vld [vmem:[#allocation2 + $0x18] sm:$0xff]
    %v957 = vld [vmem:[#allocation2 + $0x20] sm:$0xff]
    %v958 = vld [vmem:[#allocation2 + $0x28] sm:$0xff]
    %v959 = vld [vmem:[#allocation2 + $0x30] sm:$0xff]
    %v960 = vld [vmem:[#allocation2 + $0x38] sm:$0xff]
    %v961 = vld [vmem:[#allocation2 + $0x40] sm:$0xff]
    %v962 = vld [vmem:[#allocation2 + $0x48] sm:$0xff]
    %v963 = vld [vmem:[#allocation2 + $0x50] sm:$0xff]
    %v964 = vld [vmem:[#allocation2 + $0x58] sm:$0xff]
    %v965 = vld [vmem:[#allocation2 + $0x60] sm:$0xff]
    %v966 = vld [vmem:[#allocation2 + $0x68] sm:$0xff]
    %v967 = vld [vmem:[#allocation2 + $0x70] sm:$0xff]
    %v968 = vld [vmem:[#allocation2 + $0x78] sm:$0xff]
    %v969 = vld [vmem:[%s2] sm:$0x1]
    %v971 = vlaneseq
    %v972 = vshrl.u32 %v971, 7
    %v973 = vsub.s32 0, %v972
    %v974 = vrot.slane %v969, %v973
    %v976 = vadd.f32 %v953, %v974
    %v977 = vadd.f32 %v954, %v974
    %v978 = vadd.f32 %v955, %v974
    %v979 = vadd.f32 %v956, %v974
    %v980 = vadd.f32 %v957, %v974
    %v981 = vadd.f32 %v958, %v974
    %v982 = vadd.f32 %v959, %v974
    %v983 = vadd.f32 %v960, %v974
    %v984 = vadd.f32 %v961, %v974
    %v985 = vadd.f32 %v962, %v974
    %v986 = vadd.f32 %v963, %v974
    %v987 = vadd.f32 %v964, %v974
    %v988 = vadd.f32 %v965, %v974
    %v989 = vadd.f32 %v966, %v974
    %v990 = vadd.f32 %v967, %v974
    %v991 = vadd.f32 %v968, %v974
    %v992 = vxor.u32 %v976, 2147483648
    %v993 = vxor.u32 %v977, 2147483648
    %v994 = vxor.u32 %v978, 2147483648
    %v995 = vxor.u32 %v979, 2147483648
    %v996 = vxor.u32 %v980, 2147483648
    %v997 = vxor.u32 %v981, 2147483648
    %v998 = vxor.u32 %v982, 2147483648
    %v999 = vxor.u32 %v983, 2147483648
    %v1000 = vxor.u32 %v984, 2147483648
    %v1001 = vxor.u32 %v985, 2147483648
    %v1002 = vxor.u32 %v986, 2147483648
    %v1003 = vxor.u32 %v987, 2147483648
    %v1004 = vxor.u32 %v988, 2147483648
    %v1005 = vxor.u32 %v989, 2147483648
    %v1006 = vxor.u32 %v990, 2147483648
    %v1007 = vxor.u32 %v991, 2147483648
    %v1008 = vmul.f32 %v992, 1.442695
    %v1009 = vpow.pop %v1008
    %v1010 = vmul.f32 %v993, 1.442695
    %v1011 = vpow.pop %v1010
    %v1012 = vmul.f32 %v994, 1.442695
    %v1013 = vpow.pop %v1012
    %v1014 = vmul.f32 %v995, 1.442695
    %v1015 = vpow.pop %v1014
    %v1016 = vmul.f32 %v996, 1.442695
    %v1017 = vpow.pop %v1016
    %v1018 = vmul.f32 %v997, 1.442695
    %v1019 = vpow.pop %v1018
    %v1020 = vmul.f32 %v998, 1.442695
    %v1021 = vpow.pop %v1020
    %v1022 = vmul.f32 %v999, 1.442695
    %v1023 = vpow.pop %v1022
    %v1024 = vmul.f32 %v1000, 1.442695
    %v1025 = vpow.pop %v1024
    %v1026 = vmul.f32 %v1001, 1.442695
    %v1027 = vpow.pop %v1026
    %v1028 = vmul.f32 %v1002, 1.442695
    %v1029 = vpow.pop %v1028
    %v1030 = vmul.f32 %v1003, 1.442695
    %v1031 = vpow.pop %v1030
    %v1032 = vmul.f32 %v1004, 1.442695
    %v1033 = vpow.pop %v1032
    %v1034 = vmul.f32 %v1005, 1.442695
    %v1035 = vpow.pop %v1034
    %v1036 = vmul.f32 %v1006, 1.442695
    %v1037 = vpow.pop %v1036
    %v1038 = vmul.f32 %v1007, 1.442695
    %v1039 = vpow.pop %v1038
    %v1040 = vadd.f32 %v1009, 1.0
    %v1041 = vadd.f32 %v1011, 1.0
    %v1042 = vadd.f32 %v1013, 1.0
    %v1043 = vadd.f32 %v1015, 1.0
    %v1044 = vadd.f32 %v1017, 1.0
    %v1045 = vadd.f32 %v1019, 1.0
    %v1046 = vadd.f32 %v1021, 1.0
    %v1047 = vadd.f32 %v1023, 1.0
    %v1048 = vadd.f32 %v1025, 1.0
    %v1049 = vadd.f32 %v1027, 1.0
    %v1050 = vadd.f32 %v1029, 1.0
    %v1051 = vadd.f32 %v1031, 1.0
    %v1052 = vadd.f32 %v1033, 1.0
    %v1053 = vadd.f32 %v1035, 1.0
    %v1054 = vadd.f32 %v1037, 1.0
    %v1055 = vadd.f32 %v1039, 1.0
    %v1056 = vrcp.pop %v1040
    %v1057 = vmul.f32 1.0, %v1056
    %v1058 = vrcp.pop %v1041
    %v1059 = vmul.f32 1.0, %v1058
    %v1060 = vrcp.pop %v1042
    %v1061 = vmul.f32 1.0, %v1060
    %v1062 = vrcp.pop %v1043
    %v1063 = vmul.f32 1.0, %v1062
    %v1064 = vrcp.pop %v1044
    %v1065 = vmul.f32 1.0, %v1064
    %v1066 = vrcp.pop %v1045
    %v1067 = vmul.f32 1.0, %v1066
    %v1068 = vrcp.pop %v1046
    %v1069 = vmul.f32 1.0, %v1068
    %v1070 = vrcp.pop %v1047
    %v1071 = vmul.f32 1.0, %v1070
    %v1072 = vrcp.pop %v1048
    %v1073 = vmul.f32 1.0, %v1072
    %v1074 = vrcp.pop %v1049
    %v1075 = vmul.f32 1.0, %v1074
    %v1076 = vrcp.pop %v1050
    %v1077 = vmul.f32 1.0, %v1076
    %v1078 = vrcp.pop %v1051
    %v1079 = vmul.f32 1.0, %v1078
    %v1080 = vrcp.pop %v1052
    %v1081 = vmul.f32 1.0, %v1080
    %v1082 = vrcp.pop %v1053
    %v1083 = vmul.f32 1.0, %v1082
    %v1084 = vrcp.pop %v1054
    %v1085 = vmul.f32 1.0, %v1084
    %v1086 = vrcp.pop %v1055
    %v1087 = vmul.f32 1.0, %v1086
    %1088 = vst [vmem:[%s3] sm:$0xff] %v1057
    %1089 = vst [vmem:[%s3 + $0x8] sm:$0xff] %v1059
    %1090 = vst [vmem:[%s3 + $0x10] sm:$0xff] %v1061
    %1091 = vst [vmem:[%s3 + $0x18] sm:$0xff] %v1063
    %1092 = vst [vmem:[%s3 + $0x20] sm:$0xff] %v1065
    %1093 = vst [vmem:[%s3 + $0x28] sm:$0xff] %v1067
    %1094 = vst [vmem:[%s3 + $0x30] sm:$0xff] %v1069
    %1095 = vst [vmem:[%s3 + $0x38] sm:$0xff] %v1071
    %1096 = vst [vmem:[%s3 + $0x40] sm:$0xff] %v1073
    %1097 = vst [vmem:[%s3 + $0x48] sm:$0xff] %v1075
    %1098 = vst [vmem:[%s3 + $0x50] sm:$0xff] %v1077
    %1099 = vst [vmem:[%s3 + $0x58] sm:$0xff] %v1079
    %1100 = vst [vmem:[%s3 + $0x60] sm:$0xff] %v1081
    %1101 = vst [vmem:[%s3 + $0x68] sm:$0xff] %v1083
    %1102 = vst [vmem:[%s3 + $0x70] sm:$0xff] %v1085
    %1103 = vst [vmem:[%s3 + $0x78] sm:$0xff] %v1087
  $region21: #{lip_sync_forward.19} parent=0 // pred_fallthru
    _
  // Predicated region
  $region22: #{lip_sync_forward.19} parent=0 // pred_check
    _
  $region23: #{lip_sync_forward.19} parent=0 // pred_check_branch
    %1105 = sbr.rel (0) target = $region25
  $region24: #{lip_sync_forward.19} parent=0 // pred_region
    _
  $region25: #{lip_sync_forward.19} parent=0 // pred_fallthru
    _
  // Predicated region
  $region26: #{lip_sync_forward.19} parent=0 // pred_check
    _
  $region27: #{lip_sync_forward.19} parent=0 // pred_check_branch
    %1107 = sbr.rel (0) target = $region29
  $region28: #{lip_sync_forward.19} parent=0 // pred_region
    _
  $region29: #{lip_sync_forward.19} parent=0 // pred_fallthru
    _

</llo_original>
